<compile_context>
chip_gen: v6e
topology: v6e:2x2x1
jax: 0.10.0
libtpu: 0.0.40
codegen_flags: <defaults>
</compile_context>

<pallas_src>
import math

import jax
import jax.numpy as jnp
from jax.experimental import pallas as pl
from jax.experimental.pallas import tpu as pltpu


# ----------------------------- math helpers -------------------------------- #
def _sigmoid(x):
    return 1.0 / (1.0 + jnp.exp(-x))


def _layer_norm(x, g, b, eps=1e-12):
    mu = jnp.mean(x, axis=-1, keepdims=True)
    var = jnp.mean(jnp.square(x - mu), axis=-1, keepdims=True)
    return (x - mu) * jax.lax.rsqrt(var + eps) * g + b


def _gelu_tanh(x):
    c = math.sqrt(2.0 / math.pi)
    return 0.5 * x * (1.0 + jnp.tanh(c * (x + 0.044715 * x * x * x)))


def _pad_rows(tab, mult=8):
    """Pad an embedding table with zero rows to a sublane multiple."""
    v, d = tab.shape
    vp = ((v + mult - 1) // mult) * mult
    if vp == v:
        return tab
    return jnp.concatenate([tab, jnp.zeros((vp - v, d), tab.dtype)], axis=0)


# ------------------------------- kernel ------------------------------------ #
def _lstm_attn_kernel(
    # blocked per-batch inputs
    idx_ref,                         # (TB, S, 5) int32 global embedding indices
    mask_ref,                        # (TB, 1, S) f32
    # fused embedding+projection table + bias
    t_emb_ref, b_comb_ref,           # (Vtot, HD) mm, (1, HD) f32
    # single-layer LSTM (gate order i, f, g, o; b = b_ih + b_hh)
    w_ih_ref, w_hh_ref, b_lstm_ref,  # (HD, 4HD) mm x2, (1, 4HD) f32
    # Bert self-attention, per-head weight layout
    wq_ref, bq_ref, wk_ref, bk_ref, wv_ref, bv_ref,   # (NH,HD,DH) mm / (NH,1,DH) f32
    wo_ref, bo_ref, ln1_g_ref, ln1_b_ref,             # (NH,DH,HD) mm, (1,HD) f32 x3
    wi_ref, bi_ref, wo2_ref, bo2_ref, ln2_g_ref, ln2_b_ref,   # FFN + LN
    # classifier
    w_fc_ref, b_fc_ref,              # (1, HD) f32, (1, 1) f32
    # output
    out_ref,                         # (TB, 1, S) f32
    # scratch
    lstm_buf_ref,                    # VMEM (TB, S, HD) f32
):
    f32 = jnp.float32
    mm = t_emb_ref.dtype             # matmul operand dtype (f32 or bf16)
    TB, S, F = idx_ref.shape
    HD = w_ih_ref.shape[0]
    G4 = w_ih_ref.shape[1]
    NH = wq_ref.shape[0]
    DH = wq_ref.shape[2]
    Vtot = t_emb_ref.shape[0]
    N = TB * S

    # ---- fused embeddings + comb_proj: one combined one-hot, one matmul ----
    gidx = idx_ref[...].reshape(N, F)
    iota = jax.lax.broadcasted_iota(jnp.int32, (N, Vtot), 1)
    onehot = jnp.zeros((N, Vtot), f32)
    for fi in range(F):
        onehot = onehot + (iota == gidx[:, fi:fi + 1]).astype(f32)
    x = jnp.dot(onehot.astype(mm), t_emb_ref[...],
                preferred_element_type=f32) + b_comb_ref[...]          # (N, HD)

    # ---- 1-layer LSTM: hoisted input matmul, only h @ w_hh in the loop ----
    x_gates = jnp.dot(x.astype(mm), w_ih_ref[...],
                      preferred_element_type=f32) + b_lstm_ref[...]    # (N, 4HD)
    xg3 = x_gates.reshape(TB, S, G4)
    w_hh = w_hh_ref[...]
    h = jnp.zeros((TB, HD), f32)
    c = jnp.zeros((TB, HD), f32)
    for t in range(S):               # small static trip count (see TODO above)
        gates = xg3[:, t, :] + jnp.dot(h.astype(mm), w_hh,
                                       preferred_element_type=f32)
        i_g = _sigmoid(gates[:, 0 * HD:1 * HD])
        f_g = _sigmoid(gates[:, 1 * HD:2 * HD])
        g_g = jnp.tanh(gates[:, 2 * HD:3 * HD])
        o_g = _sigmoid(gates[:, 3 * HD:4 * HD])
        c = f_g * c + i_g * g_g
        h = o_g * jnp.tanh(c)
        lstm_buf_ref[:, t, :] = h
    lstm2 = lstm_buf_ref[...].reshape(N, HD)
    lstm2_mm = lstm2.astype(mm)

    # ---- BertEncoder (1 layer): heads via pre-split weights ----
    ext_mask = (1.0 - mask_ref[...]) * (-10000.0)                      # (TB, 1, S)
    scale = 1.0 / math.sqrt(DH)
    attn_acc = jnp.zeros((N, HD), f32)
    for hi in range(NH):
        qh = jnp.dot(lstm2_mm, wq_ref[hi], preferred_element_type=f32) + bq_ref[hi]
        kh = jnp.dot(lstm2_mm, wk_ref[hi], preferred_element_type=f32) + bk_ref[hi]
        vh = jnp.dot(lstm2_mm, wv_ref[hi], preferred_element_type=f32) + bv_ref[hi]
        qh3 = qh.reshape(TB, S, DH)
        kh3 = kh.reshape(TB, S, DH)
        vh3 = vh.reshape(TB, S, DH)
        scores = jnp.einsum('bqd,bkd->bqk', qh3.astype(mm), kh3.astype(mm),
                            preferred_element_type=f32) * scale + ext_mask
        scores = scores - jnp.max(scores, axis=-1, keepdims=True)
        p = jnp.exp(scores)
        probs = p * pl.reciprocal(jnp.sum(p, axis=-1, keepdims=True), approx=True)
        ctx = jnp.einsum('bqk,bkd->bqd', probs.astype(mm), vh3.astype(mm),
                         preferred_element_type=f32)                   # (TB, S, DH)
        attn_acc = attn_acc + jnp.dot(ctx.reshape(N, DH).astype(mm), wo_ref[hi],
                                      preferred_element_type=f32)
    attn_out = _layer_norm(attn_acc + bo_ref[...] + lstm2,
                           ln1_g_ref[...], ln1_b_ref[...])

    # ---- FFN + output LayerNorm ----
    inter = _gelu_tanh(jnp.dot(attn_out.astype(mm), wi_ref[...],
                               preferred_element_type=f32) + bi_ref[...])
    ffn = jnp.dot(inter.astype(mm), wo2_ref[...],
                  preferred_element_type=f32) + bo2_ref[...]
    seq_out = _layer_norm(ffn + attn_out, ln2_g_ref[...], ln2_b_ref[...])

    # ---- fc + sigmoid ----
    logits = jnp.sum(seq_out * w_fc_ref[...], axis=-1, keepdims=True) + b_fc_ref[...]
    out_ref[...] = _sigmoid(logits).reshape(TB, 1, S).astype(out_ref.dtype)


# ------------------------------- wrapper ------------------------------------ #
_EMB_FIELDS = ["tab_inter", "tab_test", "tab_ques", "tab_tag", "tab_elap"]


def lstm_attn_forward(inputs, params, *, n_heads, batch_block=None,
                      matmul_dtype=jnp.bfloat16):
    """LSTMATNN.forward (eval semantics).  `inputs` is the module's 8-tuple;
    returns (B, S) predictions."""
    test, question, tag, _, elapsed_question, mask, interaction, _ = inputs
    B, S = interaction.shape
    HD = params["w_ih"].shape[0]
    assert HD % n_heads == 0
    DH = HD // n_heads
    TB = B if batch_block is None else int(batch_block)
    assert B % TB == 0, "batch_block must divide the batch size"
    f32 = jnp.float32
    mm = matmul_dtype

    # --- fuse embeddings + comb_proj: T = blockdiag(tables) @ w_comb --------
    tabs = [params[name].astype(f32) for name in _EMB_FIELDS]
    intd = tabs[0].shape[1]
    w_comb = params["w_comb"].astype(f32)                       # (5*intd, HD)
    pieces, offsets, off = [], [], 0
    for fi, tab in enumerate(tabs):
        tab_p = _pad_rows(tab)                                  # zero slack rows
        pieces.append(tab_p @ w_comb[fi * intd:(fi + 1) * intd, :])
        offsets.append(off)
        off += tab_p.shape[0]
    t_emb = jnp.concatenate(pieces, axis=0).astype(mm)          # (Vtot, HD)

    # --- pack the 5 index streams into one (B, S, 5) int32 input ------------
    fields = [interaction, test, question, tag, elapsed_question]
    gidx = jnp.stack([fields[fi].astype(jnp.int32) + offsets[fi]
                      for fi in range(5)], axis=-1)             # (B, S, 5)
    mask3 = mask.astype(f32).reshape(B, 1, S)

    # --- per-head attention weight layout (no in-kernel lane slicing) -------
    def heads_w(w):      # (HD, HD) -> (NH, HD, DH)
        return jnp.transpose(w.reshape(HD, n_heads, DH), (1, 0, 2)).astype(mm)

    def heads_b(b):      # (1, HD) -> (NH, 1, DH)
        return b.reshape(n_heads, DH)[:, None, :].astype(f32)

    weights = [
        t_emb, params["b_comb"].astype(f32),
        params["w_ih"].astype(mm), params["w_hh"].astype(mm),
        params["b_lstm"].astype(f32),
        heads_w(params["wq"]), heads_b(params["bq"]),
        heads_w(params["wk"]), heads_b(params["bk"]),
        heads_w(params["wv"]), heads_b(params["bv"]),
        params["wo"].reshape(n_heads, DH, HD).astype(mm), params["bo"].astype(f32),
        params["ln1_g"].astype(f32), params["ln1_b"].astype(f32),
        params["wi"].astype(mm), params["bi"].astype(f32),
        params["wo2"].astype(mm), params["bo2"].astype(f32),
        params["ln2_g"].astype(f32), params["ln2_b"].astype(f32),
        params["w_fc"].astype(f32), params["b_fc"].astype(f32),
    ]

    def const_spec(w):
        zeros = (0,) * w.ndim
        return pl.BlockSpec(w.shape, lambda i, _z=zeros: _z)

    in_specs = ([pl.BlockSpec((TB, S, 5), lambda i: (i, 0, 0)),
                 pl.BlockSpec((TB, 1, S), lambda i: (i, 0, 0))]
                + [const_spec(w) for w in weights])

    out = pl.pallas_call(
        _lstm_attn_kernel,
        out_shape=jax.ShapeDtypeStruct((B, 1, S), f32),
        grid=(B // TB,),
        in_specs=in_specs,
        out_specs=pl.BlockSpec((TB, 1, S), lambda i: (i, 0, 0)),
        scratch_shapes=[pltpu.VMEM((TB, S, HD), f32)],
        compiler_params=pltpu.CompilerParams(
            dimension_semantics=("parallel",)),     # batch blocks independent
    )(gidx, mask3, *weights)
    return out.reshape(B, S)


# --------------------------- pure-JAX reference ----------------------------- #
def _reference_forward(inputs, params, *, n_heads):
    test, question, tag, _, elapsed, mask, interaction, _ = inputs
    B, S = interaction.shape
    HD = params["w_ih"].shape[0]
    DH = HD // n_heads
    f32 = jnp.float32

    embed = jnp.concatenate([params["tab_inter"][interaction],
                             params["tab_test"][test],
                             params["tab_ques"][question],
                             params["tab_tag"][tag],
                             params["tab_elap"][elapsed]], axis=-1)
    x = embed @ params["w_comb"] + params["b_comb"]

    h = jnp.zeros((B, HD), f32)
    c = jnp.zeros((B, HD), f32)
    outs = []
    for t in range(S):
        gates = x[:, t, :] @ params["w_ih"] + h @ params["w_hh"] + params["b_lstm"]
        i_g = _sigmoid(gates[:, :HD])
        f_g = _sigmoid(gates[:, HD:2 * HD])
        g_g = jnp.tanh(gates[:, 2 * HD:3 * HD])
        o_g = _sigmoid(gates[:, 3 * HD:])
        c = f_g * c + i_g * g_g
        h = o_g * jnp.tanh(c)
        outs.append(h)
    lstm_out = jnp.stack(outs, axis=1)

    ext = (1.0 - mask.astype(f32)) * (-10000.0)
    q = lstm_out @ params["wq"] + params["bq"]
    k = lstm_out @ params["wk"] + params["bk"]
    v = lstm_out @ params["wv"] + params["bv"]
    ctx = []
    for hh in range(n_heads):
        lo, hi = hh * DH, (hh + 1) * DH
        sc = jnp.einsum('bqd,bkd->bqk', q[..., lo:hi], k[..., lo:hi]) / math.sqrt(DH)
        sc = sc + ext[:, None, :]
        sc = sc - jnp.max(sc, axis=-1, keepdims=True)
        p = jnp.exp(sc)
        p = p / jnp.sum(p, axis=-1, keepdims=True)
        ctx.append(jnp.einsum('bqk,bkd->bqd', p, v[..., lo:hi]))
    context = jnp.concatenate(ctx, axis=-1)
    attn = _layer_norm(context @ params["wo"] + params["bo"] + lstm_out,
                       params["ln1_g"], params["ln1_b"])
    inter = _gelu_tanh(attn @ params["wi"] + params["bi"])
    seq = _layer_norm(inter @ params["wo2"] + params["bo2"] + attn,
                      params["ln2_g"], params["ln2_b"])
    logits = jnp.sum(seq * params["w_fc"], axis=-1) + params["b_fc"][0, 0]
    return _sigmoid(logits)


# ---------------------------------- demo ------------------------------------ #
if __name__ == "__main__":
    # Small demo config consistent with the module's forward.
    hidden_dim = 128                 # hd (lane-aligned); intd = hd // 3
    intd = hidden_dim // 3
    n_test, n_questions, n_tag, n_elapsed = 7, 10, 5, 6
    n_heads = 2
    batch, seq_len = 8, 8

    key = jax.random.PRNGKey(0)
    ks = iter(jax.random.split(key, 64))

    def nrm(shape, s=0.1):
        return (s * jax.random.normal(next(ks), shape)).astype(jnp.float32)

    params = {
        "tab_inter": nrm((3, intd)),
        "tab_test": nrm((n_test + 1, intd)),
        "tab_ques": nrm((n_questions + 1, intd)),
        "tab_tag": nrm((n_tag + 1, intd)),
        "tab_elap": nrm((n_elapsed + 1, intd)),
        "w_comb": nrm((5 * intd, hidden_dim)),       # Linear weights stored as (in, out)
        "b_comb": nrm((1, hidden_dim)),
        "w_ih": nrm((hidden_dim, 4 * hidden_dim)),   # gate order i, f, g, o
        "w_hh": nrm((hidden_dim, 4 * hidden_dim)),
        "b_lstm": nrm((1, 4 * hidden_dim)),          # b_ih + b_hh folded together
        "wq": nrm((hidden_dim, hidden_dim)), "bq": nrm((1, hidden_dim)),
        "wk": nrm((hidden_dim, hidden_dim)), "bk": nrm((1, hidden_dim)),
        "wv": nrm((hidden_dim, hidden_dim)), "bv": nrm((1, hidden_dim)),
        "wo": nrm((hidden_dim, hidden_dim)), "bo": nrm((1, hidden_dim)),
        "ln1_g": 1.0 + nrm((1, hidden_dim)), "ln1_b": nrm((1, hidden_dim)),
        "wi": nrm((hidden_dim, hidden_dim)), "bi": nrm((1, hidden_dim)),   # intermediate == hd
        "wo2": nrm((hidden_dim, hidden_dim)), "bo2": nrm((1, hidden_dim)),
        "ln2_g": 1.0 + nrm((1, hidden_dim)), "ln2_b": nrm((1, hidden_dim)),
        "w_fc": nrm((1, hidden_dim)), "b_fc": nrm((1, 1)),
    }

    ki1, ki2, ki3, ki4, ki5, km = jax.random.split(next(ks), 6)
    test_ids = jax.random.randint(ki1, (batch, seq_len), 0, n_test + 1, jnp.int32)
    ques_ids = jax.random.randint(ki2, (batch, seq_len), 0, n_questions + 1, jnp.int32)
    tag_ids = jax.random.randint(ki3, (batch, seq_len), 0, n_tag + 1, jnp.int32)
    elap_ids = jax.random.randint(ki4, (batch, seq_len), 0, n_elapsed + 1, jnp.int32)
    inter_ids = jax.random.randint(ki5, (batch, seq_len), 0, 3, jnp.int32)
    mask = (jax.random.uniform(km, (batch, seq_len)) > 0.25).astype(jnp.float32)
    correct = jnp.zeros((batch, seq_len), jnp.int32)    # unused slot in the input tuple
    extra = jnp.zeros((batch, seq_len), jnp.int32)      # unused slot in the input tuple
    inputs = (test_ids, ques_ids, tag_ids, correct, elap_ids, mask, inter_ids, extra)

    # Full-precision kernel path (validation) + bf16-MXU path (v6e/v7x fast path).
    preds_f32 = lstm_attn_forward(inputs, params, n_heads=n_heads,
                                  batch_block=4, matmul_dtype=jnp.float32)
    preds_bf16 = lstm_attn_forward(inputs, params, n_heads=n_heads,
                                   batch_block=4, matmul_dtype=jnp.bfloat16)
    jax.block_until_ready((preds_f32, preds_bf16))

    ref = _reference_forward(inputs, params, n_heads=n_heads)
    assert preds_f32.shape == (batch, seq_len)
    assert preds_bf16.shape == (batch, seq_len)
    assert jnp.allclose(preds_f32, ref, atol=2e-2, rtol=2e-2), (
        f"f32 mismatch vs reference (max {float(jnp.max(jnp.abs(preds_f32 - ref)))})")
    assert jnp.allclose(preds_bf16, ref, atol=5e-2, rtol=5e-2), (
        f"bf16 mismatch vs reference (max {float(jnp.max(jnp.abs(preds_bf16 - ref)))})")
    print("KERNEL_OK")
</pallas_src>

<mosaic_0001>
module attributes {stable_mosaic.version = 11 : i64} {
  func.func @_lstm_attn_kernel(%arg0: i32, %arg1: memref<4x8x5xi32, #tpu.memory_space<vmem>>, %arg2: memref<4x1x8xf32, #tpu.memory_space<vmem>>, %arg3: memref<48x128xf32, #tpu.memory_space<vmem>>, %arg4: memref<1x128xf32, #tpu.memory_space<vmem>>, %arg5: memref<128x512xf32, #tpu.memory_space<vmem>>, %arg6: memref<128x512xf32, #tpu.memory_space<vmem>>, %arg7: memref<1x512xf32, #tpu.memory_space<vmem>>, %arg8: memref<2x128x64xf32, #tpu.memory_space<vmem>>, %arg9: memref<2x1x64xf32, #tpu.memory_space<vmem>>, %arg10: memref<2x128x64xf32, #tpu.memory_space<vmem>>, %arg11: memref<2x1x64xf32, #tpu.memory_space<vmem>>, %arg12: memref<2x128x64xf32, #tpu.memory_space<vmem>>, %arg13: memref<2x1x64xf32, #tpu.memory_space<vmem>>, %arg14: memref<2x64x128xf32, #tpu.memory_space<vmem>>, %arg15: memref<1x128xf32, #tpu.memory_space<vmem>>, %arg16: memref<1x128xf32, #tpu.memory_space<vmem>>, %arg17: memref<1x128xf32, #tpu.memory_space<vmem>>, %arg18: memref<128x128xf32, #tpu.memory_space<vmem>>, %arg19: memref<1x128xf32, #tpu.memory_space<vmem>>, %arg20: memref<128x128xf32, #tpu.memory_space<vmem>>, %arg21: memref<1x128xf32, #tpu.memory_space<vmem>>, %arg22: memref<1x128xf32, #tpu.memory_space<vmem>>, %arg23: memref<1x128xf32, #tpu.memory_space<vmem>>, %arg24: memref<1x128xf32, #tpu.memory_space<vmem>>, %arg25: memref<1x1xf32, #tpu.memory_space<vmem>>, %arg26: memref<4x1x8xf32, #tpu.memory_space<vmem>>, %arg27: memref<4x8x128xf32, #tpu.memory_space<vmem>>) attributes {dimension_semantics = [#tpu.dimension_semantics<parallel>], iteration_bounds = array<i64: 2>, scalar_prefetch = 0 : i64, scratch_operands = 1 : i64, tpu.core_type = #tpu.core_type<tc>, window_params = [{transform_indices = @transform_0, window_bounds = array<i64: 4, 8, 5>}, {transform_indices = @transform_1, window_bounds = array<i64: 4, 1, 8>}, {pipeline_mode = #tpu.pipeline_mode<synchronous>, transform_indices = @transform_2, window_bounds = array<i64: 48, 128>}, {pipeline_mode = #tpu.pipeline_mode<synchronous>, transform_indices = @transform_3, window_bounds = array<i64: 1, 128>}, {pipeline_mode = #tpu.pipeline_mode<synchronous>, transform_indices = @transform_4, window_bounds = array<i64: 128, 512>}, {pipeline_mode = #tpu.pipeline_mode<synchronous>, transform_indices = @transform_5, window_bounds = array<i64: 128, 512>}, {pipeline_mode = #tpu.pipeline_mode<synchronous>, transform_indices = @transform_6, window_bounds = array<i64: 1, 512>}, {pipeline_mode = #tpu.pipeline_mode<synchronous>, transform_indices = @transform_7, window_bounds = array<i64: 2, 128, 64>}, {pipeline_mode = #tpu.pipeline_mode<synchronous>, transform_indices = @transform_8, window_bounds = array<i64: 2, 1, 64>}, {pipeline_mode = #tpu.pipeline_mode<synchronous>, transform_indices = @transform_9, window_bounds = array<i64: 2, 128, 64>}, {pipeline_mode = #tpu.pipeline_mode<synchronous>, transform_indices = @transform_10, window_bounds = array<i64: 2, 1, 64>}, {pipeline_mode = #tpu.pipeline_mode<synchronous>, transform_indices = @transform_11, window_bounds = array<i64: 2, 128, 64>}, {pipeline_mode = #tpu.pipeline_mode<synchronous>, transform_indices = @transform_12, window_bounds = array<i64: 2, 1, 64>}, {pipeline_mode = #tpu.pipeline_mode<synchronous>, transform_indices = @transform_13, window_bounds = array<i64: 2, 64, 128>}, {pipeline_mode = #tpu.pipeline_mode<synchronous>, transform_indices = @transform_14, window_bounds = array<i64: 1, 128>}, {pipeline_mode = #tpu.pipeline_mode<synchronous>, transform_indices = @transform_15, window_bounds = array<i64: 1, 128>}, {pipeline_mode = #tpu.pipeline_mode<synchronous>, transform_indices = @transform_16, window_bounds = array<i64: 1, 128>}, {pipeline_mode = #tpu.pipeline_mode<synchronous>, transform_indices = @transform_17, window_bounds = array<i64: 128, 128>}, {pipeline_mode = #tpu.pipeline_mode<synchronous>, transform_indices = @transform_18, window_bounds = array<i64: 1, 128>}, {pipeline_mode = #tpu.pipeline_mode<synchronous>, transform_indices = @transform_19, window_bounds = array<i64: 128, 128>}, {pipeline_mode = #tpu.pipeline_mode<synchronous>, transform_indices = @transform_20, window_bounds = array<i64: 1, 128>}, {pipeline_mode = #tpu.pipeline_mode<synchronous>, transform_indices = @transform_21, window_bounds = array<i64: 1, 128>}, {pipeline_mode = #tpu.pipeline_mode<synchronous>, transform_indices = @transform_22, window_bounds = array<i64: 1, 128>}, {pipeline_mode = #tpu.pipeline_mode<synchronous>, transform_indices = @transform_23, window_bounds = array<i64: 1, 128>}, {pipeline_mode = #tpu.pipeline_mode<synchronous>, transform_indices = @transform_24, window_bounds = array<i64: 1, 1>}, {transform_indices = @transform_25, window_bounds = array<i64: 4, 1, 8>}]} {
    %c0 = arith.constant 0 : index
    %c0_0 = arith.constant 0 : index
    %c0_1 = arith.constant 0 : index
    %0 = vector.load %arg1[%c0, %c0_0, %c0_1] : memref<4x8x5xi32, #tpu.memory_space<vmem>>, vector<4x8x5xi32>
    %1 = vector.shape_cast %0 : vector<4x8x5xi32> to vector<32x5xi32>
    %2 = tpu.iota {dimensions = array<i32: 1>} : vector<32x48xi32>
    %cst = arith.constant 0.000000e+00 : f32
    %3 = vector.broadcast %cst : f32 to vector<32x48xf32>
    %4 = vector.extract_strided_slice %1 {offsets = [0, 0], sizes = [32, 1], strides = [1, 1]} : vector<32x5xi32> to vector<32x1xi32>
    %5 = vector.broadcast %4 : vector<32x1xi32> to vector<32x48xi32>
    %6 = arith.cmpi eq, %2, %5 : vector<32x48xi32>
    %7 = arith.extui %6 : vector<32x48xi1> to vector<32x48xi32>
    %8 = arith.sitofp %7 : vector<32x48xi32> to vector<32x48xf32>
    %9 = arith.addf %3, %8 : vector<32x48xf32>
    %10 = vector.extract_strided_slice %1 {offsets = [0, 1], sizes = [32, 1], strides = [1, 1]} : vector<32x5xi32> to vector<32x1xi32>
    %11 = vector.broadcast %10 : vector<32x1xi32> to vector<32x48xi32>
    %12 = arith.cmpi eq, %2, %11 : vector<32x48xi32>
    %13 = arith.extui %12 : vector<32x48xi1> to vector<32x48xi32>
    %14 = arith.sitofp %13 : vector<32x48xi32> to vector<32x48xf32>
    %15 = arith.addf %9, %14 : vector<32x48xf32>
    %16 = vector.extract_strided_slice %1 {offsets = [0, 2], sizes = [32, 1], strides = [1, 1]} : vector<32x5xi32> to vector<32x1xi32>
    %17 = vector.broadcast %16 : vector<32x1xi32> to vector<32x48xi32>
    %18 = arith.cmpi eq, %2, %17 : vector<32x48xi32>
    %19 = arith.extui %18 : vector<32x48xi1> to vector<32x48xi32>
    %20 = arith.sitofp %19 : vector<32x48xi32> to vector<32x48xf32>
    %21 = arith.addf %15, %20 : vector<32x48xf32>
    %22 = vector.extract_strided_slice %1 {offsets = [0, 3], sizes = [32, 1], strides = [1, 1]} : vector<32x5xi32> to vector<32x1xi32>
    %23 = vector.broadcast %22 : vector<32x1xi32> to vector<32x48xi32>
    %24 = arith.cmpi eq, %2, %23 : vector<32x48xi32>
    %25 = arith.extui %24 : vector<32x48xi1> to vector<32x48xi32>
    %26 = arith.sitofp %25 : vector<32x48xi32> to vector<32x48xf32>
    %27 = arith.addf %21, %26 : vector<32x48xf32>
    %28 = vector.extract_strided_slice %1 {offsets = [0, 4], sizes = [32, 1], strides = [1, 1]} : vector<32x5xi32> to vector<32x1xi32>
    %29 = vector.broadcast %28 : vector<32x1xi32> to vector<32x48xi32>
    %30 = arith.cmpi eq, %2, %29 : vector<32x48xi32>
    %31 = arith.extui %30 : vector<32x48xi1> to vector<32x48xi32>
    %32 = arith.sitofp %31 : vector<32x48xi32> to vector<32x48xf32>
    %33 = arith.addf %27, %32 : vector<32x48xf32>
    %c0_2 = arith.constant 0 : index
    %c0_3 = arith.constant 0 : index
    %34 = vector.load %arg3[%c0_2, %c0_3] : memref<48x128xf32, #tpu.memory_space<vmem>>, vector<48x128xf32>
    %cst_4 = arith.constant dense<0.000000e+00> : vector<32x128xf32>
    %35 = tpu.matmul %33, %34, %cst_4 {dimension_numbers = #tpu.dot_dimension_numbers<[1], [0], [0], [1], [0, 0, 1, 1], [], []>} : vector<32x48xf32>, vector<48x128xf32>, vector<32x128xf32> -> vector<32x128xf32>
    %c0_5 = arith.constant 0 : index
    %c0_6 = arith.constant 0 : index
    %36 = vector.load %arg4[%c0_5, %c0_6] : memref<1x128xf32, #tpu.memory_space<vmem>>, vector<1x128xf32>
    %37 = vector.broadcast %36 : vector<1x128xf32> to vector<32x128xf32>
    %38 = arith.addf %35, %37 : vector<32x128xf32>
    %c0_7 = arith.constant 0 : index
    %c0_8 = arith.constant 0 : index
    %39 = vector.load %arg5[%c0_7, %c0_8] : memref<128x512xf32, #tpu.memory_space<vmem>>, vector<128x512xf32>
    %cst_9 = arith.constant dense<0.000000e+00> : vector<32x512xf32>
    %40 = tpu.matmul %38, %39, %cst_9 {dimension_numbers = #tpu.dot_dimension_numbers<[1], [0], [0], [1], [0, 0, 1, 1], [], []>} : vector<32x128xf32>, vector<128x512xf32>, vector<32x512xf32> -> vector<32x512xf32>
    %c0_10 = arith.constant 0 : index
    %c0_11 = arith.constant 0 : index
    %41 = vector.load %arg7[%c0_10, %c0_11] : memref<1x512xf32, #tpu.memory_space<vmem>>, vector<1x512xf32>
    %42 = vector.broadcast %41 : vector<1x512xf32> to vector<32x512xf32>
    %43 = arith.addf %40, %42 : vector<32x512xf32>
    %44 = vector.shape_cast %43 : vector<32x512xf32> to vector<4x8x512xf32>
    %c0_12 = arith.constant 0 : index
    %c0_13 = arith.constant 0 : index
    %45 = vector.load %arg6[%c0_12, %c0_13] : memref<128x512xf32, #tpu.memory_space<vmem>>, vector<128x512xf32>
    %cst_14 = arith.constant 0.000000e+00 : f32
    %46 = vector.broadcast %cst_14 : f32 to vector<4x128xf32>
    %cst_15 = arith.constant 0.000000e+00 : f32
    %47 = vector.broadcast %cst_15 : f32 to vector<4x128xf32>
    %48 = vector.extract_strided_slice %44 {offsets = [0, 0, 0], sizes = [4, 1, 512], strides = [1, 1, 1]} : vector<4x8x512xf32> to vector<4x1x512xf32>
    %49 = vector.shape_cast %48 : vector<4x1x512xf32> to vector<4x512xf32>
    %cst_16 = arith.constant dense<0.000000e+00> : vector<4x512xf32>
    %50 = tpu.matmul %46, %45, %cst_16 {dimension_numbers = #tpu.dot_dimension_numbers<[1], [0], [0], [1], [0, 0, 1, 1], [], []>} : vector<4x128xf32>, vector<128x512xf32>, vector<4x512xf32> -> vector<4x512xf32>
    %51 = arith.addf %49, %50 : vector<4x512xf32>
    %52 = vector.extract_strided_slice %51 {offsets = [0, 0], sizes = [4, 128], strides = [1, 1]} : vector<4x512xf32> to vector<4x128xf32>
    %cst_17 = arith.constant 0.000000e+00 : f32
    %53 = vector.broadcast %cst_17 : f32 to vector<4x128xf32>
    %54 = arith.subf %53, %52 : vector<4x128xf32>
    %55 = math.exp %54 : vector<4x128xf32>
    %cst_18 = arith.constant 1.000000e+00 : f32
    %56 = vector.broadcast %cst_18 : f32 to vector<4x128xf32>
    %57 = arith.addf %56, %55 : vector<4x128xf32>
    %cst_19 = arith.constant 1.000000e+00 : f32
    %58 = vector.broadcast %cst_19 : f32 to vector<4x128xf32>
    %59 = arith.divf %58, %57 : vector<4x128xf32>
    %60 = vector.extract_strided_slice %51 {offsets = [0, 128], sizes = [4, 128], strides = [1, 1]} : vector<4x512xf32> to vector<4x128xf32>
    %cst_20 = arith.constant 0.000000e+00 : f32
    %61 = vector.broadcast %cst_20 : f32 to vector<4x128xf32>
    %62 = arith.subf %61, %60 : vector<4x128xf32>
    %63 = math.exp %62 : vector<4x128xf32>
    %cst_21 = arith.constant 1.000000e+00 : f32
    %64 = vector.broadcast %cst_21 : f32 to vector<4x128xf32>
    %65 = arith.addf %64, %63 : vector<4x128xf32>
    %cst_22 = arith.constant 1.000000e+00 : f32
    %66 = vector.broadcast %cst_22 : f32 to vector<4x128xf32>
    %67 = arith.divf %66, %65 : vector<4x128xf32>
    %68 = vector.extract_strided_slice %51 {offsets = [0, 256], sizes = [4, 128], strides = [1, 1]} : vector<4x512xf32> to vector<4x128xf32>
    %69 = math.tanh %68 : vector<4x128xf32>
    %70 = vector.extract_strided_slice %51 {offsets = [0, 384], sizes = [4, 128], strides = [1, 1]} : vector<4x512xf32> to vector<4x128xf32>
    %cst_23 = arith.constant 0.000000e+00 : f32
    %71 = vector.broadcast %cst_23 : f32 to vector<4x128xf32>
    %72 = arith.subf %71, %70 : vector<4x128xf32>
    %73 = math.exp %72 : vector<4x128xf32>
    %cst_24 = arith.constant 1.000000e+00 : f32
    %74 = vector.broadcast %cst_24 : f32 to vector<4x128xf32>
    %75 = arith.addf %74, %73 : vector<4x128xf32>
    %cst_25 = arith.constant 1.000000e+00 : f32
    %76 = vector.broadcast %cst_25 : f32 to vector<4x128xf32>
    %77 = arith.divf %76, %75 : vector<4x128xf32>
    %78 = arith.mulf %67, %47 : vector<4x128xf32>
    %79 = arith.mulf %59, %69 : vector<4x128xf32>
    %80 = arith.addf %78, %79 : vector<4x128xf32>
    %81 = math.tanh %80 : vector<4x128xf32>
    %82 = arith.mulf %77, %81 : vector<4x128xf32>
    %c0_26 = arith.constant 0 : index
    %c0_27 = arith.constant 0 : index
    %c0_28 = arith.constant 0 : index
    %83 = vector.load %arg27[%c0_26, %c0_27, %c0_28] : memref<4x8x128xf32, #tpu.memory_space<vmem>>, vector<4x1x128xf32>
    %84 = vector.shape_cast %83 : vector<4x1x128xf32> to vector<4x128xf32>
    %85 = vector.shape_cast %82 : vector<4x128xf32> to vector<4x1x128xf32>
    tpu.vector_store %arg27[%c0_26, %c0_27, %c0_28], %85 {strides = array<i32>} : memref<4x8x128xf32, #tpu.memory_space<vmem>>, vector<4x1x128xf32>,
    %86 = vector.extract_strided_slice %44 {offsets = [0, 1, 0], sizes = [4, 1, 512], strides = [1, 1, 1]} : vector<4x8x512xf32> to vector<4x1x512xf32>
    %87 = vector.shape_cast %86 : vector<4x1x512xf32> to vector<4x512xf32>
    %cst_29 = arith.constant dense<0.000000e+00> : vector<4x512xf32>
    %88 = tpu.matmul %82, %45, %cst_29 {dimension_numbers = #tpu.dot_dimension_numbers<[1], [0], [0], [1], [0, 0, 1, 1], [], []>} : vector<4x128xf32>, vector<128x512xf32>, vector<4x512xf32> -> vector<4x512xf32>
    %89 = arith.addf %87, %88 : vector<4x512xf32>
    %90 = vector.extract_strided_slice %89 {offsets = [0, 0], sizes = [4, 128], strides = [1, 1]} : vector<4x512xf32> to vector<4x128xf32>
    %cst_30 = arith.constant 0.000000e+00 : f32
    %91 = vector.broadcast %cst_30 : f32 to vector<4x128xf32>
    %92 = arith.subf %91, %90 : vector<4x128xf32>
    %93 = math.exp %92 : vector<4x128xf32>
    %cst_31 = arith.constant 1.000000e+00 : f32
    %94 = vector.broadcast %cst_31 : f32 to vector<4x128xf32>
    %95 = arith.addf %94, %93 : vector<4x128xf32>
    %cst_32 = arith.constant 1.000000e+00 : f32
    %96 = vector.broadcast %cst_32 : f32 to vector<4x128xf32>
    %97 = arith.divf %96, %95 : vector<4x128xf32>
    %98 = vector.extract_strided_slice %89 {offsets = [0, 128], sizes = [4, 128], strides = [1, 1]} : vector<4x512xf32> to vector<4x128xf32>
    %cst_33 = arith.constant 0.000000e+00 : f32
    %99 = vector.broadcast %cst_33 : f32 to vector<4x128xf32>
    %100 = arith.subf %99, %98 : vector<4x128xf32>
    %101 = math.exp %100 : vector<4x128xf32>
    %cst_34 = arith.constant 1.000000e+00 : f32
    %102 = vector.broadcast %cst_34 : f32 to vector<4x128xf32>
    %103 = arith.addf %102, %101 : vector<4x128xf32>
    %cst_35 = arith.constant 1.000000e+00 : f32
    %104 = vector.broadcast %cst_35 : f32 to vector<4x128xf32>
    %105 = arith.divf %104, %103 : vector<4x128xf32>
    %106 = vector.extract_strided_slice %89 {offsets = [0, 256], sizes = [4, 128], strides = [1, 1]} : vector<4x512xf32> to vector<4x128xf32>
    %107 = math.tanh %106 : vector<4x128xf32>
    %108 = vector.extract_strided_slice %89 {offsets = [0, 384], sizes = [4, 128], strides = [1, 1]} : vector<4x512xf32> to vector<4x128xf32>
    %cst_36 = arith.constant 0.000000e+00 : f32
    %109 = vector.broadcast %cst_36 : f32 to vector<4x128xf32>
    %110 = arith.subf %109, %108 : vector<4x128xf32>
    %111 = math.exp %110 : vector<4x128xf32>
    %cst_37 = arith.constant 1.000000e+00 : f32
    %112 = vector.broadcast %cst_37 : f32 to vector<4x128xf32>
    %113 = arith.addf %112, %111 : vector<4x128xf32>
    %cst_38 = arith.constant 1.000000e+00 : f32
    %114 = vector.broadcast %cst_38 : f32 to vector<4x128xf32>
    %115 = arith.divf %114, %113 : vector<4x128xf32>
    %116 = arith.mulf %105, %80 : vector<4x128xf32>
    %117 = arith.mulf %97, %107 : vector<4x128xf32>
    %118 = arith.addf %116, %117 : vector<4x128xf32>
    %119 = math.tanh %118 : vector<4x128xf32>
    %120 = arith.mulf %115, %119 : vector<4x128xf32>
    %c0_39 = arith.constant 0 : index
    %c1 = arith.constant 1 : index
    %c0_40 = arith.constant 0 : index
    %121 = vector.load %arg27[%c0_39, %c1, %c0_40] : memref<4x8x128xf32, #tpu.memory_space<vmem>>, vector<4x1x128xf32>
    %122 = vector.shape_cast %121 : vector<4x1x128xf32> to vector<4x128xf32>
    %123 = vector.shape_cast %120 : vector<4x128xf32> to vector<4x1x128xf32>
    tpu.vector_store %arg27[%c0_39, %c1, %c0_40], %123 {strides = array<i32>} : memref<4x8x128xf32, #tpu.memory_space<vmem>>, vector<4x1x128xf32>,
    %124 = vector.extract_strided_slice %44 {offsets = [0, 2, 0], sizes = [4, 1, 512], strides = [1, 1, 1]} : vector<4x8x512xf32> to vector<4x1x512xf32>
    %125 = vector.shape_cast %124 : vector<4x1x512xf32> to vector<4x512xf32>
    %cst_41 = arith.constant dense<0.000000e+00> : vector<4x512xf32>
    %126 = tpu.matmul %120, %45, %cst_41 {dimension_numbers = #tpu.dot_dimension_numbers<[1], [0], [0], [1], [0, 0, 1, 1], [], []>} : vector<4x128xf32>, vector<128x512xf32>, vector<4x512xf32> -> vector<4x512xf32>
    %127 = arith.addf %125, %126 : vector<4x512xf32>
    %128 = vector.extract_strided_slice %127 {offsets = [0, 0], sizes = [4, 128], strides = [1, 1]} : vector<4x512xf32> to vector<4x128xf32>
    %cst_42 = arith.constant 0.000000e+00 : f32
    %129 = vector.broadcast %cst_42 : f32 to vector<4x128xf32>
    %130 = arith.subf %129, %128 : vector<4x128xf32>
    %131 = math.exp %130 : vector<4x128xf32>
    %cst_43 = arith.constant 1.000000e+00 : f32
    %132 = vector.broadcast %cst_43 : f32 to vector<4x128xf32>
    %133 = arith.addf %132, %131 : vector<4x128xf32>
    %cst_44 = arith.constant 1.000000e+00 : f32
    %134 = vector.broadcast %cst_44 : f32 to vector<4x128xf32>
    %135 = arith.divf %134, %133 : vector<4x128xf32>
    %136 = vector.extract_strided_slice %127 {offsets = [0, 128], sizes = [4, 128], strides = [1, 1]} : vector<4x512xf32> to vector<4x128xf32>
    %cst_45 = arith.constant 0.000000e+00 : f32
    %137 = vector.broadcast %cst_45 : f32 to vector<4x128xf32>
    %138 = arith.subf %137, %136 : vector<4x128xf32>
    %139 = math.exp %138 : vector<4x128xf32>
    %cst_46 = arith.constant 1.000000e+00 : f32
    %140 = vector.broadcast %cst_46 : f32 to vector<4x128xf32>
    %141 = arith.addf %140, %139 : vector<4x128xf32>
    %cst_47 = arith.constant 1.000000e+00 : f32
    %142 = vector.broadcast %cst_47 : f32 to vector<4x128xf32>
    %143 = arith.divf %142, %141 : vector<4x128xf32>
    %144 = vector.extract_strided_slice %127 {offsets = [0, 256], sizes = [4, 128], strides = [1, 1]} : vector<4x512xf32> to vector<4x128xf32>
    %145 = math.tanh %144 : vector<4x128xf32>
    %146 = vector.extract_strided_slice %127 {offsets = [0, 384], sizes = [4, 128], strides = [1, 1]} : vector<4x512xf32> to vector<4x128xf32>
    %cst_48 = arith.constant 0.000000e+00 : f32
    %147 = vector.broadcast %cst_48 : f32 to vector<4x128xf32>
    %148 = arith.subf %147, %146 : vector<4x128xf32>
    %149 = math.exp %148 : vector<4x128xf32>
    %cst_49 = arith.constant 1.000000e+00 : f32
    %150 = vector.broadcast %cst_49 : f32 to vector<4x128xf32>
    %151 = arith.addf %150, %149 : vector<4x128xf32>
    %cst_50 = arith.constant 1.000000e+00 : f32
    %152 = vector.broadcast %cst_50 : f32 to vector<4x128xf32>
    %153 = arith.divf %152, %151 : vector<4x128xf32>
    %154 = arith.mulf %143, %118 : vector<4x128xf32>
    %155 = arith.mulf %135, %145 : vector<4x128xf32>
    %156 = arith.addf %154, %155 : vector<4x128xf32>
    %157 = math.tanh %156 : vector<4x128xf32>
    %158 = arith.mulf %153, %157 : vector<4x128xf32>
    %c0_51 = arith.constant 0 : index
    %c2 = arith.constant 2 : index
    %c0_52 = arith.constant 0 : index
    %159 = vector.load %arg27[%c0_51, %c2, %c0_52] : memref<4x8x128xf32, #tpu.memory_space<vmem>>, vector<4x1x128xf32>
    %160 = vector.shape_cast %159 : vector<4x1x128xf32> to vector<4x128xf32>
    %161 = vector.shape_cast %158 : vector<4x128xf32> to vector<4x1x128xf32>
    tpu.vector_store %arg27[%c0_51, %c2, %c0_52], %161 {strides = array<i32>} : memref<4x8x128xf32, #tpu.memory_space<vmem>>, vector<4x1x128xf32>,
    %162 = vector.extract_strided_slice %44 {offsets = [0, 3, 0], sizes = [4, 1, 512], strides = [1, 1, 1]} : vector<4x8x512xf32> to vector<4x1x512xf32>
    %163 = vector.shape_cast %162 : vector<4x1x512xf32> to vector<4x512xf32>
    %cst_53 = arith.constant dense<0.000000e+00> : vector<4x512xf32>
    %164 = tpu.matmul %158, %45, %cst_53 {dimension_numbers = #tpu.dot_dimension_numbers<[1], [0], [0], [1], [0, 0, 1, 1], [], []>} : vector<4x128xf32>, vector<128x512xf32>, vector<4x512xf32> -> vector<4x512xf32>
    %165 = arith.addf %163, %164 : vector<4x512xf32>
    %166 = vector.extract_strided_slice %165 {offsets = [0, 0], sizes = [4, 128], strides = [1, 1]} : vector<4x512xf32> to vector<4x128xf32>
    %cst_54 = arith.constant 0.000000e+00 : f32
    %167 = vector.broadcast %cst_54 : f32 to vector<4x128xf32>
    %168 = arith.subf %167, %166 : vector<4x128xf32>
    %169 = math.exp %168 : vector<4x128xf32>
    %cst_55 = arith.constant 1.000000e+00 : f32
    %170 = vector.broadcast %cst_55 : f32 to vector<4x128xf32>
    %171 = arith.addf %170, %169 : vector<4x128xf32>
    %cst_56 = arith.constant 1.000000e+00 : f32
    %172 = vector.broadcast %cst_56 : f32 to vector<4x128xf32>
    %173 = arith.divf %172, %171 : vector<4x128xf32>
    %174 = vector.extract_strided_slice %165 {offsets = [0, 128], sizes = [4, 128], strides = [1, 1]} : vector<4x512xf32> to vector<4x128xf32>
    %cst_57 = arith.constant 0.000000e+00 : f32
    %175 = vector.broadcast %cst_57 : f32 to vector<4x128xf32>
    %176 = arith.subf %175, %174 : vector<4x128xf32>
    %177 = math.exp %176 : vector<4x128xf32>
    %cst_58 = arith.constant 1.000000e+00 : f32
    %178 = vector.broadcast %cst_58 : f32 to vector<4x128xf32>
    %179 = arith.addf %178, %177 : vector<4x128xf32>
    %cst_59 = arith.constant 1.000000e+00 : f32
    %180 = vector.broadcast %cst_59 : f32 to vector<4x128xf32>
    %181 = arith.divf %180, %179 : vector<4x128xf32>
    %182 = vector.extract_strided_slice %165 {offsets = [0, 256], sizes = [4, 128], strides = [1, 1]} : vector<4x512xf32> to vector<4x128xf32>
    %183 = math.tanh %182 : vector<4x128xf32>
    %184 = vector.extract_strided_slice %165 {offsets = [0, 384], sizes = [4, 128], strides = [1, 1]} : vector<4x512xf32> to vector<4x128xf32>
    %cst_60 = arith.constant 0.000000e+00 : f32
    %185 = vector.broadcast %cst_60 : f32 to vector<4x128xf32>
    %186 = arith.subf %185, %184 : vector<4x128xf32>
    %187 = math.exp %186 : vector<4x128xf32>
    %cst_61 = arith.constant 1.000000e+00 : f32
    %188 = vector.broadcast %cst_61 : f32 to vector<4x128xf32>
    %189 = arith.addf %188, %187 : vector<4x128xf32>
    %cst_62 = arith.constant 1.000000e+00 : f32
    %190 = vector.broadcast %cst_62 : f32 to vector<4x128xf32>
    %191 = arith.divf %190, %189 : vector<4x128xf32>
    %192 = arith.mulf %181, %156 : vector<4x128xf32>
    %193 = arith.mulf %173, %183 : vector<4x128xf32>
    %194 = arith.addf %192, %193 : vector<4x128xf32>
    %195 = math.tanh %194 : vector<4x128xf32>
    %196 = arith.mulf %191, %195 : vector<4x128xf32>
    %c0_63 = arith.constant 0 : index
    %c3 = arith.constant 3 : index
    %c0_64 = arith.constant 0 : index
    %197 = vector.load %arg27[%c0_63, %c3, %c0_64] : memref<4x8x128xf32, #tpu.memory_space<vmem>>, vector<4x1x128xf32>
    %198 = vector.shape_cast %197 : vector<4x1x128xf32> to vector<4x128xf32>
    %199 = vector.shape_cast %196 : vector<4x128xf32> to vector<4x1x128xf32>
    tpu.vector_store %arg27[%c0_63, %c3, %c0_64], %199 {strides = array<i32>} : memref<4x8x128xf32, #tpu.memory_space<vmem>>, vector<4x1x128xf32>,
    %200 = vector.extract_strided_slice %44 {offsets = [0, 4, 0], sizes = [4, 1, 512], strides = [1, 1, 1]} : vector<4x8x512xf32> to vector<4x1x512xf32>
    %201 = vector.shape_cast %200 : vector<4x1x512xf32> to vector<4x512xf32>
    %cst_65 = arith.constant dense<0.000000e+00> : vector<4x512xf32>
    %202 = tpu.matmul %196, %45, %cst_65 {dimension_numbers = #tpu.dot_dimension_numbers<[1], [0], [0], [1], [0, 0, 1, 1], [], []>} : vector<4x128xf32>, vector<128x512xf32>, vector<4x512xf32> -> vector<4x512xf32>
    %203 = arith.addf %201, %202 : vector<4x512xf32>
    %204 = vector.extract_strided_slice %203 {offsets = [0, 0], sizes = [4, 128], strides = [1, 1]} : vector<4x512xf32> to vector<4x128xf32>
    %cst_66 = arith.constant 0.000000e+00 : f32
    %205 = vector.broadcast %cst_66 : f32 to vector<4x128xf32>
    %206 = arith.subf %205, %204 : vector<4x128xf32>
    %207 = math.exp %206 : vector<4x128xf32>
    %cst_67 = arith.constant 1.000000e+00 : f32
    %208 = vector.broadcast %cst_67 : f32 to vector<4x128xf32>
    %209 = arith.addf %208, %207 : vector<4x128xf32>
    %cst_68 = arith.constant 1.000000e+00 : f32
    %210 = vector.broadcast %cst_68 : f32 to vector<4x128xf32>
    %211 = arith.divf %210, %209 : vector<4x128xf32>
    %212 = vector.extract_strided_slice %203 {offsets = [0, 128], sizes = [4, 128], strides = [1, 1]} : vector<4x512xf32> to vector<4x128xf32>
    %cst_69 = arith.constant 0.000000e+00 : f32
    %213 = vector.broadcast %cst_69 : f32 to vector<4x128xf32>
    %214 = arith.subf %213, %212 : vector<4x128xf32>
    %215 = math.exp %214 : vector<4x128xf32>
    %cst_70 = arith.constant 1.000000e+00 : f32
    %216 = vector.broadcast %cst_70 : f32 to vector<4x128xf32>
    %217 = arith.addf %216, %215 : vector<4x128xf32>
    %cst_71 = arith.constant 1.000000e+00 : f32
    %218 = vector.broadcast %cst_71 : f32 to vector<4x128xf32>
    %219 = arith.divf %218, %217 : vector<4x128xf32>
    %220 = vector.extract_strided_slice %203 {offsets = [0, 256], sizes = [4, 128], strides = [1, 1]} : vector<4x512xf32> to vector<4x128xf32>
    %221 = math.tanh %220 : vector<4x128xf32>
    %222 = vector.extract_strided_slice %203 {offsets = [0, 384], sizes = [4, 128], strides = [1, 1]} : vector<4x512xf32> to vector<4x128xf32>
    %cst_72 = arith.constant 0.000000e+00 : f32
    %223 = vector.broadcast %cst_72 : f32 to vector<4x128xf32>
    %224 = arith.subf %223, %222 : vector<4x128xf32>
    %225 = math.exp %224 : vector<4x128xf32>
    %cst_73 = arith.constant 1.000000e+00 : f32
    %226 = vector.broadcast %cst_73 : f32 to vector<4x128xf32>
    %227 = arith.addf %226, %225 : vector<4x128xf32>
    %cst_74 = arith.constant 1.000000e+00 : f32
    %228 = vector.broadcast %cst_74 : f32 to vector<4x128xf32>
    %229 = arith.divf %228, %227 : vector<4x128xf32>
    %230 = arith.mulf %219, %194 : vector<4x128xf32>
    %231 = arith.mulf %211, %221 : vector<4x128xf32>
    %232 = arith.addf %230, %231 : vector<4x128xf32>
    %233 = math.tanh %232 : vector<4x128xf32>
    %234 = arith.mulf %229, %233 : vector<4x128xf32>
    %c0_75 = arith.constant 0 : index
    %c4 = arith.constant 4 : index
    %c0_76 = arith.constant 0 : index
    %235 = vector.load %arg27[%c0_75, %c4, %c0_76] : memref<4x8x128xf32, #tpu.memory_space<vmem>>, vector<4x1x128xf32>
    %236 = vector.shape_cast %235 : vector<4x1x128xf32> to vector<4x128xf32>
    %237 = vector.shape_cast %234 : vector<4x128xf32> to vector<4x1x128xf32>
    tpu.vector_store %arg27[%c0_75, %c4, %c0_76], %237 {strides = array<i32>} : memref<4x8x128xf32, #tpu.memory_space<vmem>>, vector<4x1x128xf32>,
    %238 = vector.extract_strided_slice %44 {offsets = [0, 5, 0], sizes = [4, 1, 512], strides = [1, 1, 1]} : vector<4x8x512xf32> to vector<4x1x512xf32>
    %239 = vector.shape_cast %238 : vector<4x1x512xf32> to vector<4x512xf32>
    %cst_77 = arith.constant dense<0.000000e+00> : vector<4x512xf32>
    %240 = tpu.matmul %234, %45, %cst_77 {dimension_numbers = #tpu.dot_dimension_numbers<[1], [0], [0], [1], [0, 0, 1, 1], [], []>} : vector<4x128xf32>, vector<128x512xf32>, vector<4x512xf32> -> vector<4x512xf32>
    %241 = arith.addf %239, %240 : vector<4x512xf32>
    %242 = vector.extract_strided_slice %241 {offsets = [0, 0], sizes = [4, 128], strides = [1, 1]} : vector<4x512xf32> to vector<4x128xf32>
    %cst_78 = arith.constant 0.000000e+00 : f32
    %243 = vector.broadcast %cst_78 : f32 to vector<4x128xf32>
    %244 = arith.subf %243, %242 : vector<4x128xf32>
    %245 = math.exp %244 : vector<4x128xf32>
    %cst_79 = arith.constant 1.000000e+00 : f32
    %246 = vector.broadcast %cst_79 : f32 to vector<4x128xf32>
    %247 = arith.addf %246, %245 : vector<4x128xf32>
    %cst_80 = arith.constant 1.000000e+00 : f32
    %248 = vector.broadcast %cst_80 : f32 to vector<4x128xf32>
    %249 = arith.divf %248, %247 : vector<4x128xf32>
    %250 = vector.extract_strided_slice %241 {offsets = [0, 128], sizes = [4, 128], strides = [1, 1]} : vector<4x512xf32> to vector<4x128xf32>
    %cst_81 = arith.constant 0.000000e+00 : f32
    %251 = vector.broadcast %cst_81 : f32 to vector<4x128xf32>
    %252 = arith.subf %251, %250 : vector<4x128xf32>
    %253 = math.exp %252 : vector<4x128xf32>
    %cst_82 = arith.constant 1.000000e+00 : f32
    %254 = vector.broadcast %cst_82 : f32 to vector<4x128xf32>
    %255 = arith.addf %254, %253 : vector<4x128xf32>
    %cst_83 = arith.constant 1.000000e+00 : f32
    %256 = vector.broadcast %cst_83 : f32 to vector<4x128xf32>
    %257 = arith.divf %256, %255 : vector<4x128xf32>
    %258 = vector.extract_strided_slice %241 {offsets = [0, 256], sizes = [4, 128], strides = [1, 1]} : vector<4x512xf32> to vector<4x128xf32>
    %259 = math.tanh %258 : vector<4x128xf32>
    %260 = vector.extract_strided_slice %241 {offsets = [0, 384], sizes = [4, 128], strides = [1, 1]} : vector<4x512xf32> to vector<4x128xf32>
    %cst_84 = arith.constant 0.000000e+00 : f32
    %261 = vector.broadcast %cst_84 : f32 to vector<4x128xf32>
    %262 = arith.subf %261, %260 : vector<4x128xf32>
    %263 = math.exp %262 : vector<4x128xf32>
    %cst_85 = arith.constant 1.000000e+00 : f32
    %264 = vector.broadcast %cst_85 : f32 to vector<4x128xf32>
    %265 = arith.addf %264, %263 : vector<4x128xf32>
    %cst_86 = arith.constant 1.000000e+00 : f32
    %266 = vector.broadcast %cst_86 : f32 to vector<4x128xf32>
    %267 = arith.divf %266, %265 : vector<4x128xf32>
    %268 = arith.mulf %257, %232 : vector<4x128xf32>
    %269 = arith.mulf %249, %259 : vector<4x128xf32>
    %270 = arith.addf %268, %269 : vector<4x128xf32>
    %271 = math.tanh %270 : vector<4x128xf32>
    %272 = arith.mulf %267, %271 : vector<4x128xf32>
    %c0_87 = arith.constant 0 : index
    %c5 = arith.constant 5 : index
    %c0_88 = arith.constant 0 : index
    %273 = vector.load %arg27[%c0_87, %c5, %c0_88] : memref<4x8x128xf32, #tpu.memory_space<vmem>>, vector<4x1x128xf32>
    %274 = vector.shape_cast %273 : vector<4x1x128xf32> to vector<4x128xf32>
    %275 = vector.shape_cast %272 : vector<4x128xf32> to vector<4x1x128xf32>
    tpu.vector_store %arg27[%c0_87, %c5, %c0_88], %275 {strides = array<i32>} : memref<4x8x128xf32, #tpu.memory_space<vmem>>, vector<4x1x128xf32>,
    %276 = vector.extract_strided_slice %44 {offsets = [0, 6, 0], sizes = [4, 1, 512], strides = [1, 1, 1]} : vector<4x8x512xf32> to vector<4x1x512xf32>
    %277 = vector.shape_cast %276 : vector<4x1x512xf32> to vector<4x512xf32>
    %cst_89 = arith.constant dense<0.000000e+00> : vector<4x512xf32>
    %278 = tpu.matmul %272, %45, %cst_89 {dimension_numbers = #tpu.dot_dimension_numbers<[1], [0], [0], [1], [0, 0, 1, 1], [], []>} : vector<4x128xf32>, vector<128x512xf32>, vector<4x512xf32> -> vector<4x512xf32>
    %279 = arith.addf %277, %278 : vector<4x512xf32>
    %280 = vector.extract_strided_slice %279 {offsets = [0, 0], sizes = [4, 128], strides = [1, 1]} : vector<4x512xf32> to vector<4x128xf32>
    %cst_90 = arith.constant 0.000000e+00 : f32
    %281 = vector.broadcast %cst_90 : f32 to vector<4x128xf32>
    %282 = arith.subf %281, %280 : vector<4x128xf32>
    %283 = math.exp %282 : vector<4x128xf32>
    %cst_91 = arith.constant 1.000000e+00 : f32
    %284 = vector.broadcast %cst_91 : f32 to vector<4x128xf32>
    %285 = arith.addf %284, %283 : vector<4x128xf32>
    %cst_92 = arith.constant 1.000000e+00 : f32
    %286 = vector.broadcast %cst_92 : f32 to vector<4x128xf32>
    %287 = arith.divf %286, %285 : vector<4x128xf32>
    %288 = vector.extract_strided_slice %279 {offsets = [0, 128], sizes = [4, 128], strides = [1, 1]} : vector<4x512xf32> to vector<4x128xf32>
    %cst_93 = arith.constant 0.000000e+00 : f32
    %289 = vector.broadcast %cst_93 : f32 to vector<4x128xf32>
    %290 = arith.subf %289, %288 : vector<4x128xf32>
    %291 = math.exp %290 : vector<4x128xf32>
    %cst_94 = arith.constant 1.000000e+00 : f32
    %292 = vector.broadcast %cst_94 : f32 to vector<4x128xf32>
    %293 = arith.addf %292, %291 : vector<4x128xf32>
    %cst_95 = arith.constant 1.000000e+00 : f32
    %294 = vector.broadcast %cst_95 : f32 to vector<4x128xf32>
    %295 = arith.divf %294, %293 : vector<4x128xf32>
    %296 = vector.extract_strided_slice %279 {offsets = [0, 256], sizes = [4, 128], strides = [1, 1]} : vector<4x512xf32> to vector<4x128xf32>
    %297 = math.tanh %296 : vector<4x128xf32>
    %298 = vector.extract_strided_slice %279 {offsets = [0, 384], sizes = [4, 128], strides = [1, 1]} : vector<4x512xf32> to vector<4x128xf32>
    %cst_96 = arith.constant 0.000000e+00 : f32
    %299 = vector.broadcast %cst_96 : f32 to vector<4x128xf32>
    %300 = arith.subf %299, %298 : vector<4x128xf32>
    %301 = math.exp %300 : vector<4x128xf32>
    %cst_97 = arith.constant 1.000000e+00 : f32
    %302 = vector.broadcast %cst_97 : f32 to vector<4x128xf32>
    %303 = arith.addf %302, %301 : vector<4x128xf32>
    %cst_98 = arith.constant 1.000000e+00 : f32
    %304 = vector.broadcast %cst_98 : f32 to vector<4x128xf32>
    %305 = arith.divf %304, %303 : vector<4x128xf32>
    %306 = arith.mulf %295, %270 : vector<4x128xf32>
    %307 = arith.mulf %287, %297 : vector<4x128xf32>
    %308 = arith.addf %306, %307 : vector<4x128xf32>
    %309 = math.tanh %308 : vector<4x128xf32>
    %310 = arith.mulf %305, %309 : vector<4x128xf32>
    %c0_99 = arith.constant 0 : index
    %c6 = arith.constant 6 : index
    %c0_100 = arith.constant 0 : index
    %311 = vector.load %arg27[%c0_99, %c6, %c0_100] : memref<4x8x128xf32, #tpu.memory_space<vmem>>, vector<4x1x128xf32>
    %312 = vector.shape_cast %311 : vector<4x1x128xf32> to vector<4x128xf32>
    %313 = vector.shape_cast %310 : vector<4x128xf32> to vector<4x1x128xf32>
    tpu.vector_store %arg27[%c0_99, %c6, %c0_100], %313 {strides = array<i32>} : memref<4x8x128xf32, #tpu.memory_space<vmem>>, vector<4x1x128xf32>,
    %314 = vector.extract_strided_slice %44 {offsets = [0, 7, 0], sizes = [4, 1, 512], strides = [1, 1, 1]} : vector<4x8x512xf32> to vector<4x1x512xf32>
    %315 = vector.shape_cast %314 : vector<4x1x512xf32> to vector<4x512xf32>
    %cst_101 = arith.constant dense<0.000000e+00> : vector<4x512xf32>
    %316 = tpu.matmul %310, %45, %cst_101 {dimension_numbers = #tpu.dot_dimension_numbers<[1], [0], [0], [1], [0, 0, 1, 1], [], []>} : vector<4x128xf32>, vector<128x512xf32>, vector<4x512xf32> -> vector<4x512xf32>
    %317 = arith.addf %315, %316 : vector<4x512xf32>
    %318 = vector.extract_strided_slice %317 {offsets = [0, 0], sizes = [4, 128], strides = [1, 1]} : vector<4x512xf32> to vector<4x128xf32>
    %cst_102 = arith.constant 0.000000e+00 : f32
    %319 = vector.broadcast %cst_102 : f32 to vector<4x128xf32>
    %320 = arith.subf %319, %318 : vector<4x128xf32>
    %321 = math.exp %320 : vector<4x128xf32>
    %cst_103 = arith.constant 1.000000e+00 : f32
    %322 = vector.broadcast %cst_103 : f32 to vector<4x128xf32>
    %323 = arith.addf %322, %321 : vector<4x128xf32>
    %cst_104 = arith.constant 1.000000e+00 : f32
    %324 = vector.broadcast %cst_104 : f32 to vector<4x128xf32>
    %325 = arith.divf %324, %323 : vector<4x128xf32>
    %326 = vector.extract_strided_slice %317 {offsets = [0, 128], sizes = [4, 128], strides = [1, 1]} : vector<4x512xf32> to vector<4x128xf32>
    %cst_105 = arith.constant 0.000000e+00 : f32
    %327 = vector.broadcast %cst_105 : f32 to vector<4x128xf32>
    %328 = arith.subf %327, %326 : vector<4x128xf32>
    %329 = math.exp %328 : vector<4x128xf32>
    %cst_106 = arith.constant 1.000000e+00 : f32
    %330 = vector.broadcast %cst_106 : f32 to vector<4x128xf32>
    %331 = arith.addf %330, %329 : vector<4x128xf32>
    %cst_107 = arith.constant 1.000000e+00 : f32
    %332 = vector.broadcast %cst_107 : f32 to vector<4x128xf32>
    %333 = arith.divf %332, %331 : vector<4x128xf32>
    %334 = vector.extract_strided_slice %317 {offsets = [0, 256], sizes = [4, 128], strides = [1, 1]} : vector<4x512xf32> to vector<4x128xf32>
    %335 = math.tanh %334 : vector<4x128xf32>
    %336 = vector.extract_strided_slice %317 {offsets = [0, 384], sizes = [4, 128], strides = [1, 1]} : vector<4x512xf32> to vector<4x128xf32>
    %cst_108 = arith.constant 0.000000e+00 : f32
    %337 = vector.broadcast %cst_108 : f32 to vector<4x128xf32>
    %338 = arith.subf %337, %336 : vector<4x128xf32>
    %339 = math.exp %338 : vector<4x128xf32>
    %cst_109 = arith.constant 1.000000e+00 : f32
    %340 = vector.broadcast %cst_109 : f32 to vector<4x128xf32>
    %341 = arith.addf %340, %339 : vector<4x128xf32>
    %cst_110 = arith.constant 1.000000e+00 : f32
    %342 = vector.broadcast %cst_110 : f32 to vector<4x128xf32>
    %343 = arith.divf %342, %341 : vector<4x128xf32>
    %344 = arith.mulf %333, %308 : vector<4x128xf32>
    %345 = arith.mulf %325, %335 : vector<4x128xf32>
    %346 = arith.addf %344, %345 : vector<4x128xf32>
    %347 = math.tanh %346 : vector<4x128xf32>
    %348 = arith.mulf %343, %347 : vector<4x128xf32>
    %c0_111 = arith.constant 0 : index
    %c7 = arith.constant 7 : index
    %c0_112 = arith.constant 0 : index
    %349 = vector.load %arg27[%c0_111, %c7, %c0_112] : memref<4x8x128xf32, #tpu.memory_space<vmem>>, vector<4x1x128xf32>
    %350 = vector.shape_cast %349 : vector<4x1x128xf32> to vector<4x128xf32>
    %351 = vector.shape_cast %348 : vector<4x128xf32> to vector<4x1x128xf32>
    tpu.vector_store %arg27[%c0_111, %c7, %c0_112], %351 {strides = array<i32>} : memref<4x8x128xf32, #tpu.memory_space<vmem>>, vector<4x1x128xf32>,
    %c0_113 = arith.constant 0 : index
    %c0_114 = arith.constant 0 : index
    %c0_115 = arith.constant 0 : index
    %352 = vector.load %arg27[%c0_113, %c0_114, %c0_115] : memref<4x8x128xf32, #tpu.memory_space<vmem>>, vector<4x8x128xf32>
    %353 = vector.shape_cast %352 : vector<4x8x128xf32> to vector<32x128xf32>
    %c0_116 = arith.constant 0 : index
    %c0_117 = arith.constant 0 : index
    %c0_118 = arith.constant 0 : index
    %354 = vector.load %arg2[%c0_116, %c0_117, %c0_118] : memref<4x1x8xf32, #tpu.memory_space<vmem>>, vector<4x1x8xf32>
    %cst_119 = arith.constant 1.000000e+00 : f32
    %355 = vector.broadcast %cst_119 : f32 to vector<4x1x8xf32>
    %356 = arith.subf %355, %354 : vector<4x1x8xf32>
    %cst_120 = arith.constant -1.000000e+04 : f32
    %357 = vector.broadcast %cst_120 : f32 to vector<4x1x8xf32>
    %358 = arith.mulf %356, %357 : vector<4x1x8xf32>
    %cst_121 = arith.constant 0.000000e+00 : f32
    %359 = vector.broadcast %cst_121 : f32 to vector<32x128xf32>
    %c0_122 = arith.constant 0 : index
    %c0_123 = arith.constant 0 : index
    %c0_124 = arith.constant 0 : index
    %360 = vector.load %arg8[%c0_122, %c0_123, %c0_124] : memref<2x128x64xf32, #tpu.memory_space<vmem>>, vector<1x128x64xf32>
    %361 = vector.shape_cast %360 : vector<1x128x64xf32> to vector<128x64xf32>
    %cst_125 = arith.constant dense<0.000000e+00> : vector<32x64xf32>
    %362 = tpu.matmul %353, %361, %cst_125 {dimension_numbers = #tpu.dot_dimension_numbers<[1], [0], [0], [1], [0, 0, 1, 1], [], []>} : vector<32x128xf32>, vector<128x64xf32>, vector<32x64xf32> -> vector<32x64xf32>
    %c0_126 = arith.constant 0 : index
    %c0_127 = arith.constant 0 : index
    %c0_128 = arith.constant 0 : index
    %363 = vector.load %arg9[%c0_126, %c0_127, %c0_128] : memref<2x1x64xf32, #tpu.memory_space<vmem>>, vector<1x1x64xf32>
    %364 = vector.shape_cast %363 : vector<1x1x64xf32> to vector<1x64xf32>
    %365 = vector.broadcast %364 : vector<1x64xf32> to vector<32x64xf32>
    %366 = arith.addf %362, %365 : vector<32x64xf32>
    %c0_129 = arith.constant 0 : index
    %c0_130 = arith.constant 0 : index
    %c0_131 = arith.constant 0 : index
    %367 = vector.load %arg10[%c0_129, %c0_130, %c0_131] : memref<2x128x64xf32, #tpu.memory_space<vmem>>, vector<1x128x64xf32>
    %368 = vector.shape_cast %367 : vector<1x128x64xf32> to vector<128x64xf32>
    %cst_132 = arith.constant dense<0.000000e+00> : vector<32x64xf32>
    %369 = tpu.matmul %353, %368, %cst_132 {dimension_numbers = #tpu.dot_dimension_numbers<[1], [0], [0], [1], [0, 0, 1, 1], [], []>} : vector<32x128xf32>, vector<128x64xf32>, vector<32x64xf32> -> vector<32x64xf32>
    %c0_133 = arith.constant 0 : index
    %c0_134 = arith.constant 0 : index
    %c0_135 = arith.constant 0 : index
    %370 = vector.load %arg11[%c0_133, %c0_134, %c0_135] : memref<2x1x64xf32, #tpu.memory_space<vmem>>, vector<1x1x64xf32>
    %371 = vector.shape_cast %370 : vector<1x1x64xf32> to vector<1x64xf32>
    %372 = vector.broadcast %371 : vector<1x64xf32> to vector<32x64xf32>
    %373 = arith.addf %369, %372 : vector<32x64xf32>
    %c0_136 = arith.constant 0 : index
    %c0_137 = arith.constant 0 : index
    %c0_138 = arith.constant 0 : index
    %374 = vector.load %arg12[%c0_136, %c0_137, %c0_138] : memref<2x128x64xf32, #tpu.memory_space<vmem>>, vector<1x128x64xf32>
    %375 = vector.shape_cast %374 : vector<1x128x64xf32> to vector<128x64xf32>
    %cst_139 = arith.constant dense<0.000000e+00> : vector<32x64xf32>
    %376 = tpu.matmul %353, %375, %cst_139 {dimension_numbers = #tpu.dot_dimension_numbers<[1], [0], [0], [1], [0, 0, 1, 1], [], []>} : vector<32x128xf32>, vector<128x64xf32>, vector<32x64xf32> -> vector<32x64xf32>
    %c0_140 = arith.constant 0 : index
    %c0_141 = arith.constant 0 : index
    %c0_142 = arith.constant 0 : index
    %377 = vector.load %arg13[%c0_140, %c0_141, %c0_142] : memref<2x1x64xf32, #tpu.memory_space<vmem>>, vector<1x1x64xf32>
    %378 = vector.shape_cast %377 : vector<1x1x64xf32> to vector<1x64xf32>
    %379 = vector.broadcast %378 : vector<1x64xf32> to vector<32x64xf32>
    %380 = arith.addf %376, %379 : vector<32x64xf32>
    %381 = vector.shape_cast %366 : vector<32x64xf32> to vector<4x8x64xf32>
    %382 = vector.shape_cast %373 : vector<32x64xf32> to vector<4x8x64xf32>
    %383 = vector.shape_cast %380 : vector<32x64xf32> to vector<4x8x64xf32>
    "tpu.trace_start"() <{level = 10 : i32, message = "bqd,bkd->bqk"}> : () -> ()
    %cst_143 = arith.constant dense<0.000000e+00> : vector<4x8x8xf32>
    %384 = tpu.matmul %381, %382, %cst_143 {dimension_numbers = #tpu.dot_dimension_numbers<[2], [2], [1], [1], [0, 0, 0, 1, 1, 1], [0], [0]>} : vector<4x8x64xf32>, vector<4x8x64xf32>, vector<4x8x8xf32> -> vector<4x8x8xf32>
    "tpu.trace_stop"() : () -> ()
    %cst_144 = arith.constant 1.250000e-01 : f32
    %385 = vector.broadcast %cst_144 : f32 to vector<4x8x8xf32>
    %386 = arith.mulf %384, %385 : vector<4x8x8xf32>
    %387 = vector.broadcast %358 : vector<4x1x8xf32> to vector<4x8x8xf32>
    %388 = arith.addf %386, %387 : vector<4x8x8xf32>
    %cst_145 = arith.constant dense<0xFF800000> : vector<4x8xf32>
    %389 = vector.multi_reduction <maximumf>, %388, %cst_145 [2] : vector<4x8x8xf32> to vector<4x8xf32>
    %390 = vector.shape_cast %389 : vector<4x8xf32> to vector<4x8x1xf32>
    %391 = vector.broadcast %390 : vector<4x8x1xf32> to vector<4x8x8xf32>
    %392 = arith.subf %388, %391 : vector<4x8x8xf32>
    %393 = math.exp %392 : vector<4x8x8xf32>
    %cst_146 = arith.constant dense<0.000000e+00> : vector<4x8xf32>
    %394 = vector.multi_reduction <add>, %393, %cst_146 [2] : vector<4x8x8xf32> to vector<4x8xf32>
    %395 = vector.shape_cast %394 : vector<4x8xf32> to vector<4x8x1xf32>
    %396 = tpu.reciprocal %395 {approx = true} : vector<4x8x1xf32> -> vector<4x8x1xf32>
    %397 = vector.broadcast %396 : vector<4x8x1xf32> to vector<4x8x8xf32>
    %398 = arith.mulf %393, %397 : vector<4x8x8xf32>
    "tpu.trace_start"() <{level = 10 : i32, message = "bqk,bkd->bqd"}> : () -> ()
    %cst_147 = arith.constant dense<0.000000e+00> : vector<4x8x64xf32>
    %399 = tpu.matmul %398, %383, %cst_147 {dimension_numbers = #tpu.dot_dimension_numbers<[2], [1], [1], [2], [0, 0, 0, 1, 1, 2], [0], [0]>} : vector<4x8x8xf32>, vector<4x8x64xf32>, vector<4x8x64xf32> -> vector<4x8x64xf32>
    "tpu.trace_stop"() : () -> ()
    %400 = vector.shape_cast %399 : vector<4x8x64xf32> to vector<32x64xf32>
    %c0_148 = arith.constant 0 : index
    %c0_149 = arith.constant 0 : index
    %c0_150 = arith.constant 0 : index
    %401 = vector.load %arg14[%c0_148, %c0_149, %c0_150] : memref<2x64x128xf32, #tpu.memory_space<vmem>>, vector<1x64x128xf32>
    %402 = vector.shape_cast %401 : vector<1x64x128xf32> to vector<64x128xf32>
    %cst_151 = arith.constant dense<0.000000e+00> : vector<32x128xf32>
    %403 = tpu.matmul %400, %402, %cst_151 {dimension_numbers = #tpu.dot_dimension_numbers<[1], [0], [0], [1], [0, 0, 1, 1], [], []>} : vector<32x64xf32>, vector<64x128xf32>, vector<32x128xf32> -> vector<32x128xf32>
    %404 = arith.addf %359, %403 : vector<32x128xf32>
    %c1_152 = arith.constant 1 : index
    %c0_153 = arith.constant 0 : index
    %c0_154 = arith.constant 0 : index
    %405 = vector.load %arg8[%c1_152, %c0_153, %c0_154] : memref<2x128x64xf32, #tpu.memory_space<vmem>>, vector<1x128x64xf32>
    %406 = vector.shape_cast %405 : vector<1x128x64xf32> to vector<128x64xf32>
    %cst_155 = arith.constant dense<0.000000e+00> : vector<32x64xf32>
    %407 = tpu.matmul %353, %406, %cst_155 {dimension_numbers = #tpu.dot_dimension_numbers<[1], [0], [0], [1], [0, 0, 1, 1], [], []>} : vector<32x128xf32>, vector<128x64xf32>, vector<32x64xf32> -> vector<32x64xf32>
    %c1_156 = arith.constant 1 : index
    %c0_157 = arith.constant 0 : index
    %c0_158 = arith.constant 0 : index
    %408 = vector.load %arg9[%c1_156, %c0_157, %c0_158] : memref<2x1x64xf32, #tpu.memory_space<vmem>>, vector<1x1x64xf32>
    %409 = vector.shape_cast %408 : vector<1x1x64xf32> to vector<1x64xf32>
    %410 = vector.broadcast %409 : vector<1x64xf32> to vector<32x64xf32>
    %411 = arith.addf %407, %410 : vector<32x64xf32>
    %c1_159 = arith.constant 1 : index
    %c0_160 = arith.constant 0 : index
    %c0_161 = arith.constant 0 : index
    %412 = vector.load %arg10[%c1_159, %c0_160, %c0_161] : memref<2x128x64xf32, #tpu.memory_space<vmem>>, vector<1x128x64xf32>
    %413 = vector.shape_cast %412 : vector<1x128x64xf32> to vector<128x64xf32>
    %cst_162 = arith.constant dense<0.000000e+00> : vector<32x64xf32>
    %414 = tpu.matmul %353, %413, %cst_162 {dimension_numbers = #tpu.dot_dimension_numbers<[1], [0], [0], [1], [0, 0, 1, 1], [], []>} : vector<32x128xf32>, vector<128x64xf32>, vector<32x64xf32> -> vector<32x64xf32>
    %c1_163 = arith.constant 1 : index
    %c0_164 = arith.constant 0 : index
    %c0_165 = arith.constant 0 : index
    %415 = vector.load %arg11[%c1_163, %c0_164, %c0_165] : memref<2x1x64xf32, #tpu.memory_space<vmem>>, vector<1x1x64xf32>
    %416 = vector.shape_cast %415 : vector<1x1x64xf32> to vector<1x64xf32>
    %417 = vector.broadcast %416 : vector<1x64xf32> to vector<32x64xf32>
    %418 = arith.addf %414, %417 : vector<32x64xf32>
    %c1_166 = arith.constant 1 : index
    %c0_167 = arith.constant 0 : index
    %c0_168 = arith.constant 0 : index
    %419 = vector.load %arg12[%c1_166, %c0_167, %c0_168] : memref<2x128x64xf32, #tpu.memory_space<vmem>>, vector<1x128x64xf32>
    %420 = vector.shape_cast %419 : vector<1x128x64xf32> to vector<128x64xf32>
    %cst_169 = arith.constant dense<0.000000e+00> : vector<32x64xf32>
    %421 = tpu.matmul %353, %420, %cst_169 {dimension_numbers = #tpu.dot_dimension_numbers<[1], [0], [0], [1], [0, 0, 1, 1], [], []>} : vector<32x128xf32>, vector<128x64xf32>, vector<32x64xf32> -> vector<32x64xf32>
    %c1_170 = arith.constant 1 : index
    %c0_171 = arith.constant 0 : index
    %c0_172 = arith.constant 0 : index
    %422 = vector.load %arg13[%c1_170, %c0_171, %c0_172] : memref<2x1x64xf32, #tpu.memory_space<vmem>>, vector<1x1x64xf32>
    %423 = vector.shape_cast %422 : vector<1x1x64xf32> to vector<1x64xf32>
    %424 = vector.broadcast %423 : vector<1x64xf32> to vector<32x64xf32>
    %425 = arith.addf %421, %424 : vector<32x64xf32>
    %426 = vector.shape_cast %411 : vector<32x64xf32> to vector<4x8x64xf32>
    %427 = vector.shape_cast %418 : vector<32x64xf32> to vector<4x8x64xf32>
    %428 = vector.shape_cast %425 : vector<32x64xf32> to vector<4x8x64xf32>
    "tpu.trace_start"() <{level = 10 : i32, message = "bqd,bkd->bqk"}> : () -> ()
    %cst_173 = arith.constant dense<0.000000e+00> : vector<4x8x8xf32>
    %429 = tpu.matmul %426, %427, %cst_173 {dimension_numbers = #tpu.dot_dimension_numbers<[2], [2], [1], [1], [0, 0, 0, 1, 1, 1], [0], [0]>} : vector<4x8x64xf32>, vector<4x8x64xf32>, vector<4x8x8xf32> -> vector<4x8x8xf32>
    "tpu.trace_stop"() : () -> ()
    %cst_174 = arith.constant 1.250000e-01 : f32
    %430 = vector.broadcast %cst_174 : f32 to vector<4x8x8xf32>
    %431 = arith.mulf %429, %430 : vector<4x8x8xf32>
    %432 = vector.broadcast %358 : vector<4x1x8xf32> to vector<4x8x8xf32>
    %433 = arith.addf %431, %432 : vector<4x8x8xf32>
    %cst_175 = arith.constant dense<0xFF800000> : vector<4x8xf32>
    %434 = vector.multi_reduction <maximumf>, %433, %cst_175 [2] : vector<4x8x8xf32> to vector<4x8xf32>
    %435 = vector.shape_cast %434 : vector<4x8xf32> to vector<4x8x1xf32>
    %436 = vector.broadcast %435 : vector<4x8x1xf32> to vector<4x8x8xf32>
    %437 = arith.subf %433, %436 : vector<4x8x8xf32>
    %438 = math.exp %437 : vector<4x8x8xf32>
    %cst_176 = arith.constant dense<0.000000e+00> : vector<4x8xf32>
    %439 = vector.multi_reduction <add>, %438, %cst_176 [2] : vector<4x8x8xf32> to vector<4x8xf32>
    %440 = vector.shape_cast %439 : vector<4x8xf32> to vector<4x8x1xf32>
    %441 = tpu.reciprocal %440 {approx = true} : vector<4x8x1xf32> -> vector<4x8x1xf32>
    %442 = vector.broadcast %441 : vector<4x8x1xf32> to vector<4x8x8xf32>
    %443 = arith.mulf %438, %442 : vector<4x8x8xf32>
    "tpu.trace_start"() <{level = 10 : i32, message = "bqk,bkd->bqd"}> : () -> ()
    %cst_177 = arith.constant dense<0.000000e+00> : vector<4x8x64xf32>
    %444 = tpu.matmul %443, %428, %cst_177 {dimension_numbers = #tpu.dot_dimension_numbers<[2], [1], [1], [2], [0, 0, 0, 1, 1, 2], [0], [0]>} : vector<4x8x8xf32>, vector<4x8x64xf32>, vector<4x8x64xf32> -> vector<4x8x64xf32>
    "tpu.trace_stop"() : () -> ()
    %445 = vector.shape_cast %444 : vector<4x8x64xf32> to vector<32x64xf32>
    %c1_178 = arith.constant 1 : index
    %c0_179 = arith.constant 0 : index
    %c0_180 = arith.constant 0 : index
    %446 = vector.load %arg14[%c1_178, %c0_179, %c0_180] : memref<2x64x128xf32, #tpu.memory_space<vmem>>, vector<1x64x128xf32>
    %447 = vector.shape_cast %446 : vector<1x64x128xf32> to vector<64x128xf32>
    %cst_181 = arith.constant dense<0.000000e+00> : vector<32x128xf32>
    %448 = tpu.matmul %445, %447, %cst_181 {dimension_numbers = #tpu.dot_dimension_numbers<[1], [0], [0], [1], [0, 0, 1, 1], [], []>} : vector<32x64xf32>, vector<64x128xf32>, vector<32x128xf32> -> vector<32x128xf32>
    %449 = arith.addf %404, %448 : vector<32x128xf32>
    %c0_182 = arith.constant 0 : index
    %c0_183 = arith.constant 0 : index
    %450 = vector.load %arg15[%c0_182, %c0_183] : memref<1x128xf32, #tpu.memory_space<vmem>>, vector<1x128xf32>
    %451 = vector.broadcast %450 : vector<1x128xf32> to vector<32x128xf32>
    %452 = arith.addf %449, %451 : vector<32x128xf32>
    %453 = arith.addf %452, %353 : vector<32x128xf32>
    %c0_184 = arith.constant 0 : index
    %c0_185 = arith.constant 0 : index
    %454 = vector.load %arg16[%c0_184, %c0_185] : memref<1x128xf32, #tpu.memory_space<vmem>>, vector<1x128xf32>
    %c0_186 = arith.constant 0 : index
    %c0_187 = arith.constant 0 : index
    %455 = vector.load %arg17[%c0_186, %c0_187] : memref<1x128xf32, #tpu.memory_space<vmem>>, vector<1x128xf32>
    %cst_188 = arith.constant dense<0.000000e+00> : vector<32xf32>
    %456 = vector.multi_reduction <add>, %453, %cst_188 [1] : vector<32x128xf32> to vector<32xf32>
    %457 = vector.shape_cast %456 : vector<32xf32> to vector<32x1xf32>
    %cst_189 = arith.constant 1.280000e+02 : f32
    %458 = vector.broadcast %cst_189 : f32 to vector<32x1xf32>
    %459 = arith.divf %457, %458 : vector<32x1xf32>
    %460 = vector.broadcast %459 : vector<32x1xf32> to vector<32x128xf32>
    %461 = arith.subf %453, %460 : vector<32x128xf32>
    %462 = arith.mulf %461, %461 : vector<32x128xf32>
    %cst_190 = arith.constant dense<0.000000e+00> : vector<32xf32>
    %463 = vector.multi_reduction <add>, %462, %cst_190 [1] : vector<32x128xf32> to vector<32xf32>
    %464 = vector.shape_cast %463 : vector<32xf32> to vector<32x1xf32>
    %cst_191 = arith.constant 1.280000e+02 : f32
    %465 = vector.broadcast %cst_191 : f32 to vector<32x1xf32>
    %466 = arith.divf %464, %465 : vector<32x1xf32>
    %467 = vector.broadcast %459 : vector<32x1xf32> to vector<32x128xf32>
    %468 = arith.subf %453, %467 : vector<32x128xf32>
    %cst_192 = arith.constant 9.99999996E-13 : f32
    %469 = vector.broadcast %cst_192 : f32 to vector<32x1xf32>
    %470 = arith.addf %466, %469 : vector<32x1xf32>
    %471 = math.rsqrt %470 : vector<32x1xf32>
    %472 = vector.broadcast %471 : vector<32x1xf32> to vector<32x128xf32>
    %473 = arith.mulf %468, %472 : vector<32x128xf32>
    %474 = vector.broadcast %454 : vector<1x128xf32> to vector<32x128xf32>
    %475 = arith.mulf %473, %474 : vector<32x128xf32>
    %476 = vector.broadcast %455 : vector<1x128xf32> to vector<32x128xf32>
    %477 = arith.addf %475, %476 : vector<32x128xf32>
    %c0_193 = arith.constant 0 : index
    %c0_194 = arith.constant 0 : index
    %478 = vector.load %arg18[%c0_193, %c0_194] : memref<128x128xf32, #tpu.memory_space<vmem>>, vector<128x128xf32>
    %cst_195 = arith.constant dense<0.000000e+00> : vector<32x128xf32>
    %479 = tpu.matmul %477, %478, %cst_195 {dimension_numbers = #tpu.dot_dimension_numbers<[1], [0], [0], [1], [0, 0, 1, 1], [], []>} : vector<32x128xf32>, vector<128x128xf32>, vector<32x128xf32> -> vector<32x128xf32>
    %c0_196 = arith.constant 0 : index
    %c0_197 = arith.constant 0 : index
    %480 = vector.load %arg19[%c0_196, %c0_197] : memref<1x128xf32, #tpu.memory_space<vmem>>, vector<1x128xf32>
    %481 = vector.broadcast %480 : vector<1x128xf32> to vector<32x128xf32>
    %482 = arith.addf %479, %481 : vector<32x128xf32>
    %cst_198 = arith.constant 5.000000e-01 : f32
    %483 = vector.broadcast %cst_198 : f32 to vector<32x128xf32>
    %484 = arith.mulf %483, %482 : vector<32x128xf32>
    %cst_199 = arith.constant 4.471500e-02 : f32
    %485 = vector.broadcast %cst_199 : f32 to vector<32x128xf32>
    %486 = arith.mulf %485, %482 : vector<32x128xf32>
    %487 = arith.mulf %486, %482 : vector<32x128xf32>
    %488 = arith.mulf %487, %482 : vector<32x128xf32>
    %489 = arith.addf %482, %488 : vector<32x128xf32>
    %cst_200 = arith.constant 0.797884583 : f32
    %490 = vector.broadcast %cst_200 : f32 to vector<32x128xf32>
    %491 = arith.mulf %490, %489 : vector<32x128xf32>
    %492 = math.tanh %491 : vector<32x128xf32>
    %cst_201 = arith.constant 1.000000e+00 : f32
    %493 = vector.broadcast %cst_201 : f32 to vector<32x128xf32>
    %494 = arith.addf %493, %492 : vector<32x128xf32>
    %495 = arith.mulf %484, %494 : vector<32x128xf32>
    %c0_202 = arith.constant 0 : index
    %c0_203 = arith.constant 0 : index
    %496 = vector.load %arg20[%c0_202, %c0_203] : memref<128x128xf32, #tpu.memory_space<vmem>>, vector<128x128xf32>
    %cst_204 = arith.constant dense<0.000000e+00> : vector<32x128xf32>
    %497 = tpu.matmul %495, %496, %cst_204 {dimension_numbers = #tpu.dot_dimension_numbers<[1], [0], [0], [1], [0, 0, 1, 1], [], []>} : vector<32x128xf32>, vector<128x128xf32>, vector<32x128xf32> -> vector<32x128xf32>
    %c0_205 = arith.constant 0 : index
    %c0_206 = arith.constant 0 : index
    %498 = vector.load %arg21[%c0_205, %c0_206] : memref<1x128xf32, #tpu.memory_space<vmem>>, vector<1x128xf32>
    %499 = vector.broadcast %498 : vector<1x128xf32> to vector<32x128xf32>
    %500 = arith.addf %497, %499 : vector<32x128xf32>
    %501 = arith.addf %500, %477 : vector<32x128xf32>
    %c0_207 = arith.constant 0 : index
    %c0_208 = arith.constant 0 : index
    %502 = vector.load %arg22[%c0_207, %c0_208] : memref<1x128xf32, #tpu.memory_space<vmem>>, vector<1x128xf32>
    %c0_209 = arith.constant 0 : index
    %c0_210 = arith.constant 0 : index
    %503 = vector.load %arg23[%c0_209, %c0_210] : memref<1x128xf32, #tpu.memory_space<vmem>>, vector<1x128xf32>
    %cst_211 = arith.constant dense<0.000000e+00> : vector<32xf32>
    %504 = vector.multi_reduction <add>, %501, %cst_211 [1] : vector<32x128xf32> to vector<32xf32>
    %505 = vector.shape_cast %504 : vector<32xf32> to vector<32x1xf32>
    %cst_212 = arith.constant 1.280000e+02 : f32
    %506 = vector.broadcast %cst_212 : f32 to vector<32x1xf32>
    %507 = arith.divf %505, %506 : vector<32x1xf32>
    %508 = vector.broadcast %507 : vector<32x1xf32> to vector<32x128xf32>
    %509 = arith.subf %501, %508 : vector<32x128xf32>
    %510 = arith.mulf %509, %509 : vector<32x128xf32>
    %cst_213 = arith.constant dense<0.000000e+00> : vector<32xf32>
    %511 = vector.multi_reduction <add>, %510, %cst_213 [1] : vector<32x128xf32> to vector<32xf32>
    %512 = vector.shape_cast %511 : vector<32xf32> to vector<32x1xf32>
    %cst_214 = arith.constant 1.280000e+02 : f32
    %513 = vector.broadcast %cst_214 : f32 to vector<32x1xf32>
    %514 = arith.divf %512, %513 : vector<32x1xf32>
    %515 = vector.broadcast %507 : vector<32x1xf32> to vector<32x128xf32>
    %516 = arith.subf %501, %515 : vector<32x128xf32>
    %cst_215 = arith.constant 9.99999996E-13 : f32
    %517 = vector.broadcast %cst_215 : f32 to vector<32x1xf32>
    %518 = arith.addf %514, %517 : vector<32x1xf32>
    %519 = math.rsqrt %518 : vector<32x1xf32>
    %520 = vector.broadcast %519 : vector<32x1xf32> to vector<32x128xf32>
    %521 = arith.mulf %516, %520 : vector<32x128xf32>
    %522 = vector.broadcast %502 : vector<1x128xf32> to vector<32x128xf32>
    %523 = arith.mulf %521, %522 : vector<32x128xf32>
    %524 = vector.broadcast %503 : vector<1x128xf32> to vector<32x128xf32>
    %525 = arith.addf %523, %524 : vector<32x128xf32>
    %c0_216 = arith.constant 0 : index
    %c0_217 = arith.constant 0 : index
    %526 = vector.load %arg24[%c0_216, %c0_217] : memref<1x128xf32, #tpu.memory_space<vmem>>, vector<1x128xf32>
    %527 = vector.broadcast %526 : vector<1x128xf32> to vector<32x128xf32>
    %528 = arith.mulf %525, %527 : vector<32x128xf32>
    %cst_218 = arith.constant dense<0.000000e+00> : vector<32xf32>
    %529 = vector.multi_reduction <add>, %528, %cst_218 [1] : vector<32x128xf32> to vector<32xf32>
    %530 = vector.shape_cast %529 : vector<32xf32> to vector<32x1xf32>
    %c0_219 = arith.constant 0 : index
    %c0_220 = arith.constant 0 : index
    %531 = vector.load %arg25[%c0_219, %c0_220] : memref<1x1xf32, #tpu.memory_space<vmem>>, vector<1x1xf32>
    %532 = vector.broadcast %531 : vector<1x1xf32> to vector<32x1xf32>
    %533 = arith.addf %530, %532 : vector<32x1xf32>
    %cst_221 = arith.constant 0.000000e+00 : f32
    %534 = vector.broadcast %cst_221 : f32 to vector<32x1xf32>
    %535 = arith.subf %534, %533 : vector<32x1xf32>
    %536 = math.exp %535 : vector<32x1xf32>
    %cst_222 = arith.constant 1.000000e+00 : f32
    %537 = vector.broadcast %cst_222 : f32 to vector<32x1xf32>
    %538 = arith.addf %537, %536 : vector<32x1xf32>
    %cst_223 = arith.constant 1.000000e+00 : f32
    %539 = vector.broadcast %cst_223 : f32 to vector<32x1xf32>
    %540 = arith.divf %539, %538 : vector<32x1xf32>
    %541 = vector.shape_cast %540 : vector<32x1xf32> to vector<4x1x8xf32>
    %c0_224 = arith.constant 0 : index
    %c0_225 = arith.constant 0 : index
    %c0_226 = arith.constant 0 : index
    %542 = vector.load %arg26[%c0_224, %c0_225, %c0_226] : memref<4x1x8xf32, #tpu.memory_space<vmem>>, vector<4x1x8xf32>
    tpu.vector_store %arg26[%c0_224, %c0_225, %c0_226], %541 {strides = array<i32>} : memref<4x1x8xf32, #tpu.memory_space<vmem>>, vector<4x1x8xf32>,
    return
  }
  func.func @transform_0(%arg0: i32) -> (i32, i32, i32) {
    %c0_i32 = arith.constant 0 : i32
    %c0_i32_0 = arith.constant 0 : i32
    %c0_i32_1 = arith.constant 0 : i32
    return %arg0, %c0_i32, %c0_i32_0 : i32, i32, i32
  }
  func.func @transform_1(%arg0: i32) -> (i32, i32, i32) {
    %c0_i32 = arith.constant 0 : i32
    %c0_i32_0 = arith.constant 0 : i32
    %c0_i32_1 = arith.constant 0 : i32
    return %arg0, %c0_i32, %c0_i32_0 : i32, i32, i32
  }
  func.func @transform_2(%arg0: i32) -> (i32, i32) {
    %c0_i32 = arith.constant 0 : i32
    %c0_i32_0 = arith.constant 0 : i32
    %c0_i32_1 = arith.constant 0 : i32
    return %c0_i32, %c0_i32_0 : i32, i32
  }
  func.func @transform_3(%arg0: i32) -> (i32, i32) {
    %c0_i32 = arith.constant 0 : i32
    %c0_i32_0 = arith.constant 0 : i32
    %c0_i32_1 = arith.constant 0 : i32
    return %c0_i32, %c0_i32_0 : i32, i32
  }
  func.func @transform_4(%arg0: i32) -> (i32, i32) {
    %c0_i32 = arith.constant 0 : i32
    %c0_i32_0 = arith.constant 0 : i32
    %c0_i32_1 = arith.constant 0 : i32
    return %c0_i32, %c0_i32_0 : i32, i32
  }
  func.func @transform_5(%arg0: i32) -> (i32, i32) {
    %c0_i32 = arith.constant 0 : i32
    %c0_i32_0 = arith.constant 0 : i32
    %c0_i32_1 = arith.constant 0 : i32
    return %c0_i32, %c0_i32_0 : i32, i32
  }
  func.func @transform_6(%arg0: i32) -> (i32, i32) {
    %c0_i32 = arith.constant 0 : i32
    %c0_i32_0 = arith.constant 0 : i32
    %c0_i32_1 = arith.constant 0 : i32
    return %c0_i32, %c0_i32_0 : i32, i32
  }
  func.func @transform_7(%arg0: i32) -> (i32, i32, i32) {
    %c0_i32 = arith.constant 0 : i32
    %c0_i32_0 = arith.constant 0 : i32
    %c0_i32_1 = arith.constant 0 : i32
    %c0_i32_2 = arith.constant 0 : i32
    return %c0_i32, %c0_i32_0, %c0_i32_1 : i32, i32, i32
  }
  func.func @transform_8(%arg0: i32) -> (i32, i32, i32) {
    %c0_i32 = arith.constant 0 : i32
    %c0_i32_0 = arith.constant 0 : i32
    %c0_i32_1 = arith.constant 0 : i32
    %c0_i32_2 = arith.constant 0 : i32
    return %c0_i32, %c0_i32_0, %c0_i32_1 : i32, i32, i32
  }
  func.func @transform_9(%arg0: i32) -> (i32, i32, i32) {
    %c0_i32 = arith.constant 0 : i32
    %c0_i32_0 = arith.constant 0 : i32
    %c0_i32_1 = arith.constant 0 : i32
    %c0_i32_2 = arith.constant 0 : i32
    return %c0_i32, %c0_i32_0, %c0_i32_1 : i32, i32, i32
  }
  func.func @transform_10(%arg0: i32) -> (i32, i32, i32) {
    %c0_i32 = arith.constant 0 : i32
    %c0_i32_0 = arith.constant 0 : i32
    %c0_i32_1 = arith.constant 0 : i32
    %c0_i32_2 = arith.constant 0 : i32
    return %c0_i32, %c0_i32_0, %c0_i32_1 : i32, i32, i32
  }
  func.func @transform_11(%arg0: i32) -> (i32, i32, i32) {
    %c0_i32 = arith.constant 0 : i32
    %c0_i32_0 = arith.constant 0 : i32
    %c0_i32_1 = arith.constant 0 : i32
    %c0_i32_2 = arith.constant 0 : i32
    return %c0_i32, %c0_i32_0, %c0_i32_1 : i32, i32, i32
  }
  func.func @transform_12(%arg0: i32) -> (i32, i32, i32) {
    %c0_i32 = arith.constant 0 : i32
    %c0_i32_0 = arith.constant 0 : i32
    %c0_i32_1 = arith.constant 0 : i32
    %c0_i32_2 = arith.constant 0 : i32
    return %c0_i32, %c0_i32_0, %c0_i32_1 : i32, i32, i32
  }
  func.func @transform_13(%arg0: i32) -> (i32, i32, i32) {
    %c0_i32 = arith.constant 0 : i32
    %c0_i32_0 = arith.constant 0 : i32
    %c0_i32_1 = arith.constant 0 : i32
    %c0_i32_2 = arith.constant 0 : i32
    return %c0_i32, %c0_i32_0, %c0_i32_1 : i32, i32, i32
  }
  func.func @transform_14(%arg0: i32) -> (i32, i32) {
    %c0_i32 = arith.constant 0 : i32
    %c0_i32_0 = arith.constant 0 : i32
    %c0_i32_1 = arith.constant 0 : i32
    return %c0_i32, %c0_i32_0 : i32, i32
  }
  func.func @transform_15(%arg0: i32) -> (i32, i32) {
    %c0_i32 = arith.constant 0 : i32
    %c0_i32_0 = arith.constant 0 : i32
    %c0_i32_1 = arith.constant 0 : i32
    return %c0_i32, %c0_i32_0 : i32, i32
  }
  func.func @transform_16(%arg0: i32) -> (i32, i32) {
    %c0_i32 = arith.constant 0 : i32
    %c0_i32_0 = arith.constant 0 : i32
    %c0_i32_1 = arith.constant 0 : i32
    return %c0_i32, %c0_i32_0 : i32, i32
  }
  func.func @transform_17(%arg0: i32) -> (i32, i32) {
    %c0_i32 = arith.constant 0 : i32
    %c0_i32_0 = arith.constant 0 : i32
    %c0_i32_1 = arith.constant 0 : i32
    return %c0_i32, %c0_i32_0 : i32, i32
  }
  func.func @transform_18(%arg0: i32) -> (i32, i32) {
    %c0_i32 = arith.constant 0 : i32
    %c0_i32_0 = arith.constant 0 : i32
    %c0_i32_1 = arith.constant 0 : i32
    return %c0_i32, %c0_i32_0 : i32, i32
  }
  func.func @transform_19(%arg0: i32) -> (i32, i32) {
    %c0_i32 = arith.constant 0 : i32
    %c0_i32_0 = arith.constant 0 : i32
    %c0_i32_1 = arith.constant 0 : i32
    return %c0_i32, %c0_i32_0 : i32, i32
  }
  func.func @transform_20(%arg0: i32) -> (i32, i32) {
    %c0_i32 = arith.constant 0 : i32
    %c0_i32_0 = arith.constant 0 : i32
    %c0_i32_1 = arith.constant 0 : i32
    return %c0_i32, %c0_i32_0 : i32, i32
  }
  func.func @transform_21(%arg0: i32) -> (i32, i32) {
    %c0_i32 = arith.constant 0 : i32
    %c0_i32_0 = arith.constant 0 : i32
    %c0_i32_1 = arith.constant 0 : i32
    return %c0_i32, %c0_i32_0 : i32, i32
  }
  func.func @transform_22(%arg0: i32) -> (i32, i32) {
    %c0_i32 = arith.constant 0 : i32
    %c0_i32_0 = arith.constant 0 : i32
    %c0_i32_1 = arith.constant 0 : i32
    return %c0_i32, %c0_i32_0 : i32, i32
  }
  func.func @transform_23(%arg0: i32) -> (i32, i32) {
    %c0_i32 = arith.constant 0 : i32
    %c0_i32_0 = arith.constant 0 : i32
    %c0_i32_1 = arith.constant 0 : i32
    return %c0_i32, %c0_i32_0 : i32, i32
  }
  func.func @transform_24(%arg0: i32) -> (i32, i32) {
    %c0_i32 = arith.constant 0 : i32
    %c0_i32_0 = arith.constant 0 : i32
    %c0_i32_1 = arith.constant 0 : i32
    return %c0_i32, %c0_i32_0 : i32, i32
  }
  func.func @transform_25(%arg0: i32) -> (i32, i32, i32) {
    %c0_i32 = arith.constant 0 : i32
    %c0_i32_0 = arith.constant 0 : i32
    %c0_i32_1 = arith.constant 0 : i32
    return %arg0, %c0_i32, %c0_i32_0 : i32, i32, i32
  }
}

</mosaic_0001>

<llo_original>
// kernel: tpu_custom_call.1
$region0: #{tpu_custom_call.1}
  #allocation0 [shape = 'u32[]', space=smem, size = 0x4, offset = 0x4, fixed_abs, tag = 'smem constant byte address 0x4 - core index']
  #allocation1 [shape = 'u32[144,128]{1,0:T(1,128)}', space=vmem, size = 0x12000, scoped, tag = 'internal scratch']
  #allocation2 [shape = 'f32[4,8,128]{2,1,0:T(8,128)}', space=vmem, size = 0x4000, scoped, tag = 'scratch operand']
  #allocation3 [shape = 'f32[1,1]{1,0:T(1,128)S(1)}', space=vmem, size = 0x200, scoped, tag = 'scoped memory for tpu_custom_call.1']
  %s0 = inlined_call_operand.vmem [shape: s32[8,8,5], index: 0, kind: input, shape index: {}]
  %s1 = inlined_call_operand.hbm [shape: f32[8,1,8], index: 1, kind: input, shape index: {}]
  %s2 = inlined_call_operand.hbm [shape: f32[48,128], index: 2, kind: input, shape index: {}]
  %s3 = inlined_call_operand.vmem [shape: f32[1,128], index: 3, kind: input, shape index: {}]
  %s4 = inlined_call_operand.vmem [shape: f32[128,512], index: 4, kind: input, shape index: {}]
  %s5 = inlined_call_operand.vmem [shape: f32[128,512], index: 5, kind: input, shape index: {}]
  %s6 = inlined_call_operand.hbm [shape: f32[1,512], index: 6, kind: input, shape index: {}]
  %s7 = inlined_call_operand.vmem [shape: f32[2,128,64], index: 7, kind: input, shape index: {}]
  %s8 = inlined_call_operand.vmem [shape: f32[2,1,64], index: 8, kind: input, shape index: {}]
  %s9 = inlined_call_operand.vmem [shape: f32[2,128,64], index: 9, kind: input, shape index: {}]
  %s10 = inlined_call_operand.hbm [shape: f32[2,1,64], index: 10, kind: input, shape index: {}]
  %s11 = inlined_call_operand.vmem [shape: f32[2,128,64], index: 11, kind: input, shape index: {}]
  %s12 = inlined_call_operand.hbm [shape: f32[2,1,64], index: 12, kind: input, shape index: {}]
  %s13 = inlined_call_operand.hbm [shape: f32[2,64,128], index: 13, kind: input, shape index: {}]
  %s14 = inlined_call_operand.hbm [shape: f32[1,128], index: 14, kind: input, shape index: {}]
  %s15 = inlined_call_operand.hbm [shape: f32[1,128], index: 15, kind: input, shape index: {}]
  %s16 = inlined_call_operand.hbm [shape: f32[1,128], index: 16, kind: input, shape index: {}]
  %s17 = inlined_call_operand.vmem [shape: f32[128,128], index: 17, kind: input, shape index: {}]
  %s18 = inlined_call_operand.hbm [shape: f32[1,128], index: 18, kind: input, shape index: {}]
  %s19 = inlined_call_operand.hbm [shape: f32[128,128], index: 19, kind: input, shape index: {}]
  %s20 = inlined_call_operand.hbm [shape: f32[1,128], index: 20, kind: input, shape index: {}]
  %s21 = inlined_call_operand.hbm [shape: f32[1,128], index: 21, kind: input, shape index: {}]
  %s22 = inlined_call_operand.vmem [shape: f32[1,128], index: 22, kind: input, shape index: {}]
  %s23 = inlined_call_operand.vmem [shape: f32[1,128], index: 23, kind: input, shape index: {}]
  %s24 = inlined_call_operand.<no memory space> [shape: f32[1,1], index: 24, kind: input, shape index: {}]
  %s25 = inlined_call_operand.hbm [shape: f32[8,1,8], index: 25, kind: output, shape index: {}]
  %s26 = sld [smem:[#allocation0]]
  $region185: #{tpu_custom_call.1} parent=0
    _
  %s28 = ssub.s32 1, %s26
  %s29 = scalar_select 0, %s28, %s26
  %v30 = vstv %s24
  %31 = vst [vmem:[#allocation3] sm:$0x1] %v30
  $region1: #{tpu_custom_call.1} parent=0
    #allocation4 [shape = 'u8[4096]{0}', space=vmem, size = 0x1000, scoped, tag = 'input window, operand 1']
    #allocation5 [shape = 's32[2]{0}', space=sflag, size = 0x8, scoped, tag = 'scoped memory for tpu_custom_call.1']
    #allocation6 [shape = 's32[2]{0}', space=sflag, size = 0x8, scoped, tag = 'scoped memory for tpu_custom_call.1']
    #allocation7 [shape = 'u8[24576]{0}', space=vmem, size = 0x6000, scoped, tag = 'input window, operand 2, single buffered']
    #allocation8 [shape = 's32[1]{0}', space=sflag, size = 0x4, scoped, tag = 'scoped memory for tpu_custom_call.1']
    #allocation9 [shape = 'u8[2048]{0}', space=vmem, size = 0x800, scoped, tag = 'input window, operand 6, single buffered']
    #allocation10 [shape = 'u8[1024]{0}', space=vmem, size = 0x400, scoped, tag = 'input window, operand 10, single buffered']
    #allocation11 [shape = 's32[1]{0}', space=sflag, size = 0x4, scoped, tag = 'scoped memory for tpu_custom_call.1']
    #allocation12 [shape = 'u8[1024]{0}', space=vmem, size = 0x400, scoped, tag = 'input window, operand 12, single buffered']
    #allocation13 [shape = 'u8[65536]{0}', space=vmem, size = 0x10000, scoped, tag = 'input window, operand 13, single buffered']
    #allocation14 [shape = 's32[1]{0}', space=sflag, size = 0x4, scoped, tag = 'scoped memory for tpu_custom_call.1']
    #allocation15 [shape = 'u8[512]{0}', space=vmem, size = 0x400, scoped, tag = 'input window, operand 14, single buffered']
    #allocation16 [shape = 'u8[512]{0}', space=vmem, size = 0x400, scoped, tag = 'input window, operand 15, single buffered']
    #allocation17 [shape = 's32[1]{0}', space=sflag, size = 0x4, scoped, tag = 'scoped memory for tpu_custom_call.1']
    #allocation18 [shape = 'u8[512]{0}', space=vmem, size = 0x400, scoped, tag = 'input window, operand 16, single buffered']
    #allocation19 [shape = 'u8[512]{0}', space=vmem, size = 0x400, scoped, tag = 'input window, operand 18, single buffered']
    #allocation20 [shape = 's32[1]{0}', space=sflag, size = 0x4, scoped, tag = 'scoped memory for tpu_custom_call.1']
    #allocation21 [shape = 'u8[65536]{0}', space=vmem, size = 0x10000, scoped, tag = 'input window, operand 19, single buffered']
    #allocation22 [shape = 'u8[512]{0}', space=vmem, size = 0x400, scoped, tag = 'input window, operand 20, single buffered']
    #allocation23 [shape = 's32[1]{0}', space=sflag, size = 0x4, scoped, tag = 'scoped memory for tpu_custom_call.1']
    #allocation24 [shape = 'u8[512]{0}', space=vmem, size = 0x400, scoped, tag = 'input window, operand 21, single buffered']
    #allocation25 [shape = 'u8[4096]{0}', space=vmem, size = 0x1000, scoped, tag = 'output window, operand 0']
    %32 = vsyncpa [#allocation5], 0
    %s33 = scalar_lea.sflag [#allocation5], 1
    %34 = vsyncpa %s33, 0
    %35 = vsyncpa [#allocation8], 0
    %36 = vsyncpa [#allocation11], 0
    %37 = vsyncpa [#allocation14], 0
    %38 = vsyncpa [#allocation17], 0
    %39 = vsyncpa [#allocation20], 0
    %40 = vsyncpa [#allocation23], 0
    %41 = vsyncpa [#allocation6], 0
    %s42 = scalar_lea.sflag [#allocation6], 1
    %43 = vsyncpa %s42, 0
    loop: start=0, step=1, limit=4
    $region2: #{tpu_custom_call.1} parent=1 // loop_pre_header
      _
    $region3: #{tpu_custom_call.1} parent=1 // loop_header
      %s45 = sphi 0, %s49
      %p46 = scmp.ge.s32.totalorder %s45, 4
      %s55 = sphi 0, %s57
      %s58 = sphi 0, %s55
      %s59 = sphi 0, %s58
      %s75 = sphi 0, %s59
      %s81 = sphi 0, %s83
      %s84 = sphi 0, %s81
      %s85 = sphi 0, %s84
      %s101 = sphi 0, %s85
      %s105 = sphi 0, %s105
      %s107 = sphi 0, %s105
      %s108 = sphi 0, %s107
      %s122 = sphi 0, %s108
      %s126 = sphi 0, %s126
      %s128 = sphi 0, %s126
      %s129 = sphi 0, %s128
      %s143 = sphi 0, %s129
      %s147 = sphi 0, %s147
      %s149 = sphi 0, %s147
      %s150 = sphi 0, %s149
      %s164 = sphi 0, %s150
      %s168 = sphi 0, %s168
      %s170 = sphi 0, %s168
      %s171 = sphi 0, %s170
      %s185 = sphi 0, %s171
      %s189 = sphi 0, %s189
      %s191 = sphi 0, %s189
      %s192 = sphi 0, %s191
      %s206 = sphi 0, %s192
      %s210 = sphi 0, %s210
      %s212 = sphi 0, %s210
      %s213 = sphi 0, %s212
      %s227 = sphi 0, %s213
      %s231 = sphi 0, %s231
      %s233 = sphi 0, %s231
      %s234 = sphi 0, %s233
      %s248 = sphi 0, %s234
      %s252 = sphi 0, %s252
      %s254 = sphi 0, %s252
      %s255 = sphi 0, %s254
      %s269 = sphi 0, %s255
      %s273 = sphi 0, %s273
      %s275 = sphi 0, %s273
      %s276 = sphi 0, %s275
      %s290 = sphi 0, %s276
      %s294 = sphi 0, %s294
      %s296 = sphi 0, %s294
      %s297 = sphi 0, %s296
      %s311 = sphi 0, %s297
      %s315 = sphi 0, %s315
      %s317 = sphi 0, %s315
      %s318 = sphi 0, %s317
      %s332 = sphi 0, %s318
      %s336 = sphi 0, %s336
      %s338 = sphi 0, %s336
      %s339 = sphi 0, %s338
      %s353 = sphi 0, %s339
      %s357 = sphi 0, %s357
      %s359 = sphi 0, %s357
      %s360 = sphi 0, %s359
      %s374 = sphi 0, %s360
      %s378 = sphi 0, %s378
      %s380 = sphi 0, %s378
      %s381 = sphi 0, %s380
      %s395 = sphi 0, %s381
      %s399 = sphi 0, %s399
      %s401 = sphi 0, %s399
      %s402 = sphi 0, %s401
      %s416 = sphi 0, %s402
      %s420 = sphi 0, %s420
      %s422 = sphi 0, %s420
      %s423 = sphi 0, %s422
      %s437 = sphi 0, %s423
      %s441 = sphi 0, %s441
      %s443 = sphi 0, %s441
      %s444 = sphi 0, %s443
      %s458 = sphi 0, %s444
      %s462 = sphi 0, %s462
      %s464 = sphi 0, %s462
      %s465 = sphi 0, %s464
      %s479 = sphi 0, %s465
      %s483 = sphi 0, %s483
      %s485 = sphi 0, %s483
      %s486 = sphi 0, %s485
      %s500 = sphi 0, %s486
      %s504 = sphi 0, %s504
      %s506 = sphi 0, %s504
      %s507 = sphi 0, %s506
      %s521 = sphi 0, %s507
      %s525 = sphi 0, %s525
      %s527 = sphi 0, %s525
      %s528 = sphi 0, %s527
      %s542 = sphi 0, %s528
      %s546 = sphi 0, %s546
      %s548 = sphi 0, %s546
      %s549 = sphi 0, %s548
      %s563 = sphi 0, %s549
      %s567 = sphi 0, %s567
      %s569 = sphi 0, %s567
      %s570 = sphi 0, %s569
      %s584 = sphi 0, %s570
      %s590 = sphi 0, %s592
      %s593 = sphi 0, %s590
      %s594 = sphi 0, %s593
      %s610 = sphi 0, %s594
    $region4: #{tpu_custom_call.1} parent=1 // loop_header_branch
      %48 = sbr.rel (%p46) target = $region8
    $region5: #{tpu_custom_call.1} parent=1 // loop_body
      %s50 = ssub.s32 %s45, 1
      %s51 = ssub.s32 %s45, 2
      %s52 = sadd.s32 %s45, 1
      %s53 = ssub.s32 %s45, %s52
      %p54 = scmp.eq.s32.totalorder %s53, 0
      %s56 = sadd.s32 %s55, 1
      %s57 = scalar_select %p54, %s55, %s56
      %p60 = pneg %p54
      %p61 = scmp.eq.s32.totalorder %s45, 1
      %p62 = por %p60, %p61
      %p63 = scmp.ne.s32.totalorder %s55, %s58
      %p64 = scmp.eq.s32.totalorder %s45, 0
      %p65 = por %p63, %p64
      %p66 = scmp.ne.s32.totalorder %s55, %s58
      %p67 = scmp.eq.s32.totalorder %s50, 1
      %p68 = por %p66, %p67
      %p69 = scmp.ne.s32.totalorder %s58, %s59
      %p70 = scmp.eq.s32.totalorder %s50, 0
      %p71 = por %p69, %p70
      %p72 = scmp.ne.s32.totalorder %s58, %s59
      %p73 = scmp.eq.s32.totalorder %s51, 1
      %p74 = por %p72, %p73
      %p76 = scmp.ne.s32.totalorder %s59, %s75
      %p77 = scmp.eq.s32.totalorder %s51, 0
      %p78 = por %p76, %p77
      %s79 = ssub.s32 %s45, %s52
      %p80 = scmp.eq.s32.totalorder %s79, 0
      %s82 = sadd.s32 %s81, 1
      %s83 = scalar_select %p80, %s81, %s82
      %p86 = pneg %p80
      %p87 = scmp.eq.s32.totalorder %s45, 1
      %p88 = por %p86, %p87
      %p89 = scmp.ne.s32.totalorder %s81, %s84
      %p90 = scmp.eq.s32.totalorder %s45, 0
      %p91 = por %p89, %p90
      %p92 = scmp.ne.s32.totalorder %s81, %s84
      %p93 = scmp.eq.s32.totalorder %s50, 1
      %p94 = por %p92, %p93
      %p95 = scmp.ne.s32.totalorder %s84, %s85
      %p96 = scmp.eq.s32.totalorder %s50, 0
      %p97 = por %p95, %p96
      %p98 = scmp.ne.s32.totalorder %s84, %s85
      %p99 = scmp.eq.s32.totalorder %s51, 1
      %p100 = por %p98, %p99
      %p102 = scmp.ne.s32.totalorder %s85, %s101
      %p103 = scmp.eq.s32.totalorder %s51, 0
      %p104 = por %p102, %p103
      %s106 = sadd.s32 %s105, 1
      %p109 = scmp.eq.s32.totalorder %s45, 1
      %p110 = scmp.ne.s32.totalorder %s105, %s107
      %p111 = scmp.eq.s32.totalorder %s45, 0
      %p112 = por %p110, %p111
      %p113 = scmp.ne.s32.totalorder %s105, %s107
      %p114 = scmp.eq.s32.totalorder %s50, 1
      %p115 = por %p113, %p114
      %p116 = scmp.ne.s32.totalorder %s107, %s108
      %p117 = scmp.eq.s32.totalorder %s50, 0
      %p118 = por %p116, %p117
      %p119 = scmp.ne.s32.totalorder %s107, %s108
      %p120 = scmp.eq.s32.totalorder %s51, 1
      %p121 = por %p119, %p120
      %p123 = scmp.ne.s32.totalorder %s108, %s122
      %p124 = scmp.eq.s32.totalorder %s51, 0
      %p125 = por %p123, %p124
      %s127 = sadd.s32 %s126, 1
      %p130 = scmp.eq.s32.totalorder %s45, 1
      %p131 = scmp.ne.s32.totalorder %s126, %s128
      %p132 = scmp.eq.s32.totalorder %s45, 0
      %p133 = por %p131, %p132
      %p134 = scmp.ne.s32.totalorder %s126, %s128
      %p135 = scmp.eq.s32.totalorder %s50, 1
      %p136 = por %p134, %p135
      %p137 = scmp.ne.s32.totalorder %s128, %s129
      %p138 = scmp.eq.s32.totalorder %s50, 0
      %p139 = por %p137, %p138
      %p140 = scmp.ne.s32.totalorder %s128, %s129
      %p141 = scmp.eq.s32.totalorder %s51, 1
      %p142 = por %p140, %p141
      %p144 = scmp.ne.s32.totalorder %s129, %s143
      %p145 = scmp.eq.s32.totalorder %s51, 0
      %p146 = por %p144, %p145
      %s148 = sadd.s32 %s147, 1
      %p151 = scmp.eq.s32.totalorder %s45, 1
      %p152 = scmp.ne.s32.totalorder %s147, %s149
      %p153 = scmp.eq.s32.totalorder %s45, 0
      %p154 = por %p152, %p153
      %p155 = scmp.ne.s32.totalorder %s147, %s149
      %p156 = scmp.eq.s32.totalorder %s50, 1
      %p157 = por %p155, %p156
      %p158 = scmp.ne.s32.totalorder %s149, %s150
      %p159 = scmp.eq.s32.totalorder %s50, 0
      %p160 = por %p158, %p159
      %p161 = scmp.ne.s32.totalorder %s149, %s150
      %p162 = scmp.eq.s32.totalorder %s51, 1
      %p163 = por %p161, %p162
      %p165 = scmp.ne.s32.totalorder %s150, %s164
      %p166 = scmp.eq.s32.totalorder %s51, 0
      %p167 = por %p165, %p166
      %s169 = sadd.s32 %s168, 1
      %p172 = scmp.eq.s32.totalorder %s45, 1
      %p173 = scmp.ne.s32.totalorder %s168, %s170
      %p174 = scmp.eq.s32.totalorder %s45, 0
      %p175 = por %p173, %p174
      %p176 = scmp.ne.s32.totalorder %s168, %s170
      %p177 = scmp.eq.s32.totalorder %s50, 1
      %p178 = por %p176, %p177
      %p179 = scmp.ne.s32.totalorder %s170, %s171
      %p180 = scmp.eq.s32.totalorder %s50, 0
      %p181 = por %p179, %p180
      %p182 = scmp.ne.s32.totalorder %s170, %s171
      %p183 = scmp.eq.s32.totalorder %s51, 1
      %p184 = por %p182, %p183
      %p186 = scmp.ne.s32.totalorder %s171, %s185
      %p187 = scmp.eq.s32.totalorder %s51, 0
      %p188 = por %p186, %p187
      %s190 = sadd.s32 %s189, 1
      %p193 = scmp.eq.s32.totalorder %s45, 1
      %p194 = scmp.ne.s32.totalorder %s189, %s191
      %p195 = scmp.eq.s32.totalorder %s45, 0
      %p196 = por %p194, %p195
      %p197 = scmp.ne.s32.totalorder %s189, %s191
      %p198 = scmp.eq.s32.totalorder %s50, 1
      %p199 = por %p197, %p198
      %p200 = scmp.ne.s32.totalorder %s191, %s192
      %p201 = scmp.eq.s32.totalorder %s50, 0
      %p202 = por %p200, %p201
      %p203 = scmp.ne.s32.totalorder %s191, %s192
      %p204 = scmp.eq.s32.totalorder %s51, 1
      %p205 = por %p203, %p204
      %p207 = scmp.ne.s32.totalorder %s192, %s206
      %p208 = scmp.eq.s32.totalorder %s51, 0
      %p209 = por %p207, %p208
      %s211 = sadd.s32 %s210, 1
      %p214 = scmp.eq.s32.totalorder %s45, 1
      %p215 = scmp.ne.s32.totalorder %s210, %s212
      %p216 = scmp.eq.s32.totalorder %s45, 0
      %p217 = por %p215, %p216
      %p218 = scmp.ne.s32.totalorder %s210, %s212
      %p219 = scmp.eq.s32.totalorder %s50, 1
      %p220 = por %p218, %p219
      %p221 = scmp.ne.s32.totalorder %s212, %s213
      %p222 = scmp.eq.s32.totalorder %s50, 0
      %p223 = por %p221, %p222
      %p224 = scmp.ne.s32.totalorder %s212, %s213
      %p225 = scmp.eq.s32.totalorder %s51, 1
      %p226 = por %p224, %p225
      %p228 = scmp.ne.s32.totalorder %s213, %s227
      %p229 = scmp.eq.s32.totalorder %s51, 0
      %p230 = por %p228, %p229
      %s232 = sadd.s32 %s231, 1
      %p235 = scmp.eq.s32.totalorder %s45, 1
      %p236 = scmp.ne.s32.totalorder %s231, %s233
      %p237 = scmp.eq.s32.totalorder %s45, 0
      %p238 = por %p236, %p237
      %p239 = scmp.ne.s32.totalorder %s231, %s233
      %p240 = scmp.eq.s32.totalorder %s50, 1
      %p241 = por %p239, %p240
      %p242 = scmp.ne.s32.totalorder %s233, %s234
      %p243 = scmp.eq.s32.totalorder %s50, 0
      %p244 = por %p242, %p243
      %p245 = scmp.ne.s32.totalorder %s233, %s234
      %p246 = scmp.eq.s32.totalorder %s51, 1
      %p247 = por %p245, %p246
      %p249 = scmp.ne.s32.totalorder %s234, %s248
      %p250 = scmp.eq.s32.totalorder %s51, 0
      %p251 = por %p249, %p250
      %s253 = sadd.s32 %s252, 1
      %p256 = scmp.eq.s32.totalorder %s45, 1
      %p257 = scmp.ne.s32.totalorder %s252, %s254
      %p258 = scmp.eq.s32.totalorder %s45, 0
      %p259 = por %p257, %p258
      %p260 = scmp.ne.s32.totalorder %s252, %s254
      %p261 = scmp.eq.s32.totalorder %s50, 1
      %p262 = por %p260, %p261
      %p263 = scmp.ne.s32.totalorder %s254, %s255
      %p264 = scmp.eq.s32.totalorder %s50, 0
      %p265 = por %p263, %p264
      %p266 = scmp.ne.s32.totalorder %s254, %s255
      %p267 = scmp.eq.s32.totalorder %s51, 1
      %p268 = por %p266, %p267
      %p270 = scmp.ne.s32.totalorder %s255, %s269
      %p271 = scmp.eq.s32.totalorder %s51, 0
      %p272 = por %p270, %p271
      %s274 = sadd.s32 %s273, 1
      %p277 = scmp.eq.s32.totalorder %s45, 1
      %p278 = scmp.ne.s32.totalorder %s273, %s275
      %p279 = scmp.eq.s32.totalorder %s45, 0
      %p280 = por %p278, %p279
      %p281 = scmp.ne.s32.totalorder %s273, %s275
      %p282 = scmp.eq.s32.totalorder %s50, 1
      %p283 = por %p281, %p282
      %p284 = scmp.ne.s32.totalorder %s275, %s276
      %p285 = scmp.eq.s32.totalorder %s50, 0
      %p286 = por %p284, %p285
      %p287 = scmp.ne.s32.totalorder %s275, %s276
      %p288 = scmp.eq.s32.totalorder %s51, 1
      %p289 = por %p287, %p288
      %p291 = scmp.ne.s32.totalorder %s276, %s290
      %p292 = scmp.eq.s32.totalorder %s51, 0
      %p293 = por %p291, %p292
      %s295 = sadd.s32 %s294, 1
      %p298 = scmp.eq.s32.totalorder %s45, 1
      %p299 = scmp.ne.s32.totalorder %s294, %s296
      %p300 = scmp.eq.s32.totalorder %s45, 0
      %p301 = por %p299, %p300
      %p302 = scmp.ne.s32.totalorder %s294, %s296
      %p303 = scmp.eq.s32.totalorder %s50, 1
      %p304 = por %p302, %p303
      %p305 = scmp.ne.s32.totalorder %s296, %s297
      %p306 = scmp.eq.s32.totalorder %s50, 0
      %p307 = por %p305, %p306
      %p308 = scmp.ne.s32.totalorder %s296, %s297
      %p309 = scmp.eq.s32.totalorder %s51, 1
      %p310 = por %p308, %p309
      %p312 = scmp.ne.s32.totalorder %s297, %s311
      %p313 = scmp.eq.s32.totalorder %s51, 0
      %p314 = por %p312, %p313
      %s316 = sadd.s32 %s315, 1
      %p319 = scmp.eq.s32.totalorder %s45, 1
      %p320 = scmp.ne.s32.totalorder %s315, %s317
      %p321 = scmp.eq.s32.totalorder %s45, 0
      %p322 = por %p320, %p321
      %p323 = scmp.ne.s32.totalorder %s315, %s317
      %p324 = scmp.eq.s32.totalorder %s50, 1
      %p325 = por %p323, %p324
      %p326 = scmp.ne.s32.totalorder %s317, %s318
      %p327 = scmp.eq.s32.totalorder %s50, 0
      %p328 = por %p326, %p327
      %p329 = scmp.ne.s32.totalorder %s317, %s318
      %p330 = scmp.eq.s32.totalorder %s51, 1
      %p331 = por %p329, %p330
      %p333 = scmp.ne.s32.totalorder %s318, %s332
      %p334 = scmp.eq.s32.totalorder %s51, 0
      %p335 = por %p333, %p334
      %s337 = sadd.s32 %s336, 1
      %p340 = scmp.eq.s32.totalorder %s45, 1
      %p341 = scmp.ne.s32.totalorder %s336, %s338
      %p342 = scmp.eq.s32.totalorder %s45, 0
      %p343 = por %p341, %p342
      %p344 = scmp.ne.s32.totalorder %s336, %s338
      %p345 = scmp.eq.s32.totalorder %s50, 1
      %p346 = por %p344, %p345
      %p347 = scmp.ne.s32.totalorder %s338, %s339
      %p348 = scmp.eq.s32.totalorder %s50, 0
      %p349 = por %p347, %p348
      %p350 = scmp.ne.s32.totalorder %s338, %s339
      %p351 = scmp.eq.s32.totalorder %s51, 1
      %p352 = por %p350, %p351
      %p354 = scmp.ne.s32.totalorder %s339, %s353
      %p355 = scmp.eq.s32.totalorder %s51, 0
      %p356 = por %p354, %p355
      %s358 = sadd.s32 %s357, 1
      %p361 = scmp.eq.s32.totalorder %s45, 1
      %p362 = scmp.ne.s32.totalorder %s357, %s359
      %p363 = scmp.eq.s32.totalorder %s45, 0
      %p364 = por %p362, %p363
      %p365 = scmp.ne.s32.totalorder %s357, %s359
      %p366 = scmp.eq.s32.totalorder %s50, 1
      %p367 = por %p365, %p366
      %p368 = scmp.ne.s32.totalorder %s359, %s360
      %p369 = scmp.eq.s32.totalorder %s50, 0
      %p370 = por %p368, %p369
      %p371 = scmp.ne.s32.totalorder %s359, %s360
      %p372 = scmp.eq.s32.totalorder %s51, 1
      %p373 = por %p371, %p372
      %p375 = scmp.ne.s32.totalorder %s360, %s374
      %p376 = scmp.eq.s32.totalorder %s51, 0
      %p377 = por %p375, %p376
      %s379 = sadd.s32 %s378, 1
      %p382 = scmp.eq.s32.totalorder %s45, 1
      %p383 = scmp.ne.s32.totalorder %s378, %s380
      %p384 = scmp.eq.s32.totalorder %s45, 0
      %p385 = por %p383, %p384
      %p386 = scmp.ne.s32.totalorder %s378, %s380
      %p387 = scmp.eq.s32.totalorder %s50, 1
      %p388 = por %p386, %p387
      %p389 = scmp.ne.s32.totalorder %s380, %s381
      %p390 = scmp.eq.s32.totalorder %s50, 0
      %p391 = por %p389, %p390
      %p392 = scmp.ne.s32.totalorder %s380, %s381
      %p393 = scmp.eq.s32.totalorder %s51, 1
      %p394 = por %p392, %p393
      %p396 = scmp.ne.s32.totalorder %s381, %s395
      %p397 = scmp.eq.s32.totalorder %s51, 0
      %p398 = por %p396, %p397
      %s400 = sadd.s32 %s399, 1
      %p403 = scmp.eq.s32.totalorder %s45, 1
      %p404 = scmp.ne.s32.totalorder %s399, %s401
      %p405 = scmp.eq.s32.totalorder %s45, 0
      %p406 = por %p404, %p405
      %p407 = scmp.ne.s32.totalorder %s399, %s401
      %p408 = scmp.eq.s32.totalorder %s50, 1
      %p409 = por %p407, %p408
      %p410 = scmp.ne.s32.totalorder %s401, %s402
      %p411 = scmp.eq.s32.totalorder %s50, 0
      %p412 = por %p410, %p411
      %p413 = scmp.ne.s32.totalorder %s401, %s402
      %p414 = scmp.eq.s32.totalorder %s51, 1
      %p415 = por %p413, %p414
      %p417 = scmp.ne.s32.totalorder %s402, %s416
      %p418 = scmp.eq.s32.totalorder %s51, 0
      %p419 = por %p417, %p418
      %s421 = sadd.s32 %s420, 1
      %p424 = scmp.eq.s32.totalorder %s45, 1
      %p425 = scmp.ne.s32.totalorder %s420, %s422
      %p426 = scmp.eq.s32.totalorder %s45, 0
      %p427 = por %p425, %p426
      %p428 = scmp.ne.s32.totalorder %s420, %s422
      %p429 = scmp.eq.s32.totalorder %s50, 1
      %p430 = por %p428, %p429
      %p431 = scmp.ne.s32.totalorder %s422, %s423
      %p432 = scmp.eq.s32.totalorder %s50, 0
      %p433 = por %p431, %p432
      %p434 = scmp.ne.s32.totalorder %s422, %s423
      %p435 = scmp.eq.s32.totalorder %s51, 1
      %p436 = por %p434, %p435
      %p438 = scmp.ne.s32.totalorder %s423, %s437
      %p439 = scmp.eq.s32.totalorder %s51, 0
      %p440 = por %p438, %p439
      %s442 = sadd.s32 %s441, 1
      %p445 = scmp.eq.s32.totalorder %s45, 1
      %p446 = scmp.ne.s32.totalorder %s441, %s443
      %p447 = scmp.eq.s32.totalorder %s45, 0
      %p448 = por %p446, %p447
      %p449 = scmp.ne.s32.totalorder %s441, %s443
      %p450 = scmp.eq.s32.totalorder %s50, 1
      %p451 = por %p449, %p450
      %p452 = scmp.ne.s32.totalorder %s443, %s444
      %p453 = scmp.eq.s32.totalorder %s50, 0
      %p454 = por %p452, %p453
      %p455 = scmp.ne.s32.totalorder %s443, %s444
      %p456 = scmp.eq.s32.totalorder %s51, 1
      %p457 = por %p455, %p456
      %p459 = scmp.ne.s32.totalorder %s444, %s458
      %p460 = scmp.eq.s32.totalorder %s51, 0
      %p461 = por %p459, %p460
      %s463 = sadd.s32 %s462, 1
      %p466 = scmp.eq.s32.totalorder %s45, 1
      %p467 = scmp.ne.s32.totalorder %s462, %s464
      %p468 = scmp.eq.s32.totalorder %s45, 0
      %p469 = por %p467, %p468
      %p470 = scmp.ne.s32.totalorder %s462, %s464
      %p471 = scmp.eq.s32.totalorder %s50, 1
      %p472 = por %p470, %p471
      %p473 = scmp.ne.s32.totalorder %s464, %s465
      %p474 = scmp.eq.s32.totalorder %s50, 0
      %p475 = por %p473, %p474
      %p476 = scmp.ne.s32.totalorder %s464, %s465
      %p477 = scmp.eq.s32.totalorder %s51, 1
      %p478 = por %p476, %p477
      %p480 = scmp.ne.s32.totalorder %s465, %s479
      %p481 = scmp.eq.s32.totalorder %s51, 0
      %p482 = por %p480, %p481
      %s484 = sadd.s32 %s483, 1
      %p487 = scmp.eq.s32.totalorder %s45, 1
      %p488 = scmp.ne.s32.totalorder %s483, %s485
      %p489 = scmp.eq.s32.totalorder %s45, 0
      %p490 = por %p488, %p489
      %p491 = scmp.ne.s32.totalorder %s483, %s485
      %p492 = scmp.eq.s32.totalorder %s50, 1
      %p493 = por %p491, %p492
      %p494 = scmp.ne.s32.totalorder %s485, %s486
      %p495 = scmp.eq.s32.totalorder %s50, 0
      %p496 = por %p494, %p495
      %p497 = scmp.ne.s32.totalorder %s485, %s486
      %p498 = scmp.eq.s32.totalorder %s51, 1
      %p499 = por %p497, %p498
      %p501 = scmp.ne.s32.totalorder %s486, %s500
      %p502 = scmp.eq.s32.totalorder %s51, 0
      %p503 = por %p501, %p502
      %s505 = sadd.s32 %s504, 1
      %p508 = scmp.eq.s32.totalorder %s45, 1
      %p509 = scmp.ne.s32.totalorder %s504, %s506
      %p510 = scmp.eq.s32.totalorder %s45, 0
      %p511 = por %p509, %p510
      %p512 = scmp.ne.s32.totalorder %s504, %s506
      %p513 = scmp.eq.s32.totalorder %s50, 1
      %p514 = por %p512, %p513
      %p515 = scmp.ne.s32.totalorder %s506, %s507
      %p516 = scmp.eq.s32.totalorder %s50, 0
      %p517 = por %p515, %p516
      %p518 = scmp.ne.s32.totalorder %s506, %s507
      %p519 = scmp.eq.s32.totalorder %s51, 1
      %p520 = por %p518, %p519
      %p522 = scmp.ne.s32.totalorder %s507, %s521
      %p523 = scmp.eq.s32.totalorder %s51, 0
      %p524 = por %p522, %p523
      %s526 = sadd.s32 %s525, 1
      %p529 = scmp.eq.s32.totalorder %s45, 1
      %p530 = scmp.ne.s32.totalorder %s525, %s527
      %p531 = scmp.eq.s32.totalorder %s45, 0
      %p532 = por %p530, %p531
      %p533 = scmp.ne.s32.totalorder %s525, %s527
      %p534 = scmp.eq.s32.totalorder %s50, 1
      %p535 = por %p533, %p534
      %p536 = scmp.ne.s32.totalorder %s527, %s528
      %p537 = scmp.eq.s32.totalorder %s50, 0
      %p538 = por %p536, %p537
      %p539 = scmp.ne.s32.totalorder %s527, %s528
      %p540 = scmp.eq.s32.totalorder %s51, 1
      %p541 = por %p539, %p540
      %p543 = scmp.ne.s32.totalorder %s528, %s542
      %p544 = scmp.eq.s32.totalorder %s51, 0
      %p545 = por %p543, %p544
      %s547 = sadd.s32 %s546, 1
      %p550 = scmp.eq.s32.totalorder %s45, 1
      %p551 = scmp.ne.s32.totalorder %s546, %s548
      %p552 = scmp.eq.s32.totalorder %s45, 0
      %p553 = por %p551, %p552
      %p554 = scmp.ne.s32.totalorder %s546, %s548
      %p555 = scmp.eq.s32.totalorder %s50, 1
      %p556 = por %p554, %p555
      %p557 = scmp.ne.s32.totalorder %s548, %s549
      %p558 = scmp.eq.s32.totalorder %s50, 0
      %p559 = por %p557, %p558
      %p560 = scmp.ne.s32.totalorder %s548, %s549
      %p561 = scmp.eq.s32.totalorder %s51, 1
      %p562 = por %p560, %p561
      %p564 = scmp.ne.s32.totalorder %s549, %s563
      %p565 = scmp.eq.s32.totalorder %s51, 0
      %p566 = por %p564, %p565
      %s568 = sadd.s32 %s567, 1
      %p571 = scmp.eq.s32.totalorder %s45, 1
      %p572 = scmp.ne.s32.totalorder %s567, %s569
      %p573 = scmp.eq.s32.totalorder %s45, 0
      %p574 = por %p572, %p573
      %p575 = scmp.ne.s32.totalorder %s567, %s569
      %p576 = scmp.eq.s32.totalorder %s50, 1
      %p577 = por %p575, %p576
      %p578 = scmp.ne.s32.totalorder %s569, %s570
      %p579 = scmp.eq.s32.totalorder %s50, 0
      %p580 = por %p578, %p579
      %p581 = scmp.ne.s32.totalorder %s569, %s570
      %p582 = scmp.eq.s32.totalorder %s51, 1
      %p583 = por %p581, %p582
      %p585 = scmp.ne.s32.totalorder %s570, %s584
      %p586 = scmp.eq.s32.totalorder %s51, 0
      %p587 = por %p585, %p586
      %s588 = ssub.s32 %s45, %s52
      %p589 = scmp.eq.s32.totalorder %s588, 0
      %s591 = sadd.s32 %s590, 1
      %s592 = scalar_select %p589, %s590, %s591
      %p595 = pneg %p589
      %p596 = scmp.eq.s32.totalorder %s45, 1
      %p597 = por %p595, %p596
      %p598 = scmp.ne.s32.totalorder %s590, %s593
      %p599 = scmp.eq.s32.totalorder %s45, 0
      %p600 = por %p598, %p599
      %p601 = scmp.ne.s32.totalorder %s590, %s593
      %p602 = scmp.eq.s32.totalorder %s50, 1
      %p603 = por %p601, %p602
      %p604 = scmp.ne.s32.totalorder %s593, %s594
      %p605 = scmp.eq.s32.totalorder %s50, 0
      %p606 = por %p604, %p605
      %p607 = scmp.ne.s32.totalorder %s593, %s594
      %p608 = scmp.eq.s32.totalorder %s51, 1
      %p609 = por %p607, %p608
      %p611 = scmp.ne.s32.totalorder %s594, %s610
      %p612 = scmp.eq.s32.totalorder %s51, 0
      %p613 = por %p611, %p612
      %p614 = scmp.le.s32.totalorder 1, %s45
      %p615 = scmp.lt.s32.totalorder %s45, 3
      %p616 = pnand %p614, %p615
      %p617 = pneg %p616
      // Predicated region
      $region9: #{tpu_custom_call.1} parent=5 // pred_check
        _
      $region10: #{tpu_custom_call.1} parent=5 // pred_check_branch
        %619 = sbr.rel (%p616) target = $region12
      $region11: #{tpu_custom_call.1} parent=5 // pred_region
        %s620 = ssub.s32 %s45, 1
        // Predicated region
        $region13: #{tpu_custom_call.1} parent=11 // pred_check
          %p621 = pneg %p118
        $region14: #{tpu_custom_call.1} parent=11 // pred_check_branch
          %623 = sbr.rel (%p621) target = $region16
        $region15: #{tpu_custom_call.1} parent=11 // pred_region
          %s625 = ssub.s32 768, 768
          %626 = vsyncadd [#allocation8], %s625
          %s627 = sshll.u32 [#allocation7], 4
          %s628 = int_to_ptr.vmem [resolvable:$true] %s627
          %633 = dma.hbm_to_vmem [thread:$0]  %s2, 768, %s628, [#allocation8], 128, 128, 8
        $region16: #{tpu_custom_call.1} parent=11 // pred_fallthru
          _
        // Predicated region
        $region17: #{tpu_custom_call.1} parent=11 // pred_check
          %p634 = pneg %p139
        $region18: #{tpu_custom_call.1} parent=11 // pred_check_branch
          %636 = sbr.rel (%p634) target = $region20
        $region19: #{tpu_custom_call.1} parent=11 // pred_region
          _
        $region20: #{tpu_custom_call.1} parent=11 // pred_fallthru
          _
        // Predicated region
        $region21: #{tpu_custom_call.1} parent=11 // pred_check
          %p637 = pneg %p160
        $region22: #{tpu_custom_call.1} parent=11 // pred_check_branch
          %639 = sbr.rel (%p637) target = $region24
        $region23: #{tpu_custom_call.1} parent=11 // pred_region
          _
        $region24: #{tpu_custom_call.1} parent=11 // pred_fallthru
          _
        // Predicated region
        $region25: #{tpu_custom_call.1} parent=11 // pred_check
          %p640 = pneg %p181
        $region26: #{tpu_custom_call.1} parent=11 // pred_check_branch
          %642 = sbr.rel (%p640) target = $region28
        $region27: #{tpu_custom_call.1} parent=11 // pred_region
          _
        $region28: #{tpu_custom_call.1} parent=11 // pred_fallthru
          _
        // Predicated region
        $region29: #{tpu_custom_call.1} parent=11 // pred_check
          %p643 = pneg %p202
        $region30: #{tpu_custom_call.1} parent=11 // pred_check_branch
          %645 = sbr.rel (%p643) target = $region32
        $region31: #{tpu_custom_call.1} parent=11 // pred_region
          %s647 = ssub.s32 64, 64
          %648 = vsyncadd [#allocation8], %s647
          %s650 = sshll.u32 [#allocation9], 4
          %s651 = int_to_ptr.vmem [resolvable:$true] %s650
          %653 = dma.hbm_to_vmem [thread:$0]  %s6, 64, %s651, [#allocation8]
        $region32: #{tpu_custom_call.1} parent=11 // pred_fallthru
          _
        // Predicated region
        $region33: #{tpu_custom_call.1} parent=11 // pred_check
          %p654 = pneg %p223
        $region34: #{tpu_custom_call.1} parent=11 // pred_check_branch
          %656 = sbr.rel (%p654) target = $region36
        $region35: #{tpu_custom_call.1} parent=11 // pred_region
          _
        $region36: #{tpu_custom_call.1} parent=11 // pred_fallthru
          _
        // Predicated region
        $region37: #{tpu_custom_call.1} parent=11 // pred_check
          %p657 = pneg %p244
        $region38: #{tpu_custom_call.1} parent=11 // pred_check_branch
          %659 = sbr.rel (%p657) target = $region40
        $region39: #{tpu_custom_call.1} parent=11 // pred_region
          _
        $region40: #{tpu_custom_call.1} parent=11 // pred_fallthru
          _
        // Predicated region
        $region41: #{tpu_custom_call.1} parent=11 // pred_check
          %p660 = pneg %p265
        $region42: #{tpu_custom_call.1} parent=11 // pred_check_branch
          %662 = sbr.rel (%p660) target = $region44
        $region43: #{tpu_custom_call.1} parent=11 // pred_region
          _
        $region44: #{tpu_custom_call.1} parent=11 // pred_fallthru
          _
        // Predicated region
        $region45: #{tpu_custom_call.1} parent=11 // pred_check
          %p663 = pneg %p286
        $region46: #{tpu_custom_call.1} parent=11 // pred_check_branch
          %665 = sbr.rel (%p663) target = $region48
        $region47: #{tpu_custom_call.1} parent=11 // pred_region
          %s667 = ssub.s32 32, 32
          %668 = vsyncadd [#allocation11], %s667
          %s669 = sshll.u32 [#allocation10], 4
          %s670 = int_to_ptr.vmem [resolvable:$true] %s669
          %675 = dma.hbm_to_vmem [thread:$0]  %s10, 32, %s670, [#allocation11], 16, 16, 1
        $region48: #{tpu_custom_call.1} parent=11 // pred_fallthru
          _
        // Predicated region
        $region49: #{tpu_custom_call.1} parent=11 // pred_check
          %p676 = pneg %p307
        $region50: #{tpu_custom_call.1} parent=11 // pred_check_branch
          %678 = sbr.rel (%p676) target = $region52
        $region51: #{tpu_custom_call.1} parent=11 // pred_region
          _
        $region52: #{tpu_custom_call.1} parent=11 // pred_fallthru
          _
        // Predicated region
        $region53: #{tpu_custom_call.1} parent=11 // pred_check
          %p679 = pneg %p328
        $region54: #{tpu_custom_call.1} parent=11 // pred_check_branch
          %681 = sbr.rel (%p679) target = $region56
        $region55: #{tpu_custom_call.1} parent=11 // pred_region
          %s683 = ssub.s32 32, 32
          %684 = vsyncadd [#allocation11], %s683
          %s685 = sshll.u32 [#allocation12], 4
          %s686 = int_to_ptr.vmem [resolvable:$true] %s685
          %691 = dma.hbm_to_vmem [thread:$0]  %s12, 32, %s686, [#allocation11], 16, 16, 1
        $region56: #{tpu_custom_call.1} parent=11 // pred_fallthru
          _
        // Predicated region
        $region57: #{tpu_custom_call.1} parent=11 // pred_check
          %p692 = pneg %p349
        $region58: #{tpu_custom_call.1} parent=11 // pred_check_branch
          %694 = sbr.rel (%p692) target = $region60
        $region59: #{tpu_custom_call.1} parent=11 // pred_region
          %s696 = ssub.s32 2048, 2048
          %697 = vsyncadd [#allocation14], %s696
          %s698 = sshll.u32 [#allocation13], 4
          %s699 = int_to_ptr.vmem [resolvable:$true] %s698
          %704 = dma.hbm_to_vmem [thread:$0]  %s13, 2048, %s699, [#allocation14], 128, 128, 8
        $region60: #{tpu_custom_call.1} parent=11 // pred_fallthru
          _
        // Predicated region
        $region61: #{tpu_custom_call.1} parent=11 // pred_check
          %p705 = pneg %p370
        $region62: #{tpu_custom_call.1} parent=11 // pred_check_branch
          %707 = sbr.rel (%p705) target = $region64
        $region63: #{tpu_custom_call.1} parent=11 // pred_region
          %s709 = ssub.s32 16, 16
          %710 = vsyncadd [#allocation14], %s709
          %s712 = sshll.u32 [#allocation15], 4
          %s713 = int_to_ptr.vmem [resolvable:$true] %s712
          %715 = dma.hbm_to_vmem [thread:$0]  %s14, 16, %s713, [#allocation14]
        $region64: #{tpu_custom_call.1} parent=11 // pred_fallthru
          _
        // Predicated region
        $region65: #{tpu_custom_call.1} parent=11 // pred_check
          %p716 = pneg %p391
        $region66: #{tpu_custom_call.1} parent=11 // pred_check_branch
          %718 = sbr.rel (%p716) target = $region68
        $region67: #{tpu_custom_call.1} parent=11 // pred_region
          %s720 = ssub.s32 16, 16
          %721 = vsyncadd [#allocation17], %s720
          %s723 = sshll.u32 [#allocation16], 4
          %s724 = int_to_ptr.vmem [resolvable:$true] %s723
          %726 = dma.hbm_to_vmem [thread:$0]  %s15, 16, %s724, [#allocation17]
        $region68: #{tpu_custom_call.1} parent=11 // pred_fallthru
          _
        // Predicated region
        $region69: #{tpu_custom_call.1} parent=11 // pred_check
          %p727 = pneg %p412
        $region70: #{tpu_custom_call.1} parent=11 // pred_check_branch
          %729 = sbr.rel (%p727) target = $region72
        $region71: #{tpu_custom_call.1} parent=11 // pred_region
          %s731 = ssub.s32 16, 16
          %732 = vsyncadd [#allocation17], %s731
          %s734 = sshll.u32 [#allocation18], 4
          %s735 = int_to_ptr.vmem [resolvable:$true] %s734
          %737 = dma.hbm_to_vmem [thread:$0]  %s16, 16, %s735, [#allocation17]
        $region72: #{tpu_custom_call.1} parent=11 // pred_fallthru
          _
        // Predicated region
        $region73: #{tpu_custom_call.1} parent=11 // pred_check
          %p738 = pneg %p433
        $region74: #{tpu_custom_call.1} parent=11 // pred_check_branch
          %740 = sbr.rel (%p738) target = $region76
        $region75: #{tpu_custom_call.1} parent=11 // pred_region
          _
        $region76: #{tpu_custom_call.1} parent=11 // pred_fallthru
          _
        // Predicated region
        $region77: #{tpu_custom_call.1} parent=11 // pred_check
          %p741 = pneg %p454
        $region78: #{tpu_custom_call.1} parent=11 // pred_check_branch
          %743 = sbr.rel (%p741) target = $region80
        $region79: #{tpu_custom_call.1} parent=11 // pred_region
          %s745 = ssub.s32 16, 16
          %746 = vsyncadd [#allocation20], %s745
          %s748 = sshll.u32 [#allocation19], 4
          %s749 = int_to_ptr.vmem [resolvable:$true] %s748
          %751 = dma.hbm_to_vmem [thread:$0]  %s18, 16, %s749, [#allocation20]
        $region80: #{tpu_custom_call.1} parent=11 // pred_fallthru
          _
        // Predicated region
        $region81: #{tpu_custom_call.1} parent=11 // pred_check
          %p752 = pneg %p475
        $region82: #{tpu_custom_call.1} parent=11 // pred_check_branch
          %754 = sbr.rel (%p752) target = $region84
        $region83: #{tpu_custom_call.1} parent=11 // pred_region
          %s756 = ssub.s32 2048, 2048
          %757 = vsyncadd [#allocation20], %s756
          %s758 = sshll.u32 [#allocation21], 4
          %s759 = int_to_ptr.vmem [resolvable:$true] %s758
          %764 = dma.hbm_to_vmem [thread:$0]  %s19, 2048, %s759, [#allocation20], 128, 128, 8
        $region84: #{tpu_custom_call.1} parent=11 // pred_fallthru
          _
        // Predicated region
        $region85: #{tpu_custom_call.1} parent=11 // pred_check
          %p765 = pneg %p496
        $region86: #{tpu_custom_call.1} parent=11 // pred_check_branch
          %767 = sbr.rel (%p765) target = $region88
        $region87: #{tpu_custom_call.1} parent=11 // pred_region
          %s769 = ssub.s32 16, 16
          %770 = vsyncadd [#allocation23], %s769
          %s772 = sshll.u32 [#allocation22], 4
          %s773 = int_to_ptr.vmem [resolvable:$true] %s772
          %775 = dma.hbm_to_vmem [thread:$0]  %s20, 16, %s773, [#allocation23]
        $region88: #{tpu_custom_call.1} parent=11 // pred_fallthru
          _
        // Predicated region
        $region89: #{tpu_custom_call.1} parent=11 // pred_check
          %p776 = pneg %p517
        $region90: #{tpu_custom_call.1} parent=11 // pred_check_branch
          %778 = sbr.rel (%p776) target = $region92
        $region91: #{tpu_custom_call.1} parent=11 // pred_region
          %s780 = ssub.s32 16, 16
          %781 = vsyncadd [#allocation23], %s780
          %s783 = sshll.u32 [#allocation24], 4
          %s784 = int_to_ptr.vmem [resolvable:$true] %s783
          %786 = dma.hbm_to_vmem [thread:$0]  %s21, 16, %s784, [#allocation23]
        $region92: #{tpu_custom_call.1} parent=11 // pred_fallthru
          _
        // Predicated region
        $region93: #{tpu_custom_call.1} parent=11 // pred_check
          %p787 = pneg %p538
        $region94: #{tpu_custom_call.1} parent=11 // pred_check_branch
          %789 = sbr.rel (%p787) target = $region96
        $region95: #{tpu_custom_call.1} parent=11 // pred_region
          _
        $region96: #{tpu_custom_call.1} parent=11 // pred_fallthru
          _
        // Predicated region
        $region97: #{tpu_custom_call.1} parent=11 // pred_check
          %p790 = pneg %p559
        $region98: #{tpu_custom_call.1} parent=11 // pred_check_branch
          %792 = sbr.rel (%p790) target = $region100
        $region99: #{tpu_custom_call.1} parent=11 // pred_region
          _
        $region100: #{tpu_custom_call.1} parent=11 // pred_fallthru
          _
        // Predicated region
        $region101: #{tpu_custom_call.1} parent=11 // pred_check
          %p793 = pneg %p580
        $region102: #{tpu_custom_call.1} parent=11 // pred_check_branch
          %795 = sbr.rel (%p793) target = $region104
        $region103: #{tpu_custom_call.1} parent=11 // pred_region
          _
        $region104: #{tpu_custom_call.1} parent=11 // pred_fallthru
          _
      $region12: #{tpu_custom_call.1} parent=5 // pred_fallthru
        _
      %p796 = scmp.lt.s32.totalorder %s45, 2
      // Predicated region
      $region105: #{tpu_custom_call.1} parent=5 // pred_check
        %p797 = pneg %p796
      $region106: #{tpu_custom_call.1} parent=5 // pred_check_branch
        %799 = sbr.rel (%p797) target = $region108
      $region107: #{tpu_custom_call.1} parent=5 // pred_region
        // Predicated region
        $region109: #{tpu_custom_call.1} parent=107 // pred_check
          %p800 = pneg %p65
        $region110: #{tpu_custom_call.1} parent=107 // pred_check_branch
          %802 = sbr.rel (%p800) target = $region112
        $region111: #{tpu_custom_call.1} parent=107 // pred_region
          %s803 = smul.u32 4, %s45
          %p804 = scmp.lt.s32.totalorder %s803, 7
          %s805 = scalar_select %p804, %s803, 7
          %s806 = smul.addr %s805, 8
          %s807 = scalar_lea.vmem %s0, %s806
          %s808 = smul.u32 4, %s45
        $region112: #{tpu_custom_call.1} parent=107 // pred_fallthru
          _
        // Predicated region
        $region113: #{tpu_custom_call.1} parent=107 // pred_check
          %p809 = pneg %p91
        $region114: #{tpu_custom_call.1} parent=107 // pred_check_branch
          %811 = sbr.rel (%p809) target = $region116
        $region115: #{tpu_custom_call.1} parent=107 // pred_region
          %s812 = sand.u32 %s81, 1
          %s813 = scalar_lea.sflag [#allocation5], %s812
          %s814 = sand.u32 %s81, 1
          %s815 = smul.addr %s814, 4
          %s816 = scalar_lea.vmem [#allocation4], %s815
          %s817 = smul.u32 4, %s45
          %s819 = ssub.s32 64, 64
          %820 = vsyncadd %s813, %s819
          %s821 = smul.addr %s817, 16
          %s822 = scalar_lea.hbm %s1, %s821
          %s823 = sshll.u32 %s816, 4
          %s824 = int_to_ptr.vmem [resolvable:$true] %s823
          %829 = dma.hbm_to_vmem [thread:$0]  %s822, 64, %s824, %s813, 16, 16, 1
        $region116: #{tpu_custom_call.1} parent=107 // pred_fallthru
          _
      $region108: #{tpu_custom_call.1} parent=5 // pred_fallthru
        _
      %p830 = scmp.le.s32.totalorder 1, %s45
      %p831 = scmp.lt.s32.totalorder %s45, 3
      %p832 = pnand %p830, %p831
      %p833 = pneg %p832
      // Predicated region
      $region117: #{tpu_custom_call.1} parent=5 // pred_check
        _
      $region118: #{tpu_custom_call.1} parent=5 // pred_check_branch
        %835 = sbr.rel (%p832) target = $region120
      $region119: #{tpu_custom_call.1} parent=5 // pred_region
        %s836 = ssub.s32 %s45, 1
        %s837 = sand.u32 %s84, 1
        %s838 = scalar_lea.sflag [#allocation5], %s837
        %s839 = sand.u32 %s84, 1
        %s840 = smul.addr %s839, 4
        %s841 = scalar_lea.vmem [#allocation4], %s840
        // Predicated region
        $region121: #{tpu_custom_call.1} parent=119 // pred_check
          %p842 = pneg %p97
        $region122: #{tpu_custom_call.1} parent=119 // pred_check_branch
          %844 = sbr.rel (%p842) target = $region124
        $region123: #{tpu_custom_call.1} parent=119 // pred_region
          %845 = dma.done %s838, 64
        $region124: #{tpu_custom_call.1} parent=119 // pred_fallthru
          _
        // Predicated region
        $region125: #{tpu_custom_call.1} parent=119 // pred_check
          %p846 = pneg %p118
        $region126: #{tpu_custom_call.1} parent=119 // pred_check_branch
          %848 = sbr.rel (%p846) target = $region128
        $region127: #{tpu_custom_call.1} parent=119 // pred_region
          %849 = dma.done [#allocation8], 768
        $region128: #{tpu_custom_call.1} parent=119 // pred_fallthru
          _
        // Predicated region
        $region129: #{tpu_custom_call.1} parent=119 // pred_check
          %p850 = pneg %p202
        $region130: #{tpu_custom_call.1} parent=119 // pred_check_branch
          %852 = sbr.rel (%p850) target = $region132
        $region131: #{tpu_custom_call.1} parent=119 // pred_region
          %853 = dma.done [#allocation8], 64
        $region132: #{tpu_custom_call.1} parent=119 // pred_fallthru
          _
        // Predicated region
        $region133: #{tpu_custom_call.1} parent=119 // pred_check
          %p854 = pneg %p286
        $region134: #{tpu_custom_call.1} parent=119 // pred_check_branch
          %856 = sbr.rel (%p854) target = $region136
        $region135: #{tpu_custom_call.1} parent=119 // pred_region
          %857 = dma.done [#allocation11], 32
        $region136: #{tpu_custom_call.1} parent=119 // pred_fallthru
          _
        // Predicated region
        $region137: #{tpu_custom_call.1} parent=119 // pred_check
          %p858 = pneg %p328
        $region138: #{tpu_custom_call.1} parent=119 // pred_check_branch
          %860 = sbr.rel (%p858) target = $region140
        $region139: #{tpu_custom_call.1} parent=119 // pred_region
          %861 = dma.done [#allocation11], 32
        $region140: #{tpu_custom_call.1} parent=119 // pred_fallthru
          _
        // Predicated region
        $region141: #{tpu_custom_call.1} parent=119 // pred_check
          %p862 = pneg %p349
        $region142: #{tpu_custom_call.1} parent=119 // pred_check_branch
          %864 = sbr.rel (%p862) target = $region144
        $region143: #{tpu_custom_call.1} parent=119 // pred_region
          %865 = dma.done [#allocation14], 2048
        $region144: #{tpu_custom_call.1} parent=119 // pred_fallthru
          _
        // Predicated region
        $region145: #{tpu_custom_call.1} parent=119 // pred_check
          %p866 = pneg %p370
        $region146: #{tpu_custom_call.1} parent=119 // pred_check_branch
          %868 = sbr.rel (%p866) target = $region148
        $region147: #{tpu_custom_call.1} parent=119 // pred_region
          %869 = dma.done [#allocation14], 16
        $region148: #{tpu_custom_call.1} parent=119 // pred_fallthru
          _
        // Predicated region
        $region149: #{tpu_custom_call.1} parent=119 // pred_check
          %p870 = pneg %p391
        $region150: #{tpu_custom_call.1} parent=119 // pred_check_branch
          %872 = sbr.rel (%p870) target = $region152
        $region151: #{tpu_custom_call.1} parent=119 // pred_region
          %873 = dma.done [#allocation17], 16
        $region152: #{tpu_custom_call.1} parent=119 // pred_fallthru
          _
        // Predicated region
        $region153: #{tpu_custom_call.1} parent=119 // pred_check
          %p874 = pneg %p412
        $region154: #{tpu_custom_call.1} parent=119 // pred_check_branch
          %876 = sbr.rel (%p874) target = $region156
        $region155: #{tpu_custom_call.1} parent=119 // pred_region
          %877 = dma.done [#allocation17], 16
        $region156: #{tpu_custom_call.1} parent=119 // pred_fallthru
          _
        // Predicated region
        $region157: #{tpu_custom_call.1} parent=119 // pred_check
          %p878 = pneg %p454
        $region158: #{tpu_custom_call.1} parent=119 // pred_check_branch
          %880 = sbr.rel (%p878) target = $region160
        $region159: #{tpu_custom_call.1} parent=119 // pred_region
          %881 = dma.done [#allocation20], 16
        $region160: #{tpu_custom_call.1} parent=119 // pred_fallthru
          _
        // Predicated region
        $region161: #{tpu_custom_call.1} parent=119 // pred_check
          %p882 = pneg %p475
        $region162: #{tpu_custom_call.1} parent=119 // pred_check_branch
          %884 = sbr.rel (%p882) target = $region164
        $region163: #{tpu_custom_call.1} parent=119 // pred_region
          %885 = dma.done [#allocation20], 2048
        $region164: #{tpu_custom_call.1} parent=119 // pred_fallthru
          _
        // Predicated region
        $region165: #{tpu_custom_call.1} parent=119 // pred_check
          %p886 = pneg %p496
        $region166: #{tpu_custom_call.1} parent=119 // pred_check_branch
          %888 = sbr.rel (%p886) target = $region168
        $region167: #{tpu_custom_call.1} parent=119 // pred_region
          %889 = dma.done [#allocation23], 16
        $region168: #{tpu_custom_call.1} parent=119 // pred_fallthru
          _
        // Predicated region
        $region169: #{tpu_custom_call.1} parent=119 // pred_check
          %p890 = pneg %p517
        $region170: #{tpu_custom_call.1} parent=119 // pred_check_branch
          %892 = sbr.rel (%p890) target = $region172
        $region171: #{tpu_custom_call.1} parent=119 // pred_region
          %893 = dma.done [#allocation23], 16
        $region172: #{tpu_custom_call.1} parent=119 // pred_fallthru
          _
        %s894 = smul.u32 4, %s50
        %p895 = scmp.lt.s32.totalorder %s894, 7
        %s896 = scalar_select %p895, %s894, 7
        %s897 = smul.addr %s896, 8
        %s898 = scalar_lea.vmem %s0, %s897
        %p899 = pneg %p71
        %p900 = pneg %p68
        %s901 = sand.u32 %s84, 1
        %s902 = scalar_lea.sflag [#allocation5], %s901
        %s903 = sand.u32 %s84, 1
        %s904 = smul.addr %s903, 4
        %s905 = scalar_lea.vmem [#allocation4], %s904
        %p906 = pneg %p97
        %p907 = pneg %p94
        %p908 = pneg %p118
        %p909 = pneg %p115
        %p910 = pneg %p139
        %p911 = pneg %p136
        %p912 = pneg %p160
        %p913 = pneg %p157
        %p914 = pneg %p181
        %p915 = pneg %p178
        %p916 = pneg %p202
        %p917 = pneg %p199
        %p918 = pneg %p223
        %p919 = pneg %p220
        %p920 = pneg %p244
        %p921 = pneg %p241
        %p922 = pneg %p265
        %p923 = pneg %p262
        %p924 = pneg %p286
        %p925 = pneg %p283
        %p926 = pneg %p307
        %p927 = pneg %p304
        %p928 = pneg %p328
        %p929 = pneg %p325
        %p930 = pneg %p349
        %p931 = pneg %p346
        %p932 = pneg %p370
        %p933 = pneg %p367
        %p934 = pneg %p391
        %p935 = pneg %p388
        %p936 = pneg %p412
        %p937 = pneg %p409
        %p938 = pneg %p433
        %p939 = pneg %p430
        %p940 = pneg %p454
        %p941 = pneg %p451
        %p942 = pneg %p475
        %p943 = pneg %p472
        %p944 = pneg %p496
        %p945 = pneg %p493
        %p946 = pneg %p517
        %p947 = pneg %p514
        %p948 = pneg %p538
        %p949 = pneg %p535
        %p950 = pneg %p559
        %p951 = pneg %p556
        %p952 = pneg %p580
        %p953 = pneg %p577
        %p954 = pneg %p606
        %p955 = pneg %p603
        %s956 = sand.u32 %s593, 1
        %s957 = scalar_lea.sflag [#allocation6], %s956
        %s958 = sand.u32 %s593, 1
        %s959 = smul.addr %s958, 4
        %s960 = scalar_lea.vmem [#allocation25], %s959
        %s961 = smul.u32 4, %s50
        %p962 = scmp.lt.s32.totalorder %s961, 7
        %s963 = scalar_select %p962, %s961, 7
        %s964 = smul.addr %s963, 8
        %s965 = scalar_lea.vmem %s0, %s964
        %s966 = smul.u32 4, %s50
        %s967 = smul.u32 4, %s50
        %s968 = smul.u32 4, %s50
        %v969 = vld [vmem:[%s965] sm:$0xff]
        %v970 = vld [vmem:[%s965 + $0x8] sm:$0xff]
        %v971 = vld [vmem:[%s965 + $0x10] sm:$0xff]
        %v972 = vld [vmem:[%s965 + $0x18] sm:$0xff]
        %v973 = vlaneseq
        %v974 = vand.u32 %v973, 127
        %975 = vset.pattern.permute.xlu0 0
        %976 = vperm.xlu0 %975, %v969
        %v977 = vpop.permute.xlu0 %976
        %978 = vset.pattern.permute.xlu0 0
        %979 = vperm.xlu0 %978, %v970
        %v980 = vpop.permute.xlu0 %979
        %981 = vset.pattern.permute.xlu0 0
        %982 = vperm.xlu0 %981, %v971
        %v983 = vpop.permute.xlu0 %982
        %984 = vset.pattern.permute.xlu0 0
        %985 = vperm.xlu0 %984, %v972
        %v986 = vpop.permute.xlu0 %985
        %vm987 = vcmp.eq.s32.totalorder %v974, %v977
        %vm988 = vcmp.eq.s32.totalorder %v974, %v980
        %vm989 = vcmp.eq.s32.totalorder %v974, %v983
        %vm990 = vcmp.eq.s32.totalorder %v974, %v986
        %v991 = vsel %vm987, 1, 0
        %v992 = vsel %vm988, 1, 0
        %v993 = vsel %vm989, 1, 0
        %v994 = vsel %vm990, 1, 0
        %v995 = vcvt.s32.f32 %v991
        %v996 = vcvt.s32.f32 %v992
        %v997 = vcvt.s32.f32 %v993
        %v998 = vcvt.s32.f32 %v994
        %v999 = vadd.f32 %v995, 0.0
        %v1000 = vadd.f32 %v996, 0.0
        %v1001 = vadd.f32 %v997, 0.0
        %v1002 = vadd.f32 %v998, 0.0
        %1003 = vset.pattern.permute.xlu0 1
        %1004 = vperm.xlu0 %1003, %v969
        %v1005 = vpop.permute.xlu0 %1004
        %1006 = vset.pattern.permute.xlu0 1
        %1007 = vperm.xlu0 %1006, %v970
        %v1008 = vpop.permute.xlu0 %1007
        %1009 = vset.pattern.permute.xlu0 1
        %1010 = vperm.xlu0 %1009, %v971
        %v1011 = vpop.permute.xlu0 %1010
        %1012 = vset.pattern.permute.xlu0 1
        %1013 = vperm.xlu0 %1012, %v972
        %v1014 = vpop.permute.xlu0 %1013
        %vm1015 = vcmp.eq.s32.totalorder %v974, %v1005
        %vm1016 = vcmp.eq.s32.totalorder %v974, %v1008
        %vm1017 = vcmp.eq.s32.totalorder %v974, %v1011
        %vm1018 = vcmp.eq.s32.totalorder %v974, %v1014
        %v1019 = vsel %vm1015, 1, 0
        %v1020 = vsel %vm1016, 1, 0
        %v1021 = vsel %vm1017, 1, 0
        %v1022 = vsel %vm1018, 1, 0
        %v1023 = vcvt.s32.f32 %v1019
        %v1024 = vcvt.s32.f32 %v1020
        %v1025 = vcvt.s32.f32 %v1021
        %v1026 = vcvt.s32.f32 %v1022
        %v1027 = vadd.f32 %v999, %v1023
        %v1028 = vadd.f32 %v1000, %v1024
        %v1029 = vadd.f32 %v1001, %v1025
        %v1030 = vadd.f32 %v1002, %v1026
        %1031 = vset.pattern.permute.xlu0 2
        %1032 = vperm.xlu0 %1031, %v969
        %v1033 = vpop.permute.xlu0 %1032
        %1034 = vset.pattern.permute.xlu0 2
        %1035 = vperm.xlu0 %1034, %v970
        %v1036 = vpop.permute.xlu0 %1035
        %1037 = vset.pattern.permute.xlu0 2
        %1038 = vperm.xlu0 %1037, %v971
        %v1039 = vpop.permute.xlu0 %1038
        %1040 = vset.pattern.permute.xlu0 2
        %1041 = vperm.xlu0 %1040, %v972
        %v1042 = vpop.permute.xlu0 %1041
        %vm1043 = vcmp.eq.s32.totalorder %v974, %v1033
        %vm1044 = vcmp.eq.s32.totalorder %v974, %v1036
        %vm1045 = vcmp.eq.s32.totalorder %v974, %v1039
        %vm1046 = vcmp.eq.s32.totalorder %v974, %v1042
        %v1047 = vsel %vm1043, 1, 0
        %v1048 = vsel %vm1044, 1, 0
        %v1049 = vsel %vm1045, 1, 0
        %v1050 = vsel %vm1046, 1, 0
        %v1051 = vcvt.s32.f32 %v1047
        %v1052 = vcvt.s32.f32 %v1048
        %v1053 = vcvt.s32.f32 %v1049
        %v1054 = vcvt.s32.f32 %v1050
        %v1055 = vadd.f32 %v1027, %v1051
        %v1056 = vadd.f32 %v1028, %v1052
        %v1057 = vadd.f32 %v1029, %v1053
        %v1058 = vadd.f32 %v1030, %v1054
        %1059 = vset.pattern.permute.xlu0 3
        %1060 = vperm.xlu0 %1059, %v969
        %v1061 = vpop.permute.xlu0 %1060
        %1062 = vset.pattern.permute.xlu0 3
        %1063 = vperm.xlu0 %1062, %v970
        %v1064 = vpop.permute.xlu0 %1063
        %1065 = vset.pattern.permute.xlu0 3
        %1066 = vperm.xlu0 %1065, %v971
        %v1067 = vpop.permute.xlu0 %1066
        %1068 = vset.pattern.permute.xlu0 3
        %1069 = vperm.xlu0 %1068, %v972
        %v1070 = vpop.permute.xlu0 %1069
        %vm1071 = vcmp.eq.s32.totalorder %v974, %v1061
        %vm1072 = vcmp.eq.s32.totalorder %v974, %v1064
        %vm1073 = vcmp.eq.s32.totalorder %v974, %v1067
        %vm1074 = vcmp.eq.s32.totalorder %v974, %v1070
        %v1075 = vsel %vm1071, 1, 0
        %v1076 = vsel %vm1072, 1, 0
        %v1077 = vsel %vm1073, 1, 0
        %v1078 = vsel %vm1074, 1, 0
        %v1079 = vcvt.s32.f32 %v1075
        %v1080 = vcvt.s32.f32 %v1076
        %v1081 = vcvt.s32.f32 %v1077
        %v1082 = vcvt.s32.f32 %v1078
        %v1083 = vadd.f32 %v1055, %v1079
        %v1084 = vadd.f32 %v1056, %v1080
        %v1085 = vadd.f32 %v1057, %v1081
        %v1086 = vadd.f32 %v1058, %v1082
        %1087 = vset.pattern.permute.xlu0 4
        %1088 = vperm.xlu0 %1087, %v969
        %v1089 = vpop.permute.xlu0 %1088
        %1090 = vset.pattern.permute.xlu0 4
        %1091 = vperm.xlu0 %1090, %v970
        %v1092 = vpop.permute.xlu0 %1091
        %1093 = vset.pattern.permute.xlu0 4
        %1094 = vperm.xlu0 %1093, %v971
        %v1095 = vpop.permute.xlu0 %1094
        %1096 = vset.pattern.permute.xlu0 4
        %1097 = vperm.xlu0 %1096, %v972
        %v1098 = vpop.permute.xlu0 %1097
        %vm1099 = vcmp.eq.s32.totalorder %v974, %v1089
        %vm1100 = vcmp.eq.s32.totalorder %v974, %v1092
        %vm1101 = vcmp.eq.s32.totalorder %v974, %v1095
        %vm1102 = vcmp.eq.s32.totalorder %v974, %v1098
        %v1103 = vsel %vm1099, 1, 0
        %v1104 = vsel %vm1100, 1, 0
        %v1105 = vsel %vm1101, 1, 0
        %v1106 = vsel %vm1102, 1, 0
        %v1107 = vcvt.s32.f32 %v1103
        %v1108 = vcvt.s32.f32 %v1104
        %v1109 = vcvt.s32.f32 %v1105
        %v1110 = vcvt.s32.f32 %v1106
        %v1111 = vadd.f32 %v1083, %v1107
        %v1112 = vadd.f32 %v1084, %v1108
        %v1113 = vadd.f32 %v1085, %v1109
        %v1114 = vadd.f32 %v1086, %v1110
        %v1115 = vld [vmem:[#allocation7] sm:$0xff]
        %v1116 = vld [vmem:[#allocation7 + $0x8] sm:$0xff]
        %v1117 = vld [vmem:[#allocation7 + $0x10] sm:$0xff]
        %v1118 = vld [vmem:[#allocation7 + $0x18] sm:$0xff]
        %v1119 = vld [vmem:[#allocation7 + $0x20] sm:$0xff]
        %v1120 = vld [vmem:[#allocation7 + $0x28] sm:$0xff]
        %v1121 = vld [vmem:[%s3] sm:$0x1]
        %v1123 = vlaneseq
        %v1124 = vshrl.u32 %v1123, 7
        %v1125 = vsub.s32 0, %v1124
        %v1126 = vrot.slane %v1121, %v1125
        %vm1128 = vcmask 392192
        %v1130 = vsel %vm1128, %v1111, 0
        %v1133 = vsel %vm1128, %v1112, 0
        %v1136 = vsel %vm1128, %v1113, 0
        %v1139 = vsel %vm1128, %v1114, 0
        %1141 = vmatprep.subr.mxu0 0.0
        %1142 = vmatpush1.msra.mxu0 0.0
        %1143 = vmatprep.subr.mxu0 0.0
        %1144 = vmatpush1.msra.mxu0 0.0
        %1145 = vmatprep.subr.mxu0 0.0
        %1146 = vmatpush1.msra.mxu0 0.0
        %1147 = vmatprep.subr.mxu0 0.0
        %1148 = vmatpush1.msra.mxu0 0.0
        %1149 = vmatprep.subr.mxu0 0.0
        %1150 = vmatpush1.msra.mxu0 0.0
        %1151 = vmatprep.subr.mxu0 0.0
        %1152 = vmatpush1.msra.mxu0 0.0
        %1153 = vmatprep.subr.mxu0 0.0
        %1154 = vmatpush1.msra.mxu0 0.0
        %1155 = vmatprep.subr.mxu0 0.0
        %1156 = vmatpush1.msra.mxu0 0.0
        %1157 = vmatprep.subr.mxu0 0.0
        %1158 = vmatpush1.msra.mxu0 0.0
        %1159 = vmatprep.subr.mxu0 0.0
        %1160 = vmatpush1.msra.mxu0 0.0
        %1161 = vmatprep.subr.mxu0 0.0
        %1162 = vmatpush1.msra.mxu0 %v1120
        %1163 = vmatprep.subr.mxu0 0.0
        %1164 = vmatpush1.msra.mxu0 %v1119
        %1165 = vmatprep.subr.mxu0 0.0
        %1166 = vmatpush1.msra.mxu0 %v1118
        %1167 = vmatprep.subr.mxu0 0.0
        %1168 = vmatpush1.msra.mxu0 %v1117
        %1169 = vmatprep.subr.mxu0 0.0
        %1170 = vmatpush1.msra.mxu0 %v1116
        %1171 = vmatprep.subr.mxu0 0.0
        %1172 = vmatpush1.msra.mxu0 %v1115
        %1173 = vmatprep.subr.mxu0 0.0
        %1174 = vmatpush2.msra.mxu0 0.0
        %1175 = vmatprep.subr.mxu0 0.0
        %1176 = vmatpush2.msra.mxu0 0.0
        %1177 = vmatprep.subr.mxu0 0.0
        %1178 = vmatpush2.msra.mxu0 0.0
        %1179 = vmatprep.subr.mxu0 0.0
        %1180 = vmatpush2.msra.mxu0 0.0
        %1181 = vmatprep.subr.mxu0 0.0
        %1182 = vmatpush2.msra.mxu0 0.0
        %1183 = vmatprep.subr.mxu0 0.0
        %1184 = vmatpush2.msra.mxu0 0.0
        %1185 = vmatprep.subr.mxu0 0.0
        %1186 = vmatpush2.msra.mxu0 0.0
        %1187 = vmatprep.subr.mxu0 0.0
        %1188 = vmatpush2.msra.mxu0 0.0
        %1189 = vmatprep.subr.mxu0 0.0
        %1190 = vmatpush2.msra.mxu0 0.0
        %1191 = vmatprep.subr.mxu0 0.0
        %1192 = vmatpush2.msra.mxu0 0.0
        %1193 = vmatprep.subr.mxu0 0.0
        %1194 = vmatpush2.msra.mxu0 0.0
        %1195 = vmatprep.subr.mxu0 0.0
        %1196 = vmatpush2.msra.mxu0 0.0
        %1197 = vmatprep.subr.mxu0 0.0
        %1198 = vmatpush2.msra.mxu0 0.0
        %1199 = vmatprep.subr.mxu0 0.0
        %1200 = vmatpush2.msra.mxu0 0.0
        %1201 = vmatprep.subr.mxu0 0.0
        %1202 = vmatpush2.msra.mxu0 0.0
        %1203 = vmatprep.subr.mxu0 0.0
        %1204 = vmatpush2.msra.mxu0 0.0
        %1205 = vmatprep.mubr.f32.mxu0 0.0
        %1206 = vmatmul.mubr.f32.gmra.mxu0 %v1130
        %v1207 = vpop.f32.mrf.mxu0
        %v1208 = vadd.f32 %v1126, %v1207
        %v1209 = vpop.f32.mrf.mxu0
        %1210 = vmatprep.mubr.f32.mxu0 0.0
        %1211 = vmatmul.mubr.f32.gmra.mxu0 %v1133
        %v1212 = vpop.f32.mrf.mxu0
        %v1213 = vadd.f32 %v1126, %v1212
        %v1214 = vpop.f32.mrf.mxu0
        %1215 = vmatprep.mubr.f32.mxu0 0.0
        %1216 = vmatmul.mubr.f32.gmra.mxu0 %v1136
        %v1217 = vpop.f32.mrf.mxu0
        %v1218 = vadd.f32 %v1126, %v1217
        %v1219 = vpop.f32.mrf.mxu0
        %1220 = vmatprep.mubr.f32.mxu0 0.0
        %1221 = vmatmul.mubr.f32.gmra.mxu0 %v1139
        %v1222 = vpop.f32.mrf.mxu0
        %v1223 = vadd.f32 %v1126, %v1222
        %v1224 = vpop.f32.mrf.mxu0
        %1225 = vdwg.mxu0
        %v1226 = vld [vmem:[%s4] sm:$0xff]
        %v1227 = vld [vmem:[%s4 + $0x8] sm:$0xff]
        %v1228 = vld [vmem:[%s4 + $0x10] sm:$0xff]
        %v1229 = vld [vmem:[%s4 + $0x18] sm:$0xff]
        %v1230 = vld [vmem:[%s4 + $0x20] sm:$0xff]
        %v1231 = vld [vmem:[%s4 + $0x28] sm:$0xff]
        %v1232 = vld [vmem:[%s4 + $0x30] sm:$0xff]
        %v1233 = vld [vmem:[%s4 + $0x38] sm:$0xff]
        %v1234 = vld [vmem:[%s4 + $0x40] sm:$0xff]
        %v1235 = vld [vmem:[%s4 + $0x48] sm:$0xff]
        %v1236 = vld [vmem:[%s4 + $0x50] sm:$0xff]
        %v1237 = vld [vmem:[%s4 + $0x58] sm:$0xff]
        %v1238 = vld [vmem:[%s4 + $0x60] sm:$0xff]
        %v1239 = vld [vmem:[%s4 + $0x68] sm:$0xff]
        %v1240 = vld [vmem:[%s4 + $0x70] sm:$0xff]
        %v1241 = vld [vmem:[%s4 + $0x78] sm:$0xff]
        %v1242 = vld [vmem:[%s4 + $0x80] sm:$0xff]
        %v1243 = vld [vmem:[%s4 + $0x88] sm:$0xff]
        %v1244 = vld [vmem:[%s4 + $0x90] sm:$0xff]
        %v1245 = vld [vmem:[%s4 + $0x98] sm:$0xff]
        %v1246 = vld [vmem:[%s4 + $0xa0] sm:$0xff]
        %v1247 = vld [vmem:[%s4 + $0xa8] sm:$0xff]
        %v1248 = vld [vmem:[%s4 + $0xb0] sm:$0xff]
        %v1249 = vld [vmem:[%s4 + $0xb8] sm:$0xff]
        %v1250 = vld [vmem:[%s4 + $0xc0] sm:$0xff]
        %v1251 = vld [vmem:[%s4 + $0xc8] sm:$0xff]
        %v1252 = vld [vmem:[%s4 + $0xd0] sm:$0xff]
        %v1253 = vld [vmem:[%s4 + $0xd8] sm:$0xff]
        %v1254 = vld [vmem:[%s4 + $0xe0] sm:$0xff]
        %v1255 = vld [vmem:[%s4 + $0xe8] sm:$0xff]
        %v1256 = vld [vmem:[%s4 + $0xf0] sm:$0xff]
        %v1257 = vld [vmem:[%s4 + $0xf8] sm:$0xff]
        %v1258 = vld [vmem:[%s4 + $0x100] sm:$0xff]
        %v1259 = vld [vmem:[%s4 + $0x108] sm:$0xff]
        %v1260 = vld [vmem:[%s4 + $0x110] sm:$0xff]
        %v1261 = vld [vmem:[%s4 + $0x118] sm:$0xff]
        %v1262 = vld [vmem:[%s4 + $0x120] sm:$0xff]
        %v1263 = vld [vmem:[%s4 + $0x128] sm:$0xff]
        %v1264 = vld [vmem:[%s4 + $0x130] sm:$0xff]
        %v1265 = vld [vmem:[%s4 + $0x138] sm:$0xff]
        %v1266 = vld [vmem:[%s4 + $0x140] sm:$0xff]
        %v1267 = vld [vmem:[%s4 + $0x148] sm:$0xff]
        %v1268 = vld [vmem:[%s4 + $0x150] sm:$0xff]
        %v1269 = vld [vmem:[%s4 + $0x158] sm:$0xff]
        %v1270 = vld [vmem:[%s4 + $0x160] sm:$0xff]
        %v1271 = vld [vmem:[%s4 + $0x168] sm:$0xff]
        %v1272 = vld [vmem:[%s4 + $0x170] sm:$0xff]
        %v1273 = vld [vmem:[%s4 + $0x178] sm:$0xff]
        %v1274 = vld [vmem:[%s4 + $0x180] sm:$0xff]
        %v1275 = vld [vmem:[%s4 + $0x188] sm:$0xff]
        %v1276 = vld [vmem:[%s4 + $0x190] sm:$0xff]
        %v1277 = vld [vmem:[%s4 + $0x198] sm:$0xff]
        %v1278 = vld [vmem:[%s4 + $0x1a0] sm:$0xff]
        %v1279 = vld [vmem:[%s4 + $0x1a8] sm:$0xff]
        %v1280 = vld [vmem:[%s4 + $0x1b0] sm:$0xff]
        %v1281 = vld [vmem:[%s4 + $0x1b8] sm:$0xff]
        %v1282 = vld [vmem:[%s4 + $0x1c0] sm:$0xff]
        %v1283 = vld [vmem:[%s4 + $0x1c8] sm:$0xff]
        %v1284 = vld [vmem:[%s4 + $0x1d0] sm:$0xff]
        %v1285 = vld [vmem:[%s4 + $0x1d8] sm:$0xff]
        %v1286 = vld [vmem:[%s4 + $0x1e0] sm:$0xff]
        %v1287 = vld [vmem:[%s4 + $0x1e8] sm:$0xff]
        %v1288 = vld [vmem:[%s4 + $0x1f0] sm:$0xff]
        %v1289 = vld [vmem:[%s4 + $0x1f8] sm:$0xff]
        %v1290 = vld [vmem:[#allocation9] sm:$0xf]
        %v1292 = vlaneseq
        %v1293 = vshrl.u32 %v1292, 7
        %v1294 = vsub.s32 0, %v1293
        %v1295 = vrot.slane %v1290, %v1294
        %v1296 = vlaneseq
        %v1297 = vshrl.u32 %v1296, 7
        %v1298 = vsub.s32 1, %v1297
        %v1299 = vrot.slane %v1290, %v1298
        %v1300 = vlaneseq
        %v1301 = vshrl.u32 %v1300, 7
        %v1302 = vsub.s32 2, %v1301
        %v1303 = vrot.slane %v1290, %v1302
        %v1304 = vlaneseq
        %v1305 = vshrl.u32 %v1304, 7
        %v1306 = vsub.s32 3, %v1305
        %v1307 = vrot.slane %v1290, %v1306
        %1312 = vmatprep.subr.mxu0 %v1287
        %1313 = vmatpush1.msra.mxu0 %v1286
        %1314 = vmatprep.subr.mxu0 %v1283
        %1315 = vmatpush1.msra.mxu0 %v1282
        %1316 = vmatprep.subr.mxu0 %v1279
        %1317 = vmatpush1.msra.mxu0 %v1278
        %1318 = vmatprep.subr.mxu0 %v1275
        %1319 = vmatpush1.msra.mxu0 %v1274
        %1320 = vmatprep.subr.mxu0 %v1271
        %1321 = vmatpush1.msra.mxu0 %v1270
        %1322 = vmatprep.subr.mxu0 %v1267
        %1323 = vmatpush1.msra.mxu0 %v1266
        %1324 = vmatprep.subr.mxu0 %v1263
        %1325 = vmatpush1.msra.mxu0 %v1262
        %1326 = vmatprep.subr.mxu0 %v1259
        %1327 = vmatpush1.msra.mxu0 %v1258
        %1328 = vmatprep.subr.mxu0 %v1255
        %1329 = vmatpush1.msra.mxu0 %v1254
        %1330 = vmatprep.subr.mxu0 %v1251
        %1331 = vmatpush1.msra.mxu0 %v1250
        %1332 = vmatprep.subr.mxu0 %v1247
        %1333 = vmatpush1.msra.mxu0 %v1246
        %1334 = vmatprep.subr.mxu0 %v1243
        %1335 = vmatpush1.msra.mxu0 %v1242
        %1336 = vmatprep.subr.mxu0 %v1239
        %1337 = vmatpush1.msra.mxu0 %v1238
        %1338 = vmatprep.subr.mxu0 %v1235
        %1339 = vmatpush1.msra.mxu0 %v1234
        %1340 = vmatprep.subr.mxu0 %v1231
        %1341 = vmatpush1.msra.mxu0 %v1230
        %1342 = vmatprep.subr.mxu0 %v1227
        %1343 = vmatpush1.msra.mxu0 %v1226
        %1344 = vmatprep.subr.mxu0 0.0
        %1345 = vmatpush2.msra.mxu0 0.0
        %1346 = vmatprep.subr.mxu0 0.0
        %1347 = vmatpush2.msra.mxu0 0.0
        %1348 = vmatprep.subr.mxu0 0.0
        %1349 = vmatpush2.msra.mxu0 0.0
        %1350 = vmatprep.subr.mxu0 0.0
        %1351 = vmatpush2.msra.mxu0 0.0
        %1352 = vmatprep.subr.mxu0 0.0
        %1353 = vmatpush2.msra.mxu0 0.0
        %1354 = vmatprep.subr.mxu0 0.0
        %1355 = vmatpush2.msra.mxu0 0.0
        %1356 = vmatprep.subr.mxu0 0.0
        %1357 = vmatpush2.msra.mxu0 0.0
        %1358 = vmatprep.subr.mxu0 0.0
        %1359 = vmatpush2.msra.mxu0 0.0
        %1360 = vmatprep.subr.mxu0 0.0
        %1361 = vmatpush2.msra.mxu0 0.0
        %1362 = vmatprep.subr.mxu0 0.0
        %1363 = vmatpush2.msra.mxu0 0.0
        %1364 = vmatprep.subr.mxu0 0.0
        %1365 = vmatpush2.msra.mxu0 0.0
        %1366 = vmatprep.subr.mxu0 0.0
        %1367 = vmatpush2.msra.mxu0 0.0
        %1368 = vmatprep.subr.mxu0 0.0
        %1369 = vmatpush2.msra.mxu0 0.0
        %1370 = vmatprep.subr.mxu0 0.0
        %1371 = vmatpush2.msra.mxu0 0.0
        %1372 = vmatprep.subr.mxu0 0.0
        %1373 = vmatpush2.msra.mxu0 0.0
        %1374 = vmatprep.subr.mxu0 0.0
        %1375 = vmatpush2.msra.mxu0 0.0
        %1376 = vmatprep.mubr.f32.mxu0 0.0
        %1377 = vmatmul.mubr.f32.gmra.mxu0 %v1208
        %v1378 = vpop.f32.mrf.mxu0
        %v1379 = vadd.f32 %v1295, %v1378
        %v1380 = vpop.f32.mrf.mxu0
        %v1381 = vadd.f32 %v1299, %v1380
        %1382 = vmatprep.mubr.f32.mxu0 0.0
        %1383 = vmatmul.mubr.f32.gmra.mxu0 %v1213
        %v1384 = vpop.f32.mrf.mxu0
        %v1385 = vadd.f32 %v1295, %v1384
        %v1386 = vpop.f32.mrf.mxu0
        %v1387 = vadd.f32 %v1299, %v1386
        %1388 = vmatprep.mubr.f32.mxu0 0.0
        %1389 = vmatmul.mubr.f32.gmra.mxu0 %v1218
        %v1390 = vpop.f32.mrf.mxu0
        %v1391 = vadd.f32 %v1295, %v1390
        %v1392 = vpop.f32.mrf.mxu0
        %v1393 = vadd.f32 %v1299, %v1392
        %1394 = vmatprep.mubr.f32.mxu0 0.0
        %1395 = vmatmul.mubr.f32.gmra.mxu0 %v1223
        %v1396 = vpop.f32.mrf.mxu0
        %v1397 = vadd.f32 %v1295, %v1396
        %v1398 = vpop.f32.mrf.mxu0
        %v1399 = vadd.f32 %v1299, %v1398
        %1400 = vdwg.mxu0
        %1401 = vmatprep.subr.mxu0 %v1289
        %1402 = vmatpush1.msra.mxu0 %v1288
        %1403 = vmatprep.subr.mxu0 %v1285
        %1404 = vmatpush1.msra.mxu0 %v1284
        %1405 = vmatprep.subr.mxu0 %v1281
        %1406 = vmatpush1.msra.mxu0 %v1280
        %1407 = vmatprep.subr.mxu0 %v1277
        %1408 = vmatpush1.msra.mxu0 %v1276
        %1409 = vmatprep.subr.mxu0 %v1273
        %1410 = vmatpush1.msra.mxu0 %v1272
        %1411 = vmatprep.subr.mxu0 %v1269
        %1412 = vmatpush1.msra.mxu0 %v1268
        %1413 = vmatprep.subr.mxu0 %v1265
        %1414 = vmatpush1.msra.mxu0 %v1264
        %1415 = vmatprep.subr.mxu0 %v1261
        %1416 = vmatpush1.msra.mxu0 %v1260
        %1417 = vmatprep.subr.mxu0 %v1257
        %1418 = vmatpush1.msra.mxu0 %v1256
        %1419 = vmatprep.subr.mxu0 %v1253
        %1420 = vmatpush1.msra.mxu0 %v1252
        %1421 = vmatprep.subr.mxu0 %v1249
        %1422 = vmatpush1.msra.mxu0 %v1248
        %1423 = vmatprep.subr.mxu0 %v1245
        %1424 = vmatpush1.msra.mxu0 %v1244
        %1425 = vmatprep.subr.mxu0 %v1241
        %1426 = vmatpush1.msra.mxu0 %v1240
        %1427 = vmatprep.subr.mxu0 %v1237
        %1428 = vmatpush1.msra.mxu0 %v1236
        %1429 = vmatprep.subr.mxu0 %v1233
        %1430 = vmatpush1.msra.mxu0 %v1232
        %1431 = vmatprep.subr.mxu0 %v1229
        %1432 = vmatpush1.msra.mxu0 %v1228
        %1433 = vmatprep.subr.mxu0 0.0
        %1434 = vmatpush2.msra.mxu0 0.0
        %1435 = vmatprep.subr.mxu0 0.0
        %1436 = vmatpush2.msra.mxu0 0.0
        %1437 = vmatprep.subr.mxu0 0.0
        %1438 = vmatpush2.msra.mxu0 0.0
        %1439 = vmatprep.subr.mxu0 0.0
        %1440 = vmatpush2.msra.mxu0 0.0
        %1441 = vmatprep.subr.mxu0 0.0
        %1442 = vmatpush2.msra.mxu0 0.0
        %1443 = vmatprep.subr.mxu0 0.0
        %1444 = vmatpush2.msra.mxu0 0.0
        %1445 = vmatprep.subr.mxu0 0.0
        %1446 = vmatpush2.msra.mxu0 0.0
        %1447 = vmatprep.subr.mxu0 0.0
        %1448 = vmatpush2.msra.mxu0 0.0
        %1449 = vmatprep.subr.mxu0 0.0
        %1450 = vmatpush2.msra.mxu0 0.0
        %1451 = vmatprep.subr.mxu0 0.0
        %1452 = vmatpush2.msra.mxu0 0.0
        %1453 = vmatprep.subr.mxu0 0.0
        %1454 = vmatpush2.msra.mxu0 0.0
        %1455 = vmatprep.subr.mxu0 0.0
        %1456 = vmatpush2.msra.mxu0 0.0
        %1457 = vmatprep.subr.mxu0 0.0
        %1458 = vmatpush2.msra.mxu0 0.0
        %1459 = vmatprep.subr.mxu0 0.0
        %1460 = vmatpush2.msra.mxu0 0.0
        %1461 = vmatprep.subr.mxu0 0.0
        %1462 = vmatpush2.msra.mxu0 0.0
        %1463 = vmatprep.subr.mxu0 0.0
        %1464 = vmatpush2.msra.mxu0 0.0
        %1465 = vmatprep.mubr.f32.mxu0 0.0
        %1466 = vmatmul.mubr.f32.gmra.mxu0 %v1208
        %v1467 = vpop.f32.mrf.mxu0
        %v1468 = vadd.f32 %v1303, %v1467
        %v1469 = vpop.f32.mrf.mxu0
        %v1470 = vadd.f32 %v1307, %v1469
        %1471 = vmatprep.mubr.f32.mxu0 0.0
        %1472 = vmatmul.mubr.f32.gmra.mxu0 %v1213
        %v1473 = vpop.f32.mrf.mxu0
        %v1474 = vadd.f32 %v1303, %v1473
        %v1475 = vpop.f32.mrf.mxu0
        %v1476 = vadd.f32 %v1307, %v1475
        %1477 = vmatprep.mubr.f32.mxu0 0.0
        %1478 = vmatmul.mubr.f32.gmra.mxu0 %v1218
        %v1479 = vpop.f32.mrf.mxu0
        %v1480 = vadd.f32 %v1303, %v1479
        %v1481 = vpop.f32.mrf.mxu0
        %v1482 = vadd.f32 %v1307, %v1481
        %1483 = vmatprep.mubr.f32.mxu0 0.0
        %1484 = vmatmul.mubr.f32.gmra.mxu0 %v1223
        %v1485 = vpop.f32.mrf.mxu0
        %v1486 = vadd.f32 %v1303, %v1485
        %v1487 = vpop.f32.mrf.mxu0
        %v1488 = vadd.f32 %v1307, %v1487
        %1489 = vdwg.mxu0
        %v1490 = vld [vmem:[%s5] sm:$0xff]
        %v1491 = vld [vmem:[%s5 + $0x8] sm:$0xff]
        %v1492 = vld [vmem:[%s5 + $0x10] sm:$0xff]
        %v1493 = vld [vmem:[%s5 + $0x18] sm:$0xff]
        %v1494 = vld [vmem:[%s5 + $0x20] sm:$0xff]
        %v1495 = vld [vmem:[%s5 + $0x28] sm:$0xff]
        %v1496 = vld [vmem:[%s5 + $0x30] sm:$0xff]
        %v1497 = vld [vmem:[%s5 + $0x38] sm:$0xff]
        %v1498 = vld [vmem:[%s5 + $0x40] sm:$0xff]
        %v1499 = vld [vmem:[%s5 + $0x48] sm:$0xff]
        %v1500 = vld [vmem:[%s5 + $0x50] sm:$0xff]
        %v1501 = vld [vmem:[%s5 + $0x58] sm:$0xff]
        %v1502 = vld [vmem:[%s5 + $0x60] sm:$0xff]
        %v1503 = vld [vmem:[%s5 + $0x68] sm:$0xff]
        %v1504 = vld [vmem:[%s5 + $0x70] sm:$0xff]
        %v1505 = vld [vmem:[%s5 + $0x78] sm:$0xff]
        %v1506 = vld [vmem:[%s5 + $0x80] sm:$0xff]
        %v1507 = vld [vmem:[%s5 + $0x88] sm:$0xff]
        %v1508 = vld [vmem:[%s5 + $0x90] sm:$0xff]
        %v1509 = vld [vmem:[%s5 + $0x98] sm:$0xff]
        %v1510 = vld [vmem:[%s5 + $0xa0] sm:$0xff]
        %v1511 = vld [vmem:[%s5 + $0xa8] sm:$0xff]
        %v1512 = vld [vmem:[%s5 + $0xb0] sm:$0xff]
        %v1513 = vld [vmem:[%s5 + $0xb8] sm:$0xff]
        %v1514 = vld [vmem:[%s5 + $0xc0] sm:$0xff]
        %v1515 = vld [vmem:[%s5 + $0xc8] sm:$0xff]
        %v1516 = vld [vmem:[%s5 + $0xd0] sm:$0xff]
        %v1517 = vld [vmem:[%s5 + $0xd8] sm:$0xff]
        %v1518 = vld [vmem:[%s5 + $0xe0] sm:$0xff]
        %v1519 = vld [vmem:[%s5 + $0xe8] sm:$0xff]
        %v1520 = vld [vmem:[%s5 + $0xf0] sm:$0xff]
        %v1521 = vld [vmem:[%s5 + $0xf8] sm:$0xff]
        %v1522 = vld [vmem:[%s5 + $0x100] sm:$0xff]
        %v1523 = vld [vmem:[%s5 + $0x108] sm:$0xff]
        %v1524 = vld [vmem:[%s5 + $0x110] sm:$0xff]
        %v1525 = vld [vmem:[%s5 + $0x118] sm:$0xff]
        %v1526 = vld [vmem:[%s5 + $0x120] sm:$0xff]
        %v1527 = vld [vmem:[%s5 + $0x128] sm:$0xff]
        %v1528 = vld [vmem:[%s5 + $0x130] sm:$0xff]
        %v1529 = vld [vmem:[%s5 + $0x138] sm:$0xff]
        %v1530 = vld [vmem:[%s5 + $0x140] sm:$0xff]
        %v1531 = vld [vmem:[%s5 + $0x148] sm:$0xff]
        %v1532 = vld [vmem:[%s5 + $0x150] sm:$0xff]
        %v1533 = vld [vmem:[%s5 + $0x158] sm:$0xff]
        %v1534 = vld [vmem:[%s5 + $0x160] sm:$0xff]
        %v1535 = vld [vmem:[%s5 + $0x168] sm:$0xff]
        %v1536 = vld [vmem:[%s5 + $0x170] sm:$0xff]
        %v1537 = vld [vmem:[%s5 + $0x178] sm:$0xff]
        %v1538 = vld [vmem:[%s5 + $0x180] sm:$0xff]
        %v1539 = vld [vmem:[%s5 + $0x188] sm:$0xff]
        %v1540 = vld [vmem:[%s5 + $0x190] sm:$0xff]
        %v1541 = vld [vmem:[%s5 + $0x198] sm:$0xff]
        %v1542 = vld [vmem:[%s5 + $0x1a0] sm:$0xff]
        %v1543 = vld [vmem:[%s5 + $0x1a8] sm:$0xff]
        %v1544 = vld [vmem:[%s5 + $0x1b0] sm:$0xff]
        %v1545 = vld [vmem:[%s5 + $0x1b8] sm:$0xff]
        %v1546 = vld [vmem:[%s5 + $0x1c0] sm:$0xff]
        %v1547 = vld [vmem:[%s5 + $0x1c8] sm:$0xff]
        %v1548 = vld [vmem:[%s5 + $0x1d0] sm:$0xff]
        %v1549 = vld [vmem:[%s5 + $0x1d8] sm:$0xff]
        %v1550 = vld [vmem:[%s5 + $0x1e0] sm:$0xff]
        %v1551 = vld [vmem:[%s5 + $0x1e8] sm:$0xff]
        %v1552 = vld [vmem:[%s5 + $0x1f0] sm:$0xff]
        %v1553 = vld [vmem:[%s5 + $0x1f8] sm:$0xff]
        %1554 = vmatprep.subr.mxu0 %v1551
        %1555 = vmatpush1.msra.mxu0 %v1550
        %1556 = vmatprep.subr.mxu0 %v1547
        %1557 = vmatpush1.msra.mxu0 %v1546
        %1558 = vmatprep.subr.mxu0 %v1543
        %1559 = vmatpush1.msra.mxu0 %v1542
        %1560 = vmatprep.subr.mxu0 %v1539
        %1561 = vmatpush1.msra.mxu0 %v1538
        %1562 = vmatprep.subr.mxu0 %v1535
        %1563 = vmatpush1.msra.mxu0 %v1534
        %1564 = vmatprep.subr.mxu0 %v1531
        %1565 = vmatpush1.msra.mxu0 %v1530
        %1566 = vmatprep.subr.mxu0 %v1527
        %1567 = vmatpush1.msra.mxu0 %v1526
        %1568 = vmatprep.subr.mxu0 %v1523
        %1569 = vmatpush1.msra.mxu0 %v1522
        %1570 = vmatprep.subr.mxu0 %v1519
        %1571 = vmatpush1.msra.mxu0 %v1518
        %1572 = vmatprep.subr.mxu0 %v1515
        %1573 = vmatpush1.msra.mxu0 %v1514
        %1574 = vmatprep.subr.mxu0 %v1511
        %1575 = vmatpush1.msra.mxu0 %v1510
        %1576 = vmatprep.subr.mxu0 %v1507
        %1577 = vmatpush1.msra.mxu0 %v1506
        %1578 = vmatprep.subr.mxu0 %v1503
        %1579 = vmatpush1.msra.mxu0 %v1502
        %1580 = vmatprep.subr.mxu0 %v1499
        %1581 = vmatpush1.msra.mxu0 %v1498
        %1582 = vmatprep.subr.mxu0 %v1495
        %1583 = vmatpush1.msra.mxu0 %v1494
        %1584 = vmatprep.subr.mxu0 %v1491
        %1585 = vmatpush1.msra.mxu0 %v1490
        %1586 = vmatprep.subr.mxu0 0.0
        %1587 = vmatpush2.msra.mxu0 0.0
        %1588 = vmatprep.subr.mxu0 0.0
        %1589 = vmatpush2.msra.mxu0 0.0
        %1590 = vmatprep.subr.mxu0 0.0
        %1591 = vmatpush2.msra.mxu0 0.0
        %1592 = vmatprep.subr.mxu0 0.0
        %1593 = vmatpush2.msra.mxu0 0.0
        %1594 = vmatprep.subr.mxu0 0.0
        %1595 = vmatpush2.msra.mxu0 0.0
        %1596 = vmatprep.subr.mxu0 0.0
        %1597 = vmatpush2.msra.mxu0 0.0
        %1598 = vmatprep.subr.mxu0 0.0
        %1599 = vmatpush2.msra.mxu0 0.0
        %1600 = vmatprep.subr.mxu0 0.0
        %1601 = vmatpush2.msra.mxu0 0.0
        %1602 = vmatprep.subr.mxu0 0.0
        %1603 = vmatpush2.msra.mxu0 0.0
        %1604 = vmatprep.subr.mxu0 0.0
        %1605 = vmatpush2.msra.mxu0 0.0
        %1606 = vmatprep.subr.mxu0 0.0
        %1607 = vmatpush2.msra.mxu0 0.0
        %1608 = vmatprep.subr.mxu0 0.0
        %1609 = vmatpush2.msra.mxu0 0.0
        %1610 = vmatprep.subr.mxu0 0.0
        %1611 = vmatpush2.msra.mxu0 0.0
        %1612 = vmatprep.subr.mxu0 0.0
        %1613 = vmatpush2.msra.mxu0 0.0
        %1614 = vmatprep.subr.mxu0 0.0
        %1615 = vmatpush2.msra.mxu0 0.0
        %1616 = vmatprep.subr.mxu0 0.0
        %1617 = vmatpush2.msra.mxu0 0.0
        %1618 = vmatprep.mubr.f32.mxu0 0.0
        %1619 = vmatmul.mubr.f32.gmra.mxu0 0.0
        %v1620 = vpop.f32.mrf.mxu0
        %v1621 = vadd.f32 0.0, %v1620
        %v1622 = vpop.f32.mrf.mxu0
        %v1623 = vadd.f32 0.0, %v1622
        %1624 = vdwg.mxu0
        %1625 = vmatprep.subr.mxu0 %v1553
        %1626 = vmatpush1.msra.mxu0 %v1552
        %1627 = vmatprep.subr.mxu0 %v1549
        %1628 = vmatpush1.msra.mxu0 %v1548
        %1629 = vmatprep.subr.mxu0 %v1545
        %1630 = vmatpush1.msra.mxu0 %v1544
        %1631 = vmatprep.subr.mxu0 %v1541
        %1632 = vmatpush1.msra.mxu0 %v1540
        %1633 = vmatprep.subr.mxu0 %v1537
        %1634 = vmatpush1.msra.mxu0 %v1536
        %1635 = vmatprep.subr.mxu0 %v1533
        %1636 = vmatpush1.msra.mxu0 %v1532
        %1637 = vmatprep.subr.mxu0 %v1529
        %1638 = vmatpush1.msra.mxu0 %v1528
        %1639 = vmatprep.subr.mxu0 %v1525
        %1640 = vmatpush1.msra.mxu0 %v1524
        %1641 = vmatprep.subr.mxu0 %v1521
        %1642 = vmatpush1.msra.mxu0 %v1520
        %1643 = vmatprep.subr.mxu0 %v1517
        %1644 = vmatpush1.msra.mxu0 %v1516
        %1645 = vmatprep.subr.mxu0 %v1513
        %1646 = vmatpush1.msra.mxu0 %v1512
        %1647 = vmatprep.subr.mxu0 %v1509
        %1648 = vmatpush1.msra.mxu0 %v1508
        %1649 = vmatprep.subr.mxu0 %v1505
        %1650 = vmatpush1.msra.mxu0 %v1504
        %1651 = vmatprep.subr.mxu0 %v1501
        %1652 = vmatpush1.msra.mxu0 %v1500
        %1653 = vmatprep.subr.mxu0 %v1497
        %1654 = vmatpush1.msra.mxu0 %v1496
        %1655 = vmatprep.subr.mxu0 %v1493
        %1656 = vmatpush1.msra.mxu0 %v1492
        %1657 = vmatprep.subr.mxu0 0.0
        %1658 = vmatpush2.msra.mxu0 0.0
        %1659 = vmatprep.subr.mxu0 0.0
        %1660 = vmatpush2.msra.mxu0 0.0
        %1661 = vmatprep.subr.mxu0 0.0
        %1662 = vmatpush2.msra.mxu0 0.0
        %1663 = vmatprep.subr.mxu0 0.0
        %1664 = vmatpush2.msra.mxu0 0.0
        %1665 = vmatprep.subr.mxu0 0.0
        %1666 = vmatpush2.msra.mxu0 0.0
        %1667 = vmatprep.subr.mxu0 0.0
        %1668 = vmatpush2.msra.mxu0 0.0
        %1669 = vmatprep.subr.mxu0 0.0
        %1670 = vmatpush2.msra.mxu0 0.0
        %1671 = vmatprep.subr.mxu0 0.0
        %1672 = vmatpush2.msra.mxu0 0.0
        %1673 = vmatprep.subr.mxu0 0.0
        %1674 = vmatpush2.msra.mxu0 0.0
        %1675 = vmatprep.subr.mxu0 0.0
        %1676 = vmatpush2.msra.mxu0 0.0
        %1677 = vmatprep.subr.mxu0 0.0
        %1678 = vmatpush2.msra.mxu0 0.0
        %1679 = vmatprep.subr.mxu0 0.0
        %1680 = vmatpush2.msra.mxu0 0.0
        %1681 = vmatprep.subr.mxu0 0.0
        %1682 = vmatpush2.msra.mxu0 0.0
        %1683 = vmatprep.subr.mxu0 0.0
        %1684 = vmatpush2.msra.mxu0 0.0
        %1685 = vmatprep.subr.mxu0 0.0
        %1686 = vmatpush2.msra.mxu0 0.0
        %1687 = vmatprep.subr.mxu0 0.0
        %1688 = vmatpush2.msra.mxu0 0.0
        %1689 = vmatprep.mubr.f32.mxu0 0.0
        %1690 = vmatmul.mubr.f32.gmra.mxu0 0.0
        %v1691 = vpop.f32.mrf.mxu0
        %v1692 = vadd.f32 0.0, %v1691
        %v1693 = vpop.f32.mrf.mxu0
        %v1694 = vadd.f32 0.0, %v1693
        %1695 = vdwg.mxu0
        %v1700 = vrot.slane %v1621, 1
        %v1701 = vrot.slane %v1623, 1
        %v1702 = vrot.slane %v1692, 1
        %v1703 = vrot.slane %v1694, 1
        %v1704 = vrot.slane %v1621, 2
        %v1705 = vrot.slane %v1623, 2
        %v1706 = vrot.slane %v1692, 2
        %v1707 = vrot.slane %v1694, 2
        %v1708 = vrot.slane %v1621, 3
        %v1709 = vrot.slane %v1623, 3
        %v1710 = vrot.slane %v1692, 3
        %v1711 = vrot.slane %v1694, 3
        %v1728 = vadd.f32 %v1379, %v1621
        %v1729 = vadd.f32 %v1381, %v1623
        %v1730 = vadd.f32 %v1468, %v1692
        %v1731 = vadd.f32 %v1470, %v1694
        %v1732 = vadd.f32 %v1385, %v1700
        %v1733 = vadd.f32 %v1387, %v1701
        %v1734 = vadd.f32 %v1474, %v1702
        %v1735 = vadd.f32 %v1476, %v1703
        %v1736 = vadd.f32 %v1391, %v1704
        %v1737 = vadd.f32 %v1393, %v1705
        %v1738 = vadd.f32 %v1480, %v1706
        %v1739 = vadd.f32 %v1482, %v1707
        %v1740 = vadd.f32 %v1397, %v1708
        %v1741 = vadd.f32 %v1399, %v1709
        %v1742 = vadd.f32 %v1486, %v1710
        %v1743 = vadd.f32 %v1488, %v1711
        %v1744 = vsub.f32 0.0, %v1728
        %v1745 = vsub.f32 0.0, %v1732
        %v1746 = vsub.f32 0.0, %v1736
        %v1747 = vsub.f32 0.0, %v1740
        %v1748 = vmul.f32 %v1744, 1.442695
        %v1749 = vpow.pop %v1748
        %v1750 = vmul.f32 %v1745, 1.442695
        %v1751 = vpow.pop %v1750
        %v1752 = vmul.f32 %v1746, 1.442695
        %v1753 = vpow.pop %v1752
        %v1754 = vmul.f32 %v1747, 1.442695
        %v1755 = vpow.pop %v1754
        %v1756 = vadd.f32 %v1749, 1.0
        %v1757 = vadd.f32 %v1751, 1.0
        %v1758 = vadd.f32 %v1753, 1.0
        %v1759 = vadd.f32 %v1755, 1.0
        %v1760 = vrcp.pop %v1756
        %v1761 = vmul.f32 1.0, %v1760
        %v1762 = vrcp.pop %v1757
        %v1763 = vmul.f32 1.0, %v1762
        %v1764 = vrcp.pop %v1758
        %v1765 = vmul.f32 1.0, %v1764
        %v1766 = vrcp.pop %v1759
        %v1767 = vmul.f32 1.0, %v1766
        %v1768 = vsub.f32 0.0, %v1729
        %v1769 = vsub.f32 0.0, %v1733
        %v1770 = vsub.f32 0.0, %v1737
        %v1771 = vsub.f32 0.0, %v1741
        %v1772 = vmul.f32 %v1768, 1.442695
        %v1773 = vpow.pop %v1772
        %v1774 = vmul.f32 %v1769, 1.442695
        %v1775 = vpow.pop %v1774
        %v1776 = vmul.f32 %v1770, 1.442695
        %v1777 = vpow.pop %v1776
        %v1778 = vmul.f32 %v1771, 1.442695
        %v1779 = vpow.pop %v1778
        %v1780 = vadd.f32 %v1773, 1.0
        %v1781 = vadd.f32 %v1775, 1.0
        %v1782 = vadd.f32 %v1777, 1.0
        %v1783 = vadd.f32 %v1779, 1.0
        %v1784 = vrcp.pop %v1780
        %v1785 = vmul.f32 1.0, %v1784
        %v1786 = vrcp.pop %v1781
        %v1787 = vmul.f32 1.0, %v1786
        %v1788 = vrcp.pop %v1782
        %v1789 = vmul.f32 1.0, %v1788
        %v1790 = vrcp.pop %v1783
        %v1791 = vmul.f32 1.0, %v1790
        %v1792 = vtanh.pop %v1730
        %v1793 = vtanh.pop %v1734
        %v1794 = vtanh.pop %v1738
        %v1795 = vtanh.pop %v1742
        %v1796 = vsub.f32 0.0, %v1731
        %v1797 = vsub.f32 0.0, %v1735
        %v1798 = vsub.f32 0.0, %v1739
        %v1799 = vsub.f32 0.0, %v1743
        %v1800 = vmul.f32 %v1796, 1.442695
        %v1801 = vpow.pop %v1800
        %v1802 = vmul.f32 %v1797, 1.442695
        %v1803 = vpow.pop %v1802
        %v1804 = vmul.f32 %v1798, 1.442695
        %v1805 = vpow.pop %v1804
        %v1806 = vmul.f32 %v1799, 1.442695
        %v1807 = vpow.pop %v1806
        %v1808 = vadd.f32 %v1801, 1.0
        %v1809 = vadd.f32 %v1803, 1.0
        %v1810 = vadd.f32 %v1805, 1.0
        %v1811 = vadd.f32 %v1807, 1.0
        %v1812 = vrcp.pop %v1808
        %v1813 = vmul.f32 1.0, %v1812
        %v1814 = vrcp.pop %v1809
        %v1815 = vmul.f32 1.0, %v1814
        %v1816 = vrcp.pop %v1810
        %v1817 = vmul.f32 1.0, %v1816
        %v1818 = vrcp.pop %v1811
        %v1819 = vmul.f32 1.0, %v1818
        %v1820 = vmul.f32 %v1785, 0.0
        %v1821 = vmul.f32 %v1787, 0.0
        %v1822 = vmul.f32 %v1789, 0.0
        %v1823 = vmul.f32 %v1791, 0.0
        %v1824 = vmul.f32 %v1761, %v1792
        %v1825 = vmul.f32 %v1763, %v1793
        %v1826 = vmul.f32 %v1765, %v1794
        %v1827 = vmul.f32 %v1767, %v1795
        %v1828 = vadd.f32 %v1820, %v1824
        %v1829 = vadd.f32 %v1821, %v1825
        %v1830 = vadd.f32 %v1822, %v1826
        %v1831 = vadd.f32 %v1823, %v1827
        %v1832 = vtanh.pop %v1828
        %v1833 = vtanh.pop %v1829
        %v1834 = vtanh.pop %v1830
        %v1835 = vtanh.pop %v1831
        %v1836 = vmul.f32 %v1813, %v1832
        %v1837 = vmul.f32 %v1815, %v1833
        %v1838 = vmul.f32 %v1817, %v1834
        %v1839 = vmul.f32 %v1819, %v1835
        %1840 = vst [vmem:[#allocation2] sm:$0x1] %v1836
        %1841 = vst [vmem:[#allocation2 + $0x8] sm:$0x1] %v1837
        %1842 = vst [vmem:[#allocation2 + $0x10] sm:$0x1] %v1838
        %1843 = vst [vmem:[#allocation2 + $0x18] sm:$0x1] %v1839
        %v1848 = vrot.slane %v1837, 7
        %vm1849 = vcmask 1041409
        %v1850 = vsel %vm1849, %v1848, %v1836
        %v1851 = vrot.slane %v1838, 6
        %vm1852 = vcmask 1042434
        %v1853 = vsel %vm1852, %v1851, %v1850
        %v1854 = vrot.slane %v1839, 5
        %vm1855 = vcmask 1043459
        %v1856 = vsel %vm1855, %v1854, %v1853
        %1858 = vmatprep.subr.mxu0 %v1551
        %1859 = vmatpush1.msra.mxu0 %v1550
        %1860 = vmatprep.subr.mxu0 %v1547
        %1861 = vmatpush1.msra.mxu0 %v1546
        %1862 = vmatprep.subr.mxu0 %v1543
        %1863 = vmatpush1.msra.mxu0 %v1542
        %1864 = vmatprep.subr.mxu0 %v1539
        %1865 = vmatpush1.msra.mxu0 %v1538
        %1866 = vmatprep.subr.mxu0 %v1535
        %1867 = vmatpush1.msra.mxu0 %v1534
        %1868 = vmatprep.subr.mxu0 %v1531
        %1869 = vmatpush1.msra.mxu0 %v1530
        %1870 = vmatprep.subr.mxu0 %v1527
        %1871 = vmatpush1.msra.mxu0 %v1526
        %1872 = vmatprep.subr.mxu0 %v1523
        %1873 = vmatpush1.msra.mxu0 %v1522
        %1874 = vmatprep.subr.mxu0 %v1519
        %1875 = vmatpush1.msra.mxu0 %v1518
        %1876 = vmatprep.subr.mxu0 %v1515
        %1877 = vmatpush1.msra.mxu0 %v1514
        %1878 = vmatprep.subr.mxu0 %v1511
        %1879 = vmatpush1.msra.mxu0 %v1510
        %1880 = vmatprep.subr.mxu0 %v1507
        %1881 = vmatpush1.msra.mxu0 %v1506
        %1882 = vmatprep.subr.mxu0 %v1503
        %1883 = vmatpush1.msra.mxu0 %v1502
        %1884 = vmatprep.subr.mxu0 %v1499
        %1885 = vmatpush1.msra.mxu0 %v1498
        %1886 = vmatprep.subr.mxu0 %v1495
        %1887 = vmatpush1.msra.mxu0 %v1494
        %1888 = vmatprep.subr.mxu0 %v1491
        %1889 = vmatpush1.msra.mxu0 %v1490
        %1890 = vmatprep.subr.mxu0 0.0
        %1891 = vmatpush2.msra.mxu0 0.0
        %1892 = vmatprep.subr.mxu0 0.0
        %1893 = vmatpush2.msra.mxu0 0.0
        %1894 = vmatprep.subr.mxu0 0.0
        %1895 = vmatpush2.msra.mxu0 0.0
        %1896 = vmatprep.subr.mxu0 0.0
        %1897 = vmatpush2.msra.mxu0 0.0
        %1898 = vmatprep.subr.mxu0 0.0
        %1899 = vmatpush2.msra.mxu0 0.0
        %1900 = vmatprep.subr.mxu0 0.0
        %1901 = vmatpush2.msra.mxu0 0.0
        %1902 = vmatprep.subr.mxu0 0.0
        %1903 = vmatpush2.msra.mxu0 0.0
        %1904 = vmatprep.subr.mxu0 0.0
        %1905 = vmatpush2.msra.mxu0 0.0
        %1906 = vmatprep.subr.mxu0 0.0
        %1907 = vmatpush2.msra.mxu0 0.0
        %1908 = vmatprep.subr.mxu0 0.0
        %1909 = vmatpush2.msra.mxu0 0.0
        %1910 = vmatprep.subr.mxu0 0.0
        %1911 = vmatpush2.msra.mxu0 0.0
        %1912 = vmatprep.subr.mxu0 0.0
        %1913 = vmatpush2.msra.mxu0 0.0
        %1914 = vmatprep.subr.mxu0 0.0
        %1915 = vmatpush2.msra.mxu0 0.0
        %1916 = vmatprep.subr.mxu0 0.0
        %1917 = vmatpush2.msra.mxu0 0.0
        %1918 = vmatprep.subr.mxu0 0.0
        %1919 = vmatpush2.msra.mxu0 0.0
        %1920 = vmatprep.subr.mxu0 0.0
        %1921 = vmatpush2.msra.mxu0 0.0
        %1922 = vmatprep.mubr.f32.mxu0 0.0
        %1923 = vmatmul.mubr.f32.gmra.mxu0 %v1856
        %v1924 = vpop.f32.mrf.mxu0
        %v1925 = vadd.f32 0.0, %v1924
        %v1926 = vpop.f32.mrf.mxu0
        %v1927 = vadd.f32 0.0, %v1926
        %1928 = vdwg.mxu0
        %1929 = vmatprep.subr.mxu0 %v1553
        %1930 = vmatpush1.msra.mxu0 %v1552
        %1931 = vmatprep.subr.mxu0 %v1549
        %1932 = vmatpush1.msra.mxu0 %v1548
        %1933 = vmatprep.subr.mxu0 %v1545
        %1934 = vmatpush1.msra.mxu0 %v1544
        %1935 = vmatprep.subr.mxu0 %v1541
        %1936 = vmatpush1.msra.mxu0 %v1540
        %1937 = vmatprep.subr.mxu0 %v1537
        %1938 = vmatpush1.msra.mxu0 %v1536
        %1939 = vmatprep.subr.mxu0 %v1533
        %1940 = vmatpush1.msra.mxu0 %v1532
        %1941 = vmatprep.subr.mxu0 %v1529
        %1942 = vmatpush1.msra.mxu0 %v1528
        %1943 = vmatprep.subr.mxu0 %v1525
        %1944 = vmatpush1.msra.mxu0 %v1524
        %1945 = vmatprep.subr.mxu0 %v1521
        %1946 = vmatpush1.msra.mxu0 %v1520
        %1947 = vmatprep.subr.mxu0 %v1517
        %1948 = vmatpush1.msra.mxu0 %v1516
        %1949 = vmatprep.subr.mxu0 %v1513
        %1950 = vmatpush1.msra.mxu0 %v1512
        %1951 = vmatprep.subr.mxu0 %v1509
        %1952 = vmatpush1.msra.mxu0 %v1508
        %1953 = vmatprep.subr.mxu0 %v1505
        %1954 = vmatpush1.msra.mxu0 %v1504
        %1955 = vmatprep.subr.mxu0 %v1501
        %1956 = vmatpush1.msra.mxu0 %v1500
        %1957 = vmatprep.subr.mxu0 %v1497
        %1958 = vmatpush1.msra.mxu0 %v1496
        %1959 = vmatprep.subr.mxu0 %v1493
        %1960 = vmatpush1.msra.mxu0 %v1492
        %1961 = vmatprep.subr.mxu0 0.0
        %1962 = vmatpush2.msra.mxu0 0.0
        %1963 = vmatprep.subr.mxu0 0.0
        %1964 = vmatpush2.msra.mxu0 0.0
        %1965 = vmatprep.subr.mxu0 0.0
        %1966 = vmatpush2.msra.mxu0 0.0
        %1967 = vmatprep.subr.mxu0 0.0
        %1968 = vmatpush2.msra.mxu0 0.0
        %1969 = vmatprep.subr.mxu0 0.0
        %1970 = vmatpush2.msra.mxu0 0.0
        %1971 = vmatprep.subr.mxu0 0.0
        %1972 = vmatpush2.msra.mxu0 0.0
        %1973 = vmatprep.subr.mxu0 0.0
        %1974 = vmatpush2.msra.mxu0 0.0
        %1975 = vmatprep.subr.mxu0 0.0
        %1976 = vmatpush2.msra.mxu0 0.0
        %1977 = vmatprep.subr.mxu0 0.0
        %1978 = vmatpush2.msra.mxu0 0.0
        %1979 = vmatprep.subr.mxu0 0.0
        %1980 = vmatpush2.msra.mxu0 0.0
        %1981 = vmatprep.subr.mxu0 0.0
        %1982 = vmatpush2.msra.mxu0 0.0
        %1983 = vmatprep.subr.mxu0 0.0
        %1984 = vmatpush2.msra.mxu0 0.0
        %1985 = vmatprep.subr.mxu0 0.0
        %1986 = vmatpush2.msra.mxu0 0.0
        %1987 = vmatprep.subr.mxu0 0.0
        %1988 = vmatpush2.msra.mxu0 0.0
        %1989 = vmatprep.subr.mxu0 0.0
        %1990 = vmatpush2.msra.mxu0 0.0
        %1991 = vmatprep.subr.mxu0 0.0
        %1992 = vmatpush2.msra.mxu0 0.0
        %1993 = vmatprep.mubr.f32.mxu0 0.0
        %1994 = vmatmul.mubr.f32.gmra.mxu0 %v1856
        %v1995 = vpop.f32.mrf.mxu0
        %v1996 = vadd.f32 0.0, %v1995
        %v1997 = vpop.f32.mrf.mxu0
        %v1998 = vadd.f32 0.0, %v1997
        %1999 = vdwg.mxu0
        %v2004 = vrot.slane %v1925, 7
        %v2005 = vrot.slane %v1927, 7
        %v2006 = vrot.slane %v1996, 7
        %v2007 = vrot.slane %v1998, 7
        %v2008 = vrot.slane %v1925, 1
        %v2009 = vrot.slane %v1927, 1
        %v2010 = vrot.slane %v1996, 1
        %v2011 = vrot.slane %v1998, 1
        %v2012 = vrot.slane %v1925, 2
        %v2013 = vrot.slane %v1927, 2
        %v2014 = vrot.slane %v1996, 2
        %v2015 = vrot.slane %v1998, 2
        %v2032 = vadd.f32 %v1379, %v2004
        %v2033 = vadd.f32 %v1381, %v2005
        %v2034 = vadd.f32 %v1468, %v2006
        %v2035 = vadd.f32 %v1470, %v2007
        %v2036 = vadd.f32 %v1385, %v1925
        %v2037 = vadd.f32 %v1387, %v1927
        %v2038 = vadd.f32 %v1474, %v1996
        %v2039 = vadd.f32 %v1476, %v1998
        %v2040 = vadd.f32 %v1391, %v2008
        %v2041 = vadd.f32 %v1393, %v2009
        %v2042 = vadd.f32 %v1480, %v2010
        %v2043 = vadd.f32 %v1482, %v2011
        %v2044 = vadd.f32 %v1397, %v2012
        %v2045 = vadd.f32 %v1399, %v2013
        %v2046 = vadd.f32 %v1486, %v2014
        %v2047 = vadd.f32 %v1488, %v2015
        %v2048 = vsub.f32 0.0, %v2032
        %v2049 = vsub.f32 0.0, %v2036
        %v2050 = vsub.f32 0.0, %v2040
        %v2051 = vsub.f32 0.0, %v2044
        %v2052 = vmul.f32 %v2048, 1.442695
        %v2053 = vpow.pop %v2052
        %v2054 = vmul.f32 %v2049, 1.442695
        %v2055 = vpow.pop %v2054
        %v2056 = vmul.f32 %v2050, 1.442695
        %v2057 = vpow.pop %v2056
        %v2058 = vmul.f32 %v2051, 1.442695
        %v2059 = vpow.pop %v2058
        %v2060 = vadd.f32 %v2053, 1.0
        %v2061 = vadd.f32 %v2055, 1.0
        %v2062 = vadd.f32 %v2057, 1.0
        %v2063 = vadd.f32 %v2059, 1.0
        %v2064 = vrcp.pop %v2060
        %v2065 = vmul.f32 1.0, %v2064
        %v2066 = vrcp.pop %v2061
        %v2067 = vmul.f32 1.0, %v2066
        %v2068 = vrcp.pop %v2062
        %v2069 = vmul.f32 1.0, %v2068
        %v2070 = vrcp.pop %v2063
        %v2071 = vmul.f32 1.0, %v2070
        %v2072 = vsub.f32 0.0, %v2033
        %v2073 = vsub.f32 0.0, %v2037
        %v2074 = vsub.f32 0.0, %v2041
        %v2075 = vsub.f32 0.0, %v2045
        %v2076 = vmul.f32 %v2072, 1.442695
        %v2077 = vpow.pop %v2076
        %v2078 = vmul.f32 %v2073, 1.442695
        %v2079 = vpow.pop %v2078
        %v2080 = vmul.f32 %v2074, 1.442695
        %v2081 = vpow.pop %v2080
        %v2082 = vmul.f32 %v2075, 1.442695
        %v2083 = vpow.pop %v2082
        %v2084 = vadd.f32 %v2077, 1.0
        %v2085 = vadd.f32 %v2079, 1.0
        %v2086 = vadd.f32 %v2081, 1.0
        %v2087 = vadd.f32 %v2083, 1.0
        %v2088 = vrcp.pop %v2084
        %v2089 = vmul.f32 1.0, %v2088
        %v2090 = vrcp.pop %v2085
        %v2091 = vmul.f32 1.0, %v2090
        %v2092 = vrcp.pop %v2086
        %v2093 = vmul.f32 1.0, %v2092
        %v2094 = vrcp.pop %v2087
        %v2095 = vmul.f32 1.0, %v2094
        %v2096 = vtanh.pop %v2034
        %v2097 = vtanh.pop %v2038
        %v2098 = vtanh.pop %v2042
        %v2099 = vtanh.pop %v2046
        %v2100 = vsub.f32 0.0, %v2035
        %v2101 = vsub.f32 0.0, %v2039
        %v2102 = vsub.f32 0.0, %v2043
        %v2103 = vsub.f32 0.0, %v2047
        %v2104 = vmul.f32 %v2100, 1.442695
        %v2105 = vpow.pop %v2104
        %v2106 = vmul.f32 %v2101, 1.442695
        %v2107 = vpow.pop %v2106
        %v2108 = vmul.f32 %v2102, 1.442695
        %v2109 = vpow.pop %v2108
        %v2110 = vmul.f32 %v2103, 1.442695
        %v2111 = vpow.pop %v2110
        %v2112 = vadd.f32 %v2105, 1.0
        %v2113 = vadd.f32 %v2107, 1.0
        %v2114 = vadd.f32 %v2109, 1.0
        %v2115 = vadd.f32 %v2111, 1.0
        %v2116 = vrcp.pop %v2112
        %v2117 = vmul.f32 1.0, %v2116
        %v2118 = vrcp.pop %v2113
        %v2119 = vmul.f32 1.0, %v2118
        %v2120 = vrcp.pop %v2114
        %v2121 = vmul.f32 1.0, %v2120
        %v2122 = vrcp.pop %v2115
        %v2123 = vmul.f32 1.0, %v2122
        %v2128 = vrot.slane %v1828, 7
        %v2129 = vrot.slane %v1829, 7
        %v2130 = vrot.slane %v1830, 7
        %v2131 = vrot.slane %v1831, 7
        %v2136 = vmul.f32 %v2089, %v2128
        %v2137 = vmul.f32 %v2091, %v2129
        %v2138 = vmul.f32 %v2093, %v2130
        %v2139 = vmul.f32 %v2095, %v2131
        %v2140 = vmul.f32 %v2065, %v2096
        %v2141 = vmul.f32 %v2067, %v2097
        %v2142 = vmul.f32 %v2069, %v2098
        %v2143 = vmul.f32 %v2071, %v2099
        %v2144 = vadd.f32 %v2136, %v2140
        %v2145 = vadd.f32 %v2137, %v2141
        %v2146 = vadd.f32 %v2138, %v2142
        %v2147 = vadd.f32 %v2139, %v2143
        %v2148 = vtanh.pop %v2144
        %v2149 = vtanh.pop %v2145
        %v2150 = vtanh.pop %v2146
        %v2151 = vtanh.pop %v2147
        %v2152 = vmul.f32 %v2117, %v2148
        %v2153 = vmul.f32 %v2119, %v2149
        %v2154 = vmul.f32 %v2121, %v2150
        %v2155 = vmul.f32 %v2123, %v2151
        %2156 = vst [vmem:[#allocation2] sm:$0x2] %v2152
        %2157 = vst [vmem:[#allocation2 + $0x8] sm:$0x2] %v2153
        %2158 = vst [vmem:[#allocation2 + $0x10] sm:$0x2] %v2154
        %2159 = vst [vmem:[#allocation2 + $0x18] sm:$0x2] %v2155
        %v2164 = vrot.slane %v2152, 1
        %v2165 = vsel %vm1849, %v2153, %v2164
        %v2166 = vrot.slane %v2154, 7
        %v2167 = vsel %vm1852, %v2166, %v2165
        %v2168 = vrot.slane %v2155, 6
        %v2169 = vsel %vm1855, %v2168, %v2167
        %2171 = vmatprep.subr.mxu0 %v1551
        %2172 = vmatpush1.msra.mxu0 %v1550
        %2173 = vmatprep.subr.mxu0 %v1547
        %2174 = vmatpush1.msra.mxu0 %v1546
        %2175 = vmatprep.subr.mxu0 %v1543
        %2176 = vmatpush1.msra.mxu0 %v1542
        %2177 = vmatprep.subr.mxu0 %v1539
        %2178 = vmatpush1.msra.mxu0 %v1538
        %2179 = vmatprep.subr.mxu0 %v1535
        %2180 = vmatpush1.msra.mxu0 %v1534
        %2181 = vmatprep.subr.mxu0 %v1531
        %2182 = vmatpush1.msra.mxu0 %v1530
        %2183 = vmatprep.subr.mxu0 %v1527
        %2184 = vmatpush1.msra.mxu0 %v1526
        %2185 = vmatprep.subr.mxu0 %v1523
        %2186 = vmatpush1.msra.mxu0 %v1522
        %2187 = vmatprep.subr.mxu0 %v1519
        %2188 = vmatpush1.msra.mxu0 %v1518
        %2189 = vmatprep.subr.mxu0 %v1515
        %2190 = vmatpush1.msra.mxu0 %v1514
        %2191 = vmatprep.subr.mxu0 %v1511
        %2192 = vmatpush1.msra.mxu0 %v1510
        %2193 = vmatprep.subr.mxu0 %v1507
        %2194 = vmatpush1.msra.mxu0 %v1506
        %2195 = vmatprep.subr.mxu0 %v1503
        %2196 = vmatpush1.msra.mxu0 %v1502
        %2197 = vmatprep.subr.mxu0 %v1499
        %2198 = vmatpush1.msra.mxu0 %v1498
        %2199 = vmatprep.subr.mxu0 %v1495
        %2200 = vmatpush1.msra.mxu0 %v1494
        %2201 = vmatprep.subr.mxu0 %v1491
        %2202 = vmatpush1.msra.mxu0 %v1490
        %2203 = vmatprep.subr.mxu0 0.0
        %2204 = vmatpush2.msra.mxu0 0.0
        %2205 = vmatprep.subr.mxu0 0.0
        %2206 = vmatpush2.msra.mxu0 0.0
        %2207 = vmatprep.subr.mxu0 0.0
        %2208 = vmatpush2.msra.mxu0 0.0
        %2209 = vmatprep.subr.mxu0 0.0
        %2210 = vmatpush2.msra.mxu0 0.0
        %2211 = vmatprep.subr.mxu0 0.0
        %2212 = vmatpush2.msra.mxu0 0.0
        %2213 = vmatprep.subr.mxu0 0.0
        %2214 = vmatpush2.msra.mxu0 0.0
        %2215 = vmatprep.subr.mxu0 0.0
        %2216 = vmatpush2.msra.mxu0 0.0
        %2217 = vmatprep.subr.mxu0 0.0
        %2218 = vmatpush2.msra.mxu0 0.0
        %2219 = vmatprep.subr.mxu0 0.0
        %2220 = vmatpush2.msra.mxu0 0.0
        %2221 = vmatprep.subr.mxu0 0.0
        %2222 = vmatpush2.msra.mxu0 0.0
        %2223 = vmatprep.subr.mxu0 0.0
        %2224 = vmatpush2.msra.mxu0 0.0
        %2225 = vmatprep.subr.mxu0 0.0
        %2226 = vmatpush2.msra.mxu0 0.0
        %2227 = vmatprep.subr.mxu0 0.0
        %2228 = vmatpush2.msra.mxu0 0.0
        %2229 = vmatprep.subr.mxu0 0.0
        %2230 = vmatpush2.msra.mxu0 0.0
        %2231 = vmatprep.subr.mxu0 0.0
        %2232 = vmatpush2.msra.mxu0 0.0
        %2233 = vmatprep.subr.mxu0 0.0
        %2234 = vmatpush2.msra.mxu0 0.0
        %2235 = vmatprep.mubr.f32.mxu0 0.0
        %2236 = vmatmul.mubr.f32.gmra.mxu0 %v2169
        %v2237 = vpop.f32.mrf.mxu0
        %v2238 = vadd.f32 0.0, %v2237
        %v2239 = vpop.f32.mrf.mxu0
        %v2240 = vadd.f32 0.0, %v2239
        %2241 = vdwg.mxu0
        %2242 = vmatprep.subr.mxu0 %v1553
        %2243 = vmatpush1.msra.mxu0 %v1552
        %2244 = vmatprep.subr.mxu0 %v1549
        %2245 = vmatpush1.msra.mxu0 %v1548
        %2246 = vmatprep.subr.mxu0 %v1545
        %2247 = vmatpush1.msra.mxu0 %v1544
        %2248 = vmatprep.subr.mxu0 %v1541
        %2249 = vmatpush1.msra.mxu0 %v1540
        %2250 = vmatprep.subr.mxu0 %v1537
        %2251 = vmatpush1.msra.mxu0 %v1536
        %2252 = vmatprep.subr.mxu0 %v1533
        %2253 = vmatpush1.msra.mxu0 %v1532
        %2254 = vmatprep.subr.mxu0 %v1529
        %2255 = vmatpush1.msra.mxu0 %v1528
        %2256 = vmatprep.subr.mxu0 %v1525
        %2257 = vmatpush1.msra.mxu0 %v1524
        %2258 = vmatprep.subr.mxu0 %v1521
        %2259 = vmatpush1.msra.mxu0 %v1520
        %2260 = vmatprep.subr.mxu0 %v1517
        %2261 = vmatpush1.msra.mxu0 %v1516
        %2262 = vmatprep.subr.mxu0 %v1513
        %2263 = vmatpush1.msra.mxu0 %v1512
        %2264 = vmatprep.subr.mxu0 %v1509
        %2265 = vmatpush1.msra.mxu0 %v1508
        %2266 = vmatprep.subr.mxu0 %v1505
        %2267 = vmatpush1.msra.mxu0 %v1504
        %2268 = vmatprep.subr.mxu0 %v1501
        %2269 = vmatpush1.msra.mxu0 %v1500
        %2270 = vmatprep.subr.mxu0 %v1497
        %2271 = vmatpush1.msra.mxu0 %v1496
        %2272 = vmatprep.subr.mxu0 %v1493
        %2273 = vmatpush1.msra.mxu0 %v1492
        %2274 = vmatprep.subr.mxu0 0.0
        %2275 = vmatpush2.msra.mxu0 0.0
        %2276 = vmatprep.subr.mxu0 0.0
        %2277 = vmatpush2.msra.mxu0 0.0
        %2278 = vmatprep.subr.mxu0 0.0
        %2279 = vmatpush2.msra.mxu0 0.0
        %2280 = vmatprep.subr.mxu0 0.0
        %2281 = vmatpush2.msra.mxu0 0.0
        %2282 = vmatprep.subr.mxu0 0.0
        %2283 = vmatpush2.msra.mxu0 0.0
        %2284 = vmatprep.subr.mxu0 0.0
        %2285 = vmatpush2.msra.mxu0 0.0
        %2286 = vmatprep.subr.mxu0 0.0
        %2287 = vmatpush2.msra.mxu0 0.0
        %2288 = vmatprep.subr.mxu0 0.0
        %2289 = vmatpush2.msra.mxu0 0.0
        %2290 = vmatprep.subr.mxu0 0.0
        %2291 = vmatpush2.msra.mxu0 0.0
        %2292 = vmatprep.subr.mxu0 0.0
        %2293 = vmatpush2.msra.mxu0 0.0
        %2294 = vmatprep.subr.mxu0 0.0
        %2295 = vmatpush2.msra.mxu0 0.0
        %2296 = vmatprep.subr.mxu0 0.0
        %2297 = vmatpush2.msra.mxu0 0.0
        %2298 = vmatprep.subr.mxu0 0.0
        %2299 = vmatpush2.msra.mxu0 0.0
        %2300 = vmatprep.subr.mxu0 0.0
        %2301 = vmatpush2.msra.mxu0 0.0
        %2302 = vmatprep.subr.mxu0 0.0
        %2303 = vmatpush2.msra.mxu0 0.0
        %2304 = vmatprep.subr.mxu0 0.0
        %2305 = vmatpush2.msra.mxu0 0.0
        %2306 = vmatprep.mubr.f32.mxu0 0.0
        %2307 = vmatmul.mubr.f32.gmra.mxu0 %v2169
        %v2308 = vpop.f32.mrf.mxu0
        %v2309 = vadd.f32 0.0, %v2308
        %v2310 = vpop.f32.mrf.mxu0
        %v2311 = vadd.f32 0.0, %v2310
        %2312 = vdwg.mxu0
        %v2317 = vrot.slane %v2238, 6
        %v2318 = vrot.slane %v2240, 6
        %v2319 = vrot.slane %v2309, 6
        %v2320 = vrot.slane %v2311, 6
        %v2321 = vrot.slane %v2238, 7
        %v2322 = vrot.slane %v2240, 7
        %v2323 = vrot.slane %v2309, 7
        %v2324 = vrot.slane %v2311, 7
        %v2325 = vrot.slane %v2238, 1
        %v2326 = vrot.slane %v2240, 1
        %v2327 = vrot.slane %v2309, 1
        %v2328 = vrot.slane %v2311, 1
        %v2345 = vadd.f32 %v1379, %v2317
        %v2346 = vadd.f32 %v1381, %v2318
        %v2347 = vadd.f32 %v1468, %v2319
        %v2348 = vadd.f32 %v1470, %v2320
        %v2349 = vadd.f32 %v1385, %v2321
        %v2350 = vadd.f32 %v1387, %v2322
        %v2351 = vadd.f32 %v1474, %v2323
        %v2352 = vadd.f32 %v1476, %v2324
        %v2353 = vadd.f32 %v1391, %v2238
        %v2354 = vadd.f32 %v1393, %v2240
        %v2355 = vadd.f32 %v1480, %v2309
        %v2356 = vadd.f32 %v1482, %v2311
        %v2357 = vadd.f32 %v1397, %v2325
        %v2358 = vadd.f32 %v1399, %v2326
        %v2359 = vadd.f32 %v1486, %v2327
        %v2360 = vadd.f32 %v1488, %v2328
        %v2361 = vsub.f32 0.0, %v2345
        %v2362 = vsub.f32 0.0, %v2349
        %v2363 = vsub.f32 0.0, %v2353
        %v2364 = vsub.f32 0.0, %v2357
        %v2365 = vmul.f32 %v2361, 1.442695
        %v2366 = vpow.pop %v2365
        %v2367 = vmul.f32 %v2362, 1.442695
        %v2368 = vpow.pop %v2367
        %v2369 = vmul.f32 %v2363, 1.442695
        %v2370 = vpow.pop %v2369
        %v2371 = vmul.f32 %v2364, 1.442695
        %v2372 = vpow.pop %v2371
        %v2373 = vadd.f32 %v2366, 1.0
        %v2374 = vadd.f32 %v2368, 1.0
        %v2375 = vadd.f32 %v2370, 1.0
        %v2376 = vadd.f32 %v2372, 1.0
        %v2377 = vrcp.pop %v2373
        %v2378 = vmul.f32 1.0, %v2377
        %v2379 = vrcp.pop %v2374
        %v2380 = vmul.f32 1.0, %v2379
        %v2381 = vrcp.pop %v2375
        %v2382 = vmul.f32 1.0, %v2381
        %v2383 = vrcp.pop %v2376
        %v2384 = vmul.f32 1.0, %v2383
        %v2385 = vsub.f32 0.0, %v2346
        %v2386 = vsub.f32 0.0, %v2350
        %v2387 = vsub.f32 0.0, %v2354
        %v2388 = vsub.f32 0.0, %v2358
        %v2389 = vmul.f32 %v2385, 1.442695
        %v2390 = vpow.pop %v2389
        %v2391 = vmul.f32 %v2386, 1.442695
        %v2392 = vpow.pop %v2391
        %v2393 = vmul.f32 %v2387, 1.442695
        %v2394 = vpow.pop %v2393
        %v2395 = vmul.f32 %v2388, 1.442695
        %v2396 = vpow.pop %v2395
        %v2397 = vadd.f32 %v2390, 1.0
        %v2398 = vadd.f32 %v2392, 1.0
        %v2399 = vadd.f32 %v2394, 1.0
        %v2400 = vadd.f32 %v2396, 1.0
        %v2401 = vrcp.pop %v2397
        %v2402 = vmul.f32 1.0, %v2401
        %v2403 = vrcp.pop %v2398
        %v2404 = vmul.f32 1.0, %v2403
        %v2405 = vrcp.pop %v2399
        %v2406 = vmul.f32 1.0, %v2405
        %v2407 = vrcp.pop %v2400
        %v2408 = vmul.f32 1.0, %v2407
        %v2409 = vtanh.pop %v2347
        %v2410 = vtanh.pop %v2351
        %v2411 = vtanh.pop %v2355
        %v2412 = vtanh.pop %v2359
        %v2413 = vsub.f32 0.0, %v2348
        %v2414 = vsub.f32 0.0, %v2352
        %v2415 = vsub.f32 0.0, %v2356
        %v2416 = vsub.f32 0.0, %v2360
        %v2417 = vmul.f32 %v2413, 1.442695
        %v2418 = vpow.pop %v2417
        %v2419 = vmul.f32 %v2414, 1.442695
        %v2420 = vpow.pop %v2419
        %v2421 = vmul.f32 %v2415, 1.442695
        %v2422 = vpow.pop %v2421
        %v2423 = vmul.f32 %v2416, 1.442695
        %v2424 = vpow.pop %v2423
        %v2425 = vadd.f32 %v2418, 1.0
        %v2426 = vadd.f32 %v2420, 1.0
        %v2427 = vadd.f32 %v2422, 1.0
        %v2428 = vadd.f32 %v2424, 1.0
        %v2429 = vrcp.pop %v2425
        %v2430 = vmul.f32 1.0, %v2429
        %v2431 = vrcp.pop %v2426
        %v2432 = vmul.f32 1.0, %v2431
        %v2433 = vrcp.pop %v2427
        %v2434 = vmul.f32 1.0, %v2433
        %v2435 = vrcp.pop %v2428
        %v2436 = vmul.f32 1.0, %v2435
        %v2441 = vrot.slane %v2144, 7
        %v2442 = vrot.slane %v2145, 7
        %v2443 = vrot.slane %v2146, 7
        %v2444 = vrot.slane %v2147, 7
        %v2449 = vmul.f32 %v2402, %v2441
        %v2450 = vmul.f32 %v2404, %v2442
        %v2451 = vmul.f32 %v2406, %v2443
        %v2452 = vmul.f32 %v2408, %v2444
        %v2453 = vmul.f32 %v2378, %v2409
        %v2454 = vmul.f32 %v2380, %v2410
        %v2455 = vmul.f32 %v2382, %v2411
        %v2456 = vmul.f32 %v2384, %v2412
        %v2457 = vadd.f32 %v2449, %v2453
        %v2458 = vadd.f32 %v2450, %v2454
        %v2459 = vadd.f32 %v2451, %v2455
        %v2460 = vadd.f32 %v2452, %v2456
        %v2461 = vtanh.pop %v2457
        %v2462 = vtanh.pop %v2458
        %v2463 = vtanh.pop %v2459
        %v2464 = vtanh.pop %v2460
        %v2465 = vmul.f32 %v2430, %v2461
        %v2466 = vmul.f32 %v2432, %v2462
        %v2467 = vmul.f32 %v2434, %v2463
        %v2468 = vmul.f32 %v2436, %v2464
        %2469 = vst [vmem:[#allocation2] sm:$0x4] %v2465
        %2470 = vst [vmem:[#allocation2 + $0x8] sm:$0x4] %v2466
        %2471 = vst [vmem:[#allocation2 + $0x10] sm:$0x4] %v2467
        %2472 = vst [vmem:[#allocation2 + $0x18] sm:$0x4] %v2468
        %v2477 = vrot.slane %v2465, 2
        %v2478 = vrot.slane %v2466, 1
        %v2479 = vsel %vm1849, %v2478, %v2477
        %v2480 = vsel %vm1852, %v2467, %v2479
        %v2481 = vrot.slane %v2468, 7
        %v2482 = vsel %vm1855, %v2481, %v2480
        %2484 = vmatprep.subr.mxu0 %v1551
        %2485 = vmatpush1.msra.mxu0 %v1550
        %2486 = vmatprep.subr.mxu0 %v1547
        %2487 = vmatpush1.msra.mxu0 %v1546
        %2488 = vmatprep.subr.mxu0 %v1543
        %2489 = vmatpush1.msra.mxu0 %v1542
        %2490 = vmatprep.subr.mxu0 %v1539
        %2491 = vmatpush1.msra.mxu0 %v1538
        %2492 = vmatprep.subr.mxu0 %v1535
        %2493 = vmatpush1.msra.mxu0 %v1534
        %2494 = vmatprep.subr.mxu0 %v1531
        %2495 = vmatpush1.msra.mxu0 %v1530
        %2496 = vmatprep.subr.mxu0 %v1527
        %2497 = vmatpush1.msra.mxu0 %v1526
        %2498 = vmatprep.subr.mxu0 %v1523
        %2499 = vmatpush1.msra.mxu0 %v1522
        %2500 = vmatprep.subr.mxu0 %v1519
        %2501 = vmatpush1.msra.mxu0 %v1518
        %2502 = vmatprep.subr.mxu0 %v1515
        %2503 = vmatpush1.msra.mxu0 %v1514
        %2504 = vmatprep.subr.mxu0 %v1511
        %2505 = vmatpush1.msra.mxu0 %v1510
        %2506 = vmatprep.subr.mxu0 %v1507
        %2507 = vmatpush1.msra.mxu0 %v1506
        %2508 = vmatprep.subr.mxu0 %v1503
        %2509 = vmatpush1.msra.mxu0 %v1502
        %2510 = vmatprep.subr.mxu0 %v1499
        %2511 = vmatpush1.msra.mxu0 %v1498
        %2512 = vmatprep.subr.mxu0 %v1495
        %2513 = vmatpush1.msra.mxu0 %v1494
        %2514 = vmatprep.subr.mxu0 %v1491
        %2515 = vmatpush1.msra.mxu0 %v1490
        %2516 = vmatprep.subr.mxu0 0.0
        %2517 = vmatpush2.msra.mxu0 0.0
        %2518 = vmatprep.subr.mxu0 0.0
        %2519 = vmatpush2.msra.mxu0 0.0
        %2520 = vmatprep.subr.mxu0 0.0
        %2521 = vmatpush2.msra.mxu0 0.0
        %2522 = vmatprep.subr.mxu0 0.0
        %2523 = vmatpush2.msra.mxu0 0.0
        %2524 = vmatprep.subr.mxu0 0.0
        %2525 = vmatpush2.msra.mxu0 0.0
        %2526 = vmatprep.subr.mxu0 0.0
        %2527 = vmatpush2.msra.mxu0 0.0
        %2528 = vmatprep.subr.mxu0 0.0
        %2529 = vmatpush2.msra.mxu0 0.0
        %2530 = vmatprep.subr.mxu0 0.0
        %2531 = vmatpush2.msra.mxu0 0.0
        %2532 = vmatprep.subr.mxu0 0.0
        %2533 = vmatpush2.msra.mxu0 0.0
        %2534 = vmatprep.subr.mxu0 0.0
        %2535 = vmatpush2.msra.mxu0 0.0
        %2536 = vmatprep.subr.mxu0 0.0
        %2537 = vmatpush2.msra.mxu0 0.0
        %2538 = vmatprep.subr.mxu0 0.0
        %2539 = vmatpush2.msra.mxu0 0.0
        %2540 = vmatprep.subr.mxu0 0.0
        %2541 = vmatpush2.msra.mxu0 0.0
        %2542 = vmatprep.subr.mxu0 0.0
        %2543 = vmatpush2.msra.mxu0 0.0
        %2544 = vmatprep.subr.mxu0 0.0
        %2545 = vmatpush2.msra.mxu0 0.0
        %2546 = vmatprep.subr.mxu0 0.0
        %2547 = vmatpush2.msra.mxu0 0.0
        %2548 = vmatprep.mubr.f32.mxu0 0.0
        %2549 = vmatmul.mubr.f32.gmra.mxu0 %v2482
        %v2550 = vpop.f32.mrf.mxu0
        %v2551 = vadd.f32 0.0, %v2550
        %v2552 = vpop.f32.mrf.mxu0
        %v2553 = vadd.f32 0.0, %v2552
        %2554 = vdwg.mxu0
        %2555 = vmatprep.subr.mxu0 %v1553
        %2556 = vmatpush1.msra.mxu0 %v1552
        %2557 = vmatprep.subr.mxu0 %v1549
        %2558 = vmatpush1.msra.mxu0 %v1548
        %2559 = vmatprep.subr.mxu0 %v1545
        %2560 = vmatpush1.msra.mxu0 %v1544
        %2561 = vmatprep.subr.mxu0 %v1541
        %2562 = vmatpush1.msra.mxu0 %v1540
        %2563 = vmatprep.subr.mxu0 %v1537
        %2564 = vmatpush1.msra.mxu0 %v1536
        %2565 = vmatprep.subr.mxu0 %v1533
        %2566 = vmatpush1.msra.mxu0 %v1532
        %2567 = vmatprep.subr.mxu0 %v1529
        %2568 = vmatpush1.msra.mxu0 %v1528
        %2569 = vmatprep.subr.mxu0 %v1525
        %2570 = vmatpush1.msra.mxu0 %v1524
        %2571 = vmatprep.subr.mxu0 %v1521
        %2572 = vmatpush1.msra.mxu0 %v1520
        %2573 = vmatprep.subr.mxu0 %v1517
        %2574 = vmatpush1.msra.mxu0 %v1516
        %2575 = vmatprep.subr.mxu0 %v1513
        %2576 = vmatpush1.msra.mxu0 %v1512
        %2577 = vmatprep.subr.mxu0 %v1509
        %2578 = vmatpush1.msra.mxu0 %v1508
        %2579 = vmatprep.subr.mxu0 %v1505
        %2580 = vmatpush1.msra.mxu0 %v1504
        %2581 = vmatprep.subr.mxu0 %v1501
        %2582 = vmatpush1.msra.mxu0 %v1500
        %2583 = vmatprep.subr.mxu0 %v1497
        %2584 = vmatpush1.msra.mxu0 %v1496
        %2585 = vmatprep.subr.mxu0 %v1493
        %2586 = vmatpush1.msra.mxu0 %v1492
        %2587 = vmatprep.subr.mxu0 0.0
        %2588 = vmatpush2.msra.mxu0 0.0
        %2589 = vmatprep.subr.mxu0 0.0
        %2590 = vmatpush2.msra.mxu0 0.0
        %2591 = vmatprep.subr.mxu0 0.0
        %2592 = vmatpush2.msra.mxu0 0.0
        %2593 = vmatprep.subr.mxu0 0.0
        %2594 = vmatpush2.msra.mxu0 0.0
        %2595 = vmatprep.subr.mxu0 0.0
        %2596 = vmatpush2.msra.mxu0 0.0
        %2597 = vmatprep.subr.mxu0 0.0
        %2598 = vmatpush2.msra.mxu0 0.0
        %2599 = vmatprep.subr.mxu0 0.0
        %2600 = vmatpush2.msra.mxu0 0.0
        %2601 = vmatprep.subr.mxu0 0.0
        %2602 = vmatpush2.msra.mxu0 0.0
        %2603 = vmatprep.subr.mxu0 0.0
        %2604 = vmatpush2.msra.mxu0 0.0
        %2605 = vmatprep.subr.mxu0 0.0
        %2606 = vmatpush2.msra.mxu0 0.0
        %2607 = vmatprep.subr.mxu0 0.0
        %2608 = vmatpush2.msra.mxu0 0.0
        %2609 = vmatprep.subr.mxu0 0.0
        %2610 = vmatpush2.msra.mxu0 0.0
        %2611 = vmatprep.subr.mxu0 0.0
        %2612 = vmatpush2.msra.mxu0 0.0
        %2613 = vmatprep.subr.mxu0 0.0
        %2614 = vmatpush2.msra.mxu0 0.0
        %2615 = vmatprep.subr.mxu0 0.0
        %2616 = vmatpush2.msra.mxu0 0.0
        %2617 = vmatprep.subr.mxu0 0.0
        %2618 = vmatpush2.msra.mxu0 0.0
        %2619 = vmatprep.mubr.f32.mxu0 0.0
        %2620 = vmatmul.mubr.f32.gmra.mxu0 %v2482
        %v2621 = vpop.f32.mrf.mxu0
        %v2622 = vadd.f32 0.0, %v2621
        %v2623 = vpop.f32.mrf.mxu0
        %v2624 = vadd.f32 0.0, %v2623
        %2625 = vdwg.mxu0
        %v2630 = vrot.slane %v2551, 5
        %v2631 = vrot.slane %v2553, 5
        %v2632 = vrot.slane %v2622, 5
        %v2633 = vrot.slane %v2624, 5
        %v2634 = vrot.slane %v2551, 6
        %v2635 = vrot.slane %v2553, 6
        %v2636 = vrot.slane %v2622, 6
        %v2637 = vrot.slane %v2624, 6
        %v2638 = vrot.slane %v2551, 7
        %v2639 = vrot.slane %v2553, 7
        %v2640 = vrot.slane %v2622, 7
        %v2641 = vrot.slane %v2624, 7
        %v2658 = vadd.f32 %v1379, %v2630
        %v2659 = vadd.f32 %v1381, %v2631
        %v2660 = vadd.f32 %v1468, %v2632
        %v2661 = vadd.f32 %v1470, %v2633
        %v2662 = vadd.f32 %v1385, %v2634
        %v2663 = vadd.f32 %v1387, %v2635
        %v2664 = vadd.f32 %v1474, %v2636
        %v2665 = vadd.f32 %v1476, %v2637
        %v2666 = vadd.f32 %v1391, %v2638
        %v2667 = vadd.f32 %v1393, %v2639
        %v2668 = vadd.f32 %v1480, %v2640
        %v2669 = vadd.f32 %v1482, %v2641
        %v2670 = vadd.f32 %v1397, %v2551
        %v2671 = vadd.f32 %v1399, %v2553
        %v2672 = vadd.f32 %v1486, %v2622
        %v2673 = vadd.f32 %v1488, %v2624
        %v2674 = vsub.f32 0.0, %v2658
        %v2675 = vsub.f32 0.0, %v2662
        %v2676 = vsub.f32 0.0, %v2666
        %v2677 = vsub.f32 0.0, %v2670
        %v2678 = vmul.f32 %v2674, 1.442695
        %v2679 = vpow.pop %v2678
        %v2680 = vmul.f32 %v2675, 1.442695
        %v2681 = vpow.pop %v2680
        %v2682 = vmul.f32 %v2676, 1.442695
        %v2683 = vpow.pop %v2682
        %v2684 = vmul.f32 %v2677, 1.442695
        %v2685 = vpow.pop %v2684
        %v2686 = vadd.f32 %v2679, 1.0
        %v2687 = vadd.f32 %v2681, 1.0
        %v2688 = vadd.f32 %v2683, 1.0
        %v2689 = vadd.f32 %v2685, 1.0
        %v2690 = vrcp.pop %v2686
        %v2691 = vmul.f32 1.0, %v2690
        %v2692 = vrcp.pop %v2687
        %v2693 = vmul.f32 1.0, %v2692
        %v2694 = vrcp.pop %v2688
        %v2695 = vmul.f32 1.0, %v2694
        %v2696 = vrcp.pop %v2689
        %v2697 = vmul.f32 1.0, %v2696
        %v2698 = vsub.f32 0.0, %v2659
        %v2699 = vsub.f32 0.0, %v2663
        %v2700 = vsub.f32 0.0, %v2667
        %v2701 = vsub.f32 0.0, %v2671
        %v2702 = vmul.f32 %v2698, 1.442695
        %v2703 = vpow.pop %v2702
        %v2704 = vmul.f32 %v2699, 1.442695
        %v2705 = vpow.pop %v2704
        %v2706 = vmul.f32 %v2700, 1.442695
        %v2707 = vpow.pop %v2706
        %v2708 = vmul.f32 %v2701, 1.442695
        %v2709 = vpow.pop %v2708
        %v2710 = vadd.f32 %v2703, 1.0
        %v2711 = vadd.f32 %v2705, 1.0
        %v2712 = vadd.f32 %v2707, 1.0
        %v2713 = vadd.f32 %v2709, 1.0
        %v2714 = vrcp.pop %v2710
        %v2715 = vmul.f32 1.0, %v2714
        %v2716 = vrcp.pop %v2711
        %v2717 = vmul.f32 1.0, %v2716
        %v2718 = vrcp.pop %v2712
        %v2719 = vmul.f32 1.0, %v2718
        %v2720 = vrcp.pop %v2713
        %v2721 = vmul.f32 1.0, %v2720
        %v2722 = vtanh.pop %v2660
        %v2723 = vtanh.pop %v2664
        %v2724 = vtanh.pop %v2668
        %v2725 = vtanh.pop %v2672
        %v2726 = vsub.f32 0.0, %v2661
        %v2727 = vsub.f32 0.0, %v2665
        %v2728 = vsub.f32 0.0, %v2669
        %v2729 = vsub.f32 0.0, %v2673
        %v2730 = vmul.f32 %v2726, 1.442695
        %v2731 = vpow.pop %v2730
        %v2732 = vmul.f32 %v2727, 1.442695
        %v2733 = vpow.pop %v2732
        %v2734 = vmul.f32 %v2728, 1.442695
        %v2735 = vpow.pop %v2734
        %v2736 = vmul.f32 %v2729, 1.442695
        %v2737 = vpow.pop %v2736
        %v2738 = vadd.f32 %v2731, 1.0
        %v2739 = vadd.f32 %v2733, 1.0
        %v2740 = vadd.f32 %v2735, 1.0
        %v2741 = vadd.f32 %v2737, 1.0
        %v2742 = vrcp.pop %v2738
        %v2743 = vmul.f32 1.0, %v2742
        %v2744 = vrcp.pop %v2739
        %v2745 = vmul.f32 1.0, %v2744
        %v2746 = vrcp.pop %v2740
        %v2747 = vmul.f32 1.0, %v2746
        %v2748 = vrcp.pop %v2741
        %v2749 = vmul.f32 1.0, %v2748
        %v2754 = vrot.slane %v2457, 7
        %v2755 = vrot.slane %v2458, 7
        %v2756 = vrot.slane %v2459, 7
        %v2757 = vrot.slane %v2460, 7
        %v2762 = vmul.f32 %v2715, %v2754
        %v2763 = vmul.f32 %v2717, %v2755
        %v2764 = vmul.f32 %v2719, %v2756
        %v2765 = vmul.f32 %v2721, %v2757
        %v2766 = vmul.f32 %v2691, %v2722
        %v2767 = vmul.f32 %v2693, %v2723
        %v2768 = vmul.f32 %v2695, %v2724
        %v2769 = vmul.f32 %v2697, %v2725
        %v2770 = vadd.f32 %v2762, %v2766
        %v2771 = vadd.f32 %v2763, %v2767
        %v2772 = vadd.f32 %v2764, %v2768
        %v2773 = vadd.f32 %v2765, %v2769
        %v2774 = vtanh.pop %v2770
        %v2775 = vtanh.pop %v2771
        %v2776 = vtanh.pop %v2772
        %v2777 = vtanh.pop %v2773
        %v2778 = vmul.f32 %v2743, %v2774
        %v2779 = vmul.f32 %v2745, %v2775
        %v2780 = vmul.f32 %v2747, %v2776
        %v2781 = vmul.f32 %v2749, %v2777
        %2782 = vst [vmem:[#allocation2] sm:$0x8] %v2778
        %2783 = vst [vmem:[#allocation2 + $0x8] sm:$0x8] %v2779
        %2784 = vst [vmem:[#allocation2 + $0x10] sm:$0x8] %v2780
        %2785 = vst [vmem:[#allocation2 + $0x18] sm:$0x8] %v2781
        %v2790 = vrot.slane %v2778, 3
        %v2791 = vrot.slane %v2779, 2
        %v2792 = vsel %vm1849, %v2791, %v2790
        %v2793 = vrot.slane %v2780, 1
        %v2794 = vsel %vm1852, %v2793, %v2792
        %v2795 = vsel %vm1855, %v2781, %v2794
        %2797 = vmatprep.subr.mxu0 %v1551
        %2798 = vmatpush1.msra.mxu0 %v1550
        %2799 = vmatprep.subr.mxu0 %v1547
        %2800 = vmatpush1.msra.mxu0 %v1546
        %2801 = vmatprep.subr.mxu0 %v1543
        %2802 = vmatpush1.msra.mxu0 %v1542
        %2803 = vmatprep.subr.mxu0 %v1539
        %2804 = vmatpush1.msra.mxu0 %v1538
        %2805 = vmatprep.subr.mxu0 %v1535
        %2806 = vmatpush1.msra.mxu0 %v1534
        %2807 = vmatprep.subr.mxu0 %v1531
        %2808 = vmatpush1.msra.mxu0 %v1530
        %2809 = vmatprep.subr.mxu0 %v1527
        %2810 = vmatpush1.msra.mxu0 %v1526
        %2811 = vmatprep.subr.mxu0 %v1523
        %2812 = vmatpush1.msra.mxu0 %v1522
        %2813 = vmatprep.subr.mxu0 %v1519
        %2814 = vmatpush1.msra.mxu0 %v1518
        %2815 = vmatprep.subr.mxu0 %v1515
        %2816 = vmatpush1.msra.mxu0 %v1514
        %2817 = vmatprep.subr.mxu0 %v1511
        %2818 = vmatpush1.msra.mxu0 %v1510
        %2819 = vmatprep.subr.mxu0 %v1507
        %2820 = vmatpush1.msra.mxu0 %v1506
        %2821 = vmatprep.subr.mxu0 %v1503
        %2822 = vmatpush1.msra.mxu0 %v1502
        %2823 = vmatprep.subr.mxu0 %v1499
        %2824 = vmatpush1.msra.mxu0 %v1498
        %2825 = vmatprep.subr.mxu0 %v1495
        %2826 = vmatpush1.msra.mxu0 %v1494
        %2827 = vmatprep.subr.mxu0 %v1491
        %2828 = vmatpush1.msra.mxu0 %v1490
        %2829 = vmatprep.subr.mxu0 0.0
        %2830 = vmatpush2.msra.mxu0 0.0
        %2831 = vmatprep.subr.mxu0 0.0
        %2832 = vmatpush2.msra.mxu0 0.0
        %2833 = vmatprep.subr.mxu0 0.0
        %2834 = vmatpush2.msra.mxu0 0.0
        %2835 = vmatprep.subr.mxu0 0.0
        %2836 = vmatpush2.msra.mxu0 0.0
        %2837 = vmatprep.subr.mxu0 0.0
        %2838 = vmatpush2.msra.mxu0 0.0
        %2839 = vmatprep.subr.mxu0 0.0
        %2840 = vmatpush2.msra.mxu0 0.0
        %2841 = vmatprep.subr.mxu0 0.0
        %2842 = vmatpush2.msra.mxu0 0.0
        %2843 = vmatprep.subr.mxu0 0.0
        %2844 = vmatpush2.msra.mxu0 0.0
        %2845 = vmatprep.subr.mxu0 0.0
        %2846 = vmatpush2.msra.mxu0 0.0
        %2847 = vmatprep.subr.mxu0 0.0
        %2848 = vmatpush2.msra.mxu0 0.0
        %2849 = vmatprep.subr.mxu0 0.0
        %2850 = vmatpush2.msra.mxu0 0.0
        %2851 = vmatprep.subr.mxu0 0.0
        %2852 = vmatpush2.msra.mxu0 0.0
        %2853 = vmatprep.subr.mxu0 0.0
        %2854 = vmatpush2.msra.mxu0 0.0
        %2855 = vmatprep.subr.mxu0 0.0
        %2856 = vmatpush2.msra.mxu0 0.0
        %2857 = vmatprep.subr.mxu0 0.0
        %2858 = vmatpush2.msra.mxu0 0.0
        %2859 = vmatprep.subr.mxu0 0.0
        %2860 = vmatpush2.msra.mxu0 0.0
        %2861 = vmatprep.mubr.f32.mxu0 0.0
        %2862 = vmatmul.mubr.f32.gmra.mxu0 %v2795
        %v2863 = vpop.f32.mrf.mxu0
        %v2864 = vadd.f32 0.0, %v2863
        %v2865 = vpop.f32.mrf.mxu0
        %v2866 = vadd.f32 0.0, %v2865
        %2867 = vdwg.mxu0
        %2868 = vmatprep.subr.mxu0 %v1553
        %2869 = vmatpush1.msra.mxu0 %v1552
        %2870 = vmatprep.subr.mxu0 %v1549
        %2871 = vmatpush1.msra.mxu0 %v1548
        %2872 = vmatprep.subr.mxu0 %v1545
        %2873 = vmatpush1.msra.mxu0 %v1544
        %2874 = vmatprep.subr.mxu0 %v1541
        %2875 = vmatpush1.msra.mxu0 %v1540
        %2876 = vmatprep.subr.mxu0 %v1537
        %2877 = vmatpush1.msra.mxu0 %v1536
        %2878 = vmatprep.subr.mxu0 %v1533
        %2879 = vmatpush1.msra.mxu0 %v1532
        %2880 = vmatprep.subr.mxu0 %v1529
        %2881 = vmatpush1.msra.mxu0 %v1528
        %2882 = vmatprep.subr.mxu0 %v1525
        %2883 = vmatpush1.msra.mxu0 %v1524
        %2884 = vmatprep.subr.mxu0 %v1521
        %2885 = vmatpush1.msra.mxu0 %v1520
        %2886 = vmatprep.subr.mxu0 %v1517
        %2887 = vmatpush1.msra.mxu0 %v1516
        %2888 = vmatprep.subr.mxu0 %v1513
        %2889 = vmatpush1.msra.mxu0 %v1512
        %2890 = vmatprep.subr.mxu0 %v1509
        %2891 = vmatpush1.msra.mxu0 %v1508
        %2892 = vmatprep.subr.mxu0 %v1505
        %2893 = vmatpush1.msra.mxu0 %v1504
        %2894 = vmatprep.subr.mxu0 %v1501
        %2895 = vmatpush1.msra.mxu0 %v1500
        %2896 = vmatprep.subr.mxu0 %v1497
        %2897 = vmatpush1.msra.mxu0 %v1496
        %2898 = vmatprep.subr.mxu0 %v1493
        %2899 = vmatpush1.msra.mxu0 %v1492
        %2900 = vmatprep.subr.mxu0 0.0
        %2901 = vmatpush2.msra.mxu0 0.0
        %2902 = vmatprep.subr.mxu0 0.0
        %2903 = vmatpush2.msra.mxu0 0.0
        %2904 = vmatprep.subr.mxu0 0.0
        %2905 = vmatpush2.msra.mxu0 0.0
        %2906 = vmatprep.subr.mxu0 0.0
        %2907 = vmatpush2.msra.mxu0 0.0
        %2908 = vmatprep.subr.mxu0 0.0
        %2909 = vmatpush2.msra.mxu0 0.0
        %2910 = vmatprep.subr.mxu0 0.0
        %2911 = vmatpush2.msra.mxu0 0.0
        %2912 = vmatprep.subr.mxu0 0.0
        %2913 = vmatpush2.msra.mxu0 0.0
        %2914 = vmatprep.subr.mxu0 0.0
        %2915 = vmatpush2.msra.mxu0 0.0
        %2916 = vmatprep.subr.mxu0 0.0
        %2917 = vmatpush2.msra.mxu0 0.0
        %2918 = vmatprep.subr.mxu0 0.0
        %2919 = vmatpush2.msra.mxu0 0.0
        %2920 = vmatprep.subr.mxu0 0.0
        %2921 = vmatpush2.msra.mxu0 0.0
        %2922 = vmatprep.subr.mxu0 0.0
        %2923 = vmatpush2.msra.mxu0 0.0
        %2924 = vmatprep.subr.mxu0 0.0
        %2925 = vmatpush2.msra.mxu0 0.0
        %2926 = vmatprep.subr.mxu0 0.0
        %2927 = vmatpush2.msra.mxu0 0.0
        %2928 = vmatprep.subr.mxu0 0.0
        %2929 = vmatpush2.msra.mxu0 0.0
        %2930 = vmatprep.subr.mxu0 0.0
        %2931 = vmatpush2.msra.mxu0 0.0
        %2932 = vmatprep.mubr.f32.mxu0 0.0
        %2933 = vmatmul.mubr.f32.gmra.mxu0 %v2795
        %v2934 = vpop.f32.mrf.mxu0
        %v2935 = vadd.f32 0.0, %v2934
        %v2936 = vpop.f32.mrf.mxu0
        %v2937 = vadd.f32 0.0, %v2936
        %2938 = vdwg.mxu0
        %v2943 = vrot.slane %v2864, 4
        %v2944 = vrot.slane %v2866, 4
        %v2945 = vrot.slane %v2935, 4
        %v2946 = vrot.slane %v2937, 4
        %v2947 = vrot.slane %v2864, 5
        %v2948 = vrot.slane %v2866, 5
        %v2949 = vrot.slane %v2935, 5
        %v2950 = vrot.slane %v2937, 5
        %v2951 = vrot.slane %v2864, 6
        %v2952 = vrot.slane %v2866, 6
        %v2953 = vrot.slane %v2935, 6
        %v2954 = vrot.slane %v2937, 6
        %v2955 = vrot.slane %v2864, 7
        %v2956 = vrot.slane %v2866, 7
        %v2957 = vrot.slane %v2935, 7
        %v2958 = vrot.slane %v2937, 7
        %v2975 = vadd.f32 %v1379, %v2943
        %v2976 = vadd.f32 %v1381, %v2944
        %v2977 = vadd.f32 %v1468, %v2945
        %v2978 = vadd.f32 %v1470, %v2946
        %v2979 = vadd.f32 %v1385, %v2947
        %v2980 = vadd.f32 %v1387, %v2948
        %v2981 = vadd.f32 %v1474, %v2949
        %v2982 = vadd.f32 %v1476, %v2950
        %v2983 = vadd.f32 %v1391, %v2951
        %v2984 = vadd.f32 %v1393, %v2952
        %v2985 = vadd.f32 %v1480, %v2953
        %v2986 = vadd.f32 %v1482, %v2954
        %v2987 = vadd.f32 %v1397, %v2955
        %v2988 = vadd.f32 %v1399, %v2956
        %v2989 = vadd.f32 %v1486, %v2957
        %v2990 = vadd.f32 %v1488, %v2958
        %v2991 = vsub.f32 0.0, %v2975
        %v2992 = vsub.f32 0.0, %v2979
        %v2993 = vsub.f32 0.0, %v2983
        %v2994 = vsub.f32 0.0, %v2987
        %v2995 = vmul.f32 %v2991, 1.442695
        %v2996 = vpow.pop %v2995
        %v2997 = vmul.f32 %v2992, 1.442695
        %v2998 = vpow.pop %v2997
        %v2999 = vmul.f32 %v2993, 1.442695
        %v3000 = vpow.pop %v2999
        %v3001 = vmul.f32 %v2994, 1.442695
        %v3002 = vpow.pop %v3001
        %v3003 = vadd.f32 %v2996, 1.0
        %v3004 = vadd.f32 %v2998, 1.0
        %v3005 = vadd.f32 %v3000, 1.0
        %v3006 = vadd.f32 %v3002, 1.0
        %v3007 = vrcp.pop %v3003
        %v3008 = vmul.f32 1.0, %v3007
        %v3009 = vrcp.pop %v3004
        %v3010 = vmul.f32 1.0, %v3009
        %v3011 = vrcp.pop %v3005
        %v3012 = vmul.f32 1.0, %v3011
        %v3013 = vrcp.pop %v3006
        %v3014 = vmul.f32 1.0, %v3013
        %v3015 = vsub.f32 0.0, %v2976
        %v3016 = vsub.f32 0.0, %v2980
        %v3017 = vsub.f32 0.0, %v2984
        %v3018 = vsub.f32 0.0, %v2988
        %v3019 = vmul.f32 %v3015, 1.442695
        %v3020 = vpow.pop %v3019
        %v3021 = vmul.f32 %v3016, 1.442695
        %v3022 = vpow.pop %v3021
        %v3023 = vmul.f32 %v3017, 1.442695
        %v3024 = vpow.pop %v3023
        %v3025 = vmul.f32 %v3018, 1.442695
        %v3026 = vpow.pop %v3025
        %v3027 = vadd.f32 %v3020, 1.0
        %v3028 = vadd.f32 %v3022, 1.0
        %v3029 = vadd.f32 %v3024, 1.0
        %v3030 = vadd.f32 %v3026, 1.0
        %v3031 = vrcp.pop %v3027
        %v3032 = vmul.f32 1.0, %v3031
        %v3033 = vrcp.pop %v3028
        %v3034 = vmul.f32 1.0, %v3033
        %v3035 = vrcp.pop %v3029
        %v3036 = vmul.f32 1.0, %v3035
        %v3037 = vrcp.pop %v3030
        %v3038 = vmul.f32 1.0, %v3037
        %v3039 = vtanh.pop %v2977
        %v3040 = vtanh.pop %v2981
        %v3041 = vtanh.pop %v2985
        %v3042 = vtanh.pop %v2989
        %v3043 = vsub.f32 0.0, %v2978
        %v3044 = vsub.f32 0.0, %v2982
        %v3045 = vsub.f32 0.0, %v2986
        %v3046 = vsub.f32 0.0, %v2990
        %v3047 = vmul.f32 %v3043, 1.442695
        %v3048 = vpow.pop %v3047
        %v3049 = vmul.f32 %v3044, 1.442695
        %v3050 = vpow.pop %v3049
        %v3051 = vmul.f32 %v3045, 1.442695
        %v3052 = vpow.pop %v3051
        %v3053 = vmul.f32 %v3046, 1.442695
        %v3054 = vpow.pop %v3053
        %v3055 = vadd.f32 %v3048, 1.0
        %v3056 = vadd.f32 %v3050, 1.0
        %v3057 = vadd.f32 %v3052, 1.0
        %v3058 = vadd.f32 %v3054, 1.0
        %v3059 = vrcp.pop %v3055
        %v3060 = vmul.f32 1.0, %v3059
        %v3061 = vrcp.pop %v3056
        %v3062 = vmul.f32 1.0, %v3061
        %v3063 = vrcp.pop %v3057
        %v3064 = vmul.f32 1.0, %v3063
        %v3065 = vrcp.pop %v3058
        %v3066 = vmul.f32 1.0, %v3065
        %v3071 = vrot.slane %v2770, 7
        %v3072 = vrot.slane %v2771, 7
        %v3073 = vrot.slane %v2772, 7
        %v3074 = vrot.slane %v2773, 7
        %v3079 = vmul.f32 %v3032, %v3071
        %v3080 = vmul.f32 %v3034, %v3072
        %v3081 = vmul.f32 %v3036, %v3073
        %v3082 = vmul.f32 %v3038, %v3074
        %v3083 = vmul.f32 %v3008, %v3039
        %v3084 = vmul.f32 %v3010, %v3040
        %v3085 = vmul.f32 %v3012, %v3041
        %v3086 = vmul.f32 %v3014, %v3042
        %v3087 = vadd.f32 %v3079, %v3083
        %v3088 = vadd.f32 %v3080, %v3084
        %v3089 = vadd.f32 %v3081, %v3085
        %v3090 = vadd.f32 %v3082, %v3086
        %v3091 = vtanh.pop %v3087
        %v3092 = vtanh.pop %v3088
        %v3093 = vtanh.pop %v3089
        %v3094 = vtanh.pop %v3090
        %v3095 = vmul.f32 %v3060, %v3091
        %v3096 = vmul.f32 %v3062, %v3092
        %v3097 = vmul.f32 %v3064, %v3093
        %v3098 = vmul.f32 %v3066, %v3094
        %3099 = vst [vmem:[#allocation2] sm:$0x10] %v3095
        %3100 = vst [vmem:[#allocation2 + $0x8] sm:$0x10] %v3096
        %3101 = vst [vmem:[#allocation2 + $0x10] sm:$0x10] %v3097
        %3102 = vst [vmem:[#allocation2 + $0x18] sm:$0x10] %v3098
        %v3107 = vrot.slane %v3095, 4
        %v3108 = vrot.slane %v3096, 3
        %v3109 = vsel %vm1849, %v3108, %v3107
        %v3110 = vrot.slane %v3097, 2
        %v3111 = vsel %vm1852, %v3110, %v3109
        %v3112 = vrot.slane %v3098, 1
        %v3113 = vsel %vm1855, %v3112, %v3111
        %3115 = vmatprep.subr.mxu0 %v1551
        %3116 = vmatpush1.msra.mxu0 %v1550
        %3117 = vmatprep.subr.mxu0 %v1547
        %3118 = vmatpush1.msra.mxu0 %v1546
        %3119 = vmatprep.subr.mxu0 %v1543
        %3120 = vmatpush1.msra.mxu0 %v1542
        %3121 = vmatprep.subr.mxu0 %v1539
        %3122 = vmatpush1.msra.mxu0 %v1538
        %3123 = vmatprep.subr.mxu0 %v1535
        %3124 = vmatpush1.msra.mxu0 %v1534
        %3125 = vmatprep.subr.mxu0 %v1531
        %3126 = vmatpush1.msra.mxu0 %v1530
        %3127 = vmatprep.subr.mxu0 %v1527
        %3128 = vmatpush1.msra.mxu0 %v1526
        %3129 = vmatprep.subr.mxu0 %v1523
        %3130 = vmatpush1.msra.mxu0 %v1522
        %3131 = vmatprep.subr.mxu0 %v1519
        %3132 = vmatpush1.msra.mxu0 %v1518
        %3133 = vmatprep.subr.mxu0 %v1515
        %3134 = vmatpush1.msra.mxu0 %v1514
        %3135 = vmatprep.subr.mxu0 %v1511
        %3136 = vmatpush1.msra.mxu0 %v1510
        %3137 = vmatprep.subr.mxu0 %v1507
        %3138 = vmatpush1.msra.mxu0 %v1506
        %3139 = vmatprep.subr.mxu0 %v1503
        %3140 = vmatpush1.msra.mxu0 %v1502
        %3141 = vmatprep.subr.mxu0 %v1499
        %3142 = vmatpush1.msra.mxu0 %v1498
        %3143 = vmatprep.subr.mxu0 %v1495
        %3144 = vmatpush1.msra.mxu0 %v1494
        %3145 = vmatprep.subr.mxu0 %v1491
        %3146 = vmatpush1.msra.mxu0 %v1490
        %3147 = vmatprep.subr.mxu0 0.0
        %3148 = vmatpush2.msra.mxu0 0.0
        %3149 = vmatprep.subr.mxu0 0.0
        %3150 = vmatpush2.msra.mxu0 0.0
        %3151 = vmatprep.subr.mxu0 0.0
        %3152 = vmatpush2.msra.mxu0 0.0
        %3153 = vmatprep.subr.mxu0 0.0
        %3154 = vmatpush2.msra.mxu0 0.0
        %3155 = vmatprep.subr.mxu0 0.0
        %3156 = vmatpush2.msra.mxu0 0.0
        %3157 = vmatprep.subr.mxu0 0.0
        %3158 = vmatpush2.msra.mxu0 0.0
        %3159 = vmatprep.subr.mxu0 0.0
        %3160 = vmatpush2.msra.mxu0 0.0
        %3161 = vmatprep.subr.mxu0 0.0
        %3162 = vmatpush2.msra.mxu0 0.0
        %3163 = vmatprep.subr.mxu0 0.0
        %3164 = vmatpush2.msra.mxu0 0.0
        %3165 = vmatprep.subr.mxu0 0.0
        %3166 = vmatpush2.msra.mxu0 0.0
        %3167 = vmatprep.subr.mxu0 0.0
        %3168 = vmatpush2.msra.mxu0 0.0
        %3169 = vmatprep.subr.mxu0 0.0
        %3170 = vmatpush2.msra.mxu0 0.0
        %3171 = vmatprep.subr.mxu0 0.0
        %3172 = vmatpush2.msra.mxu0 0.0
        %3173 = vmatprep.subr.mxu0 0.0
        %3174 = vmatpush2.msra.mxu0 0.0
        %3175 = vmatprep.subr.mxu0 0.0
        %3176 = vmatpush2.msra.mxu0 0.0
        %3177 = vmatprep.subr.mxu0 0.0
        %3178 = vmatpush2.msra.mxu0 0.0
        %3179 = vmatprep.mubr.f32.mxu0 0.0
        %3180 = vmatmul.mubr.f32.gmra.mxu0 %v3113
        %v3181 = vpop.f32.mrf.mxu0
        %v3182 = vadd.f32 0.0, %v3181
        %v3183 = vpop.f32.mrf.mxu0
        %v3184 = vadd.f32 0.0, %v3183
        %3185 = vdwg.mxu0
        %3186 = vmatprep.subr.mxu0 %v1553
        %3187 = vmatpush1.msra.mxu0 %v1552
        %3188 = vmatprep.subr.mxu0 %v1549
        %3189 = vmatpush1.msra.mxu0 %v1548
        %3190 = vmatprep.subr.mxu0 %v1545
        %3191 = vmatpush1.msra.mxu0 %v1544
        %3192 = vmatprep.subr.mxu0 %v1541
        %3193 = vmatpush1.msra.mxu0 %v1540
        %3194 = vmatprep.subr.mxu0 %v1537
        %3195 = vmatpush1.msra.mxu0 %v1536
        %3196 = vmatprep.subr.mxu0 %v1533
        %3197 = vmatpush1.msra.mxu0 %v1532
        %3198 = vmatprep.subr.mxu0 %v1529
        %3199 = vmatpush1.msra.mxu0 %v1528
        %3200 = vmatprep.subr.mxu0 %v1525
        %3201 = vmatpush1.msra.mxu0 %v1524
        %3202 = vmatprep.subr.mxu0 %v1521
        %3203 = vmatpush1.msra.mxu0 %v1520
        %3204 = vmatprep.subr.mxu0 %v1517
        %3205 = vmatpush1.msra.mxu0 %v1516
        %3206 = vmatprep.subr.mxu0 %v1513
        %3207 = vmatpush1.msra.mxu0 %v1512
        %3208 = vmatprep.subr.mxu0 %v1509
        %3209 = vmatpush1.msra.mxu0 %v1508
        %3210 = vmatprep.subr.mxu0 %v1505
        %3211 = vmatpush1.msra.mxu0 %v1504
        %3212 = vmatprep.subr.mxu0 %v1501
        %3213 = vmatpush1.msra.mxu0 %v1500
        %3214 = vmatprep.subr.mxu0 %v1497
        %3215 = vmatpush1.msra.mxu0 %v1496
        %3216 = vmatprep.subr.mxu0 %v1493
        %3217 = vmatpush1.msra.mxu0 %v1492
        %3218 = vmatprep.subr.mxu0 0.0
        %3219 = vmatpush2.msra.mxu0 0.0
        %3220 = vmatprep.subr.mxu0 0.0
        %3221 = vmatpush2.msra.mxu0 0.0
        %3222 = vmatprep.subr.mxu0 0.0
        %3223 = vmatpush2.msra.mxu0 0.0
        %3224 = vmatprep.subr.mxu0 0.0
        %3225 = vmatpush2.msra.mxu0 0.0
        %3226 = vmatprep.subr.mxu0 0.0
        %3227 = vmatpush2.msra.mxu0 0.0
        %3228 = vmatprep.subr.mxu0 0.0
        %3229 = vmatpush2.msra.mxu0 0.0
        %3230 = vmatprep.subr.mxu0 0.0
        %3231 = vmatpush2.msra.mxu0 0.0
        %3232 = vmatprep.subr.mxu0 0.0
        %3233 = vmatpush2.msra.mxu0 0.0
        %3234 = vmatprep.subr.mxu0 0.0
        %3235 = vmatpush2.msra.mxu0 0.0
        %3236 = vmatprep.subr.mxu0 0.0
        %3237 = vmatpush2.msra.mxu0 0.0
        %3238 = vmatprep.subr.mxu0 0.0
        %3239 = vmatpush2.msra.mxu0 0.0
        %3240 = vmatprep.subr.mxu0 0.0
        %3241 = vmatpush2.msra.mxu0 0.0
        %3242 = vmatprep.subr.mxu0 0.0
        %3243 = vmatpush2.msra.mxu0 0.0
        %3244 = vmatprep.subr.mxu0 0.0
        %3245 = vmatpush2.msra.mxu0 0.0
        %3246 = vmatprep.subr.mxu0 0.0
        %3247 = vmatpush2.msra.mxu0 0.0
        %3248 = vmatprep.subr.mxu0 0.0
        %3249 = vmatpush2.msra.mxu0 0.0
        %3250 = vmatprep.mubr.f32.mxu0 0.0
        %3251 = vmatmul.mubr.f32.gmra.mxu0 %v3113
        %v3252 = vpop.f32.mrf.mxu0
        %v3253 = vadd.f32 0.0, %v3252
        %v3254 = vpop.f32.mrf.mxu0
        %v3255 = vadd.f32 0.0, %v3254
        %3256 = vdwg.mxu0
        %v3261 = vrot.slane %v3182, 3
        %v3262 = vrot.slane %v3184, 3
        %v3263 = vrot.slane %v3253, 3
        %v3264 = vrot.slane %v3255, 3
        %v3265 = vrot.slane %v3182, 4
        %v3266 = vrot.slane %v3184, 4
        %v3267 = vrot.slane %v3253, 4
        %v3268 = vrot.slane %v3255, 4
        %v3269 = vrot.slane %v3182, 5
        %v3270 = vrot.slane %v3184, 5
        %v3271 = vrot.slane %v3253, 5
        %v3272 = vrot.slane %v3255, 5
        %v3273 = vrot.slane %v3182, 6
        %v3274 = vrot.slane %v3184, 6
        %v3275 = vrot.slane %v3253, 6
        %v3276 = vrot.slane %v3255, 6
        %v3293 = vadd.f32 %v1379, %v3261
        %v3294 = vadd.f32 %v1381, %v3262
        %v3295 = vadd.f32 %v1468, %v3263
        %v3296 = vadd.f32 %v1470, %v3264
        %v3297 = vadd.f32 %v1385, %v3265
        %v3298 = vadd.f32 %v1387, %v3266
        %v3299 = vadd.f32 %v1474, %v3267
        %v3300 = vadd.f32 %v1476, %v3268
        %v3301 = vadd.f32 %v1391, %v3269
        %v3302 = vadd.f32 %v1393, %v3270
        %v3303 = vadd.f32 %v1480, %v3271
        %v3304 = vadd.f32 %v1482, %v3272
        %v3305 = vadd.f32 %v1397, %v3273
        %v3306 = vadd.f32 %v1399, %v3274
        %v3307 = vadd.f32 %v1486, %v3275
        %v3308 = vadd.f32 %v1488, %v3276
        %v3309 = vsub.f32 0.0, %v3293
        %v3310 = vsub.f32 0.0, %v3297
        %v3311 = vsub.f32 0.0, %v3301
        %v3312 = vsub.f32 0.0, %v3305
        %v3313 = vmul.f32 %v3309, 1.442695
        %v3314 = vpow.pop %v3313
        %v3315 = vmul.f32 %v3310, 1.442695
        %v3316 = vpow.pop %v3315
        %v3317 = vmul.f32 %v3311, 1.442695
        %v3318 = vpow.pop %v3317
        %v3319 = vmul.f32 %v3312, 1.442695
        %v3320 = vpow.pop %v3319
        %v3321 = vadd.f32 %v3314, 1.0
        %v3322 = vadd.f32 %v3316, 1.0
        %v3323 = vadd.f32 %v3318, 1.0
        %v3324 = vadd.f32 %v3320, 1.0
        %v3325 = vrcp.pop %v3321
        %v3326 = vmul.f32 1.0, %v3325
        %v3327 = vrcp.pop %v3322
        %v3328 = vmul.f32 1.0, %v3327
        %v3329 = vrcp.pop %v3323
        %v3330 = vmul.f32 1.0, %v3329
        %v3331 = vrcp.pop %v3324
        %v3332 = vmul.f32 1.0, %v3331
        %v3333 = vsub.f32 0.0, %v3294
        %v3334 = vsub.f32 0.0, %v3298
        %v3335 = vsub.f32 0.0, %v3302
        %v3336 = vsub.f32 0.0, %v3306
        %v3337 = vmul.f32 %v3333, 1.442695
        %v3338 = vpow.pop %v3337
        %v3339 = vmul.f32 %v3334, 1.442695
        %v3340 = vpow.pop %v3339
        %v3341 = vmul.f32 %v3335, 1.442695
        %v3342 = vpow.pop %v3341
        %v3343 = vmul.f32 %v3336, 1.442695
        %v3344 = vpow.pop %v3343
        %v3345 = vadd.f32 %v3338, 1.0
        %v3346 = vadd.f32 %v3340, 1.0
        %v3347 = vadd.f32 %v3342, 1.0
        %v3348 = vadd.f32 %v3344, 1.0
        %v3349 = vrcp.pop %v3345
        %v3350 = vmul.f32 1.0, %v3349
        %v3351 = vrcp.pop %v3346
        %v3352 = vmul.f32 1.0, %v3351
        %v3353 = vrcp.pop %v3347
        %v3354 = vmul.f32 1.0, %v3353
        %v3355 = vrcp.pop %v3348
        %v3356 = vmul.f32 1.0, %v3355
        %v3357 = vtanh.pop %v3295
        %v3358 = vtanh.pop %v3299
        %v3359 = vtanh.pop %v3303
        %v3360 = vtanh.pop %v3307
        %v3361 = vsub.f32 0.0, %v3296
        %v3362 = vsub.f32 0.0, %v3300
        %v3363 = vsub.f32 0.0, %v3304
        %v3364 = vsub.f32 0.0, %v3308
        %v3365 = vmul.f32 %v3361, 1.442695
        %v3366 = vpow.pop %v3365
        %v3367 = vmul.f32 %v3362, 1.442695
        %v3368 = vpow.pop %v3367
        %v3369 = vmul.f32 %v3363, 1.442695
        %v3370 = vpow.pop %v3369
        %v3371 = vmul.f32 %v3364, 1.442695
        %v3372 = vpow.pop %v3371
        %v3373 = vadd.f32 %v3366, 1.0
        %v3374 = vadd.f32 %v3368, 1.0
        %v3375 = vadd.f32 %v3370, 1.0
        %v3376 = vadd.f32 %v3372, 1.0
        %v3377 = vrcp.pop %v3373
        %v3378 = vmul.f32 1.0, %v3377
        %v3379 = vrcp.pop %v3374
        %v3380 = vmul.f32 1.0, %v3379
        %v3381 = vrcp.pop %v3375
        %v3382 = vmul.f32 1.0, %v3381
        %v3383 = vrcp.pop %v3376
        %v3384 = vmul.f32 1.0, %v3383
        %v3389 = vrot.slane %v3087, 7
        %v3390 = vrot.slane %v3088, 7
        %v3391 = vrot.slane %v3089, 7
        %v3392 = vrot.slane %v3090, 7
        %v3397 = vmul.f32 %v3350, %v3389
        %v3398 = vmul.f32 %v3352, %v3390
        %v3399 = vmul.f32 %v3354, %v3391
        %v3400 = vmul.f32 %v3356, %v3392
        %v3401 = vmul.f32 %v3326, %v3357
        %v3402 = vmul.f32 %v3328, %v3358
        %v3403 = vmul.f32 %v3330, %v3359
        %v3404 = vmul.f32 %v3332, %v3360
        %v3405 = vadd.f32 %v3397, %v3401
        %v3406 = vadd.f32 %v3398, %v3402
        %v3407 = vadd.f32 %v3399, %v3403
        %v3408 = vadd.f32 %v3400, %v3404
        %v3409 = vtanh.pop %v3405
        %v3410 = vtanh.pop %v3406
        %v3411 = vtanh.pop %v3407
        %v3412 = vtanh.pop %v3408
        %v3413 = vmul.f32 %v3378, %v3409
        %v3414 = vmul.f32 %v3380, %v3410
        %v3415 = vmul.f32 %v3382, %v3411
        %v3416 = vmul.f32 %v3384, %v3412
        %3417 = vst [vmem:[#allocation2] sm:$0x20] %v3413
        %3418 = vst [vmem:[#allocation2 + $0x8] sm:$0x20] %v3414
        %3419 = vst [vmem:[#allocation2 + $0x10] sm:$0x20] %v3415
        %3420 = vst [vmem:[#allocation2 + $0x18] sm:$0x20] %v3416
        %v3425 = vrot.slane %v3413, 5
        %v3426 = vrot.slane %v3414, 4
        %v3427 = vsel %vm1849, %v3426, %v3425
        %v3428 = vrot.slane %v3415, 3
        %v3429 = vsel %vm1852, %v3428, %v3427
        %v3430 = vrot.slane %v3416, 2
        %v3431 = vsel %vm1855, %v3430, %v3429
        %3433 = vmatprep.subr.mxu0 %v1551
        %3434 = vmatpush1.msra.mxu0 %v1550
        %3435 = vmatprep.subr.mxu0 %v1547
        %3436 = vmatpush1.msra.mxu0 %v1546
        %3437 = vmatprep.subr.mxu0 %v1543
        %3438 = vmatpush1.msra.mxu0 %v1542
        %3439 = vmatprep.subr.mxu0 %v1539
        %3440 = vmatpush1.msra.mxu0 %v1538
        %3441 = vmatprep.subr.mxu0 %v1535
        %3442 = vmatpush1.msra.mxu0 %v1534
        %3443 = vmatprep.subr.mxu0 %v1531
        %3444 = vmatpush1.msra.mxu0 %v1530
        %3445 = vmatprep.subr.mxu0 %v1527
        %3446 = vmatpush1.msra.mxu0 %v1526
        %3447 = vmatprep.subr.mxu0 %v1523
        %3448 = vmatpush1.msra.mxu0 %v1522
        %3449 = vmatprep.subr.mxu0 %v1519
        %3450 = vmatpush1.msra.mxu0 %v1518
        %3451 = vmatprep.subr.mxu0 %v1515
        %3452 = vmatpush1.msra.mxu0 %v1514
        %3453 = vmatprep.subr.mxu0 %v1511
        %3454 = vmatpush1.msra.mxu0 %v1510
        %3455 = vmatprep.subr.mxu0 %v1507
        %3456 = vmatpush1.msra.mxu0 %v1506
        %3457 = vmatprep.subr.mxu0 %v1503
        %3458 = vmatpush1.msra.mxu0 %v1502
        %3459 = vmatprep.subr.mxu0 %v1499
        %3460 = vmatpush1.msra.mxu0 %v1498
        %3461 = vmatprep.subr.mxu0 %v1495
        %3462 = vmatpush1.msra.mxu0 %v1494
        %3463 = vmatprep.subr.mxu0 %v1491
        %3464 = vmatpush1.msra.mxu0 %v1490
        %3465 = vmatprep.subr.mxu0 0.0
        %3466 = vmatpush2.msra.mxu0 0.0
        %3467 = vmatprep.subr.mxu0 0.0
        %3468 = vmatpush2.msra.mxu0 0.0
        %3469 = vmatprep.subr.mxu0 0.0
        %3470 = vmatpush2.msra.mxu0 0.0
        %3471 = vmatprep.subr.mxu0 0.0
        %3472 = vmatpush2.msra.mxu0 0.0
        %3473 = vmatprep.subr.mxu0 0.0
        %3474 = vmatpush2.msra.mxu0 0.0
        %3475 = vmatprep.subr.mxu0 0.0
        %3476 = vmatpush2.msra.mxu0 0.0
        %3477 = vmatprep.subr.mxu0 0.0
        %3478 = vmatpush2.msra.mxu0 0.0
        %3479 = vmatprep.subr.mxu0 0.0
        %3480 = vmatpush2.msra.mxu0 0.0
        %3481 = vmatprep.subr.mxu0 0.0
        %3482 = vmatpush2.msra.mxu0 0.0
        %3483 = vmatprep.subr.mxu0 0.0
        %3484 = vmatpush2.msra.mxu0 0.0
        %3485 = vmatprep.subr.mxu0 0.0
        %3486 = vmatpush2.msra.mxu0 0.0
        %3487 = vmatprep.subr.mxu0 0.0
        %3488 = vmatpush2.msra.mxu0 0.0
        %3489 = vmatprep.subr.mxu0 0.0
        %3490 = vmatpush2.msra.mxu0 0.0
        %3491 = vmatprep.subr.mxu0 0.0
        %3492 = vmatpush2.msra.mxu0 0.0
        %3493 = vmatprep.subr.mxu0 0.0
        %3494 = vmatpush2.msra.mxu0 0.0
        %3495 = vmatprep.subr.mxu0 0.0
        %3496 = vmatpush2.msra.mxu0 0.0
        %3497 = vmatprep.mubr.f32.mxu0 0.0
        %3498 = vmatmul.mubr.f32.gmra.mxu0 %v3431
        %v3499 = vpop.f32.mrf.mxu0
        %v3500 = vadd.f32 0.0, %v3499
        %v3501 = vpop.f32.mrf.mxu0
        %v3502 = vadd.f32 0.0, %v3501
        %3503 = vdwg.mxu0
        %3504 = vmatprep.subr.mxu0 %v1553
        %3505 = vmatpush1.msra.mxu0 %v1552
        %3506 = vmatprep.subr.mxu0 %v1549
        %3507 = vmatpush1.msra.mxu0 %v1548
        %3508 = vmatprep.subr.mxu0 %v1545
        %3509 = vmatpush1.msra.mxu0 %v1544
        %3510 = vmatprep.subr.mxu0 %v1541
        %3511 = vmatpush1.msra.mxu0 %v1540
        %3512 = vmatprep.subr.mxu0 %v1537
        %3513 = vmatpush1.msra.mxu0 %v1536
        %3514 = vmatprep.subr.mxu0 %v1533
        %3515 = vmatpush1.msra.mxu0 %v1532
        %3516 = vmatprep.subr.mxu0 %v1529
        %3517 = vmatpush1.msra.mxu0 %v1528
        %3518 = vmatprep.subr.mxu0 %v1525
        %3519 = vmatpush1.msra.mxu0 %v1524
        %3520 = vmatprep.subr.mxu0 %v1521
        %3521 = vmatpush1.msra.mxu0 %v1520
        %3522 = vmatprep.subr.mxu0 %v1517
        %3523 = vmatpush1.msra.mxu0 %v1516
        %3524 = vmatprep.subr.mxu0 %v1513
        %3525 = vmatpush1.msra.mxu0 %v1512
        %3526 = vmatprep.subr.mxu0 %v1509
        %3527 = vmatpush1.msra.mxu0 %v1508
        %3528 = vmatprep.subr.mxu0 %v1505
        %3529 = vmatpush1.msra.mxu0 %v1504
        %3530 = vmatprep.subr.mxu0 %v1501
        %3531 = vmatpush1.msra.mxu0 %v1500
        %3532 = vmatprep.subr.mxu0 %v1497
        %3533 = vmatpush1.msra.mxu0 %v1496
        %3534 = vmatprep.subr.mxu0 %v1493
        %3535 = vmatpush1.msra.mxu0 %v1492
        %3536 = vmatprep.subr.mxu0 0.0
        %3537 = vmatpush2.msra.mxu0 0.0
        %3538 = vmatprep.subr.mxu0 0.0
        %3539 = vmatpush2.msra.mxu0 0.0
        %3540 = vmatprep.subr.mxu0 0.0
        %3541 = vmatpush2.msra.mxu0 0.0
        %3542 = vmatprep.subr.mxu0 0.0
        %3543 = vmatpush2.msra.mxu0 0.0
        %3544 = vmatprep.subr.mxu0 0.0
        %3545 = vmatpush2.msra.mxu0 0.0
        %3546 = vmatprep.subr.mxu0 0.0
        %3547 = vmatpush2.msra.mxu0 0.0
        %3548 = vmatprep.subr.mxu0 0.0
        %3549 = vmatpush2.msra.mxu0 0.0
        %3550 = vmatprep.subr.mxu0 0.0
        %3551 = vmatpush2.msra.mxu0 0.0
        %3552 = vmatprep.subr.mxu0 0.0
        %3553 = vmatpush2.msra.mxu0 0.0
        %3554 = vmatprep.subr.mxu0 0.0
        %3555 = vmatpush2.msra.mxu0 0.0
        %3556 = vmatprep.subr.mxu0 0.0
        %3557 = vmatpush2.msra.mxu0 0.0
        %3558 = vmatprep.subr.mxu0 0.0
        %3559 = vmatpush2.msra.mxu0 0.0
        %3560 = vmatprep.subr.mxu0 0.0
        %3561 = vmatpush2.msra.mxu0 0.0
        %3562 = vmatprep.subr.mxu0 0.0
        %3563 = vmatpush2.msra.mxu0 0.0
        %3564 = vmatprep.subr.mxu0 0.0
        %3565 = vmatpush2.msra.mxu0 0.0
        %3566 = vmatprep.subr.mxu0 0.0
        %3567 = vmatpush2.msra.mxu0 0.0
        %3568 = vmatprep.mubr.f32.mxu0 0.0
        %3569 = vmatmul.mubr.f32.gmra.mxu0 %v3431
        %v3570 = vpop.f32.mrf.mxu0
        %v3571 = vadd.f32 0.0, %v3570
        %v3572 = vpop.f32.mrf.mxu0
        %v3573 = vadd.f32 0.0, %v3572
        %3574 = vdwg.mxu0
        %v3579 = vrot.slane %v3500, 2
        %v3580 = vrot.slane %v3502, 2
        %v3581 = vrot.slane %v3571, 2
        %v3582 = vrot.slane %v3573, 2
        %v3583 = vrot.slane %v3500, 3
        %v3584 = vrot.slane %v3502, 3
        %v3585 = vrot.slane %v3571, 3
        %v3586 = vrot.slane %v3573, 3
        %v3587 = vrot.slane %v3500, 4
        %v3588 = vrot.slane %v3502, 4
        %v3589 = vrot.slane %v3571, 4
        %v3590 = vrot.slane %v3573, 4
        %v3591 = vrot.slane %v3500, 5
        %v3592 = vrot.slane %v3502, 5
        %v3593 = vrot.slane %v3571, 5
        %v3594 = vrot.slane %v3573, 5
        %v3611 = vadd.f32 %v1379, %v3579
        %v3612 = vadd.f32 %v1381, %v3580
        %v3613 = vadd.f32 %v1468, %v3581
        %v3614 = vadd.f32 %v1470, %v3582
        %v3615 = vadd.f32 %v1385, %v3583
        %v3616 = vadd.f32 %v1387, %v3584
        %v3617 = vadd.f32 %v1474, %v3585
        %v3618 = vadd.f32 %v1476, %v3586
        %v3619 = vadd.f32 %v1391, %v3587
        %v3620 = vadd.f32 %v1393, %v3588
        %v3621 = vadd.f32 %v1480, %v3589
        %v3622 = vadd.f32 %v1482, %v3590
        %v3623 = vadd.f32 %v1397, %v3591
        %v3624 = vadd.f32 %v1399, %v3592
        %v3625 = vadd.f32 %v1486, %v3593
        %v3626 = vadd.f32 %v1488, %v3594
        %v3627 = vsub.f32 0.0, %v3611
        %v3628 = vsub.f32 0.0, %v3615
        %v3629 = vsub.f32 0.0, %v3619
        %v3630 = vsub.f32 0.0, %v3623
        %v3631 = vmul.f32 %v3627, 1.442695
        %v3632 = vpow.pop %v3631
        %v3633 = vmul.f32 %v3628, 1.442695
        %v3634 = vpow.pop %v3633
        %v3635 = vmul.f32 %v3629, 1.442695
        %v3636 = vpow.pop %v3635
        %v3637 = vmul.f32 %v3630, 1.442695
        %v3638 = vpow.pop %v3637
        %v3639 = vadd.f32 %v3632, 1.0
        %v3640 = vadd.f32 %v3634, 1.0
        %v3641 = vadd.f32 %v3636, 1.0
        %v3642 = vadd.f32 %v3638, 1.0
        %v3643 = vrcp.pop %v3639
        %v3644 = vmul.f32 1.0, %v3643
        %v3645 = vrcp.pop %v3640
        %v3646 = vmul.f32 1.0, %v3645
        %v3647 = vrcp.pop %v3641
        %v3648 = vmul.f32 1.0, %v3647
        %v3649 = vrcp.pop %v3642
        %v3650 = vmul.f32 1.0, %v3649
        %v3651 = vsub.f32 0.0, %v3612
        %v3652 = vsub.f32 0.0, %v3616
        %v3653 = vsub.f32 0.0, %v3620
        %v3654 = vsub.f32 0.0, %v3624
        %v3655 = vmul.f32 %v3651, 1.442695
        %v3656 = vpow.pop %v3655
        %v3657 = vmul.f32 %v3652, 1.442695
        %v3658 = vpow.pop %v3657
        %v3659 = vmul.f32 %v3653, 1.442695
        %v3660 = vpow.pop %v3659
        %v3661 = vmul.f32 %v3654, 1.442695
        %v3662 = vpow.pop %v3661
        %v3663 = vadd.f32 %v3656, 1.0
        %v3664 = vadd.f32 %v3658, 1.0
        %v3665 = vadd.f32 %v3660, 1.0
        %v3666 = vadd.f32 %v3662, 1.0
        %v3667 = vrcp.pop %v3663
        %v3668 = vmul.f32 1.0, %v3667
        %v3669 = vrcp.pop %v3664
        %v3670 = vmul.f32 1.0, %v3669
        %v3671 = vrcp.pop %v3665
        %v3672 = vmul.f32 1.0, %v3671
        %v3673 = vrcp.pop %v3666
        %v3674 = vmul.f32 1.0, %v3673
        %v3675 = vtanh.pop %v3613
        %v3676 = vtanh.pop %v3617
        %v3677 = vtanh.pop %v3621
        %v3678 = vtanh.pop %v3625
        %v3679 = vsub.f32 0.0, %v3614
        %v3680 = vsub.f32 0.0, %v3618
        %v3681 = vsub.f32 0.0, %v3622
        %v3682 = vsub.f32 0.0, %v3626
        %v3683 = vmul.f32 %v3679, 1.442695
        %v3684 = vpow.pop %v3683
        %v3685 = vmul.f32 %v3680, 1.442695
        %v3686 = vpow.pop %v3685
        %v3687 = vmul.f32 %v3681, 1.442695
        %v3688 = vpow.pop %v3687
        %v3689 = vmul.f32 %v3682, 1.442695
        %v3690 = vpow.pop %v3689
        %v3691 = vadd.f32 %v3684, 1.0
        %v3692 = vadd.f32 %v3686, 1.0
        %v3693 = vadd.f32 %v3688, 1.0
        %v3694 = vadd.f32 %v3690, 1.0
        %v3695 = vrcp.pop %v3691
        %v3696 = vmul.f32 1.0, %v3695
        %v3697 = vrcp.pop %v3692
        %v3698 = vmul.f32 1.0, %v3697
        %v3699 = vrcp.pop %v3693
        %v3700 = vmul.f32 1.0, %v3699
        %v3701 = vrcp.pop %v3694
        %v3702 = vmul.f32 1.0, %v3701
        %v3707 = vrot.slane %v3405, 7
        %v3708 = vrot.slane %v3406, 7
        %v3709 = vrot.slane %v3407, 7
        %v3710 = vrot.slane %v3408, 7
        %v3715 = vmul.f32 %v3668, %v3707
        %v3716 = vmul.f32 %v3670, %v3708
        %v3717 = vmul.f32 %v3672, %v3709
        %v3718 = vmul.f32 %v3674, %v3710
        %v3719 = vmul.f32 %v3644, %v3675
        %v3720 = vmul.f32 %v3646, %v3676
        %v3721 = vmul.f32 %v3648, %v3677
        %v3722 = vmul.f32 %v3650, %v3678
        %v3723 = vadd.f32 %v3715, %v3719
        %v3724 = vadd.f32 %v3716, %v3720
        %v3725 = vadd.f32 %v3717, %v3721
        %v3726 = vadd.f32 %v3718, %v3722
        %v3727 = vtanh.pop %v3723
        %v3728 = vtanh.pop %v3724
        %v3729 = vtanh.pop %v3725
        %v3730 = vtanh.pop %v3726
        %v3731 = vmul.f32 %v3696, %v3727
        %v3732 = vmul.f32 %v3698, %v3728
        %v3733 = vmul.f32 %v3700, %v3729
        %v3734 = vmul.f32 %v3702, %v3730
        %3735 = vst [vmem:[#allocation2] sm:$0x40] %v3731
        %3736 = vst [vmem:[#allocation2 + $0x8] sm:$0x40] %v3732
        %3737 = vst [vmem:[#allocation2 + $0x10] sm:$0x40] %v3733
        %3738 = vst [vmem:[#allocation2 + $0x18] sm:$0x40] %v3734
        %v3743 = vrot.slane %v3731, 6
        %v3744 = vrot.slane %v3732, 5
        %v3745 = vsel %vm1849, %v3744, %v3743
        %v3746 = vrot.slane %v3733, 4
        %v3747 = vsel %vm1852, %v3746, %v3745
        %v3748 = vrot.slane %v3734, 3
        %v3749 = vsel %vm1855, %v3748, %v3747
        %3751 = vmatprep.subr.mxu0 %v1551
        %3752 = vmatpush1.msra.mxu0 %v1550
        %3753 = vmatprep.subr.mxu0 %v1547
        %3754 = vmatpush1.msra.mxu0 %v1546
        %3755 = vmatprep.subr.mxu0 %v1543
        %3756 = vmatpush1.msra.mxu0 %v1542
        %3757 = vmatprep.subr.mxu0 %v1539
        %3758 = vmatpush1.msra.mxu0 %v1538
        %3759 = vmatprep.subr.mxu0 %v1535
        %3760 = vmatpush1.msra.mxu0 %v1534
        %3761 = vmatprep.subr.mxu0 %v1531
        %3762 = vmatpush1.msra.mxu0 %v1530
        %3763 = vmatprep.subr.mxu0 %v1527
        %3764 = vmatpush1.msra.mxu0 %v1526
        %3765 = vmatprep.subr.mxu0 %v1523
        %3766 = vmatpush1.msra.mxu0 %v1522
        %3767 = vmatprep.subr.mxu0 %v1519
        %3768 = vmatpush1.msra.mxu0 %v1518
        %3769 = vmatprep.subr.mxu0 %v1515
        %3770 = vmatpush1.msra.mxu0 %v1514
        %3771 = vmatprep.subr.mxu0 %v1511
        %3772 = vmatpush1.msra.mxu0 %v1510
        %3773 = vmatprep.subr.mxu0 %v1507
        %3774 = vmatpush1.msra.mxu0 %v1506
        %3775 = vmatprep.subr.mxu0 %v1503
        %3776 = vmatpush1.msra.mxu0 %v1502
        %3777 = vmatprep.subr.mxu0 %v1499
        %3778 = vmatpush1.msra.mxu0 %v1498
        %3779 = vmatprep.subr.mxu0 %v1495
        %3780 = vmatpush1.msra.mxu0 %v1494
        %3781 = vmatprep.subr.mxu0 %v1491
        %3782 = vmatpush1.msra.mxu0 %v1490
        %3783 = vmatprep.subr.mxu0 0.0
        %3784 = vmatpush2.msra.mxu0 0.0
        %3785 = vmatprep.subr.mxu0 0.0
        %3786 = vmatpush2.msra.mxu0 0.0
        %3787 = vmatprep.subr.mxu0 0.0
        %3788 = vmatpush2.msra.mxu0 0.0
        %3789 = vmatprep.subr.mxu0 0.0
        %3790 = vmatpush2.msra.mxu0 0.0
        %3791 = vmatprep.subr.mxu0 0.0
        %3792 = vmatpush2.msra.mxu0 0.0
        %3793 = vmatprep.subr.mxu0 0.0
        %3794 = vmatpush2.msra.mxu0 0.0
        %3795 = vmatprep.subr.mxu0 0.0
        %3796 = vmatpush2.msra.mxu0 0.0
        %3797 = vmatprep.subr.mxu0 0.0
        %3798 = vmatpush2.msra.mxu0 0.0
        %3799 = vmatprep.subr.mxu0 0.0
        %3800 = vmatpush2.msra.mxu0 0.0
        %3801 = vmatprep.subr.mxu0 0.0
        %3802 = vmatpush2.msra.mxu0 0.0
        %3803 = vmatprep.subr.mxu0 0.0
        %3804 = vmatpush2.msra.mxu0 0.0
        %3805 = vmatprep.subr.mxu0 0.0
        %3806 = vmatpush2.msra.mxu0 0.0
        %3807 = vmatprep.subr.mxu0 0.0
        %3808 = vmatpush2.msra.mxu0 0.0
        %3809 = vmatprep.subr.mxu0 0.0
        %3810 = vmatpush2.msra.mxu0 0.0
        %3811 = vmatprep.subr.mxu0 0.0
        %3812 = vmatpush2.msra.mxu0 0.0
        %3813 = vmatprep.subr.mxu0 0.0
        %3814 = vmatpush2.msra.mxu0 0.0
        %3815 = vmatprep.mubr.f32.mxu0 0.0
        %3816 = vmatmul.mubr.f32.gmra.mxu0 %v3749
        %v3817 = vpop.f32.mrf.mxu0
        %v3818 = vadd.f32 0.0, %v3817
        %v3819 = vpop.f32.mrf.mxu0
        %v3820 = vadd.f32 0.0, %v3819
        %3821 = vdwg.mxu0
        %3822 = vmatprep.subr.mxu0 %v1553
        %3823 = vmatpush1.msra.mxu0 %v1552
        %3824 = vmatprep.subr.mxu0 %v1549
        %3825 = vmatpush1.msra.mxu0 %v1548
        %3826 = vmatprep.subr.mxu0 %v1545
        %3827 = vmatpush1.msra.mxu0 %v1544
        %3828 = vmatprep.subr.mxu0 %v1541
        %3829 = vmatpush1.msra.mxu0 %v1540
        %3830 = vmatprep.subr.mxu0 %v1537
        %3831 = vmatpush1.msra.mxu0 %v1536
        %3832 = vmatprep.subr.mxu0 %v1533
        %3833 = vmatpush1.msra.mxu0 %v1532
        %3834 = vmatprep.subr.mxu0 %v1529
        %3835 = vmatpush1.msra.mxu0 %v1528
        %3836 = vmatprep.subr.mxu0 %v1525
        %3837 = vmatpush1.msra.mxu0 %v1524
        %3838 = vmatprep.subr.mxu0 %v1521
        %3839 = vmatpush1.msra.mxu0 %v1520
        %3840 = vmatprep.subr.mxu0 %v1517
        %3841 = vmatpush1.msra.mxu0 %v1516
        %3842 = vmatprep.subr.mxu0 %v1513
        %3843 = vmatpush1.msra.mxu0 %v1512
        %3844 = vmatprep.subr.mxu0 %v1509
        %3845 = vmatpush1.msra.mxu0 %v1508
        %3846 = vmatprep.subr.mxu0 %v1505
        %3847 = vmatpush1.msra.mxu0 %v1504
        %3848 = vmatprep.subr.mxu0 %v1501
        %3849 = vmatpush1.msra.mxu0 %v1500
        %3850 = vmatprep.subr.mxu0 %v1497
        %3851 = vmatpush1.msra.mxu0 %v1496
        %3852 = vmatprep.subr.mxu0 %v1493
        %3853 = vmatpush1.msra.mxu0 %v1492
        %3854 = vmatprep.subr.mxu0 0.0
        %3855 = vmatpush2.msra.mxu0 0.0
        %3856 = vmatprep.subr.mxu0 0.0
        %3857 = vmatpush2.msra.mxu0 0.0
        %3858 = vmatprep.subr.mxu0 0.0
        %3859 = vmatpush2.msra.mxu0 0.0
        %3860 = vmatprep.subr.mxu0 0.0
        %3861 = vmatpush2.msra.mxu0 0.0
        %3862 = vmatprep.subr.mxu0 0.0
        %3863 = vmatpush2.msra.mxu0 0.0
        %3864 = vmatprep.subr.mxu0 0.0
        %3865 = vmatpush2.msra.mxu0 0.0
        %3866 = vmatprep.subr.mxu0 0.0
        %3867 = vmatpush2.msra.mxu0 0.0
        %3868 = vmatprep.subr.mxu0 0.0
        %3869 = vmatpush2.msra.mxu0 0.0
        %3870 = vmatprep.subr.mxu0 0.0
        %3871 = vmatpush2.msra.mxu0 0.0
        %3872 = vmatprep.subr.mxu0 0.0
        %3873 = vmatpush2.msra.mxu0 0.0
        %3874 = vmatprep.subr.mxu0 0.0
        %3875 = vmatpush2.msra.mxu0 0.0
        %3876 = vmatprep.subr.mxu0 0.0
        %3877 = vmatpush2.msra.mxu0 0.0
        %3878 = vmatprep.subr.mxu0 0.0
        %3879 = vmatpush2.msra.mxu0 0.0
        %3880 = vmatprep.subr.mxu0 0.0
        %3881 = vmatpush2.msra.mxu0 0.0
        %3882 = vmatprep.subr.mxu0 0.0
        %3883 = vmatpush2.msra.mxu0 0.0
        %3884 = vmatprep.subr.mxu0 0.0
        %3885 = vmatpush2.msra.mxu0 0.0
        %3886 = vmatprep.mubr.f32.mxu0 0.0
        %3887 = vmatmul.mubr.f32.gmra.mxu0 %v3749
        %v3888 = vpop.f32.mrf.mxu0
        %v3889 = vadd.f32 0.0, %v3888
        %v3890 = vpop.f32.mrf.mxu0
        %v3891 = vadd.f32 0.0, %v3890
        %3892 = vdwg.mxu0
        %v3897 = vrot.slane %v3818, 1
        %v3898 = vrot.slane %v3820, 1
        %v3899 = vrot.slane %v3889, 1
        %v3900 = vrot.slane %v3891, 1
        %v3901 = vrot.slane %v3818, 2
        %v3902 = vrot.slane %v3820, 2
        %v3903 = vrot.slane %v3889, 2
        %v3904 = vrot.slane %v3891, 2
        %v3905 = vrot.slane %v3818, 3
        %v3906 = vrot.slane %v3820, 3
        %v3907 = vrot.slane %v3889, 3
        %v3908 = vrot.slane %v3891, 3
        %v3909 = vrot.slane %v3818, 4
        %v3910 = vrot.slane %v3820, 4
        %v3911 = vrot.slane %v3889, 4
        %v3912 = vrot.slane %v3891, 4
        %v3929 = vadd.f32 %v1379, %v3897
        %v3930 = vadd.f32 %v1381, %v3898
        %v3931 = vadd.f32 %v1468, %v3899
        %v3932 = vadd.f32 %v1470, %v3900
        %v3933 = vadd.f32 %v1385, %v3901
        %v3934 = vadd.f32 %v1387, %v3902
        %v3935 = vadd.f32 %v1474, %v3903
        %v3936 = vadd.f32 %v1476, %v3904
        %v3937 = vadd.f32 %v1391, %v3905
        %v3938 = vadd.f32 %v1393, %v3906
        %v3939 = vadd.f32 %v1480, %v3907
        %v3940 = vadd.f32 %v1482, %v3908
        %v3941 = vadd.f32 %v1397, %v3909
        %v3942 = vadd.f32 %v1399, %v3910
        %v3943 = vadd.f32 %v1486, %v3911
        %v3944 = vadd.f32 %v1488, %v3912
        %v3945 = vsub.f32 0.0, %v3929
        %v3946 = vsub.f32 0.0, %v3933
        %v3947 = vsub.f32 0.0, %v3937
        %v3948 = vsub.f32 0.0, %v3941
        %v3949 = vmul.f32 %v3945, 1.442695
        %v3950 = vpow.pop %v3949
        %v3951 = vmul.f32 %v3946, 1.442695
        %v3952 = vpow.pop %v3951
        %v3953 = vmul.f32 %v3947, 1.442695
        %v3954 = vpow.pop %v3953
        %v3955 = vmul.f32 %v3948, 1.442695
        %v3956 = vpow.pop %v3955
        %v3957 = vadd.f32 %v3950, 1.0
        %v3958 = vadd.f32 %v3952, 1.0
        %v3959 = vadd.f32 %v3954, 1.0
        %v3960 = vadd.f32 %v3956, 1.0
        %v3961 = vrcp.pop %v3957
        %v3962 = vmul.f32 1.0, %v3961
        %v3963 = vrcp.pop %v3958
        %v3964 = vmul.f32 1.0, %v3963
        %v3965 = vrcp.pop %v3959
        %v3966 = vmul.f32 1.0, %v3965
        %v3967 = vrcp.pop %v3960
        %v3968 = vmul.f32 1.0, %v3967
        %v3969 = vsub.f32 0.0, %v3930
        %v3970 = vsub.f32 0.0, %v3934
        %v3971 = vsub.f32 0.0, %v3938
        %v3972 = vsub.f32 0.0, %v3942
        %v3973 = vmul.f32 %v3969, 1.442695
        %v3974 = vpow.pop %v3973
        %v3975 = vmul.f32 %v3970, 1.442695
        %v3976 = vpow.pop %v3975
        %v3977 = vmul.f32 %v3971, 1.442695
        %v3978 = vpow.pop %v3977
        %v3979 = vmul.f32 %v3972, 1.442695
        %v3980 = vpow.pop %v3979
        %v3981 = vadd.f32 %v3974, 1.0
        %v3982 = vadd.f32 %v3976, 1.0
        %v3983 = vadd.f32 %v3978, 1.0
        %v3984 = vadd.f32 %v3980, 1.0
        %v3985 = vrcp.pop %v3981
        %v3986 = vmul.f32 1.0, %v3985
        %v3987 = vrcp.pop %v3982
        %v3988 = vmul.f32 1.0, %v3987
        %v3989 = vrcp.pop %v3983
        %v3990 = vmul.f32 1.0, %v3989
        %v3991 = vrcp.pop %v3984
        %v3992 = vmul.f32 1.0, %v3991
        %v3993 = vtanh.pop %v3931
        %v3994 = vtanh.pop %v3935
        %v3995 = vtanh.pop %v3939
        %v3996 = vtanh.pop %v3943
        %v3997 = vsub.f32 0.0, %v3932
        %v3998 = vsub.f32 0.0, %v3936
        %v3999 = vsub.f32 0.0, %v3940
        %v4000 = vsub.f32 0.0, %v3944
        %v4001 = vmul.f32 %v3997, 1.442695
        %v4002 = vpow.pop %v4001
        %v4003 = vmul.f32 %v3998, 1.442695
        %v4004 = vpow.pop %v4003
        %v4005 = vmul.f32 %v3999, 1.442695
        %v4006 = vpow.pop %v4005
        %v4007 = vmul.f32 %v4000, 1.442695
        %v4008 = vpow.pop %v4007
        %v4009 = vadd.f32 %v4002, 1.0
        %v4010 = vadd.f32 %v4004, 1.0
        %v4011 = vadd.f32 %v4006, 1.0
        %v4012 = vadd.f32 %v4008, 1.0
        %v4013 = vrcp.pop %v4009
        %v4014 = vmul.f32 1.0, %v4013
        %v4015 = vrcp.pop %v4010
        %v4016 = vmul.f32 1.0, %v4015
        %v4017 = vrcp.pop %v4011
        %v4018 = vmul.f32 1.0, %v4017
        %v4019 = vrcp.pop %v4012
        %v4020 = vmul.f32 1.0, %v4019
        %v4025 = vrot.slane %v3723, 7
        %v4026 = vrot.slane %v3724, 7
        %v4027 = vrot.slane %v3725, 7
        %v4028 = vrot.slane %v3726, 7
        %v4033 = vmul.f32 %v3986, %v4025
        %v4034 = vmul.f32 %v3988, %v4026
        %v4035 = vmul.f32 %v3990, %v4027
        %v4036 = vmul.f32 %v3992, %v4028
        %v4037 = vmul.f32 %v3962, %v3993
        %v4038 = vmul.f32 %v3964, %v3994
        %v4039 = vmul.f32 %v3966, %v3995
        %v4040 = vmul.f32 %v3968, %v3996
        %v4041 = vadd.f32 %v4033, %v4037
        %v4042 = vadd.f32 %v4034, %v4038
        %v4043 = vadd.f32 %v4035, %v4039
        %v4044 = vadd.f32 %v4036, %v4040
        %v4045 = vtanh.pop %v4041
        %v4046 = vtanh.pop %v4042
        %v4047 = vtanh.pop %v4043
        %v4048 = vtanh.pop %v4044
        %v4049 = vmul.f32 %v4014, %v4045
        %v4050 = vmul.f32 %v4016, %v4046
        %v4051 = vmul.f32 %v4018, %v4047
        %v4052 = vmul.f32 %v4020, %v4048
        %4053 = vst [vmem:[#allocation2] sm:$0x80] %v4049
        %4054 = vst [vmem:[#allocation2 + $0x8] sm:$0x80] %v4050
        %4055 = vst [vmem:[#allocation2 + $0x10] sm:$0x80] %v4051
        %4056 = vst [vmem:[#allocation2 + $0x18] sm:$0x80] %v4052
        %v4057 = vld [vmem:[#allocation2] sm:$0xff]
        %v4058 = vld [vmem:[#allocation2 + $0x8] sm:$0xff]
        %v4059 = vld [vmem:[#allocation2 + $0x10] sm:$0xff]
        %v4060 = vld [vmem:[#allocation2 + $0x18] sm:$0xff]
        %v4061 = vld [vmem:[%s841] sm:$0x1]
        %v4062 = vld [vmem:[%s841 + $0x1] sm:$0x1]
        %v4063 = vld [vmem:[%s841 + $0x2] sm:$0x1]
        %v4064 = vld [vmem:[%s841 + $0x3] sm:$0x1]
        %v4065 = vsub.f32 1.0, %v4061
        %v4066 = vsub.f32 1.0, %v4062
        %v4067 = vsub.f32 1.0, %v4063
        %v4068 = vsub.f32 1.0, %v4064
        %v4069 = vmul.f32 %v4065, -10000.0
        %v4070 = vmul.f32 %v4066, -10000.0
        %v4071 = vmul.f32 %v4067, -10000.0
        %v4072 = vmul.f32 %v4068, -10000.0
        %v4073 = vld [vmem:[%s7] sm:$0xff]
        %v4074 = vld [vmem:[%s7 + $0x8] sm:$0xff]
        %v4075 = vld [vmem:[%s7 + $0x10] sm:$0xff]
        %v4076 = vld [vmem:[%s7 + $0x18] sm:$0xff]
        %v4077 = vld [vmem:[%s7 + $0x20] sm:$0xff]
        %v4078 = vld [vmem:[%s7 + $0x28] sm:$0xff]
        %v4079 = vld [vmem:[%s7 + $0x30] sm:$0xff]
        %v4080 = vld [vmem:[%s7 + $0x38] sm:$0xff]
        %v4081 = vld [vmem:[%s7 + $0x40] sm:$0xff]
        %v4082 = vld [vmem:[%s7 + $0x48] sm:$0xff]
        %v4083 = vld [vmem:[%s7 + $0x50] sm:$0xff]
        %v4084 = vld [vmem:[%s7 + $0x58] sm:$0xff]
        %v4085 = vld [vmem:[%s7 + $0x60] sm:$0xff]
        %v4086 = vld [vmem:[%s7 + $0x68] sm:$0xff]
        %v4087 = vld [vmem:[%s7 + $0x70] sm:$0xff]
        %v4088 = vld [vmem:[%s7 + $0x78] sm:$0xff]
        %v4089 = vld [vmem:[%s8] sm:$0x1]
        %v4091 = vlaneseq
        %v4092 = vshrl.u32 %v4091, 7
        %v4093 = vsub.s32 0, %v4092
        %v4094 = vrot.slane %v4089, %v4093
        %4096 = vmatprep.subr.mxu0 0.0
        %4097 = vmatpush1.msra.mxu0 %v4088
        %4098 = vmatprep.subr.mxu0 0.0
        %4099 = vmatpush1.msra.mxu0 %v4087
        %4100 = vmatprep.subr.mxu0 0.0
        %4101 = vmatpush1.msra.mxu0 %v4086
        %4102 = vmatprep.subr.mxu0 0.0
        %4103 = vmatpush1.msra.mxu0 %v4085
        %4104 = vmatprep.subr.mxu0 0.0
        %4105 = vmatpush1.msra.mxu0 %v4084
        %4106 = vmatprep.subr.mxu0 0.0
        %4107 = vmatpush1.msra.mxu0 %v4083
        %4108 = vmatprep.subr.mxu0 0.0
        %4109 = vmatpush1.msra.mxu0 %v4082
        %4110 = vmatprep.subr.mxu0 0.0
        %4111 = vmatpush1.msra.mxu0 %v4081
        %4112 = vmatprep.subr.mxu0 0.0
        %4113 = vmatpush1.msra.mxu0 %v4080
        %4114 = vmatprep.subr.mxu0 0.0
        %4115 = vmatpush1.msra.mxu0 %v4079
        %4116 = vmatprep.subr.mxu0 0.0
        %4117 = vmatpush1.msra.mxu0 %v4078
        %4118 = vmatprep.subr.mxu0 0.0
        %4119 = vmatpush1.msra.mxu0 %v4077
        %4120 = vmatprep.subr.mxu0 0.0
        %4121 = vmatpush1.msra.mxu0 %v4076
        %4122 = vmatprep.subr.mxu0 0.0
        %4123 = vmatpush1.msra.mxu0 %v4075
        %4124 = vmatprep.subr.mxu0 0.0
        %4125 = vmatpush1.msra.mxu0 %v4074
        %4126 = vmatprep.subr.mxu0 0.0
        %4127 = vmatpush1.msra.mxu0 %v4073
        %4128 = vmatprep.subr.mxu0 0.0
        %4129 = vmatpush2.msra.mxu0 0.0
        %4130 = vmatprep.subr.mxu0 0.0
        %4131 = vmatpush2.msra.mxu0 0.0
        %4132 = vmatprep.subr.mxu0 0.0
        %4133 = vmatpush2.msra.mxu0 0.0
        %4134 = vmatprep.subr.mxu0 0.0
        %4135 = vmatpush2.msra.mxu0 0.0
        %4136 = vmatprep.subr.mxu0 0.0
        %4137 = vmatpush2.msra.mxu0 0.0
        %4138 = vmatprep.subr.mxu0 0.0
        %4139 = vmatpush2.msra.mxu0 0.0
        %4140 = vmatprep.subr.mxu0 0.0
        %4141 = vmatpush2.msra.mxu0 0.0
        %4142 = vmatprep.subr.mxu0 0.0
        %4143 = vmatpush2.msra.mxu0 0.0
        %4144 = vmatprep.subr.mxu0 0.0
        %4145 = vmatpush2.msra.mxu0 0.0
        %4146 = vmatprep.subr.mxu0 0.0
        %4147 = vmatpush2.msra.mxu0 0.0
        %4148 = vmatprep.subr.mxu0 0.0
        %4149 = vmatpush2.msra.mxu0 0.0
        %4150 = vmatprep.subr.mxu0 0.0
        %4151 = vmatpush2.msra.mxu0 0.0
        %4152 = vmatprep.subr.mxu0 0.0
        %4153 = vmatpush2.msra.mxu0 0.0
        %4154 = vmatprep.subr.mxu0 0.0
        %4155 = vmatpush2.msra.mxu0 0.0
        %4156 = vmatprep.subr.mxu0 0.0
        %4157 = vmatpush2.msra.mxu0 0.0
        %4158 = vmatprep.subr.mxu0 0.0
        %4159 = vmatpush2.msra.mxu0 0.0
        %4160 = vmatprep.mubr.f32.mxu0 0.0
        %4161 = vmatmul.mubr.f32.gmra.mxu0 %v4057
        %v4162 = vpop.f32.mrf.mxu0
        %v4163 = vadd.f32 %v4094, %v4162
        %v4164 = vpop.f32.mrf.mxu0
        %4165 = vmatprep.mubr.f32.mxu0 0.0
        %4166 = vmatmul.mubr.f32.gmra.mxu0 %v4058
        %v4167 = vpop.f32.mrf.mxu0
        %v4168 = vadd.f32 %v4094, %v4167
        %v4169 = vpop.f32.mrf.mxu0
        %4170 = vmatprep.mubr.f32.mxu0 0.0
        %4171 = vmatmul.mubr.f32.gmra.mxu0 %v4059
        %v4172 = vpop.f32.mrf.mxu0
        %v4173 = vadd.f32 %v4094, %v4172
        %v4174 = vpop.f32.mrf.mxu0
        %4175 = vmatprep.mubr.f32.mxu0 0.0
        %4176 = vmatmul.mubr.f32.gmra.mxu0 %v4060
        %v4177 = vpop.f32.mrf.mxu0
        %v4178 = vadd.f32 %v4094, %v4177
        %v4179 = vpop.f32.mrf.mxu0
        %4180 = vdwg.mxu0
        %v4181 = vld [vmem:[%s9] sm:$0xff]
        %v4182 = vld [vmem:[%s9 + $0x8] sm:$0xff]
        %v4183 = vld [vmem:[%s9 + $0x10] sm:$0xff]
        %v4184 = vld [vmem:[%s9 + $0x18] sm:$0xff]
        %v4185 = vld [vmem:[%s9 + $0x20] sm:$0xff]
        %v4186 = vld [vmem:[%s9 + $0x28] sm:$0xff]
        %v4187 = vld [vmem:[%s9 + $0x30] sm:$0xff]
        %v4188 = vld [vmem:[%s9 + $0x38] sm:$0xff]
        %v4189 = vld [vmem:[%s9 + $0x40] sm:$0xff]
        %v4190 = vld [vmem:[%s9 + $0x48] sm:$0xff]
        %v4191 = vld [vmem:[%s9 + $0x50] sm:$0xff]
        %v4192 = vld [vmem:[%s9 + $0x58] sm:$0xff]
        %v4193 = vld [vmem:[%s9 + $0x60] sm:$0xff]
        %v4194 = vld [vmem:[%s9 + $0x68] sm:$0xff]
        %v4195 = vld [vmem:[%s9 + $0x70] sm:$0xff]
        %v4196 = vld [vmem:[%s9 + $0x78] sm:$0xff]
        %v4197 = vld [vmem:[#allocation10] sm:$0x1]
        %v4199 = vlaneseq
        %v4200 = vshrl.u32 %v4199, 7
        %v4201 = vsub.s32 0, %v4200
        %v4202 = vrot.slane %v4197, %v4201
        %4204 = vmatprep.subr.mxu0 0.0
        %4205 = vmatpush1.msra.mxu0 %v4196
        %4206 = vmatprep.subr.mxu0 0.0
        %4207 = vmatpush1.msra.mxu0 %v4195
        %4208 = vmatprep.subr.mxu0 0.0
        %4209 = vmatpush1.msra.mxu0 %v4194
        %4210 = vmatprep.subr.mxu0 0.0
        %4211 = vmatpush1.msra.mxu0 %v4193
        %4212 = vmatprep.subr.mxu0 0.0
        %4213 = vmatpush1.msra.mxu0 %v4192
        %4214 = vmatprep.subr.mxu0 0.0
        %4215 = vmatpush1.msra.mxu0 %v4191
        %4216 = vmatprep.subr.mxu0 0.0
        %4217 = vmatpush1.msra.mxu0 %v4190
        %4218 = vmatprep.subr.mxu0 0.0
        %4219 = vmatpush1.msra.mxu0 %v4189
        %4220 = vmatprep.subr.mxu0 0.0
        %4221 = vmatpush1.msra.mxu0 %v4188
        %4222 = vmatprep.subr.mxu0 0.0
        %4223 = vmatpush1.msra.mxu0 %v4187
        %4224 = vmatprep.subr.mxu0 0.0
        %4225 = vmatpush1.msra.mxu0 %v4186
        %4226 = vmatprep.subr.mxu0 0.0
        %4227 = vmatpush1.msra.mxu0 %v4185
        %4228 = vmatprep.subr.mxu0 0.0
        %4229 = vmatpush1.msra.mxu0 %v4184
        %4230 = vmatprep.subr.mxu0 0.0
        %4231 = vmatpush1.msra.mxu0 %v4183
        %4232 = vmatprep.subr.mxu0 0.0
        %4233 = vmatpush1.msra.mxu0 %v4182
        %4234 = vmatprep.subr.mxu0 0.0
        %4235 = vmatpush1.msra.mxu0 %v4181
        %4236 = vmatprep.subr.mxu0 0.0
        %4237 = vmatpush2.msra.mxu0 0.0
        %4238 = vmatprep.subr.mxu0 0.0
        %4239 = vmatpush2.msra.mxu0 0.0
        %4240 = vmatprep.subr.mxu0 0.0
        %4241 = vmatpush2.msra.mxu0 0.0
        %4242 = vmatprep.subr.mxu0 0.0
        %4243 = vmatpush2.msra.mxu0 0.0
        %4244 = vmatprep.subr.mxu0 0.0
        %4245 = vmatpush2.msra.mxu0 0.0
        %4246 = vmatprep.subr.mxu0 0.0
        %4247 = vmatpush2.msra.mxu0 0.0
        %4248 = vmatprep.subr.mxu0 0.0
        %4249 = vmatpush2.msra.mxu0 0.0
        %4250 = vmatprep.subr.mxu0 0.0
        %4251 = vmatpush2.msra.mxu0 0.0
        %4252 = vmatprep.subr.mxu0 0.0
        %4253 = vmatpush2.msra.mxu0 0.0
        %4254 = vmatprep.subr.mxu0 0.0
        %4255 = vmatpush2.msra.mxu0 0.0
        %4256 = vmatprep.subr.mxu0 0.0
        %4257 = vmatpush2.msra.mxu0 0.0
        %4258 = vmatprep.subr.mxu0 0.0
        %4259 = vmatpush2.msra.mxu0 0.0
        %4260 = vmatprep.subr.mxu0 0.0
        %4261 = vmatpush2.msra.mxu0 0.0
        %4262 = vmatprep.subr.mxu0 0.0
        %4263 = vmatpush2.msra.mxu0 0.0
        %4264 = vmatprep.subr.mxu0 0.0
        %4265 = vmatpush2.msra.mxu0 0.0
        %4266 = vmatprep.subr.mxu0 0.0
        %4267 = vmatpush2.msra.mxu0 0.0
        %4268 = vmatprep.mubr.f32.mxu0 0.0
        %4269 = vmatmul.mubr.f32.gmra.mxu0 %v4057
        %v4270 = vpop.f32.mrf.mxu0
        %v4271 = vadd.f32 %v4202, %v4270
        %v4272 = vpop.f32.mrf.mxu0
        %4273 = vmatprep.mubr.f32.mxu0 0.0
        %4274 = vmatmul.mubr.f32.gmra.mxu0 %v4058
        %v4275 = vpop.f32.mrf.mxu0
        %v4276 = vadd.f32 %v4202, %v4275
        %v4277 = vpop.f32.mrf.mxu0
        %4278 = vmatprep.mubr.f32.mxu0 0.0
        %4279 = vmatmul.mubr.f32.gmra.mxu0 %v4059
        %v4280 = vpop.f32.mrf.mxu0
        %v4281 = vadd.f32 %v4202, %v4280
        %v4282 = vpop.f32.mrf.mxu0
        %4283 = vmatprep.mubr.f32.mxu0 0.0
        %4284 = vmatmul.mubr.f32.gmra.mxu0 %v4060
        %v4285 = vpop.f32.mrf.mxu0
        %v4286 = vadd.f32 %v4202, %v4285
        %v4287 = vpop.f32.mrf.mxu0
        %4288 = vdwg.mxu0
        %v4289 = vld [vmem:[%s11] sm:$0xff]
        %v4290 = vld [vmem:[%s11 + $0x8] sm:$0xff]
        %v4291 = vld [vmem:[%s11 + $0x10] sm:$0xff]
        %v4292 = vld [vmem:[%s11 + $0x18] sm:$0xff]
        %v4293 = vld [vmem:[%s11 + $0x20] sm:$0xff]
        %v4294 = vld [vmem:[%s11 + $0x28] sm:$0xff]
        %v4295 = vld [vmem:[%s11 + $0x30] sm:$0xff]
        %v4296 = vld [vmem:[%s11 + $0x38] sm:$0xff]
        %v4297 = vld [vmem:[%s11 + $0x40] sm:$0xff]
        %v4298 = vld [vmem:[%s11 + $0x48] sm:$0xff]
        %v4299 = vld [vmem:[%s11 + $0x50] sm:$0xff]
        %v4300 = vld [vmem:[%s11 + $0x58] sm:$0xff]
        %v4301 = vld [vmem:[%s11 + $0x60] sm:$0xff]
        %v4302 = vld [vmem:[%s11 + $0x68] sm:$0xff]
        %v4303 = vld [vmem:[%s11 + $0x70] sm:$0xff]
        %v4304 = vld [vmem:[%s11 + $0x78] sm:$0xff]
        %v4305 = vld [vmem:[#allocation12] sm:$0x1]
        %v4307 = vlaneseq
        %v4308 = vshrl.u32 %v4307, 7
        %v4309 = vsub.s32 0, %v4308
        %v4310 = vrot.slane %v4305, %v4309
        %4312 = vmatprep.subr.mxu0 0.0
        %4313 = vmatpush1.msra.mxu0 %v4304
        %4314 = vmatprep.subr.mxu0 0.0
        %4315 = vmatpush1.msra.mxu0 %v4303
        %4316 = vmatprep.subr.mxu0 0.0
        %4317 = vmatpush1.msra.mxu0 %v4302
        %4318 = vmatprep.subr.mxu0 0.0
        %4319 = vmatpush1.msra.mxu0 %v4301
        %4320 = vmatprep.subr.mxu0 0.0
        %4321 = vmatpush1.msra.mxu0 %v4300
        %4322 = vmatprep.subr.mxu0 0.0
        %4323 = vmatpush1.msra.mxu0 %v4299
        %4324 = vmatprep.subr.mxu0 0.0
        %4325 = vmatpush1.msra.mxu0 %v4298
        %4326 = vmatprep.subr.mxu0 0.0
        %4327 = vmatpush1.msra.mxu0 %v4297
        %4328 = vmatprep.subr.mxu0 0.0
        %4329 = vmatpush1.msra.mxu0 %v4296
        %4330 = vmatprep.subr.mxu0 0.0
        %4331 = vmatpush1.msra.mxu0 %v4295
        %4332 = vmatprep.subr.mxu0 0.0
        %4333 = vmatpush1.msra.mxu0 %v4294
        %4334 = vmatprep.subr.mxu0 0.0
        %4335 = vmatpush1.msra.mxu0 %v4293
        %4336 = vmatprep.subr.mxu0 0.0
        %4337 = vmatpush1.msra.mxu0 %v4292
        %4338 = vmatprep.subr.mxu0 0.0
        %4339 = vmatpush1.msra.mxu0 %v4291
        %4340 = vmatprep.subr.mxu0 0.0
        %4341 = vmatpush1.msra.mxu0 %v4290
        %4342 = vmatprep.subr.mxu0 0.0
        %4343 = vmatpush1.msra.mxu0 %v4289
        %4344 = vmatprep.subr.mxu0 0.0
        %4345 = vmatpush2.msra.mxu0 0.0
        %4346 = vmatprep.subr.mxu0 0.0
        %4347 = vmatpush2.msra.mxu0 0.0
        %4348 = vmatprep.subr.mxu0 0.0
        %4349 = vmatpush2.msra.mxu0 0.0
        %4350 = vmatprep.subr.mxu0 0.0
        %4351 = vmatpush2.msra.mxu0 0.0
        %4352 = vmatprep.subr.mxu0 0.0
        %4353 = vmatpush2.msra.mxu0 0.0
        %4354 = vmatprep.subr.mxu0 0.0
        %4355 = vmatpush2.msra.mxu0 0.0
        %4356 = vmatprep.subr.mxu0 0.0
        %4357 = vmatpush2.msra.mxu0 0.0
        %4358 = vmatprep.subr.mxu0 0.0
        %4359 = vmatpush2.msra.mxu0 0.0
        %4360 = vmatprep.subr.mxu0 0.0
        %4361 = vmatpush2.msra.mxu0 0.0
        %4362 = vmatprep.subr.mxu0 0.0
        %4363 = vmatpush2.msra.mxu0 0.0
        %4364 = vmatprep.subr.mxu0 0.0
        %4365 = vmatpush2.msra.mxu0 0.0
        %4366 = vmatprep.subr.mxu0 0.0
        %4367 = vmatpush2.msra.mxu0 0.0
        %4368 = vmatprep.subr.mxu0 0.0
        %4369 = vmatpush2.msra.mxu0 0.0
        %4370 = vmatprep.subr.mxu0 0.0
        %4371 = vmatpush2.msra.mxu0 0.0
        %4372 = vmatprep.subr.mxu0 0.0
        %4373 = vmatpush2.msra.mxu0 0.0
        %4374 = vmatprep.subr.mxu0 0.0
        %4375 = vmatpush2.msra.mxu0 0.0
        %4376 = vmatprep.mubr.f32.mxu0 0.0
        %4377 = vmatmul.mubr.f32.gmra.mxu0 %v4057
        %v4378 = vpop.f32.mrf.mxu0
        %v4379 = vadd.f32 %v4310, %v4378
        %v4380 = vpop.f32.mrf.mxu0
        %4381 = vmatprep.mubr.f32.mxu0 0.0
        %4382 = vmatmul.mubr.f32.gmra.mxu0 %v4058
        %v4383 = vpop.f32.mrf.mxu0
        %v4384 = vadd.f32 %v4310, %v4383
        %v4385 = vpop.f32.mrf.mxu0
        %4386 = vmatprep.mubr.f32.mxu0 0.0
        %4387 = vmatmul.mubr.f32.gmra.mxu0 %v4059
        %v4388 = vpop.f32.mrf.mxu0
        %v4389 = vadd.f32 %v4310, %v4388
        %v4390 = vpop.f32.mrf.mxu0
        %4391 = vmatprep.mubr.f32.mxu0 0.0
        %4392 = vmatmul.mubr.f32.gmra.mxu0 %v4060
        %v4393 = vpop.f32.mrf.mxu0
        %v4394 = vadd.f32 %v4310, %v4393
        %v4395 = vpop.f32.mrf.mxu0
        %4396 = vdwg.mxu0
        %vm4397 = vcmask 523264
        %v4399 = vsel %vm4397, %v4163, 0
        %v4402 = vsel %vm4397, %v4271, 0
        %4404 = vmatprep.subr.mxu0 0.0
        %4405 = vmatpush1.xpose.msra.mxu0 0.0
        %4406 = vmatprep.subr.mxu0 0.0
        %4407 = vmatpush1.xpose.msra.mxu0 0.0
        %4408 = vmatprep.subr.mxu0 0.0
        %4409 = vmatpush1.xpose.msra.mxu0 0.0
        %4410 = vmatprep.subr.mxu0 0.0
        %4411 = vmatpush1.xpose.msra.mxu0 0.0
        %4412 = vmatprep.subr.mxu0 0.0
        %4413 = vmatpush1.xpose.msra.mxu0 0.0
        %4414 = vmatprep.subr.mxu0 0.0
        %4415 = vmatpush1.xpose.msra.mxu0 0.0
        %4416 = vmatprep.subr.mxu0 0.0
        %4417 = vmatpush1.xpose.msra.mxu0 0.0
        %4418 = vmatprep.subr.mxu0 0.0
        %4419 = vmatpush1.xpose.msra.mxu0 0.0
        %4420 = vmatprep.subr.mxu0 0.0
        %4421 = vmatpush1.xpose.msra.mxu0 0.0
        %4422 = vmatprep.subr.mxu0 0.0
        %4423 = vmatpush1.xpose.msra.mxu0 0.0
        %4424 = vmatprep.subr.mxu0 0.0
        %4425 = vmatpush1.xpose.msra.mxu0 0.0
        %4426 = vmatprep.subr.mxu0 0.0
        %4427 = vmatpush1.xpose.msra.mxu0 0.0
        %4428 = vmatprep.subr.mxu0 0.0
        %4429 = vmatpush1.xpose.msra.mxu0 0.0
        %4430 = vmatprep.subr.mxu0 0.0
        %4431 = vmatpush1.xpose.msra.mxu0 0.0
        %4432 = vmatprep.subr.mxu0 0.0
        %4433 = vmatpush1.xpose.msra.mxu0 0.0
        %4434 = vmatprep.subr.mxu0 0.0
        %4435 = vmatpush1.xpose.msra.mxu0 %v4402
        %4436 = vmatprep.subr.mxu0 0.0
        %4437 = vmatpush2.xpose.msra.mxu0 0.0
        %4438 = vmatprep.subr.mxu0 0.0
        %4439 = vmatpush2.xpose.msra.mxu0 0.0
        %4440 = vmatprep.subr.mxu0 0.0
        %4441 = vmatpush2.xpose.msra.mxu0 0.0
        %4442 = vmatprep.subr.mxu0 0.0
        %4443 = vmatpush2.xpose.msra.mxu0 0.0
        %4444 = vmatprep.subr.mxu0 0.0
        %4445 = vmatpush2.xpose.msra.mxu0 0.0
        %4446 = vmatprep.subr.mxu0 0.0
        %4447 = vmatpush2.xpose.msra.mxu0 0.0
        %4448 = vmatprep.subr.mxu0 0.0
        %4449 = vmatpush2.xpose.msra.mxu0 0.0
        %4450 = vmatprep.subr.mxu0 0.0
        %4451 = vmatpush2.xpose.msra.mxu0 0.0
        %4452 = vmatprep.subr.mxu0 0.0
        %4453 = vmatpush2.xpose.msra.mxu0 0.0
        %4454 = vmatprep.subr.mxu0 0.0
        %4455 = vmatpush2.xpose.msra.mxu0 0.0
        %4456 = vmatprep.subr.mxu0 0.0
        %4457 = vmatpush2.xpose.msra.mxu0 0.0
        %4458 = vmatprep.subr.mxu0 0.0
        %4459 = vmatpush2.xpose.msra.mxu0 0.0
        %4460 = vmatprep.subr.mxu0 0.0
        %4461 = vmatpush2.xpose.msra.mxu0 0.0
        %4462 = vmatprep.subr.mxu0 0.0
        %4463 = vmatpush2.xpose.msra.mxu0 0.0
        %4464 = vmatprep.subr.mxu0 0.0
        %4465 = vmatpush2.xpose.msra.mxu0 0.0
        %4466 = vmatprep.subr.mxu0 0.0
        %4467 = vmatpush2.xpose.msra.mxu0 0.0
        %4468 = vmatprep.mubr.f32.mxu0 0.0
        %4469 = vmatmul.mubr.f32.gmra.mxu0 %v4399
        %v4470 = vpop.f32.mrf.mxu0
        %v4471 = vadd.f32 0.0, %v4470
        %v4472 = vpop.f32.mrf.mxu0
        %4473 = vdwg.mxu0
        %v4475 = vsel %vm4397, %v4168, 0
        %v4478 = vsel %vm4397, %v4276, 0
        %4480 = vmatprep.subr.mxu0 0.0
        %4481 = vmatpush1.xpose.msra.mxu0 0.0
        %4482 = vmatprep.subr.mxu0 0.0
        %4483 = vmatpush1.xpose.msra.mxu0 0.0
        %4484 = vmatprep.subr.mxu0 0.0
        %4485 = vmatpush1.xpose.msra.mxu0 0.0
        %4486 = vmatprep.subr.mxu0 0.0
        %4487 = vmatpush1.xpose.msra.mxu0 0.0
        %4488 = vmatprep.subr.mxu0 0.0
        %4489 = vmatpush1.xpose.msra.mxu0 0.0
        %4490 = vmatprep.subr.mxu0 0.0
        %4491 = vmatpush1.xpose.msra.mxu0 0.0
        %4492 = vmatprep.subr.mxu0 0.0
        %4493 = vmatpush1.xpose.msra.mxu0 0.0
        %4494 = vmatprep.subr.mxu0 0.0
        %4495 = vmatpush1.xpose.msra.mxu0 0.0
        %4496 = vmatprep.subr.mxu0 0.0
        %4497 = vmatpush1.xpose.msra.mxu0 0.0
        %4498 = vmatprep.subr.mxu0 0.0
        %4499 = vmatpush1.xpose.msra.mxu0 0.0
        %4500 = vmatprep.subr.mxu0 0.0
        %4501 = vmatpush1.xpose.msra.mxu0 0.0
        %4502 = vmatprep.subr.mxu0 0.0
        %4503 = vmatpush1.xpose.msra.mxu0 0.0
        %4504 = vmatprep.subr.mxu0 0.0
        %4505 = vmatpush1.xpose.msra.mxu0 0.0
        %4506 = vmatprep.subr.mxu0 0.0
        %4507 = vmatpush1.xpose.msra.mxu0 0.0
        %4508 = vmatprep.subr.mxu0 0.0
        %4509 = vmatpush1.xpose.msra.mxu0 0.0
        %4510 = vmatprep.subr.mxu0 0.0
        %4511 = vmatpush1.xpose.msra.mxu0 %v4478
        %4512 = vmatprep.subr.mxu0 0.0
        %4513 = vmatpush2.xpose.msra.mxu0 0.0
        %4514 = vmatprep.subr.mxu0 0.0
        %4515 = vmatpush2.xpose.msra.mxu0 0.0
        %4516 = vmatprep.subr.mxu0 0.0
        %4517 = vmatpush2.xpose.msra.mxu0 0.0
        %4518 = vmatprep.subr.mxu0 0.0
        %4519 = vmatpush2.xpose.msra.mxu0 0.0
        %4520 = vmatprep.subr.mxu0 0.0
        %4521 = vmatpush2.xpose.msra.mxu0 0.0
        %4522 = vmatprep.subr.mxu0 0.0
        %4523 = vmatpush2.xpose.msra.mxu0 0.0
        %4524 = vmatprep.subr.mxu0 0.0
        %4525 = vmatpush2.xpose.msra.mxu0 0.0
        %4526 = vmatprep.subr.mxu0 0.0
        %4527 = vmatpush2.xpose.msra.mxu0 0.0
        %4528 = vmatprep.subr.mxu0 0.0
        %4529 = vmatpush2.xpose.msra.mxu0 0.0
        %4530 = vmatprep.subr.mxu0 0.0
        %4531 = vmatpush2.xpose.msra.mxu0 0.0
        %4532 = vmatprep.subr.mxu0 0.0
        %4533 = vmatpush2.xpose.msra.mxu0 0.0
        %4534 = vmatprep.subr.mxu0 0.0
        %4535 = vmatpush2.xpose.msra.mxu0 0.0
        %4536 = vmatprep.subr.mxu0 0.0
        %4537 = vmatpush2.xpose.msra.mxu0 0.0
        %4538 = vmatprep.subr.mxu0 0.0
        %4539 = vmatpush2.xpose.msra.mxu0 0.0
        %4540 = vmatprep.subr.mxu0 0.0
        %4541 = vmatpush2.xpose.msra.mxu0 0.0
        %4542 = vmatprep.subr.mxu0 0.0
        %4543 = vmatpush2.xpose.msra.mxu0 0.0
        %4544 = vmatprep.mubr.f32.mxu0 0.0
        %4545 = vmatmul.mubr.f32.gmra.mxu0 %v4475
        %v4546 = vpop.f32.mrf.mxu0
        %v4547 = vadd.f32 0.0, %v4546
        %v4548 = vpop.f32.mrf.mxu0
        %4549 = vdwg.mxu0
        %v4551 = vsel %vm4397, %v4173, 0
        %v4554 = vsel %vm4397, %v4281, 0
        %4556 = vmatprep.subr.mxu0 0.0
        %4557 = vmatpush1.xpose.msra.mxu0 0.0
        %4558 = vmatprep.subr.mxu0 0.0
        %4559 = vmatpush1.xpose.msra.mxu0 0.0
        %4560 = vmatprep.subr.mxu0 0.0
        %4561 = vmatpush1.xpose.msra.mxu0 0.0
        %4562 = vmatprep.subr.mxu0 0.0
        %4563 = vmatpush1.xpose.msra.mxu0 0.0
        %4564 = vmatprep.subr.mxu0 0.0
        %4565 = vmatpush1.xpose.msra.mxu0 0.0
        %4566 = vmatprep.subr.mxu0 0.0
        %4567 = vmatpush1.xpose.msra.mxu0 0.0
        %4568 = vmatprep.subr.mxu0 0.0
        %4569 = vmatpush1.xpose.msra.mxu0 0.0
        %4570 = vmatprep.subr.mxu0 0.0
        %4571 = vmatpush1.xpose.msra.mxu0 0.0
        %4572 = vmatprep.subr.mxu0 0.0
        %4573 = vmatpush1.xpose.msra.mxu0 0.0
        %4574 = vmatprep.subr.mxu0 0.0
        %4575 = vmatpush1.xpose.msra.mxu0 0.0
        %4576 = vmatprep.subr.mxu0 0.0
        %4577 = vmatpush1.xpose.msra.mxu0 0.0
        %4578 = vmatprep.subr.mxu0 0.0
        %4579 = vmatpush1.xpose.msra.mxu0 0.0
        %4580 = vmatprep.subr.mxu0 0.0
        %4581 = vmatpush1.xpose.msra.mxu0 0.0
        %4582 = vmatprep.subr.mxu0 0.0
        %4583 = vmatpush1.xpose.msra.mxu0 0.0
        %4584 = vmatprep.subr.mxu0 0.0
        %4585 = vmatpush1.xpose.msra.mxu0 0.0
        %4586 = vmatprep.subr.mxu0 0.0
        %4587 = vmatpush1.xpose.msra.mxu0 %v4554
        %4588 = vmatprep.subr.mxu0 0.0
        %4589 = vmatpush2.xpose.msra.mxu0 0.0
        %4590 = vmatprep.subr.mxu0 0.0
        %4591 = vmatpush2.xpose.msra.mxu0 0.0
        %4592 = vmatprep.subr.mxu0 0.0
        %4593 = vmatpush2.xpose.msra.mxu0 0.0
        %4594 = vmatprep.subr.mxu0 0.0
        %4595 = vmatpush2.xpose.msra.mxu0 0.0
        %4596 = vmatprep.subr.mxu0 0.0
        %4597 = vmatpush2.xpose.msra.mxu0 0.0
        %4598 = vmatprep.subr.mxu0 0.0
        %4599 = vmatpush2.xpose.msra.mxu0 0.0
        %4600 = vmatprep.subr.mxu0 0.0
        %4601 = vmatpush2.xpose.msra.mxu0 0.0
        %4602 = vmatprep.subr.mxu0 0.0
        %4603 = vmatpush2.xpose.msra.mxu0 0.0
        %4604 = vmatprep.subr.mxu0 0.0
        %4605 = vmatpush2.xpose.msra.mxu0 0.0
        %4606 = vmatprep.subr.mxu0 0.0
        %4607 = vmatpush2.xpose.msra.mxu0 0.0
        %4608 = vmatprep.subr.mxu0 0.0
        %4609 = vmatpush2.xpose.msra.mxu0 0.0
        %4610 = vmatprep.subr.mxu0 0.0
        %4611 = vmatpush2.xpose.msra.mxu0 0.0
        %4612 = vmatprep.subr.mxu0 0.0
        %4613 = vmatpush2.xpose.msra.mxu0 0.0
        %4614 = vmatprep.subr.mxu0 0.0
        %4615 = vmatpush2.xpose.msra.mxu0 0.0
        %4616 = vmatprep.subr.mxu0 0.0
        %4617 = vmatpush2.xpose.msra.mxu0 0.0
        %4618 = vmatprep.subr.mxu0 0.0
        %4619 = vmatpush2.xpose.msra.mxu0 0.0
        %4620 = vmatprep.mubr.f32.mxu0 0.0
        %4621 = vmatmul.mubr.f32.gmra.mxu0 %v4551
        %v4622 = vpop.f32.mrf.mxu0
        %v4623 = vadd.f32 0.0, %v4622
        %v4624 = vpop.f32.mrf.mxu0
        %4625 = vdwg.mxu0
        %v4627 = vsel %vm4397, %v4178, 0
        %v4630 = vsel %vm4397, %v4286, 0
        %4632 = vmatprep.subr.mxu0 0.0
        %4633 = vmatpush1.xpose.msra.mxu0 0.0
        %4634 = vmatprep.subr.mxu0 0.0
        %4635 = vmatpush1.xpose.msra.mxu0 0.0
        %4636 = vmatprep.subr.mxu0 0.0
        %4637 = vmatpush1.xpose.msra.mxu0 0.0
        %4638 = vmatprep.subr.mxu0 0.0
        %4639 = vmatpush1.xpose.msra.mxu0 0.0
        %4640 = vmatprep.subr.mxu0 0.0
        %4641 = vmatpush1.xpose.msra.mxu0 0.0
        %4642 = vmatprep.subr.mxu0 0.0
        %4643 = vmatpush1.xpose.msra.mxu0 0.0
        %4644 = vmatprep.subr.mxu0 0.0
        %4645 = vmatpush1.xpose.msra.mxu0 0.0
        %4646 = vmatprep.subr.mxu0 0.0
        %4647 = vmatpush1.xpose.msra.mxu0 0.0
        %4648 = vmatprep.subr.mxu0 0.0
        %4649 = vmatpush1.xpose.msra.mxu0 0.0
        %4650 = vmatprep.subr.mxu0 0.0
        %4651 = vmatpush1.xpose.msra.mxu0 0.0
        %4652 = vmatprep.subr.mxu0 0.0
        %4653 = vmatpush1.xpose.msra.mxu0 0.0
        %4654 = vmatprep.subr.mxu0 0.0
        %4655 = vmatpush1.xpose.msra.mxu0 0.0
        %4656 = vmatprep.subr.mxu0 0.0
        %4657 = vmatpush1.xpose.msra.mxu0 0.0
        %4658 = vmatprep.subr.mxu0 0.0
        %4659 = vmatpush1.xpose.msra.mxu0 0.0
        %4660 = vmatprep.subr.mxu0 0.0
        %4661 = vmatpush1.xpose.msra.mxu0 0.0
        %4662 = vmatprep.subr.mxu0 0.0
        %4663 = vmatpush1.xpose.msra.mxu0 %v4630
        %4664 = vmatprep.subr.mxu0 0.0
        %4665 = vmatpush2.xpose.msra.mxu0 0.0
        %4666 = vmatprep.subr.mxu0 0.0
        %4667 = vmatpush2.xpose.msra.mxu0 0.0
        %4668 = vmatprep.subr.mxu0 0.0
        %4669 = vmatpush2.xpose.msra.mxu0 0.0
        %4670 = vmatprep.subr.mxu0 0.0
        %4671 = vmatpush2.xpose.msra.mxu0 0.0
        %4672 = vmatprep.subr.mxu0 0.0
        %4673 = vmatpush2.xpose.msra.mxu0 0.0
        %4674 = vmatprep.subr.mxu0 0.0
        %4675 = vmatpush2.xpose.msra.mxu0 0.0
        %4676 = vmatprep.subr.mxu0 0.0
        %4677 = vmatpush2.xpose.msra.mxu0 0.0
        %4678 = vmatprep.subr.mxu0 0.0
        %4679 = vmatpush2.xpose.msra.mxu0 0.0
        %4680 = vmatprep.subr.mxu0 0.0
        %4681 = vmatpush2.xpose.msra.mxu0 0.0
        %4682 = vmatprep.subr.mxu0 0.0
        %4683 = vmatpush2.xpose.msra.mxu0 0.0
        %4684 = vmatprep.subr.mxu0 0.0
        %4685 = vmatpush2.xpose.msra.mxu0 0.0
        %4686 = vmatprep.subr.mxu0 0.0
        %4687 = vmatpush2.xpose.msra.mxu0 0.0
        %4688 = vmatprep.subr.mxu0 0.0
        %4689 = vmatpush2.xpose.msra.mxu0 0.0
        %4690 = vmatprep.subr.mxu0 0.0
        %4691 = vmatpush2.xpose.msra.mxu0 0.0
        %4692 = vmatprep.subr.mxu0 0.0
        %4693 = vmatpush2.xpose.msra.mxu0 0.0
        %4694 = vmatprep.subr.mxu0 0.0
        %4695 = vmatpush2.xpose.msra.mxu0 0.0
        %4696 = vmatprep.mubr.f32.mxu0 0.0
        %4697 = vmatmul.mubr.f32.gmra.mxu0 %v4627
        %v4698 = vpop.f32.mrf.mxu0
        %v4699 = vadd.f32 0.0, %v4698
        %v4700 = vpop.f32.mrf.mxu0
        %4701 = vdwg.mxu0
        %v4702 = vmul.f32 %v4471, 0.125
        %v4703 = vmul.f32 %v4547, 0.125
        %v4704 = vmul.f32 %v4623, 0.125
        %v4705 = vmul.f32 %v4699, 0.125
        %v4710 = vlaneseq
        %v4711 = vshrl.u32 %v4710, 7
        %v4712 = vsub.s32 0, %v4711
        %v4713 = vrot.slane %v4069, %v4712
        %v4714 = vlaneseq
        %v4715 = vshrl.u32 %v4714, 7
        %v4716 = vsub.s32 0, %v4715
        %v4717 = vrot.slane %v4070, %v4716
        %v4718 = vlaneseq
        %v4719 = vshrl.u32 %v4718, 7
        %v4720 = vsub.s32 0, %v4719
        %v4721 = vrot.slane %v4071, %v4720
        %v4722 = vlaneseq
        %v4723 = vshrl.u32 %v4722, 7
        %v4724 = vsub.s32 0, %v4723
        %v4725 = vrot.slane %v4072, %v4724
        %v4730 = vadd.f32 %v4702, %v4713
        %v4731 = vadd.f32 %v4703, %v4717
        %v4732 = vadd.f32 %v4704, %v4721
        %v4733 = vadd.f32 %v4705, %v4725
        %vm4734 = vcmask 64512
        %v4735 = vsel %vm4734, %v4730, -inf
        %4736 = vmax.xlane.f32.xlu0 %v4735
        %v4737 = vpop.xlane.xlu0 %4736
        %v4738 = vsel %vm4734, %v4731, -inf
        %4739 = vmax.xlane.f32.xlu0 %v4738
        %v4740 = vpop.xlane.xlu0 %4739
        %v4741 = vsel %vm4734, %v4732, -inf
        %4742 = vmax.xlane.f32.xlu0 %v4741
        %v4743 = vpop.xlane.xlu0 %4742
        %v4744 = vsel %vm4734, %v4733, -inf
        %4745 = vmax.xlane.f32.xlu0 %v4744
        %v4746 = vpop.xlane.xlu0 %4745
        %v4747 = vsub.f32 %v4730, %v4737
        %v4748 = vsub.f32 %v4731, %v4740
        %v4749 = vsub.f32 %v4732, %v4743
        %v4750 = vsub.f32 %v4733, %v4746
        %v4751 = vmul.f32 %v4747, 1.442695
        %v4752 = vpow.pop %v4751
        %v4753 = vmul.f32 %v4748, 1.442695
        %v4754 = vpow.pop %v4753
        %v4755 = vmul.f32 %v4749, 1.442695
        %v4756 = vpow.pop %v4755
        %v4757 = vmul.f32 %v4750, 1.442695
        %v4758 = vpow.pop %v4757
        %v4759 = vsel %vm4734, %v4752, 0.0
        %4760 = vadd.xlane.f32.xlu0 %v4759
        %v4761 = vpop.xlane.xlu0 %4760
        %v4762 = vsel %vm4734, %v4754, 0.0
        %4763 = vadd.xlane.f32.xlu0 %v4762
        %v4764 = vpop.xlane.xlu0 %4763
        %v4765 = vsel %vm4734, %v4756, 0.0
        %4766 = vadd.xlane.f32.xlu0 %v4765
        %v4767 = vpop.xlane.xlu0 %4766
        %v4768 = vsel %vm4734, %v4758, 0.0
        %4769 = vadd.xlane.f32.xlu0 %v4768
        %v4770 = vpop.xlane.xlu0 %4769
        %v4771 = vrcp.pop %v4761
        %v4772 = vrcp.pop %v4764
        %v4773 = vrcp.pop %v4767
        %v4774 = vrcp.pop %v4770
        %v4775 = vmul.f32 %v4752, %v4771
        %v4776 = vmul.f32 %v4754, %v4772
        %v4777 = vmul.f32 %v4756, %v4773
        %v4778 = vmul.f32 %v4758, %v4774
        %v4780 = vsel %vm4734, %v4775, 0
        %4782 = vmatprep.subr.mxu0 0.0
        %4783 = vmatpush1.msra.mxu0 0.0
        %4784 = vmatprep.subr.mxu0 0.0
        %4785 = vmatpush1.msra.mxu0 0.0
        %4786 = vmatprep.subr.mxu0 0.0
        %4787 = vmatpush1.msra.mxu0 0.0
        %4788 = vmatprep.subr.mxu0 0.0
        %4789 = vmatpush1.msra.mxu0 0.0
        %4790 = vmatprep.subr.mxu0 0.0
        %4791 = vmatpush1.msra.mxu0 0.0
        %4792 = vmatprep.subr.mxu0 0.0
        %4793 = vmatpush1.msra.mxu0 0.0
        %4794 = vmatprep.subr.mxu0 0.0
        %4795 = vmatpush1.msra.mxu0 0.0
        %4796 = vmatprep.subr.mxu0 0.0
        %4797 = vmatpush1.msra.mxu0 0.0
        %4798 = vmatprep.subr.mxu0 0.0
        %4799 = vmatpush1.msra.mxu0 0.0
        %4800 = vmatprep.subr.mxu0 0.0
        %4801 = vmatpush1.msra.mxu0 0.0
        %4802 = vmatprep.subr.mxu0 0.0
        %4803 = vmatpush1.msra.mxu0 0.0
        %4804 = vmatprep.subr.mxu0 0.0
        %4805 = vmatpush1.msra.mxu0 0.0
        %4806 = vmatprep.subr.mxu0 0.0
        %4807 = vmatpush1.msra.mxu0 0.0
        %4808 = vmatprep.subr.mxu0 0.0
        %4809 = vmatpush1.msra.mxu0 0.0
        %4810 = vmatprep.subr.mxu0 0.0
        %4811 = vmatpush1.msra.mxu0 0.0
        %4812 = vmatprep.subr.mxu0 0.0
        %4813 = vmatpush1.msra.mxu0 %v4379
        %4814 = vmatprep.subr.mxu0 0.0
        %4815 = vmatpush2.msra.mxu0 0.0
        %4816 = vmatprep.subr.mxu0 0.0
        %4817 = vmatpush2.msra.mxu0 0.0
        %4818 = vmatprep.subr.mxu0 0.0
        %4819 = vmatpush2.msra.mxu0 0.0
        %4820 = vmatprep.subr.mxu0 0.0
        %4821 = vmatpush2.msra.mxu0 0.0
        %4822 = vmatprep.subr.mxu0 0.0
        %4823 = vmatpush2.msra.mxu0 0.0
        %4824 = vmatprep.subr.mxu0 0.0
        %4825 = vmatpush2.msra.mxu0 0.0
        %4826 = vmatprep.subr.mxu0 0.0
        %4827 = vmatpush2.msra.mxu0 0.0
        %4828 = vmatprep.subr.mxu0 0.0
        %4829 = vmatpush2.msra.mxu0 0.0
        %4830 = vmatprep.subr.mxu0 0.0
        %4831 = vmatpush2.msra.mxu0 0.0
        %4832 = vmatprep.subr.mxu0 0.0
        %4833 = vmatpush2.msra.mxu0 0.0
        %4834 = vmatprep.subr.mxu0 0.0
        %4835 = vmatpush2.msra.mxu0 0.0
        %4836 = vmatprep.subr.mxu0 0.0
        %4837 = vmatpush2.msra.mxu0 0.0
        %4838 = vmatprep.subr.mxu0 0.0
        %4839 = vmatpush2.msra.mxu0 0.0
        %4840 = vmatprep.subr.mxu0 0.0
        %4841 = vmatpush2.msra.mxu0 0.0
        %4842 = vmatprep.subr.mxu0 0.0
        %4843 = vmatpush2.msra.mxu0 0.0
        %4844 = vmatprep.subr.mxu0 0.0
        %4845 = vmatpush2.msra.mxu0 0.0
        %4846 = vmatprep.mubr.f32.mxu0 0.0
        %4847 = vmatmul.mubr.f32.gmra.mxu0 %v4780
        %v4848 = vpop.f32.mrf.mxu0
        %v4849 = vadd.f32 0.0, %v4848
        %v4850 = vpop.f32.mrf.mxu0
        %4851 = vdwg.mxu0
        %v4853 = vsel %vm4734, %v4776, 0
        %4855 = vmatprep.subr.mxu0 0.0
        %4856 = vmatpush1.msra.mxu0 0.0
        %4857 = vmatprep.subr.mxu0 0.0
        %4858 = vmatpush1.msra.mxu0 0.0
        %4859 = vmatprep.subr.mxu0 0.0
        %4860 = vmatpush1.msra.mxu0 0.0
        %4861 = vmatprep.subr.mxu0 0.0
        %4862 = vmatpush1.msra.mxu0 0.0
        %4863 = vmatprep.subr.mxu0 0.0
        %4864 = vmatpush1.msra.mxu0 0.0
        %4865 = vmatprep.subr.mxu0 0.0
        %4866 = vmatpush1.msra.mxu0 0.0
        %4867 = vmatprep.subr.mxu0 0.0
        %4868 = vmatpush1.msra.mxu0 0.0
        %4869 = vmatprep.subr.mxu0 0.0
        %4870 = vmatpush1.msra.mxu0 0.0
        %4871 = vmatprep.subr.mxu0 0.0
        %4872 = vmatpush1.msra.mxu0 0.0
        %4873 = vmatprep.subr.mxu0 0.0
        %4874 = vmatpush1.msra.mxu0 0.0
        %4875 = vmatprep.subr.mxu0 0.0
        %4876 = vmatpush1.msra.mxu0 0.0
        %4877 = vmatprep.subr.mxu0 0.0
        %4878 = vmatpush1.msra.mxu0 0.0
        %4879 = vmatprep.subr.mxu0 0.0
        %4880 = vmatpush1.msra.mxu0 0.0
        %4881 = vmatprep.subr.mxu0 0.0
        %4882 = vmatpush1.msra.mxu0 0.0
        %4883 = vmatprep.subr.mxu0 0.0
        %4884 = vmatpush1.msra.mxu0 0.0
        %4885 = vmatprep.subr.mxu0 0.0
        %4886 = vmatpush1.msra.mxu0 %v4384
        %4887 = vmatprep.subr.mxu0 0.0
        %4888 = vmatpush2.msra.mxu0 0.0
        %4889 = vmatprep.subr.mxu0 0.0
        %4890 = vmatpush2.msra.mxu0 0.0
        %4891 = vmatprep.subr.mxu0 0.0
        %4892 = vmatpush2.msra.mxu0 0.0
        %4893 = vmatprep.subr.mxu0 0.0
        %4894 = vmatpush2.msra.mxu0 0.0
        %4895 = vmatprep.subr.mxu0 0.0
        %4896 = vmatpush2.msra.mxu0 0.0
        %4897 = vmatprep.subr.mxu0 0.0
        %4898 = vmatpush2.msra.mxu0 0.0
        %4899 = vmatprep.subr.mxu0 0.0
        %4900 = vmatpush2.msra.mxu0 0.0
        %4901 = vmatprep.subr.mxu0 0.0
        %4902 = vmatpush2.msra.mxu0 0.0
        %4903 = vmatprep.subr.mxu0 0.0
        %4904 = vmatpush2.msra.mxu0 0.0
        %4905 = vmatprep.subr.mxu0 0.0
        %4906 = vmatpush2.msra.mxu0 0.0
        %4907 = vmatprep.subr.mxu0 0.0
        %4908 = vmatpush2.msra.mxu0 0.0
        %4909 = vmatprep.subr.mxu0 0.0
        %4910 = vmatpush2.msra.mxu0 0.0
        %4911 = vmatprep.subr.mxu0 0.0
        %4912 = vmatpush2.msra.mxu0 0.0
        %4913 = vmatprep.subr.mxu0 0.0
        %4914 = vmatpush2.msra.mxu0 0.0
        %4915 = vmatprep.subr.mxu0 0.0
        %4916 = vmatpush2.msra.mxu0 0.0
        %4917 = vmatprep.subr.mxu0 0.0
        %4918 = vmatpush2.msra.mxu0 0.0
        %4919 = vmatprep.mubr.f32.mxu0 0.0
        %4920 = vmatmul.mubr.f32.gmra.mxu0 %v4853
        %v4921 = vpop.f32.mrf.mxu0
        %v4922 = vadd.f32 0.0, %v4921
        %v4923 = vpop.f32.mrf.mxu0
        %4924 = vdwg.mxu0
        %v4926 = vsel %vm4734, %v4777, 0
        %4928 = vmatprep.subr.mxu0 0.0
        %4929 = vmatpush1.msra.mxu0 0.0
        %4930 = vmatprep.subr.mxu0 0.0
        %4931 = vmatpush1.msra.mxu0 0.0
        %4932 = vmatprep.subr.mxu0 0.0
        %4933 = vmatpush1.msra.mxu0 0.0
        %4934 = vmatprep.subr.mxu0 0.0
        %4935 = vmatpush1.msra.mxu0 0.0
        %4936 = vmatprep.subr.mxu0 0.0
        %4937 = vmatpush1.msra.mxu0 0.0
        %4938 = vmatprep.subr.mxu0 0.0
        %4939 = vmatpush1.msra.mxu0 0.0
        %4940 = vmatprep.subr.mxu0 0.0
        %4941 = vmatpush1.msra.mxu0 0.0
        %4942 = vmatprep.subr.mxu0 0.0
        %4943 = vmatpush1.msra.mxu0 0.0
        %4944 = vmatprep.subr.mxu0 0.0
        %4945 = vmatpush1.msra.mxu0 0.0
        %4946 = vmatprep.subr.mxu0 0.0
        %4947 = vmatpush1.msra.mxu0 0.0
        %4948 = vmatprep.subr.mxu0 0.0
        %4949 = vmatpush1.msra.mxu0 0.0
        %4950 = vmatprep.subr.mxu0 0.0
        %4951 = vmatpush1.msra.mxu0 0.0
        %4952 = vmatprep.subr.mxu0 0.0
        %4953 = vmatpush1.msra.mxu0 0.0
        %4954 = vmatprep.subr.mxu0 0.0
        %4955 = vmatpush1.msra.mxu0 0.0
        %4956 = vmatprep.subr.mxu0 0.0
        %4957 = vmatpush1.msra.mxu0 0.0
        %4958 = vmatprep.subr.mxu0 0.0
        %4959 = vmatpush1.msra.mxu0 %v4389
        %4960 = vmatprep.subr.mxu0 0.0
        %4961 = vmatpush2.msra.mxu0 0.0
        %4962 = vmatprep.subr.mxu0 0.0
        %4963 = vmatpush2.msra.mxu0 0.0
        %4964 = vmatprep.subr.mxu0 0.0
        %4965 = vmatpush2.msra.mxu0 0.0
        %4966 = vmatprep.subr.mxu0 0.0
        %4967 = vmatpush2.msra.mxu0 0.0
        %4968 = vmatprep.subr.mxu0 0.0
        %4969 = vmatpush2.msra.mxu0 0.0
        %4970 = vmatprep.subr.mxu0 0.0
        %4971 = vmatpush2.msra.mxu0 0.0
        %4972 = vmatprep.subr.mxu0 0.0
        %4973 = vmatpush2.msra.mxu0 0.0
        %4974 = vmatprep.subr.mxu0 0.0
        %4975 = vmatpush2.msra.mxu0 0.0
        %4976 = vmatprep.subr.mxu0 0.0
        %4977 = vmatpush2.msra.mxu0 0.0
        %4978 = vmatprep.subr.mxu0 0.0
        %4979 = vmatpush2.msra.mxu0 0.0
        %4980 = vmatprep.subr.mxu0 0.0
        %4981 = vmatpush2.msra.mxu0 0.0
        %4982 = vmatprep.subr.mxu0 0.0
        %4983 = vmatpush2.msra.mxu0 0.0
        %4984 = vmatprep.subr.mxu0 0.0
        %4985 = vmatpush2.msra.mxu0 0.0
        %4986 = vmatprep.subr.mxu0 0.0
        %4987 = vmatpush2.msra.mxu0 0.0
        %4988 = vmatprep.subr.mxu0 0.0
        %4989 = vmatpush2.msra.mxu0 0.0
        %4990 = vmatprep.subr.mxu0 0.0
        %4991 = vmatpush2.msra.mxu0 0.0
        %4992 = vmatprep.mubr.f32.mxu0 0.0
        %4993 = vmatmul.mubr.f32.gmra.mxu0 %v4926
        %v4994 = vpop.f32.mrf.mxu0
        %v4995 = vadd.f32 0.0, %v4994
        %v4996 = vpop.f32.mrf.mxu0
        %4997 = vdwg.mxu0
        %v4999 = vsel %vm4734, %v4778, 0
        %5001 = vmatprep.subr.mxu0 0.0
        %5002 = vmatpush1.msra.mxu0 0.0
        %5003 = vmatprep.subr.mxu0 0.0
        %5004 = vmatpush1.msra.mxu0 0.0
        %5005 = vmatprep.subr.mxu0 0.0
        %5006 = vmatpush1.msra.mxu0 0.0
        %5007 = vmatprep.subr.mxu0 0.0
        %5008 = vmatpush1.msra.mxu0 0.0
        %5009 = vmatprep.subr.mxu0 0.0
        %5010 = vmatpush1.msra.mxu0 0.0
        %5011 = vmatprep.subr.mxu0 0.0
        %5012 = vmatpush1.msra.mxu0 0.0
        %5013 = vmatprep.subr.mxu0 0.0
        %5014 = vmatpush1.msra.mxu0 0.0
        %5015 = vmatprep.subr.mxu0 0.0
        %5016 = vmatpush1.msra.mxu0 0.0
        %5017 = vmatprep.subr.mxu0 0.0
        %5018 = vmatpush1.msra.mxu0 0.0
        %5019 = vmatprep.subr.mxu0 0.0
        %5020 = vmatpush1.msra.mxu0 0.0
        %5021 = vmatprep.subr.mxu0 0.0
        %5022 = vmatpush1.msra.mxu0 0.0
        %5023 = vmatprep.subr.mxu0 0.0
        %5024 = vmatpush1.msra.mxu0 0.0
        %5025 = vmatprep.subr.mxu0 0.0
        %5026 = vmatpush1.msra.mxu0 0.0
        %5027 = vmatprep.subr.mxu0 0.0
        %5028 = vmatpush1.msra.mxu0 0.0
        %5029 = vmatprep.subr.mxu0 0.0
        %5030 = vmatpush1.msra.mxu0 0.0
        %5031 = vmatprep.subr.mxu0 0.0
        %5032 = vmatpush1.msra.mxu0 %v4394
        %5033 = vmatprep.subr.mxu0 0.0
        %5034 = vmatpush2.msra.mxu0 0.0
        %5035 = vmatprep.subr.mxu0 0.0
        %5036 = vmatpush2.msra.mxu0 0.0
        %5037 = vmatprep.subr.mxu0 0.0
        %5038 = vmatpush2.msra.mxu0 0.0
        %5039 = vmatprep.subr.mxu0 0.0
        %5040 = vmatpush2.msra.mxu0 0.0
        %5041 = vmatprep.subr.mxu0 0.0
        %5042 = vmatpush2.msra.mxu0 0.0
        %5043 = vmatprep.subr.mxu0 0.0
        %5044 = vmatpush2.msra.mxu0 0.0
        %5045 = vmatprep.subr.mxu0 0.0
        %5046 = vmatpush2.msra.mxu0 0.0
        %5047 = vmatprep.subr.mxu0 0.0
        %5048 = vmatpush2.msra.mxu0 0.0
        %5049 = vmatprep.subr.mxu0 0.0
        %5050 = vmatpush2.msra.mxu0 0.0
        %5051 = vmatprep.subr.mxu0 0.0
        %5052 = vmatpush2.msra.mxu0 0.0
        %5053 = vmatprep.subr.mxu0 0.0
        %5054 = vmatpush2.msra.mxu0 0.0
        %5055 = vmatprep.subr.mxu0 0.0
        %5056 = vmatpush2.msra.mxu0 0.0
        %5057 = vmatprep.subr.mxu0 0.0
        %5058 = vmatpush2.msra.mxu0 0.0
        %5059 = vmatprep.subr.mxu0 0.0
        %5060 = vmatpush2.msra.mxu0 0.0
        %5061 = vmatprep.subr.mxu0 0.0
        %5062 = vmatpush2.msra.mxu0 0.0
        %5063 = vmatprep.subr.mxu0 0.0
        %5064 = vmatpush2.msra.mxu0 0.0
        %5065 = vmatprep.mubr.f32.mxu0 0.0
        %5066 = vmatmul.mubr.f32.gmra.mxu0 %v4999
        %v5067 = vpop.f32.mrf.mxu0
        %v5068 = vadd.f32 0.0, %v5067
        %v5069 = vpop.f32.mrf.mxu0
        %5070 = vdwg.mxu0
        %v5071 = vld [vmem:[#allocation13] sm:$0xff]
        %v5072 = vld [vmem:[#allocation13 + $0x8] sm:$0xff]
        %v5073 = vld [vmem:[#allocation13 + $0x10] sm:$0xff]
        %v5074 = vld [vmem:[#allocation13 + $0x18] sm:$0xff]
        %v5075 = vld [vmem:[#allocation13 + $0x20] sm:$0xff]
        %v5076 = vld [vmem:[#allocation13 + $0x28] sm:$0xff]
        %v5077 = vld [vmem:[#allocation13 + $0x30] sm:$0xff]
        %v5078 = vld [vmem:[#allocation13 + $0x38] sm:$0xff]
        %s5079 = scalar_lea.vmem %s7, 128
        %v5080 = vld [vmem:[%s5079] sm:$0xff]
        %v5081 = vld [vmem:[%s5079 + $0x8] sm:$0xff]
        %v5082 = vld [vmem:[%s5079 + $0x10] sm:$0xff]
        %v5083 = vld [vmem:[%s5079 + $0x18] sm:$0xff]
        %v5084 = vld [vmem:[%s5079 + $0x20] sm:$0xff]
        %v5085 = vld [vmem:[%s5079 + $0x28] sm:$0xff]
        %v5086 = vld [vmem:[%s5079 + $0x30] sm:$0xff]
        %v5087 = vld [vmem:[%s5079 + $0x38] sm:$0xff]
        %v5088 = vld [vmem:[%s5079 + $0x40] sm:$0xff]
        %v5089 = vld [vmem:[%s5079 + $0x48] sm:$0xff]
        %v5090 = vld [vmem:[%s5079 + $0x50] sm:$0xff]
        %v5091 = vld [vmem:[%s5079 + $0x58] sm:$0xff]
        %v5092 = vld [vmem:[%s5079 + $0x60] sm:$0xff]
        %v5093 = vld [vmem:[%s5079 + $0x68] sm:$0xff]
        %v5094 = vld [vmem:[%s5079 + $0x70] sm:$0xff]
        %v5095 = vld [vmem:[%s5079 + $0x78] sm:$0xff]
        %s5096 = scalar_lea.vmem %s8, 1
        %v5097 = vld [vmem:[%s5096] sm:$0x1]
        %v5099 = vlaneseq
        %v5100 = vshrl.u32 %v5099, 7
        %v5101 = vsub.s32 0, %v5100
        %v5102 = vrot.slane %v5097, %v5101
        %5104 = vmatprep.subr.mxu0 0.0
        %5105 = vmatpush1.msra.mxu0 %v5095
        %5106 = vmatprep.subr.mxu0 0.0
        %5107 = vmatpush1.msra.mxu0 %v5094
        %5108 = vmatprep.subr.mxu0 0.0
        %5109 = vmatpush1.msra.mxu0 %v5093
        %5110 = vmatprep.subr.mxu0 0.0
        %5111 = vmatpush1.msra.mxu0 %v5092
        %5112 = vmatprep.subr.mxu0 0.0
        %5113 = vmatpush1.msra.mxu0 %v5091
        %5114 = vmatprep.subr.mxu0 0.0
        %5115 = vmatpush1.msra.mxu0 %v5090
        %5116 = vmatprep.subr.mxu0 0.0
        %5117 = vmatpush1.msra.mxu0 %v5089
        %5118 = vmatprep.subr.mxu0 0.0
        %5119 = vmatpush1.msra.mxu0 %v5088
        %5120 = vmatprep.subr.mxu0 0.0
        %5121 = vmatpush1.msra.mxu0 %v5087
        %5122 = vmatprep.subr.mxu0 0.0
        %5123 = vmatpush1.msra.mxu0 %v5086
        %5124 = vmatprep.subr.mxu0 0.0
        %5125 = vmatpush1.msra.mxu0 %v5085
        %5126 = vmatprep.subr.mxu0 0.0
        %5127 = vmatpush1.msra.mxu0 %v5084
        %5128 = vmatprep.subr.mxu0 0.0
        %5129 = vmatpush1.msra.mxu0 %v5083
        %5130 = vmatprep.subr.mxu0 0.0
        %5131 = vmatpush1.msra.mxu0 %v5082
        %5132 = vmatprep.subr.mxu0 0.0
        %5133 = vmatpush1.msra.mxu0 %v5081
        %5134 = vmatprep.subr.mxu0 0.0
        %5135 = vmatpush1.msra.mxu0 %v5080
        %5136 = vmatprep.subr.mxu0 0.0
        %5137 = vmatpush2.msra.mxu0 0.0
        %5138 = vmatprep.subr.mxu0 0.0
        %5139 = vmatpush2.msra.mxu0 0.0
        %5140 = vmatprep.subr.mxu0 0.0
        %5141 = vmatpush2.msra.mxu0 0.0
        %5142 = vmatprep.subr.mxu0 0.0
        %5143 = vmatpush2.msra.mxu0 0.0
        %5144 = vmatprep.subr.mxu0 0.0
        %5145 = vmatpush2.msra.mxu0 0.0
        %5146 = vmatprep.subr.mxu0 0.0
        %5147 = vmatpush2.msra.mxu0 0.0
        %5148 = vmatprep.subr.mxu0 0.0
        %5149 = vmatpush2.msra.mxu0 0.0
        %5150 = vmatprep.subr.mxu0 0.0
        %5151 = vmatpush2.msra.mxu0 0.0
        %5152 = vmatprep.subr.mxu0 0.0
        %5153 = vmatpush2.msra.mxu0 0.0
        %5154 = vmatprep.subr.mxu0 0.0
        %5155 = vmatpush2.msra.mxu0 0.0
        %5156 = vmatprep.subr.mxu0 0.0
        %5157 = vmatpush2.msra.mxu0 0.0
        %5158 = vmatprep.subr.mxu0 0.0
        %5159 = vmatpush2.msra.mxu0 0.0
        %5160 = vmatprep.subr.mxu0 0.0
        %5161 = vmatpush2.msra.mxu0 0.0
        %5162 = vmatprep.subr.mxu0 0.0
        %5163 = vmatpush2.msra.mxu0 0.0
        %5164 = vmatprep.subr.mxu0 0.0
        %5165 = vmatpush2.msra.mxu0 0.0
        %5166 = vmatprep.subr.mxu0 0.0
        %5167 = vmatpush2.msra.mxu0 0.0
        %5168 = vmatprep.mubr.f32.mxu0 0.0
        %5169 = vmatmul.mubr.f32.gmra.mxu0 %v4057
        %v5170 = vpop.f32.mrf.mxu0
        %v5171 = vadd.f32 %v5102, %v5170
        %v5172 = vpop.f32.mrf.mxu0
        %5173 = vmatprep.mubr.f32.mxu0 0.0
        %5174 = vmatmul.mubr.f32.gmra.mxu0 %v4058
        %v5175 = vpop.f32.mrf.mxu0
        %v5176 = vadd.f32 %v5102, %v5175
        %v5177 = vpop.f32.mrf.mxu0
        %5178 = vmatprep.mubr.f32.mxu0 0.0
        %5179 = vmatmul.mubr.f32.gmra.mxu0 %v4059
        %v5180 = vpop.f32.mrf.mxu0
        %v5181 = vadd.f32 %v5102, %v5180
        %v5182 = vpop.f32.mrf.mxu0
        %5183 = vmatprep.mubr.f32.mxu0 0.0
        %5184 = vmatmul.mubr.f32.gmra.mxu0 %v4060
        %v5185 = vpop.f32.mrf.mxu0
        %v5186 = vadd.f32 %v5102, %v5185
        %v5187 = vpop.f32.mrf.mxu0
        %5188 = vdwg.mxu0
        %s5189 = scalar_lea.vmem %s9, 128
        %v5190 = vld [vmem:[%s5189] sm:$0xff]
        %v5191 = vld [vmem:[%s5189 + $0x8] sm:$0xff]
        %v5192 = vld [vmem:[%s5189 + $0x10] sm:$0xff]
        %v5193 = vld [vmem:[%s5189 + $0x18] sm:$0xff]
        %v5194 = vld [vmem:[%s5189 + $0x20] sm:$0xff]
        %v5195 = vld [vmem:[%s5189 + $0x28] sm:$0xff]
        %v5196 = vld [vmem:[%s5189 + $0x30] sm:$0xff]
        %v5197 = vld [vmem:[%s5189 + $0x38] sm:$0xff]
        %v5198 = vld [vmem:[%s5189 + $0x40] sm:$0xff]
        %v5199 = vld [vmem:[%s5189 + $0x48] sm:$0xff]
        %v5200 = vld [vmem:[%s5189 + $0x50] sm:$0xff]
        %v5201 = vld [vmem:[%s5189 + $0x58] sm:$0xff]
        %v5202 = vld [vmem:[%s5189 + $0x60] sm:$0xff]
        %v5203 = vld [vmem:[%s5189 + $0x68] sm:$0xff]
        %v5204 = vld [vmem:[%s5189 + $0x70] sm:$0xff]
        %v5205 = vld [vmem:[%s5189 + $0x78] sm:$0xff]
        %s5206 = scalar_lea.vmem [#allocation10], 1
        %v5207 = vld [vmem:[%s5206] sm:$0x1]
        %v5209 = vlaneseq
        %v5210 = vshrl.u32 %v5209, 7
        %v5211 = vsub.s32 0, %v5210
        %v5212 = vrot.slane %v5207, %v5211
        %5214 = vmatprep.subr.mxu0 0.0
        %5215 = vmatpush1.msra.mxu0 %v5205
        %5216 = vmatprep.subr.mxu0 0.0
        %5217 = vmatpush1.msra.mxu0 %v5204
        %5218 = vmatprep.subr.mxu0 0.0
        %5219 = vmatpush1.msra.mxu0 %v5203
        %5220 = vmatprep.subr.mxu0 0.0
        %5221 = vmatpush1.msra.mxu0 %v5202
        %5222 = vmatprep.subr.mxu0 0.0
        %5223 = vmatpush1.msra.mxu0 %v5201
        %5224 = vmatprep.subr.mxu0 0.0
        %5225 = vmatpush1.msra.mxu0 %v5200
        %5226 = vmatprep.subr.mxu0 0.0
        %5227 = vmatpush1.msra.mxu0 %v5199
        %5228 = vmatprep.subr.mxu0 0.0
        %5229 = vmatpush1.msra.mxu0 %v5198
        %5230 = vmatprep.subr.mxu0 0.0
        %5231 = vmatpush1.msra.mxu0 %v5197
        %5232 = vmatprep.subr.mxu0 0.0
        %5233 = vmatpush1.msra.mxu0 %v5196
        %5234 = vmatprep.subr.mxu0 0.0
        %5235 = vmatpush1.msra.mxu0 %v5195
        %5236 = vmatprep.subr.mxu0 0.0
        %5237 = vmatpush1.msra.mxu0 %v5194
        %5238 = vmatprep.subr.mxu0 0.0
        %5239 = vmatpush1.msra.mxu0 %v5193
        %5240 = vmatprep.subr.mxu0 0.0
        %5241 = vmatpush1.msra.mxu0 %v5192
        %5242 = vmatprep.subr.mxu0 0.0
        %5243 = vmatpush1.msra.mxu0 %v5191
        %5244 = vmatprep.subr.mxu0 0.0
        %5245 = vmatpush1.msra.mxu0 %v5190
        %5246 = vmatprep.subr.mxu0 0.0
        %5247 = vmatpush2.msra.mxu0 0.0
        %5248 = vmatprep.subr.mxu0 0.0
        %5249 = vmatpush2.msra.mxu0 0.0
        %5250 = vmatprep.subr.mxu0 0.0
        %5251 = vmatpush2.msra.mxu0 0.0
        %5252 = vmatprep.subr.mxu0 0.0
        %5253 = vmatpush2.msra.mxu0 0.0
        %5254 = vmatprep.subr.mxu0 0.0
        %5255 = vmatpush2.msra.mxu0 0.0
        %5256 = vmatprep.subr.mxu0 0.0
        %5257 = vmatpush2.msra.mxu0 0.0
        %5258 = vmatprep.subr.mxu0 0.0
        %5259 = vmatpush2.msra.mxu0 0.0
        %5260 = vmatprep.subr.mxu0 0.0
        %5261 = vmatpush2.msra.mxu0 0.0
        %5262 = vmatprep.subr.mxu0 0.0
        %5263 = vmatpush2.msra.mxu0 0.0
        %5264 = vmatprep.subr.mxu0 0.0
        %5265 = vmatpush2.msra.mxu0 0.0
        %5266 = vmatprep.subr.mxu0 0.0
        %5267 = vmatpush2.msra.mxu0 0.0
        %5268 = vmatprep.subr.mxu0 0.0
        %5269 = vmatpush2.msra.mxu0 0.0
        %5270 = vmatprep.subr.mxu0 0.0
        %5271 = vmatpush2.msra.mxu0 0.0
        %5272 = vmatprep.subr.mxu0 0.0
        %5273 = vmatpush2.msra.mxu0 0.0
        %5274 = vmatprep.subr.mxu0 0.0
        %5275 = vmatpush2.msra.mxu0 0.0
        %5276 = vmatprep.subr.mxu0 0.0
        %5277 = vmatpush2.msra.mxu0 0.0
        %5278 = vmatprep.mubr.f32.mxu0 0.0
        %5279 = vmatmul.mubr.f32.gmra.mxu0 %v4057
        %v5280 = vpop.f32.mrf.mxu0
        %v5281 = vadd.f32 %v5212, %v5280
        %v5282 = vpop.f32.mrf.mxu0
        %5283 = vmatprep.mubr.f32.mxu0 0.0
        %5284 = vmatmul.mubr.f32.gmra.mxu0 %v4058
        %v5285 = vpop.f32.mrf.mxu0
        %v5286 = vadd.f32 %v5212, %v5285
        %v5287 = vpop.f32.mrf.mxu0
        %5288 = vmatprep.mubr.f32.mxu0 0.0
        %5289 = vmatmul.mubr.f32.gmra.mxu0 %v4059
        %v5290 = vpop.f32.mrf.mxu0
        %v5291 = vadd.f32 %v5212, %v5290
        %v5292 = vpop.f32.mrf.mxu0
        %5293 = vmatprep.mubr.f32.mxu0 0.0
        %5294 = vmatmul.mubr.f32.gmra.mxu0 %v4060
        %v5295 = vpop.f32.mrf.mxu0
        %v5296 = vadd.f32 %v5212, %v5295
        %v5297 = vpop.f32.mrf.mxu0
        %5298 = vdwg.mxu0
        %s5299 = scalar_lea.vmem %s11, 128
        %v5300 = vld [vmem:[%s5299] sm:$0xff]
        %v5301 = vld [vmem:[%s5299 + $0x8] sm:$0xff]
        %v5302 = vld [vmem:[%s5299 + $0x10] sm:$0xff]
        %v5303 = vld [vmem:[%s5299 + $0x18] sm:$0xff]
        %v5304 = vld [vmem:[%s5299 + $0x20] sm:$0xff]
        %v5305 = vld [vmem:[%s5299 + $0x28] sm:$0xff]
        %v5306 = vld [vmem:[%s5299 + $0x30] sm:$0xff]
        %v5307 = vld [vmem:[%s5299 + $0x38] sm:$0xff]
        %v5308 = vld [vmem:[%s5299 + $0x40] sm:$0xff]
        %v5309 = vld [vmem:[%s5299 + $0x48] sm:$0xff]
        %v5310 = vld [vmem:[%s5299 + $0x50] sm:$0xff]
        %v5311 = vld [vmem:[%s5299 + $0x58] sm:$0xff]
        %v5312 = vld [vmem:[%s5299 + $0x60] sm:$0xff]
        %v5313 = vld [vmem:[%s5299 + $0x68] sm:$0xff]
        %v5314 = vld [vmem:[%s5299 + $0x70] sm:$0xff]
        %v5315 = vld [vmem:[%s5299 + $0x78] sm:$0xff]
        %s5316 = scalar_lea.vmem [#allocation12], 1
        %v5317 = vld [vmem:[%s5316] sm:$0x1]
        %v5319 = vlaneseq
        %v5320 = vshrl.u32 %v5319, 7
        %v5321 = vsub.s32 0, %v5320
        %v5322 = vrot.slane %v5317, %v5321
        %5324 = vmatprep.subr.mxu0 0.0
        %5325 = vmatpush1.msra.mxu0 %v5315
        %5326 = vmatprep.subr.mxu0 0.0
        %5327 = vmatpush1.msra.mxu0 %v5314
        %5328 = vmatprep.subr.mxu0 0.0
        %5329 = vmatpush1.msra.mxu0 %v5313
        %5330 = vmatprep.subr.mxu0 0.0
        %5331 = vmatpush1.msra.mxu0 %v5312
        %5332 = vmatprep.subr.mxu0 0.0
        %5333 = vmatpush1.msra.mxu0 %v5311
        %5334 = vmatprep.subr.mxu0 0.0
        %5335 = vmatpush1.msra.mxu0 %v5310
        %5336 = vmatprep.subr.mxu0 0.0
        %5337 = vmatpush1.msra.mxu0 %v5309
        %5338 = vmatprep.subr.mxu0 0.0
        %5339 = vmatpush1.msra.mxu0 %v5308
        %5340 = vmatprep.subr.mxu0 0.0
        %5341 = vmatpush1.msra.mxu0 %v5307
        %5342 = vmatprep.subr.mxu0 0.0
        %5343 = vmatpush1.msra.mxu0 %v5306
        %5344 = vmatprep.subr.mxu0 0.0
        %5345 = vmatpush1.msra.mxu0 %v5305
        %5346 = vmatprep.subr.mxu0 0.0
        %5347 = vmatpush1.msra.mxu0 %v5304
        %5348 = vmatprep.subr.mxu0 0.0
        %5349 = vmatpush1.msra.mxu0 %v5303
        %5350 = vmatprep.subr.mxu0 0.0
        %5351 = vmatpush1.msra.mxu0 %v5302
        %5352 = vmatprep.subr.mxu0 0.0
        %5353 = vmatpush1.msra.mxu0 %v5301
        %5354 = vmatprep.subr.mxu0 0.0
        %5355 = vmatpush1.msra.mxu0 %v5300
        %5356 = vmatprep.subr.mxu0 0.0
        %5357 = vmatpush2.msra.mxu0 0.0
        %5358 = vmatprep.subr.mxu0 0.0
        %5359 = vmatpush2.msra.mxu0 0.0
        %5360 = vmatprep.subr.mxu0 0.0
        %5361 = vmatpush2.msra.mxu0 0.0
        %5362 = vmatprep.subr.mxu0 0.0
        %5363 = vmatpush2.msra.mxu0 0.0
        %5364 = vmatprep.subr.mxu0 0.0
        %5365 = vmatpush2.msra.mxu0 0.0
        %5366 = vmatprep.subr.mxu0 0.0
        %5367 = vmatpush2.msra.mxu0 0.0
        %5368 = vmatprep.subr.mxu0 0.0
        %5369 = vmatpush2.msra.mxu0 0.0
        %5370 = vmatprep.subr.mxu0 0.0
        %5371 = vmatpush2.msra.mxu0 0.0
        %5372 = vmatprep.subr.mxu0 0.0
        %5373 = vmatpush2.msra.mxu0 0.0
        %5374 = vmatprep.subr.mxu0 0.0
        %5375 = vmatpush2.msra.mxu0 0.0
        %5376 = vmatprep.subr.mxu0 0.0
        %5377 = vmatpush2.msra.mxu0 0.0
        %5378 = vmatprep.subr.mxu0 0.0
        %5379 = vmatpush2.msra.mxu0 0.0
        %5380 = vmatprep.subr.mxu0 0.0
        %5381 = vmatpush2.msra.mxu0 0.0
        %5382 = vmatprep.subr.mxu0 0.0
        %5383 = vmatpush2.msra.mxu0 0.0
        %5384 = vmatprep.subr.mxu0 0.0
        %5385 = vmatpush2.msra.mxu0 0.0
        %5386 = vmatprep.subr.mxu0 0.0
        %5387 = vmatpush2.msra.mxu0 0.0
        %5388 = vmatprep.mubr.f32.mxu0 0.0
        %5389 = vmatmul.mubr.f32.gmra.mxu0 %v4057
        %v5390 = vpop.f32.mrf.mxu0
        %v5391 = vadd.f32 %v5322, %v5390
        %v5392 = vpop.f32.mrf.mxu0
        %5393 = vmatprep.mubr.f32.mxu0 0.0
        %5394 = vmatmul.mubr.f32.gmra.mxu0 %v4058
        %v5395 = vpop.f32.mrf.mxu0
        %v5396 = vadd.f32 %v5322, %v5395
        %v5397 = vpop.f32.mrf.mxu0
        %5398 = vmatprep.mubr.f32.mxu0 0.0
        %5399 = vmatmul.mubr.f32.gmra.mxu0 %v4059
        %v5400 = vpop.f32.mrf.mxu0
        %v5401 = vadd.f32 %v5322, %v5400
        %v5402 = vpop.f32.mrf.mxu0
        %5403 = vmatprep.mubr.f32.mxu0 0.0
        %5404 = vmatmul.mubr.f32.gmra.mxu0 %v4060
        %v5405 = vpop.f32.mrf.mxu0
        %v5406 = vadd.f32 %v5322, %v5405
        %v5407 = vpop.f32.mrf.mxu0
        %5408 = vdwg.mxu0
        %v5410 = vsel %vm4397, %v5171, 0
        %v5413 = vsel %vm4397, %v5281, 0
        %5415 = vmatprep.subr.mxu0 0.0
        %5416 = vmatpush1.xpose.msra.mxu0 0.0
        %5417 = vmatprep.subr.mxu0 0.0
        %5418 = vmatpush1.xpose.msra.mxu0 0.0
        %5419 = vmatprep.subr.mxu0 0.0
        %5420 = vmatpush1.xpose.msra.mxu0 0.0
        %5421 = vmatprep.subr.mxu0 0.0
        %5422 = vmatpush1.xpose.msra.mxu0 0.0
        %5423 = vmatprep.subr.mxu0 0.0
        %5424 = vmatpush1.xpose.msra.mxu0 0.0
        %5425 = vmatprep.subr.mxu0 0.0
        %5426 = vmatpush1.xpose.msra.mxu0 0.0
        %5427 = vmatprep.subr.mxu0 0.0
        %5428 = vmatpush1.xpose.msra.mxu0 0.0
        %5429 = vmatprep.subr.mxu0 0.0
        %5430 = vmatpush1.xpose.msra.mxu0 0.0
        %5431 = vmatprep.subr.mxu0 0.0
        %5432 = vmatpush1.xpose.msra.mxu0 0.0
        %5433 = vmatprep.subr.mxu0 0.0
        %5434 = vmatpush1.xpose.msra.mxu0 0.0
        %5435 = vmatprep.subr.mxu0 0.0
        %5436 = vmatpush1.xpose.msra.mxu0 0.0
        %5437 = vmatprep.subr.mxu0 0.0
        %5438 = vmatpush1.xpose.msra.mxu0 0.0
        %5439 = vmatprep.subr.mxu0 0.0
        %5440 = vmatpush1.xpose.msra.mxu0 0.0
        %5441 = vmatprep.subr.mxu0 0.0
        %5442 = vmatpush1.xpose.msra.mxu0 0.0
        %5443 = vmatprep.subr.mxu0 0.0
        %5444 = vmatpush1.xpose.msra.mxu0 0.0
        %5445 = vmatprep.subr.mxu0 0.0
        %5446 = vmatpush1.xpose.msra.mxu0 %v5413
        %5447 = vmatprep.subr.mxu0 0.0
        %5448 = vmatpush2.xpose.msra.mxu0 0.0
        %5449 = vmatprep.subr.mxu0 0.0
        %5450 = vmatpush2.xpose.msra.mxu0 0.0
        %5451 = vmatprep.subr.mxu0 0.0
        %5452 = vmatpush2.xpose.msra.mxu0 0.0
        %5453 = vmatprep.subr.mxu0 0.0
        %5454 = vmatpush2.xpose.msra.mxu0 0.0
        %5455 = vmatprep.subr.mxu0 0.0
        %5456 = vmatpush2.xpose.msra.mxu0 0.0
        %5457 = vmatprep.subr.mxu0 0.0
        %5458 = vmatpush2.xpose.msra.mxu0 0.0
        %5459 = vmatprep.subr.mxu0 0.0
        %5460 = vmatpush2.xpose.msra.mxu0 0.0
        %5461 = vmatprep.subr.mxu0 0.0
        %5462 = vmatpush2.xpose.msra.mxu0 0.0
        %5463 = vmatprep.subr.mxu0 0.0
        %5464 = vmatpush2.xpose.msra.mxu0 0.0
        %5465 = vmatprep.subr.mxu0 0.0
        %5466 = vmatpush2.xpose.msra.mxu0 0.0
        %5467 = vmatprep.subr.mxu0 0.0
        %5468 = vmatpush2.xpose.msra.mxu0 0.0
        %5469 = vmatprep.subr.mxu0 0.0
        %5470 = vmatpush2.xpose.msra.mxu0 0.0
        %5471 = vmatprep.subr.mxu0 0.0
        %5472 = vmatpush2.xpose.msra.mxu0 0.0
        %5473 = vmatprep.subr.mxu0 0.0
        %5474 = vmatpush2.xpose.msra.mxu0 0.0
        %5475 = vmatprep.subr.mxu0 0.0
        %5476 = vmatpush2.xpose.msra.mxu0 0.0
        %5477 = vmatprep.subr.mxu0 0.0
        %5478 = vmatpush2.xpose.msra.mxu0 0.0
        %5479 = vmatprep.mubr.f32.mxu0 0.0
        %5480 = vmatmul.mubr.f32.gmra.mxu0 %v5410
        %v5481 = vpop.f32.mrf.mxu0
        %v5482 = vadd.f32 0.0, %v5481
        %v5483 = vpop.f32.mrf.mxu0
        %5484 = vdwg.mxu0
        %v5486 = vsel %vm4397, %v5176, 0
        %v5489 = vsel %vm4397, %v5286, 0
        %5491 = vmatprep.subr.mxu0 0.0
        %5492 = vmatpush1.xpose.msra.mxu0 0.0
        %5493 = vmatprep.subr.mxu0 0.0
        %5494 = vmatpush1.xpose.msra.mxu0 0.0
        %5495 = vmatprep.subr.mxu0 0.0
        %5496 = vmatpush1.xpose.msra.mxu0 0.0
        %5497 = vmatprep.subr.mxu0 0.0
        %5498 = vmatpush1.xpose.msra.mxu0 0.0
        %5499 = vmatprep.subr.mxu0 0.0
        %5500 = vmatpush1.xpose.msra.mxu0 0.0
        %5501 = vmatprep.subr.mxu0 0.0
        %5502 = vmatpush1.xpose.msra.mxu0 0.0
        %5503 = vmatprep.subr.mxu0 0.0
        %5504 = vmatpush1.xpose.msra.mxu0 0.0
        %5505 = vmatprep.subr.mxu0 0.0
        %5506 = vmatpush1.xpose.msra.mxu0 0.0
        %5507 = vmatprep.subr.mxu0 0.0
        %5508 = vmatpush1.xpose.msra.mxu0 0.0
        %5509 = vmatprep.subr.mxu0 0.0
        %5510 = vmatpush1.xpose.msra.mxu0 0.0
        %5511 = vmatprep.subr.mxu0 0.0
        %5512 = vmatpush1.xpose.msra.mxu0 0.0
        %5513 = vmatprep.subr.mxu0 0.0
        %5514 = vmatpush1.xpose.msra.mxu0 0.0
        %5515 = vmatprep.subr.mxu0 0.0
        %5516 = vmatpush1.xpose.msra.mxu0 0.0
        %5517 = vmatprep.subr.mxu0 0.0
        %5518 = vmatpush1.xpose.msra.mxu0 0.0
        %5519 = vmatprep.subr.mxu0 0.0
        %5520 = vmatpush1.xpose.msra.mxu0 0.0
        %5521 = vmatprep.subr.mxu0 0.0
        %5522 = vmatpush1.xpose.msra.mxu0 %v5489
        %5523 = vmatprep.subr.mxu0 0.0
        %5524 = vmatpush2.xpose.msra.mxu0 0.0
        %5525 = vmatprep.subr.mxu0 0.0
        %5526 = vmatpush2.xpose.msra.mxu0 0.0
        %5527 = vmatprep.subr.mxu0 0.0
        %5528 = vmatpush2.xpose.msra.mxu0 0.0
        %5529 = vmatprep.subr.mxu0 0.0
        %5530 = vmatpush2.xpose.msra.mxu0 0.0
        %5531 = vmatprep.subr.mxu0 0.0
        %5532 = vmatpush2.xpose.msra.mxu0 0.0
        %5533 = vmatprep.subr.mxu0 0.0
        %5534 = vmatpush2.xpose.msra.mxu0 0.0
        %5535 = vmatprep.subr.mxu0 0.0
        %5536 = vmatpush2.xpose.msra.mxu0 0.0
        %5537 = vmatprep.subr.mxu0 0.0
        %5538 = vmatpush2.xpose.msra.mxu0 0.0
        %5539 = vmatprep.subr.mxu0 0.0
        %5540 = vmatpush2.xpose.msra.mxu0 0.0
        %5541 = vmatprep.subr.mxu0 0.0
        %5542 = vmatpush2.xpose.msra.mxu0 0.0
        %5543 = vmatprep.subr.mxu0 0.0
        %5544 = vmatpush2.xpose.msra.mxu0 0.0
        %5545 = vmatprep.subr.mxu0 0.0
        %5546 = vmatpush2.xpose.msra.mxu0 0.0
        %5547 = vmatprep.subr.mxu0 0.0
        %5548 = vmatpush2.xpose.msra.mxu0 0.0
        %5549 = vmatprep.subr.mxu0 0.0
        %5550 = vmatpush2.xpose.msra.mxu0 0.0
        %5551 = vmatprep.subr.mxu0 0.0
        %5552 = vmatpush2.xpose.msra.mxu0 0.0
        %5553 = vmatprep.subr.mxu0 0.0
        %5554 = vmatpush2.xpose.msra.mxu0 0.0
        %5555 = vmatprep.mubr.f32.mxu0 0.0
        %5556 = vmatmul.mubr.f32.gmra.mxu0 %v5486
        %v5557 = vpop.f32.mrf.mxu0
        %v5558 = vadd.f32 0.0, %v5557
        %v5559 = vpop.f32.mrf.mxu0
        %5560 = vdwg.mxu0
        %v5562 = vsel %vm4397, %v5181, 0
        %v5565 = vsel %vm4397, %v5291, 0
        %5567 = vmatprep.subr.mxu0 0.0
        %5568 = vmatpush1.xpose.msra.mxu0 0.0
        %5569 = vmatprep.subr.mxu0 0.0
        %5570 = vmatpush1.xpose.msra.mxu0 0.0
        %5571 = vmatprep.subr.mxu0 0.0
        %5572 = vmatpush1.xpose.msra.mxu0 0.0
        %5573 = vmatprep.subr.mxu0 0.0
        %5574 = vmatpush1.xpose.msra.mxu0 0.0
        %5575 = vmatprep.subr.mxu0 0.0
        %5576 = vmatpush1.xpose.msra.mxu0 0.0
        %5577 = vmatprep.subr.mxu0 0.0
        %5578 = vmatpush1.xpose.msra.mxu0 0.0
        %5579 = vmatprep.subr.mxu0 0.0
        %5580 = vmatpush1.xpose.msra.mxu0 0.0
        %5581 = vmatprep.subr.mxu0 0.0
        %5582 = vmatpush1.xpose.msra.mxu0 0.0
        %5583 = vmatprep.subr.mxu0 0.0
        %5584 = vmatpush1.xpose.msra.mxu0 0.0
        %5585 = vmatprep.subr.mxu0 0.0
        %5586 = vmatpush1.xpose.msra.mxu0 0.0
        %5587 = vmatprep.subr.mxu0 0.0
        %5588 = vmatpush1.xpose.msra.mxu0 0.0
        %5589 = vmatprep.subr.mxu0 0.0
        %5590 = vmatpush1.xpose.msra.mxu0 0.0
        %5591 = vmatprep.subr.mxu0 0.0
        %5592 = vmatpush1.xpose.msra.mxu0 0.0
        %5593 = vmatprep.subr.mxu0 0.0
        %5594 = vmatpush1.xpose.msra.mxu0 0.0
        %5595 = vmatprep.subr.mxu0 0.0
        %5596 = vmatpush1.xpose.msra.mxu0 0.0
        %5597 = vmatprep.subr.mxu0 0.0
        %5598 = vmatpush1.xpose.msra.mxu0 %v5565
        %5599 = vmatprep.subr.mxu0 0.0
        %5600 = vmatpush2.xpose.msra.mxu0 0.0
        %5601 = vmatprep.subr.mxu0 0.0
        %5602 = vmatpush2.xpose.msra.mxu0 0.0
        %5603 = vmatprep.subr.mxu0 0.0
        %5604 = vmatpush2.xpose.msra.mxu0 0.0
        %5605 = vmatprep.subr.mxu0 0.0
        %5606 = vmatpush2.xpose.msra.mxu0 0.0
        %5607 = vmatprep.subr.mxu0 0.0
        %5608 = vmatpush2.xpose.msra.mxu0 0.0
        %5609 = vmatprep.subr.mxu0 0.0
        %5610 = vmatpush2.xpose.msra.mxu0 0.0
        %5611 = vmatprep.subr.mxu0 0.0
        %5612 = vmatpush2.xpose.msra.mxu0 0.0
        %5613 = vmatprep.subr.mxu0 0.0
        %5614 = vmatpush2.xpose.msra.mxu0 0.0
        %5615 = vmatprep.subr.mxu0 0.0
        %5616 = vmatpush2.xpose.msra.mxu0 0.0
        %5617 = vmatprep.subr.mxu0 0.0
        %5618 = vmatpush2.xpose.msra.mxu0 0.0
        %5619 = vmatprep.subr.mxu0 0.0
        %5620 = vmatpush2.xpose.msra.mxu0 0.0
        %5621 = vmatprep.subr.mxu0 0.0
        %5622 = vmatpush2.xpose.msra.mxu0 0.0
        %5623 = vmatprep.subr.mxu0 0.0
        %5624 = vmatpush2.xpose.msra.mxu0 0.0
        %5625 = vmatprep.subr.mxu0 0.0
        %5626 = vmatpush2.xpose.msra.mxu0 0.0
        %5627 = vmatprep.subr.mxu0 0.0
        %5628 = vmatpush2.xpose.msra.mxu0 0.0
        %5629 = vmatprep.subr.mxu0 0.0
        %5630 = vmatpush2.xpose.msra.mxu0 0.0
        %5631 = vmatprep.mubr.f32.mxu0 0.0
        %5632 = vmatmul.mubr.f32.gmra.mxu0 %v5562
        %v5633 = vpop.f32.mrf.mxu0
        %v5634 = vadd.f32 0.0, %v5633
        %v5635 = vpop.f32.mrf.mxu0
        %5636 = vdwg.mxu0
        %v5638 = vsel %vm4397, %v5186, 0
        %v5641 = vsel %vm4397, %v5296, 0
        %5643 = vmatprep.subr.mxu0 0.0
        %5644 = vmatpush1.xpose.msra.mxu0 0.0
        %5645 = vmatprep.subr.mxu0 0.0
        %5646 = vmatpush1.xpose.msra.mxu0 0.0
        %5647 = vmatprep.subr.mxu0 0.0
        %5648 = vmatpush1.xpose.msra.mxu0 0.0
        %5649 = vmatprep.subr.mxu0 0.0
        %5650 = vmatpush1.xpose.msra.mxu0 0.0
        %5651 = vmatprep.subr.mxu0 0.0
        %5652 = vmatpush1.xpose.msra.mxu0 0.0
        %5653 = vmatprep.subr.mxu0 0.0
        %5654 = vmatpush1.xpose.msra.mxu0 0.0
        %5655 = vmatprep.subr.mxu0 0.0
        %5656 = vmatpush1.xpose.msra.mxu0 0.0
        %5657 = vmatprep.subr.mxu0 0.0
        %5658 = vmatpush1.xpose.msra.mxu0 0.0
        %5659 = vmatprep.subr.mxu0 0.0
        %5660 = vmatpush1.xpose.msra.mxu0 0.0
        %5661 = vmatprep.subr.mxu0 0.0
        %5662 = vmatpush1.xpose.msra.mxu0 0.0
        %5663 = vmatprep.subr.mxu0 0.0
        %5664 = vmatpush1.xpose.msra.mxu0 0.0
        %5665 = vmatprep.subr.mxu0 0.0
        %5666 = vmatpush1.xpose.msra.mxu0 0.0
        %5667 = vmatprep.subr.mxu0 0.0
        %5668 = vmatpush1.xpose.msra.mxu0 0.0
        %5669 = vmatprep.subr.mxu0 0.0
        %5670 = vmatpush1.xpose.msra.mxu0 0.0
        %5671 = vmatprep.subr.mxu0 0.0
        %5672 = vmatpush1.xpose.msra.mxu0 0.0
        %5673 = vmatprep.subr.mxu0 0.0
        %5674 = vmatpush1.xpose.msra.mxu0 %v5641
        %5675 = vmatprep.subr.mxu0 0.0
        %5676 = vmatpush2.xpose.msra.mxu0 0.0
        %5677 = vmatprep.subr.mxu0 0.0
        %5678 = vmatpush2.xpose.msra.mxu0 0.0
        %5679 = vmatprep.subr.mxu0 0.0
        %5680 = vmatpush2.xpose.msra.mxu0 0.0
        %5681 = vmatprep.subr.mxu0 0.0
        %5682 = vmatpush2.xpose.msra.mxu0 0.0
        %5683 = vmatprep.subr.mxu0 0.0
        %5684 = vmatpush2.xpose.msra.mxu0 0.0
        %5685 = vmatprep.subr.mxu0 0.0
        %5686 = vmatpush2.xpose.msra.mxu0 0.0
        %5687 = vmatprep.subr.mxu0 0.0
        %5688 = vmatpush2.xpose.msra.mxu0 0.0
        %5689 = vmatprep.subr.mxu0 0.0
        %5690 = vmatpush2.xpose.msra.mxu0 0.0
        %5691 = vmatprep.subr.mxu0 0.0
        %5692 = vmatpush2.xpose.msra.mxu0 0.0
        %5693 = vmatprep.subr.mxu0 0.0
        %5694 = vmatpush2.xpose.msra.mxu0 0.0
        %5695 = vmatprep.subr.mxu0 0.0
        %5696 = vmatpush2.xpose.msra.mxu0 0.0
        %5697 = vmatprep.subr.mxu0 0.0
        %5698 = vmatpush2.xpose.msra.mxu0 0.0
        %5699 = vmatprep.subr.mxu0 0.0
        %5700 = vmatpush2.xpose.msra.mxu0 0.0
        %5701 = vmatprep.subr.mxu0 0.0
        %5702 = vmatpush2.xpose.msra.mxu0 0.0
        %5703 = vmatprep.subr.mxu0 0.0
        %5704 = vmatpush2.xpose.msra.mxu0 0.0
        %5705 = vmatprep.subr.mxu0 0.0
        %5706 = vmatpush2.xpose.msra.mxu0 0.0
        %5707 = vmatprep.mubr.f32.mxu0 0.0
        %5708 = vmatmul.mubr.f32.gmra.mxu0 %v5638
        %v5709 = vpop.f32.mrf.mxu0
        %v5710 = vadd.f32 0.0, %v5709
        %v5711 = vpop.f32.mrf.mxu0
        %5712 = vdwg.mxu0
        %v5713 = vmul.f32 %v5482, 0.125
        %v5714 = vmul.f32 %v5558, 0.125
        %v5715 = vmul.f32 %v5634, 0.125
        %v5716 = vmul.f32 %v5710, 0.125
        %v5717 = vadd.f32 %v5713, %v4713
        %v5718 = vadd.f32 %v5714, %v4717
        %v5719 = vadd.f32 %v5715, %v4721
        %v5720 = vadd.f32 %v5716, %v4725
        %v5721 = vsel %vm4734, %v5717, -inf
        %5722 = vmax.xlane.f32.xlu0 %v5721
        %v5723 = vpop.xlane.xlu0 %5722
        %v5724 = vsel %vm4734, %v5718, -inf
        %5725 = vmax.xlane.f32.xlu0 %v5724
        %v5726 = vpop.xlane.xlu0 %5725
        %v5727 = vsel %vm4734, %v5719, -inf
        %5728 = vmax.xlane.f32.xlu0 %v5727
        %v5729 = vpop.xlane.xlu0 %5728
        %v5730 = vsel %vm4734, %v5720, -inf
        %5731 = vmax.xlane.f32.xlu0 %v5730
        %v5732 = vpop.xlane.xlu0 %5731
        %v5733 = vsub.f32 %v5717, %v5723
        %v5734 = vsub.f32 %v5718, %v5726
        %v5735 = vsub.f32 %v5719, %v5729
        %v5736 = vsub.f32 %v5720, %v5732
        %v5737 = vmul.f32 %v5733, 1.442695
        %v5738 = vpow.pop %v5737
        %v5739 = vmul.f32 %v5734, 1.442695
        %v5740 = vpow.pop %v5739
        %v5741 = vmul.f32 %v5735, 1.442695
        %v5742 = vpow.pop %v5741
        %v5743 = vmul.f32 %v5736, 1.442695
        %v5744 = vpow.pop %v5743
        %v5745 = vsel %vm4734, %v5738, 0.0
        %5746 = vadd.xlane.f32.xlu0 %v5745
        %v5747 = vpop.xlane.xlu0 %5746
        %v5748 = vsel %vm4734, %v5740, 0.0
        %5749 = vadd.xlane.f32.xlu0 %v5748
        %v5750 = vpop.xlane.xlu0 %5749
        %v5751 = vsel %vm4734, %v5742, 0.0
        %5752 = vadd.xlane.f32.xlu0 %v5751
        %v5753 = vpop.xlane.xlu0 %5752
        %v5754 = vsel %vm4734, %v5744, 0.0
        %5755 = vadd.xlane.f32.xlu0 %v5754
        %v5756 = vpop.xlane.xlu0 %5755
        %v5757 = vrcp.pop %v5747
        %v5758 = vrcp.pop %v5750
        %v5759 = vrcp.pop %v5753
        %v5760 = vrcp.pop %v5756
        %v5761 = vmul.f32 %v5738, %v5757
        %v5762 = vmul.f32 %v5740, %v5758
        %v5763 = vmul.f32 %v5742, %v5759
        %v5764 = vmul.f32 %v5744, %v5760
        %v5766 = vsel %vm4734, %v5761, 0
        %5768 = vmatprep.subr.mxu0 0.0
        %5769 = vmatpush1.msra.mxu0 0.0
        %5770 = vmatprep.subr.mxu0 0.0
        %5771 = vmatpush1.msra.mxu0 0.0
        %5772 = vmatprep.subr.mxu0 0.0
        %5773 = vmatpush1.msra.mxu0 0.0
        %5774 = vmatprep.subr.mxu0 0.0
        %5775 = vmatpush1.msra.mxu0 0.0
        %5776 = vmatprep.subr.mxu0 0.0
        %5777 = vmatpush1.msra.mxu0 0.0
        %5778 = vmatprep.subr.mxu0 0.0
        %5779 = vmatpush1.msra.mxu0 0.0
        %5780 = vmatprep.subr.mxu0 0.0
        %5781 = vmatpush1.msra.mxu0 0.0
        %5782 = vmatprep.subr.mxu0 0.0
        %5783 = vmatpush1.msra.mxu0 0.0
        %5784 = vmatprep.subr.mxu0 0.0
        %5785 = vmatpush1.msra.mxu0 0.0
        %5786 = vmatprep.subr.mxu0 0.0
        %5787 = vmatpush1.msra.mxu0 0.0
        %5788 = vmatprep.subr.mxu0 0.0
        %5789 = vmatpush1.msra.mxu0 0.0
        %5790 = vmatprep.subr.mxu0 0.0
        %5791 = vmatpush1.msra.mxu0 0.0
        %5792 = vmatprep.subr.mxu0 0.0
        %5793 = vmatpush1.msra.mxu0 0.0
        %5794 = vmatprep.subr.mxu0 0.0
        %5795 = vmatpush1.msra.mxu0 0.0
        %5796 = vmatprep.subr.mxu0 0.0
        %5797 = vmatpush1.msra.mxu0 0.0
        %5798 = vmatprep.subr.mxu0 0.0
        %5799 = vmatpush1.msra.mxu0 %v5391
        %5800 = vmatprep.subr.mxu0 0.0
        %5801 = vmatpush2.msra.mxu0 0.0
        %5802 = vmatprep.subr.mxu0 0.0
        %5803 = vmatpush2.msra.mxu0 0.0
        %5804 = vmatprep.subr.mxu0 0.0
        %5805 = vmatpush2.msra.mxu0 0.0
        %5806 = vmatprep.subr.mxu0 0.0
        %5807 = vmatpush2.msra.mxu0 0.0
        %5808 = vmatprep.subr.mxu0 0.0
        %5809 = vmatpush2.msra.mxu0 0.0
        %5810 = vmatprep.subr.mxu0 0.0
        %5811 = vmatpush2.msra.mxu0 0.0
        %5812 = vmatprep.subr.mxu0 0.0
        %5813 = vmatpush2.msra.mxu0 0.0
        %5814 = vmatprep.subr.mxu0 0.0
        %5815 = vmatpush2.msra.mxu0 0.0
        %5816 = vmatprep.subr.mxu0 0.0
        %5817 = vmatpush2.msra.mxu0 0.0
        %5818 = vmatprep.subr.mxu0 0.0
        %5819 = vmatpush2.msra.mxu0 0.0
        %5820 = vmatprep.subr.mxu0 0.0
        %5821 = vmatpush2.msra.mxu0 0.0
        %5822 = vmatprep.subr.mxu0 0.0
        %5823 = vmatpush2.msra.mxu0 0.0
        %5824 = vmatprep.subr.mxu0 0.0
        %5825 = vmatpush2.msra.mxu0 0.0
        %5826 = vmatprep.subr.mxu0 0.0
        %5827 = vmatpush2.msra.mxu0 0.0
        %5828 = vmatprep.subr.mxu0 0.0
        %5829 = vmatpush2.msra.mxu0 0.0
        %5830 = vmatprep.subr.mxu0 0.0
        %5831 = vmatpush2.msra.mxu0 0.0
        %5832 = vmatprep.mubr.f32.mxu0 0.0
        %5833 = vmatmul.mubr.f32.gmra.mxu0 %v5766
        %v5834 = vpop.f32.mrf.mxu0
        %v5835 = vadd.f32 0.0, %v5834
        %v5836 = vpop.f32.mrf.mxu0
        %5837 = vdwg.mxu0
        %v5839 = vsel %vm4734, %v5762, 0
        %5841 = vmatprep.subr.mxu0 0.0
        %5842 = vmatpush1.msra.mxu0 0.0
        %5843 = vmatprep.subr.mxu0 0.0
        %5844 = vmatpush1.msra.mxu0 0.0
        %5845 = vmatprep.subr.mxu0 0.0
        %5846 = vmatpush1.msra.mxu0 0.0
        %5847 = vmatprep.subr.mxu0 0.0
        %5848 = vmatpush1.msra.mxu0 0.0
        %5849 = vmatprep.subr.mxu0 0.0
        %5850 = vmatpush1.msra.mxu0 0.0
        %5851 = vmatprep.subr.mxu0 0.0
        %5852 = vmatpush1.msra.mxu0 0.0
        %5853 = vmatprep.subr.mxu0 0.0
        %5854 = vmatpush1.msra.mxu0 0.0
        %5855 = vmatprep.subr.mxu0 0.0
        %5856 = vmatpush1.msra.mxu0 0.0
        %5857 = vmatprep.subr.mxu0 0.0
        %5858 = vmatpush1.msra.mxu0 0.0
        %5859 = vmatprep.subr.mxu0 0.0
        %5860 = vmatpush1.msra.mxu0 0.0
        %5861 = vmatprep.subr.mxu0 0.0
        %5862 = vmatpush1.msra.mxu0 0.0
        %5863 = vmatprep.subr.mxu0 0.0
        %5864 = vmatpush1.msra.mxu0 0.0
        %5865 = vmatprep.subr.mxu0 0.0
        %5866 = vmatpush1.msra.mxu0 0.0
        %5867 = vmatprep.subr.mxu0 0.0
        %5868 = vmatpush1.msra.mxu0 0.0
        %5869 = vmatprep.subr.mxu0 0.0
        %5870 = vmatpush1.msra.mxu0 0.0
        %5871 = vmatprep.subr.mxu0 0.0
        %5872 = vmatpush1.msra.mxu0 %v5396
        %5873 = vmatprep.subr.mxu0 0.0
        %5874 = vmatpush2.msra.mxu0 0.0
        %5875 = vmatprep.subr.mxu0 0.0
        %5876 = vmatpush2.msra.mxu0 0.0
        %5877 = vmatprep.subr.mxu0 0.0
        %5878 = vmatpush2.msra.mxu0 0.0
        %5879 = vmatprep.subr.mxu0 0.0
        %5880 = vmatpush2.msra.mxu0 0.0
        %5881 = vmatprep.subr.mxu0 0.0
        %5882 = vmatpush2.msra.mxu0 0.0
        %5883 = vmatprep.subr.mxu0 0.0
        %5884 = vmatpush2.msra.mxu0 0.0
        %5885 = vmatprep.subr.mxu0 0.0
        %5886 = vmatpush2.msra.mxu0 0.0
        %5887 = vmatprep.subr.mxu0 0.0
        %5888 = vmatpush2.msra.mxu0 0.0
        %5889 = vmatprep.subr.mxu0 0.0
        %5890 = vmatpush2.msra.mxu0 0.0
        %5891 = vmatprep.subr.mxu0 0.0
        %5892 = vmatpush2.msra.mxu0 0.0
        %5893 = vmatprep.subr.mxu0 0.0
        %5894 = vmatpush2.msra.mxu0 0.0
        %5895 = vmatprep.subr.mxu0 0.0
        %5896 = vmatpush2.msra.mxu0 0.0
        %5897 = vmatprep.subr.mxu0 0.0
        %5898 = vmatpush2.msra.mxu0 0.0
        %5899 = vmatprep.subr.mxu0 0.0
        %5900 = vmatpush2.msra.mxu0 0.0
        %5901 = vmatprep.subr.mxu0 0.0
        %5902 = vmatpush2.msra.mxu0 0.0
        %5903 = vmatprep.subr.mxu0 0.0
        %5904 = vmatpush2.msra.mxu0 0.0
        %5905 = vmatprep.mubr.f32.mxu0 0.0
        %5906 = vmatmul.mubr.f32.gmra.mxu0 %v5839
        %v5907 = vpop.f32.mrf.mxu0
        %v5908 = vadd.f32 0.0, %v5907
        %v5909 = vpop.f32.mrf.mxu0
        %5910 = vdwg.mxu0
        %v5912 = vsel %vm4734, %v5763, 0
        %5914 = vmatprep.subr.mxu0 0.0
        %5915 = vmatpush1.msra.mxu0 0.0
        %5916 = vmatprep.subr.mxu0 0.0
        %5917 = vmatpush1.msra.mxu0 0.0
        %5918 = vmatprep.subr.mxu0 0.0
        %5919 = vmatpush1.msra.mxu0 0.0
        %5920 = vmatprep.subr.mxu0 0.0
        %5921 = vmatpush1.msra.mxu0 0.0
        %5922 = vmatprep.subr.mxu0 0.0
        %5923 = vmatpush1.msra.mxu0 0.0
        %5924 = vmatprep.subr.mxu0 0.0
        %5925 = vmatpush1.msra.mxu0 0.0
        %5926 = vmatprep.subr.mxu0 0.0
        %5927 = vmatpush1.msra.mxu0 0.0
        %5928 = vmatprep.subr.mxu0 0.0
        %5929 = vmatpush1.msra.mxu0 0.0
        %5930 = vmatprep.subr.mxu0 0.0
        %5931 = vmatpush1.msra.mxu0 0.0
        %5932 = vmatprep.subr.mxu0 0.0
        %5933 = vmatpush1.msra.mxu0 0.0
        %5934 = vmatprep.subr.mxu0 0.0
        %5935 = vmatpush1.msra.mxu0 0.0
        %5936 = vmatprep.subr.mxu0 0.0
        %5937 = vmatpush1.msra.mxu0 0.0
        %5938 = vmatprep.subr.mxu0 0.0
        %5939 = vmatpush1.msra.mxu0 0.0
        %5940 = vmatprep.subr.mxu0 0.0
        %5941 = vmatpush1.msra.mxu0 0.0
        %5942 = vmatprep.subr.mxu0 0.0
        %5943 = vmatpush1.msra.mxu0 0.0
        %5944 = vmatprep.subr.mxu0 0.0
        %5945 = vmatpush1.msra.mxu0 %v5401
        %5946 = vmatprep.subr.mxu0 0.0
        %5947 = vmatpush2.msra.mxu0 0.0
        %5948 = vmatprep.subr.mxu0 0.0
        %5949 = vmatpush2.msra.mxu0 0.0
        %5950 = vmatprep.subr.mxu0 0.0
        %5951 = vmatpush2.msra.mxu0 0.0
        %5952 = vmatprep.subr.mxu0 0.0
        %5953 = vmatpush2.msra.mxu0 0.0
        %5954 = vmatprep.subr.mxu0 0.0
        %5955 = vmatpush2.msra.mxu0 0.0
        %5956 = vmatprep.subr.mxu0 0.0
        %5957 = vmatpush2.msra.mxu0 0.0
        %5958 = vmatprep.subr.mxu0 0.0
        %5959 = vmatpush2.msra.mxu0 0.0
        %5960 = vmatprep.subr.mxu0 0.0
        %5961 = vmatpush2.msra.mxu0 0.0
        %5962 = vmatprep.subr.mxu0 0.0
        %5963 = vmatpush2.msra.mxu0 0.0
        %5964 = vmatprep.subr.mxu0 0.0
        %5965 = vmatpush2.msra.mxu0 0.0
        %5966 = vmatprep.subr.mxu0 0.0
        %5967 = vmatpush2.msra.mxu0 0.0
        %5968 = vmatprep.subr.mxu0 0.0
        %5969 = vmatpush2.msra.mxu0 0.0
        %5970 = vmatprep.subr.mxu0 0.0
        %5971 = vmatpush2.msra.mxu0 0.0
        %5972 = vmatprep.subr.mxu0 0.0
        %5973 = vmatpush2.msra.mxu0 0.0
        %5974 = vmatprep.subr.mxu0 0.0
        %5975 = vmatpush2.msra.mxu0 0.0
        %5976 = vmatprep.subr.mxu0 0.0
        %5977 = vmatpush2.msra.mxu0 0.0
        %5978 = vmatprep.mubr.f32.mxu0 0.0
        %5979 = vmatmul.mubr.f32.gmra.mxu0 %v5912
        %v5980 = vpop.f32.mrf.mxu0
        %v5981 = vadd.f32 0.0, %v5980
        %v5982 = vpop.f32.mrf.mxu0
        %5983 = vdwg.mxu0
        %v5985 = vsel %vm4734, %v5764, 0
        %5987 = vmatprep.subr.mxu0 0.0
        %5988 = vmatpush1.msra.mxu0 0.0
        %5989 = vmatprep.subr.mxu0 0.0
        %5990 = vmatpush1.msra.mxu0 0.0
        %5991 = vmatprep.subr.mxu0 0.0
        %5992 = vmatpush1.msra.mxu0 0.0
        %5993 = vmatprep.subr.mxu0 0.0
        %5994 = vmatpush1.msra.mxu0 0.0
        %5995 = vmatprep.subr.mxu0 0.0
        %5996 = vmatpush1.msra.mxu0 0.0
        %5997 = vmatprep.subr.mxu0 0.0
        %5998 = vmatpush1.msra.mxu0 0.0
        %5999 = vmatprep.subr.mxu0 0.0
        %6000 = vmatpush1.msra.mxu0 0.0
        %6001 = vmatprep.subr.mxu0 0.0
        %6002 = vmatpush1.msra.mxu0 0.0
        %6003 = vmatprep.subr.mxu0 0.0
        %6004 = vmatpush1.msra.mxu0 0.0
        %6005 = vmatprep.subr.mxu0 0.0
        %6006 = vmatpush1.msra.mxu0 0.0
        %6007 = vmatprep.subr.mxu0 0.0
        %6008 = vmatpush1.msra.mxu0 0.0
        %6009 = vmatprep.subr.mxu0 0.0
        %6010 = vmatpush1.msra.mxu0 0.0
        %6011 = vmatprep.subr.mxu0 0.0
        %6012 = vmatpush1.msra.mxu0 0.0
        %6013 = vmatprep.subr.mxu0 0.0
        %6014 = vmatpush1.msra.mxu0 0.0
        %6015 = vmatprep.subr.mxu0 0.0
        %6016 = vmatpush1.msra.mxu0 0.0
        %6017 = vmatprep.subr.mxu0 0.0
        %6018 = vmatpush1.msra.mxu0 %v5406
        %6019 = vmatprep.subr.mxu0 0.0
        %6020 = vmatpush2.msra.mxu0 0.0
        %6021 = vmatprep.subr.mxu0 0.0
        %6022 = vmatpush2.msra.mxu0 0.0
        %6023 = vmatprep.subr.mxu0 0.0
        %6024 = vmatpush2.msra.mxu0 0.0
        %6025 = vmatprep.subr.mxu0 0.0
        %6026 = vmatpush2.msra.mxu0 0.0
        %6027 = vmatprep.subr.mxu0 0.0
        %6028 = vmatpush2.msra.mxu0 0.0
        %6029 = vmatprep.subr.mxu0 0.0
        %6030 = vmatpush2.msra.mxu0 0.0
        %6031 = vmatprep.subr.mxu0 0.0
        %6032 = vmatpush2.msra.mxu0 0.0
        %6033 = vmatprep.subr.mxu0 0.0
        %6034 = vmatpush2.msra.mxu0 0.0
        %6035 = vmatprep.subr.mxu0 0.0
        %6036 = vmatpush2.msra.mxu0 0.0
        %6037 = vmatprep.subr.mxu0 0.0
        %6038 = vmatpush2.msra.mxu0 0.0
        %6039 = vmatprep.subr.mxu0 0.0
        %6040 = vmatpush2.msra.mxu0 0.0
        %6041 = vmatprep.subr.mxu0 0.0
        %6042 = vmatpush2.msra.mxu0 0.0
        %6043 = vmatprep.subr.mxu0 0.0
        %6044 = vmatpush2.msra.mxu0 0.0
        %6045 = vmatprep.subr.mxu0 0.0
        %6046 = vmatpush2.msra.mxu0 0.0
        %6047 = vmatprep.subr.mxu0 0.0
        %6048 = vmatpush2.msra.mxu0 0.0
        %6049 = vmatprep.subr.mxu0 0.0
        %6050 = vmatpush2.msra.mxu0 0.0
        %6051 = vmatprep.mubr.f32.mxu0 0.0
        %6052 = vmatmul.mubr.f32.gmra.mxu0 %v5985
        %v6053 = vpop.f32.mrf.mxu0
        %v6054 = vadd.f32 0.0, %v6053
        %v6055 = vpop.f32.mrf.mxu0
        %6056 = vdwg.mxu0
        %s6057 = scalar_lea.vmem [#allocation13], 64
        %v6058 = vld [vmem:[%s6057] sm:$0xff]
        %v6059 = vld [vmem:[%s6057 + $0x8] sm:$0xff]
        %v6060 = vld [vmem:[%s6057 + $0x10] sm:$0xff]
        %v6061 = vld [vmem:[%s6057 + $0x18] sm:$0xff]
        %v6062 = vld [vmem:[%s6057 + $0x20] sm:$0xff]
        %v6063 = vld [vmem:[%s6057 + $0x28] sm:$0xff]
        %v6064 = vld [vmem:[%s6057 + $0x30] sm:$0xff]
        %v6065 = vld [vmem:[%s6057 + $0x38] sm:$0xff]
        %v6067 = vsel %vm4397, %v5835, 0
        %v6070 = vsel %vm4397, %v5908, 0
        %v6073 = vsel %vm4397, %v5981, 0
        %v6076 = vsel %vm4397, %v6054, 0
        %6078 = vmatprep.subr.mxu0 0.0
        %6079 = vmatpush1.msra.mxu0 0.0
        %6080 = vmatprep.subr.mxu0 0.0
        %6081 = vmatpush1.msra.mxu0 0.0
        %6082 = vmatprep.subr.mxu0 0.0
        %6083 = vmatpush1.msra.mxu0 0.0
        %6084 = vmatprep.subr.mxu0 0.0
        %6085 = vmatpush1.msra.mxu0 0.0
        %6086 = vmatprep.subr.mxu0 0.0
        %6087 = vmatpush1.msra.mxu0 0.0
        %6088 = vmatprep.subr.mxu0 0.0
        %6089 = vmatpush1.msra.mxu0 0.0
        %6090 = vmatprep.subr.mxu0 0.0
        %6091 = vmatpush1.msra.mxu0 0.0
        %6092 = vmatprep.subr.mxu0 0.0
        %6093 = vmatpush1.msra.mxu0 0.0
        %6094 = vmatprep.subr.mxu0 0.0
        %6095 = vmatpush1.msra.mxu0 %v6065
        %6096 = vmatprep.subr.mxu0 0.0
        %6097 = vmatpush1.msra.mxu0 %v6064
        %6098 = vmatprep.subr.mxu0 0.0
        %6099 = vmatpush1.msra.mxu0 %v6063
        %6100 = vmatprep.subr.mxu0 0.0
        %6101 = vmatpush1.msra.mxu0 %v6062
        %6102 = vmatprep.subr.mxu0 0.0
        %6103 = vmatpush1.msra.mxu0 %v6061
        %6104 = vmatprep.subr.mxu0 0.0
        %6105 = vmatpush1.msra.mxu0 %v6060
        %6106 = vmatprep.subr.mxu0 0.0
        %6107 = vmatpush1.msra.mxu0 %v6059
        %6108 = vmatprep.subr.mxu0 0.0
        %6109 = vmatpush1.msra.mxu0 %v6058
        %6110 = vmatprep.subr.mxu0 0.0
        %6111 = vmatpush2.msra.mxu0 0.0
        %6112 = vmatprep.subr.mxu0 0.0
        %6113 = vmatpush2.msra.mxu0 0.0
        %6114 = vmatprep.subr.mxu0 0.0
        %6115 = vmatpush2.msra.mxu0 0.0
        %6116 = vmatprep.subr.mxu0 0.0
        %6117 = vmatpush2.msra.mxu0 0.0
        %6118 = vmatprep.subr.mxu0 0.0
        %6119 = vmatpush2.msra.mxu0 0.0
        %6120 = vmatprep.subr.mxu0 0.0
        %6121 = vmatpush2.msra.mxu0 0.0
        %6122 = vmatprep.subr.mxu0 0.0
        %6123 = vmatpush2.msra.mxu0 0.0
        %6124 = vmatprep.subr.mxu0 0.0
        %6125 = vmatpush2.msra.mxu0 0.0
        %6126 = vmatprep.subr.mxu0 0.0
        %6127 = vmatpush2.msra.mxu0 0.0
        %6128 = vmatprep.subr.mxu0 0.0
        %6129 = vmatpush2.msra.mxu0 0.0
        %6130 = vmatprep.subr.mxu0 0.0
        %6131 = vmatpush2.msra.mxu0 0.0
        %6132 = vmatprep.subr.mxu0 0.0
        %6133 = vmatpush2.msra.mxu0 0.0
        %6134 = vmatprep.subr.mxu0 0.0
        %6135 = vmatpush2.msra.mxu0 0.0
        %6136 = vmatprep.subr.mxu0 0.0
        %6137 = vmatpush2.msra.mxu0 0.0
        %6138 = vmatprep.subr.mxu0 0.0
        %6139 = vmatpush2.msra.mxu0 0.0
        %6140 = vmatprep.subr.mxu0 0.0
        %6141 = vmatpush2.msra.mxu0 0.0
        %6142 = vmatprep.mubr.f32.mxu0 0.0
        %6143 = vmatmul.mubr.f32.gmra.mxu0 %v6067
        %v6144 = vpop.f32.mrf.mxu0
        %v6145 = vadd.f32 0.0, %v6144
        %v6146 = vpop.f32.mrf.mxu0
        %6147 = vmatprep.mubr.f32.mxu0 0.0
        %6148 = vmatmul.mubr.f32.gmra.mxu0 %v6070
        %v6149 = vpop.f32.mrf.mxu0
        %v6150 = vadd.f32 0.0, %v6149
        %v6151 = vpop.f32.mrf.mxu0
        %6152 = vmatprep.mubr.f32.mxu0 0.0
        %6153 = vmatmul.mubr.f32.gmra.mxu0 %v6073
        %v6154 = vpop.f32.mrf.mxu0
        %v6155 = vadd.f32 0.0, %v6154
        %v6156 = vpop.f32.mrf.mxu0
        %6157 = vmatprep.mubr.f32.mxu0 0.0
        %6158 = vmatmul.mubr.f32.gmra.mxu0 %v6076
        %v6159 = vpop.f32.mrf.mxu0
        %v6160 = vadd.f32 0.0, %v6159
        %v6161 = vpop.f32.mrf.mxu0
        %6162 = vdwg.mxu0
        %v6164 = vsel %vm4397, %v4849, 0
        %v6167 = vsel %vm4397, %v4922, 0
        %v6170 = vsel %vm4397, %v4995, 0
        %v6173 = vsel %vm4397, %v5068, 0
        %6175 = vmatprep.subr.mxu0 0.0
        %6176 = vmatpush1.msra.mxu0 0.0
        %6177 = vmatprep.subr.mxu0 0.0
        %6178 = vmatpush1.msra.mxu0 0.0
        %6179 = vmatprep.subr.mxu0 0.0
        %6180 = vmatpush1.msra.mxu0 0.0
        %6181 = vmatprep.subr.mxu0 0.0
        %6182 = vmatpush1.msra.mxu0 0.0
        %6183 = vmatprep.subr.mxu0 0.0
        %6184 = vmatpush1.msra.mxu0 0.0
        %6185 = vmatprep.subr.mxu0 0.0
        %6186 = vmatpush1.msra.mxu0 0.0
        %6187 = vmatprep.subr.mxu0 0.0
        %6188 = vmatpush1.msra.mxu0 0.0
        %6189 = vmatprep.subr.mxu0 0.0
        %6190 = vmatpush1.msra.mxu0 0.0
        %6191 = vmatprep.subr.mxu0 0.0
        %6192 = vmatpush1.msra.mxu0 %v5078
        %6193 = vmatprep.subr.mxu0 0.0
        %6194 = vmatpush1.msra.mxu0 %v5077
        %6195 = vmatprep.subr.mxu0 0.0
        %6196 = vmatpush1.msra.mxu0 %v5076
        %6197 = vmatprep.subr.mxu0 0.0
        %6198 = vmatpush1.msra.mxu0 %v5075
        %6199 = vmatprep.subr.mxu0 0.0
        %6200 = vmatpush1.msra.mxu0 %v5074
        %6201 = vmatprep.subr.mxu0 0.0
        %6202 = vmatpush1.msra.mxu0 %v5073
        %6203 = vmatprep.subr.mxu0 0.0
        %6204 = vmatpush1.msra.mxu0 %v5072
        %6205 = vmatprep.subr.mxu0 0.0
        %6206 = vmatpush1.msra.mxu0 %v5071
        %6207 = vmatprep.subr.mxu0 0.0
        %6208 = vmatpush2.msra.mxu0 0.0
        %6209 = vmatprep.subr.mxu0 0.0
        %6210 = vmatpush2.msra.mxu0 0.0
        %6211 = vmatprep.subr.mxu0 0.0
        %6212 = vmatpush2.msra.mxu0 0.0
        %6213 = vmatprep.subr.mxu0 0.0
        %6214 = vmatpush2.msra.mxu0 0.0
        %6215 = vmatprep.subr.mxu0 0.0
        %6216 = vmatpush2.msra.mxu0 0.0
        %6217 = vmatprep.subr.mxu0 0.0
        %6218 = vmatpush2.msra.mxu0 0.0
        %6219 = vmatprep.subr.mxu0 0.0
        %6220 = vmatpush2.msra.mxu0 0.0
        %6221 = vmatprep.subr.mxu0 0.0
        %6222 = vmatpush2.msra.mxu0 0.0
        %6223 = vmatprep.subr.mxu0 0.0
        %6224 = vmatpush2.msra.mxu0 0.0
        %6225 = vmatprep.subr.mxu0 0.0
        %6226 = vmatpush2.msra.mxu0 0.0
        %6227 = vmatprep.subr.mxu0 0.0
        %6228 = vmatpush2.msra.mxu0 0.0
        %6229 = vmatprep.subr.mxu0 0.0
        %6230 = vmatpush2.msra.mxu0 0.0
        %6231 = vmatprep.subr.mxu0 0.0
        %6232 = vmatpush2.msra.mxu0 0.0
        %6233 = vmatprep.subr.mxu0 0.0
        %6234 = vmatpush2.msra.mxu0 0.0
        %6235 = vmatprep.subr.mxu0 0.0
        %6236 = vmatpush2.msra.mxu0 0.0
        %6237 = vmatprep.subr.mxu0 0.0
        %6238 = vmatpush2.msra.mxu0 0.0
        %6239 = vmatprep.mubr.f32.mxu0 0.0
        %6240 = vmatmul.mubr.f32.gmra.mxu0 %v6164
        %v6241 = vpop.f32.mrf.mxu0
        %v6242 = vadd.f32 %v6145, %v6241
        %v6243 = vpop.f32.mrf.mxu0
        %6244 = vmatprep.mubr.f32.mxu0 0.0
        %6245 = vmatmul.mubr.f32.gmra.mxu0 %v6167
        %v6246 = vpop.f32.mrf.mxu0
        %v6247 = vadd.f32 %v6150, %v6246
        %v6248 = vpop.f32.mrf.mxu0
        %6249 = vmatprep.mubr.f32.mxu0 0.0
        %6250 = vmatmul.mubr.f32.gmra.mxu0 %v6170
        %v6251 = vpop.f32.mrf.mxu0
        %v6252 = vadd.f32 %v6155, %v6251
        %v6253 = vpop.f32.mrf.mxu0
        %6254 = vmatprep.mubr.f32.mxu0 0.0
        %6255 = vmatmul.mubr.f32.gmra.mxu0 %v6173
        %v6256 = vpop.f32.mrf.mxu0
        %v6257 = vadd.f32 %v6160, %v6256
        %v6258 = vpop.f32.mrf.mxu0
        %6259 = vdwg.mxu0
        %v6260 = vld [vmem:[#allocation15] sm:$0x1]
        %v6262 = vlaneseq
        %v6263 = vshrl.u32 %v6262, 7
        %v6264 = vsub.s32 0, %v6263
        %v6265 = vrot.slane %v6260, %v6264
        %v6267 = vadd.f32 %v6242, %v6265
        %v6268 = vadd.f32 %v6247, %v6265
        %v6269 = vadd.f32 %v6252, %v6265
        %v6270 = vadd.f32 %v6257, %v6265
        %v6271 = vadd.f32 %v6267, %v4057
        %v6272 = vadd.f32 %v6268, %v4058
        %v6273 = vadd.f32 %v6269, %v4059
        %v6274 = vadd.f32 %v6270, %v4060
        %v6275 = vld [vmem:[#allocation16] sm:$0x1]
        %v6276 = vld [vmem:[#allocation18] sm:$0x1]
        %6277 = vadd.xlane.f32.xlu0 %v6271
        %v6278 = vpop.xlane.xlu0 %6277
        %6279 = vadd.xlane.f32.xlu0 %v6272
        %v6280 = vpop.xlane.xlu0 %6279
        %6281 = vadd.xlane.f32.xlu0 %v6273
        %v6282 = vpop.xlane.xlu0 %6281
        %6283 = vadd.xlane.f32.xlu0 %v6274
        %v6284 = vpop.xlane.xlu0 %6283
        %v6285 = vrcp.pop 128.0
        %v6286 = vmul.f32 %v6278, %v6285
        %v6287 = vmul.f32 %v6280, %v6285
        %v6288 = vmul.f32 %v6282, %v6285
        %v6289 = vmul.f32 %v6284, %v6285
        %v6290 = vsub.f32 %v6271, %v6286
        %v6291 = vsub.f32 %v6272, %v6287
        %v6292 = vsub.f32 %v6273, %v6288
        %v6293 = vsub.f32 %v6274, %v6289
        %v6294 = vmul.f32 %v6290, %v6290
        %v6295 = vmul.f32 %v6291, %v6291
        %v6296 = vmul.f32 %v6292, %v6292
        %v6297 = vmul.f32 %v6293, %v6293
        %6298 = vadd.xlane.f32.xlu0 %v6294
        %v6299 = vpop.xlane.xlu0 %6298
        %6300 = vadd.xlane.f32.xlu0 %v6295
        %v6301 = vpop.xlane.xlu0 %6300
        %6302 = vadd.xlane.f32.xlu0 %v6296
        %v6303 = vpop.xlane.xlu0 %6302
        %6304 = vadd.xlane.f32.xlu0 %v6297
        %v6305 = vpop.xlane.xlu0 %6304
        %v6306 = vmul.f32 %v6299, %v6285
        %v6307 = vmul.f32 %v6301, %v6285
        %v6308 = vmul.f32 %v6303, %v6285
        %v6309 = vmul.f32 %v6305, %v6285
        %v6310 = vadd.f32 %v6306, 1e-12
        %v6311 = vadd.f32 %v6307, 1e-12
        %v6312 = vadd.f32 %v6308, 1e-12
        %v6313 = vadd.f32 %v6309, 1e-12
        %v6314 = vrsqrt.pop %v6310
        %v6315 = vrsqrt.pop %v6311
        %v6316 = vrsqrt.pop %v6312
        %v6317 = vrsqrt.pop %v6313
        %v6318 = vmul.f32 %v6290, %v6314
        %v6319 = vmul.f32 %v6291, %v6315
        %v6320 = vmul.f32 %v6292, %v6316
        %v6321 = vmul.f32 %v6293, %v6317
        %v6323 = vlaneseq
        %v6324 = vshrl.u32 %v6323, 7
        %v6325 = vsub.s32 0, %v6324
        %v6326 = vrot.slane %v6275, %v6325
        %v6328 = vmul.f32 %v6318, %v6326
        %v6329 = vmul.f32 %v6319, %v6326
        %v6330 = vmul.f32 %v6320, %v6326
        %v6331 = vmul.f32 %v6321, %v6326
        %v6333 = vlaneseq
        %v6334 = vshrl.u32 %v6333, 7
        %v6335 = vsub.s32 0, %v6334
        %v6336 = vrot.slane %v6276, %v6335
        %v6338 = vadd.f32 %v6328, %v6336
        %v6339 = vadd.f32 %v6329, %v6336
        %v6340 = vadd.f32 %v6330, %v6336
        %v6341 = vadd.f32 %v6331, %v6336
        %v6342 = vld [vmem:[%s17] sm:$0xff]
        %v6343 = vld [vmem:[%s17 + $0x8] sm:$0xff]
        %v6344 = vld [vmem:[%s17 + $0x10] sm:$0xff]
        %v6345 = vld [vmem:[%s17 + $0x18] sm:$0xff]
        %v6346 = vld [vmem:[%s17 + $0x20] sm:$0xff]
        %v6347 = vld [vmem:[%s17 + $0x28] sm:$0xff]
        %v6348 = vld [vmem:[%s17 + $0x30] sm:$0xff]
        %v6349 = vld [vmem:[%s17 + $0x38] sm:$0xff]
        %v6350 = vld [vmem:[%s17 + $0x40] sm:$0xff]
        %v6351 = vld [vmem:[%s17 + $0x48] sm:$0xff]
        %v6352 = vld [vmem:[%s17 + $0x50] sm:$0xff]
        %v6353 = vld [vmem:[%s17 + $0x58] sm:$0xff]
        %v6354 = vld [vmem:[%s17 + $0x60] sm:$0xff]
        %v6355 = vld [vmem:[%s17 + $0x68] sm:$0xff]
        %v6356 = vld [vmem:[%s17 + $0x70] sm:$0xff]
        %v6357 = vld [vmem:[%s17 + $0x78] sm:$0xff]
        %v6358 = vld [vmem:[#allocation19] sm:$0x1]
        %v6360 = vlaneseq
        %v6361 = vshrl.u32 %v6360, 7
        %v6362 = vsub.s32 0, %v6361
        %v6363 = vrot.slane %v6358, %v6362
        %6365 = vmatprep.subr.mxu0 0.0
        %6366 = vmatpush1.msra.mxu0 %v6357
        %6367 = vmatprep.subr.mxu0 0.0
        %6368 = vmatpush1.msra.mxu0 %v6356
        %6369 = vmatprep.subr.mxu0 0.0
        %6370 = vmatpush1.msra.mxu0 %v6355
        %6371 = vmatprep.subr.mxu0 0.0
        %6372 = vmatpush1.msra.mxu0 %v6354
        %6373 = vmatprep.subr.mxu0 0.0
        %6374 = vmatpush1.msra.mxu0 %v6353
        %6375 = vmatprep.subr.mxu0 0.0
        %6376 = vmatpush1.msra.mxu0 %v6352
        %6377 = vmatprep.subr.mxu0 0.0
        %6378 = vmatpush1.msra.mxu0 %v6351
        %6379 = vmatprep.subr.mxu0 0.0
        %6380 = vmatpush1.msra.mxu0 %v6350
        %6381 = vmatprep.subr.mxu0 0.0
        %6382 = vmatpush1.msra.mxu0 %v6349
        %6383 = vmatprep.subr.mxu0 0.0
        %6384 = vmatpush1.msra.mxu0 %v6348
        %6385 = vmatprep.subr.mxu0 0.0
        %6386 = vmatpush1.msra.mxu0 %v6347
        %6387 = vmatprep.subr.mxu0 0.0
        %6388 = vmatpush1.msra.mxu0 %v6346
        %6389 = vmatprep.subr.mxu0 0.0
        %6390 = vmatpush1.msra.mxu0 %v6345
        %6391 = vmatprep.subr.mxu0 0.0
        %6392 = vmatpush1.msra.mxu0 %v6344
        %6393 = vmatprep.subr.mxu0 0.0
        %6394 = vmatpush1.msra.mxu0 %v6343
        %6395 = vmatprep.subr.mxu0 0.0
        %6396 = vmatpush1.msra.mxu0 %v6342
        %6397 = vmatprep.subr.mxu0 0.0
        %6398 = vmatpush2.msra.mxu0 0.0
        %6399 = vmatprep.subr.mxu0 0.0
        %6400 = vmatpush2.msra.mxu0 0.0
        %6401 = vmatprep.subr.mxu0 0.0
        %6402 = vmatpush2.msra.mxu0 0.0
        %6403 = vmatprep.subr.mxu0 0.0
        %6404 = vmatpush2.msra.mxu0 0.0
        %6405 = vmatprep.subr.mxu0 0.0
        %6406 = vmatpush2.msra.mxu0 0.0
        %6407 = vmatprep.subr.mxu0 0.0
        %6408 = vmatpush2.msra.mxu0 0.0
        %6409 = vmatprep.subr.mxu0 0.0
        %6410 = vmatpush2.msra.mxu0 0.0
        %6411 = vmatprep.subr.mxu0 0.0
        %6412 = vmatpush2.msra.mxu0 0.0
        %6413 = vmatprep.subr.mxu0 0.0
        %6414 = vmatpush2.msra.mxu0 0.0
        %6415 = vmatprep.subr.mxu0 0.0
        %6416 = vmatpush2.msra.mxu0 0.0
        %6417 = vmatprep.subr.mxu0 0.0
        %6418 = vmatpush2.msra.mxu0 0.0
        %6419 = vmatprep.subr.mxu0 0.0
        %6420 = vmatpush2.msra.mxu0 0.0
        %6421 = vmatprep.subr.mxu0 0.0
        %6422 = vmatpush2.msra.mxu0 0.0
        %6423 = vmatprep.subr.mxu0 0.0
        %6424 = vmatpush2.msra.mxu0 0.0
        %6425 = vmatprep.subr.mxu0 0.0
        %6426 = vmatpush2.msra.mxu0 0.0
        %6427 = vmatprep.subr.mxu0 0.0
        %6428 = vmatpush2.msra.mxu0 0.0
        %6429 = vmatprep.mubr.f32.mxu0 0.0
        %6430 = vmatmul.mubr.f32.gmra.mxu0 %v6338
        %v6431 = vpop.f32.mrf.mxu0
        %v6432 = vadd.f32 %v6363, %v6431
        %v6433 = vpop.f32.mrf.mxu0
        %6434 = vmatprep.mubr.f32.mxu0 0.0
        %6435 = vmatmul.mubr.f32.gmra.mxu0 %v6339
        %v6436 = vpop.f32.mrf.mxu0
        %v6437 = vadd.f32 %v6363, %v6436
        %v6438 = vpop.f32.mrf.mxu0
        %6439 = vmatprep.mubr.f32.mxu0 0.0
        %6440 = vmatmul.mubr.f32.gmra.mxu0 %v6340
        %v6441 = vpop.f32.mrf.mxu0
        %v6442 = vadd.f32 %v6363, %v6441
        %v6443 = vpop.f32.mrf.mxu0
        %6444 = vmatprep.mubr.f32.mxu0 0.0
        %6445 = vmatmul.mubr.f32.gmra.mxu0 %v6341
        %v6446 = vpop.f32.mrf.mxu0
        %v6447 = vadd.f32 %v6363, %v6446
        %v6448 = vpop.f32.mrf.mxu0
        %6449 = vdwg.mxu0
        %v6450 = vmul.f32 %v6432, 0.5
        %v6451 = vmul.f32 %v6437, 0.5
        %v6452 = vmul.f32 %v6442, 0.5
        %v6453 = vmul.f32 %v6447, 0.5
        %v6454 = vmul.f32 %v6432, 0.044715
        %v6455 = vmul.f32 %v6437, 0.044715
        %v6456 = vmul.f32 %v6442, 0.044715
        %v6457 = vmul.f32 %v6447, 0.044715
        %v6458 = vmul.f32 %v6454, %v6432
        %v6459 = vmul.f32 %v6455, %v6437
        %v6460 = vmul.f32 %v6456, %v6442
        %v6461 = vmul.f32 %v6457, %v6447
        %v6462 = vmul.f32 %v6458, %v6432
        %v6463 = vmul.f32 %v6459, %v6437
        %v6464 = vmul.f32 %v6460, %v6442
        %v6465 = vmul.f32 %v6461, %v6447
        %v6466 = vadd.f32 %v6432, %v6462
        %v6467 = vadd.f32 %v6437, %v6463
        %v6468 = vadd.f32 %v6442, %v6464
        %v6469 = vadd.f32 %v6447, %v6465
        %v6470 = vmul.f32 %v6466, 0.7978846
        %v6471 = vmul.f32 %v6467, 0.7978846
        %v6472 = vmul.f32 %v6468, 0.7978846
        %v6473 = vmul.f32 %v6469, 0.7978846
        %v6474 = vtanh.pop %v6470
        %v6475 = vtanh.pop %v6471
        %v6476 = vtanh.pop %v6472
        %v6477 = vtanh.pop %v6473
        %v6478 = vadd.f32 %v6474, 1.0
        %v6479 = vadd.f32 %v6475, 1.0
        %v6480 = vadd.f32 %v6476, 1.0
        %v6481 = vadd.f32 %v6477, 1.0
        %v6482 = vmul.f32 %v6450, %v6478
        %v6483 = vmul.f32 %v6451, %v6479
        %v6484 = vmul.f32 %v6452, %v6480
        %v6485 = vmul.f32 %v6453, %v6481
        %v6486 = vld [vmem:[#allocation21] sm:$0xff]
        %v6487 = vld [vmem:[#allocation21 + $0x8] sm:$0xff]
        %v6488 = vld [vmem:[#allocation21 + $0x10] sm:$0xff]
        %v6489 = vld [vmem:[#allocation21 + $0x18] sm:$0xff]
        %v6490 = vld [vmem:[#allocation21 + $0x20] sm:$0xff]
        %v6491 = vld [vmem:[#allocation21 + $0x28] sm:$0xff]
        %v6492 = vld [vmem:[#allocation21 + $0x30] sm:$0xff]
        %v6493 = vld [vmem:[#allocation21 + $0x38] sm:$0xff]
        %v6494 = vld [vmem:[#allocation21 + $0x40] sm:$0xff]
        %v6495 = vld [vmem:[#allocation21 + $0x48] sm:$0xff]
        %v6496 = vld [vmem:[#allocation21 + $0x50] sm:$0xff]
        %v6497 = vld [vmem:[#allocation21 + $0x58] sm:$0xff]
        %v6498 = vld [vmem:[#allocation21 + $0x60] sm:$0xff]
        %v6499 = vld [vmem:[#allocation21 + $0x68] sm:$0xff]
        %v6500 = vld [vmem:[#allocation21 + $0x70] sm:$0xff]
        %v6501 = vld [vmem:[#allocation21 + $0x78] sm:$0xff]
        %v6502 = vld [vmem:[#allocation22] sm:$0x1]
        %v6504 = vlaneseq
        %v6505 = vshrl.u32 %v6504, 7
        %v6506 = vsub.s32 0, %v6505
        %v6507 = vrot.slane %v6502, %v6506
        %6509 = vmatprep.subr.mxu0 0.0
        %6510 = vmatpush1.msra.mxu0 %v6501
        %6511 = vmatprep.subr.mxu0 0.0
        %6512 = vmatpush1.msra.mxu0 %v6500
        %6513 = vmatprep.subr.mxu0 0.0
        %6514 = vmatpush1.msra.mxu0 %v6499
        %6515 = vmatprep.subr.mxu0 0.0
        %6516 = vmatpush1.msra.mxu0 %v6498
        %6517 = vmatprep.subr.mxu0 0.0
        %6518 = vmatpush1.msra.mxu0 %v6497
        %6519 = vmatprep.subr.mxu0 0.0
        %6520 = vmatpush1.msra.mxu0 %v6496
        %6521 = vmatprep.subr.mxu0 0.0
        %6522 = vmatpush1.msra.mxu0 %v6495
        %6523 = vmatprep.subr.mxu0 0.0
        %6524 = vmatpush1.msra.mxu0 %v6494
        %6525 = vmatprep.subr.mxu0 0.0
        %6526 = vmatpush1.msra.mxu0 %v6493
        %6527 = vmatprep.subr.mxu0 0.0
        %6528 = vmatpush1.msra.mxu0 %v6492
        %6529 = vmatprep.subr.mxu0 0.0
        %6530 = vmatpush1.msra.mxu0 %v6491
        %6531 = vmatprep.subr.mxu0 0.0
        %6532 = vmatpush1.msra.mxu0 %v6490
        %6533 = vmatprep.subr.mxu0 0.0
        %6534 = vmatpush1.msra.mxu0 %v6489
        %6535 = vmatprep.subr.mxu0 0.0
        %6536 = vmatpush1.msra.mxu0 %v6488
        %6537 = vmatprep.subr.mxu0 0.0
        %6538 = vmatpush1.msra.mxu0 %v6487
        %6539 = vmatprep.subr.mxu0 0.0
        %6540 = vmatpush1.msra.mxu0 %v6486
        %6541 = vmatprep.subr.mxu0 0.0
        %6542 = vmatpush2.msra.mxu0 0.0
        %6543 = vmatprep.subr.mxu0 0.0
        %6544 = vmatpush2.msra.mxu0 0.0
        %6545 = vmatprep.subr.mxu0 0.0
        %6546 = vmatpush2.msra.mxu0 0.0
        %6547 = vmatprep.subr.mxu0 0.0
        %6548 = vmatpush2.msra.mxu0 0.0
        %6549 = vmatprep.subr.mxu0 0.0
        %6550 = vmatpush2.msra.mxu0 0.0
        %6551 = vmatprep.subr.mxu0 0.0
        %6552 = vmatpush2.msra.mxu0 0.0
        %6553 = vmatprep.subr.mxu0 0.0
        %6554 = vmatpush2.msra.mxu0 0.0
        %6555 = vmatprep.subr.mxu0 0.0
        %6556 = vmatpush2.msra.mxu0 0.0
        %6557 = vmatprep.subr.mxu0 0.0
        %6558 = vmatpush2.msra.mxu0 0.0
        %6559 = vmatprep.subr.mxu0 0.0
        %6560 = vmatpush2.msra.mxu0 0.0
        %6561 = vmatprep.subr.mxu0 0.0
        %6562 = vmatpush2.msra.mxu0 0.0
        %6563 = vmatprep.subr.mxu0 0.0
        %6564 = vmatpush2.msra.mxu0 0.0
        %6565 = vmatprep.subr.mxu0 0.0
        %6566 = vmatpush2.msra.mxu0 0.0
        %6567 = vmatprep.subr.mxu0 0.0
        %6568 = vmatpush2.msra.mxu0 0.0
        %6569 = vmatprep.subr.mxu0 0.0
        %6570 = vmatpush2.msra.mxu0 0.0
        %6571 = vmatprep.subr.mxu0 0.0
        %6572 = vmatpush2.msra.mxu0 0.0
        %6573 = vmatprep.mubr.f32.mxu0 0.0
        %6574 = vmatmul.mubr.f32.gmra.mxu0 %v6482
        %v6575 = vpop.f32.mrf.mxu0
        %v6576 = vadd.f32 %v6507, %v6575
        %v6577 = vpop.f32.mrf.mxu0
        %6578 = vmatprep.mubr.f32.mxu0 0.0
        %6579 = vmatmul.mubr.f32.gmra.mxu0 %v6483
        %v6580 = vpop.f32.mrf.mxu0
        %v6581 = vadd.f32 %v6507, %v6580
        %v6582 = vpop.f32.mrf.mxu0
        %6583 = vmatprep.mubr.f32.mxu0 0.0
        %6584 = vmatmul.mubr.f32.gmra.mxu0 %v6484
        %v6585 = vpop.f32.mrf.mxu0
        %v6586 = vadd.f32 %v6507, %v6585
        %v6587 = vpop.f32.mrf.mxu0
        %6588 = vmatprep.mubr.f32.mxu0 0.0
        %6589 = vmatmul.mubr.f32.gmra.mxu0 %v6485
        %v6590 = vpop.f32.mrf.mxu0
        %v6591 = vadd.f32 %v6507, %v6590
        %v6592 = vpop.f32.mrf.mxu0
        %6593 = vdwg.mxu0
        %v6594 = vadd.f32 %v6576, %v6338
        %v6595 = vadd.f32 %v6581, %v6339
        %v6596 = vadd.f32 %v6586, %v6340
        %v6597 = vadd.f32 %v6591, %v6341
        %v6598 = vld [vmem:[#allocation24] sm:$0x1]
        %v6599 = vld [vmem:[%s22] sm:$0x1]
        %6600 = vadd.xlane.f32.xlu0 %v6594
        %v6601 = vpop.xlane.xlu0 %6600
        %6602 = vadd.xlane.f32.xlu0 %v6595
        %v6603 = vpop.xlane.xlu0 %6602
        %6604 = vadd.xlane.f32.xlu0 %v6596
        %v6605 = vpop.xlane.xlu0 %6604
        %6606 = vadd.xlane.f32.xlu0 %v6597
        %v6607 = vpop.xlane.xlu0 %6606
        %v6608 = vmul.f32 %v6601, %v6285
        %v6609 = vmul.f32 %v6603, %v6285
        %v6610 = vmul.f32 %v6605, %v6285
        %v6611 = vmul.f32 %v6607, %v6285
        %v6612 = vsub.f32 %v6594, %v6608
        %v6613 = vsub.f32 %v6595, %v6609
        %v6614 = vsub.f32 %v6596, %v6610
        %v6615 = vsub.f32 %v6597, %v6611
        %v6616 = vmul.f32 %v6612, %v6612
        %v6617 = vmul.f32 %v6613, %v6613
        %v6618 = vmul.f32 %v6614, %v6614
        %v6619 = vmul.f32 %v6615, %v6615
        %6620 = vadd.xlane.f32.xlu0 %v6616
        %v6621 = vpop.xlane.xlu0 %6620
        %6622 = vadd.xlane.f32.xlu0 %v6617
        %v6623 = vpop.xlane.xlu0 %6622
        %6624 = vadd.xlane.f32.xlu0 %v6618
        %v6625 = vpop.xlane.xlu0 %6624
        %6626 = vadd.xlane.f32.xlu0 %v6619
        %v6627 = vpop.xlane.xlu0 %6626
        %v6628 = vmul.f32 %v6621, %v6285
        %v6629 = vmul.f32 %v6623, %v6285
        %v6630 = vmul.f32 %v6625, %v6285
        %v6631 = vmul.f32 %v6627, %v6285
        %v6632 = vadd.f32 %v6628, 1e-12
        %v6633 = vadd.f32 %v6629, 1e-12
        %v6634 = vadd.f32 %v6630, 1e-12
        %v6635 = vadd.f32 %v6631, 1e-12
        %v6636 = vrsqrt.pop %v6632
        %v6637 = vrsqrt.pop %v6633
        %v6638 = vrsqrt.pop %v6634
        %v6639 = vrsqrt.pop %v6635
        %v6640 = vmul.f32 %v6612, %v6636
        %v6641 = vmul.f32 %v6613, %v6637
        %v6642 = vmul.f32 %v6614, %v6638
        %v6643 = vmul.f32 %v6615, %v6639
        %v6645 = vlaneseq
        %v6646 = vshrl.u32 %v6645, 7
        %v6647 = vsub.s32 0, %v6646
        %v6648 = vrot.slane %v6598, %v6647
        %v6650 = vmul.f32 %v6640, %v6648
        %v6651 = vmul.f32 %v6641, %v6648
        %v6652 = vmul.f32 %v6642, %v6648
        %v6653 = vmul.f32 %v6643, %v6648
        %v6655 = vlaneseq
        %v6656 = vshrl.u32 %v6655, 7
        %v6657 = vsub.s32 0, %v6656
        %v6658 = vrot.slane %v6599, %v6657
        %v6660 = vadd.f32 %v6650, %v6658
        %v6661 = vadd.f32 %v6651, %v6658
        %v6662 = vadd.f32 %v6652, %v6658
        %v6663 = vadd.f32 %v6653, %v6658
        %v6664 = vld [vmem:[%s23] sm:$0x1]
        %v6666 = vlaneseq
        %v6667 = vshrl.u32 %v6666, 7
        %v6668 = vsub.s32 0, %v6667
        %v6669 = vrot.slane %v6664, %v6668
        %v6671 = vmul.f32 %v6660, %v6669
        %v6672 = vmul.f32 %v6661, %v6669
        %v6673 = vmul.f32 %v6662, %v6669
        %v6674 = vmul.f32 %v6663, %v6669
        %6675 = vadd.xlane.f32.xlu0 %v6671
        %v6676 = vpop.xlane.xlu0 %6675
        %6677 = vadd.xlane.f32.xlu0 %v6672
        %v6678 = vpop.xlane.xlu0 %6677
        %6679 = vadd.xlane.f32.xlu0 %v6673
        %v6680 = vpop.xlane.xlu0 %6679
        %6681 = vadd.xlane.f32.xlu0 %v6674
        %v6682 = vpop.xlane.xlu0 %6681
        %v6683 = vld [vmem:[#allocation3] sm:$0x1]
        %v6685 = vlaneseq
        %v6686 = vshrl.u32 %v6685, 7
        %v6687 = vsub.s32 0, %v6686
        %v6688 = vrot.slane %v6683, %v6687
        %v6690 = vadd.f32 %v6676, %v6688
        %v6691 = vadd.f32 %v6678, %v6688
        %v6692 = vadd.f32 %v6680, %v6688
        %v6693 = vadd.f32 %v6682, %v6688
        %v6694 = vsub.f32 0.0, %v6690
        %v6695 = vsub.f32 0.0, %v6691
        %v6696 = vsub.f32 0.0, %v6692
        %v6697 = vsub.f32 0.0, %v6693
        %v6698 = vmul.f32 %v6694, 1.442695
        %v6699 = vpow.pop %v6698
        %v6700 = vmul.f32 %v6695, 1.442695
        %v6701 = vpow.pop %v6700
        %v6702 = vmul.f32 %v6696, 1.442695
        %v6703 = vpow.pop %v6702
        %v6704 = vmul.f32 %v6697, 1.442695
        %v6705 = vpow.pop %v6704
        %v6706 = vadd.f32 %v6699, 1.0
        %v6707 = vadd.f32 %v6701, 1.0
        %v6708 = vadd.f32 %v6703, 1.0
        %v6709 = vadd.f32 %v6705, 1.0
        %v6710 = vrcp.pop %v6706
        %v6711 = vmul.f32 1.0, %v6710
        %v6712 = vrcp.pop %v6707
        %v6713 = vmul.f32 1.0, %v6712
        %v6714 = vrcp.pop %v6708
        %v6715 = vmul.f32 1.0, %v6714
        %v6716 = vrcp.pop %v6709
        %v6717 = vmul.f32 1.0, %v6716
        %6722 = vset.pattern.permute.xlu0 0
        %6723 = vperm.xlu0 %6722, %v6711
        %v6724 = vpop.permute.xlu0 %6723
        %6725 = vset.pattern.permute.xlu0 0
        %6726 = vperm.xlu0 %6725, %v6713
        %v6727 = vpop.permute.xlu0 %6726
        %6728 = vset.pattern.permute.xlu0 0
        %6729 = vperm.xlu0 %6728, %v6715
        %v6730 = vpop.permute.xlu0 %6729
        %6731 = vset.pattern.permute.xlu0 0
        %6732 = vperm.xlu0 %6731, %v6717
        %v6733 = vpop.permute.xlu0 %6732
        %v6734 = vlaneseq
        %v6735 = vshrl.u32 %v6734, 7
        %v6736 = vsub.s32 %v974, %v6735
        %v6737 = vrot.slane %v6724, %v6736
        %v6738 = vlaneseq
        %v6739 = vshrl.u32 %v6738, 7
        %v6740 = vsub.s32 %v974, %v6739
        %v6741 = vrot.slane %v6727, %v6740
        %v6742 = vlaneseq
        %v6743 = vshrl.u32 %v6742, 7
        %v6744 = vsub.s32 %v974, %v6743
        %v6745 = vrot.slane %v6730, %v6744
        %v6746 = vlaneseq
        %v6747 = vshrl.u32 %v6746, 7
        %v6748 = vsub.s32 %v974, %v6747
        %v6749 = vrot.slane %v6733, %v6748
        %vm6754 = vcmask 57344
        %6755 = vst.msk [vmem:[%s960] sm:$0x1] %vm6754, %v6737
        %6756 = vst.msk [vmem:[%s960 + $0x1] sm:$0x1] %vm6754, %v6741
        %6757 = vst.msk [vmem:[%s960 + $0x2] sm:$0x1] %vm6754, %v6745
        %6758 = vst.msk [vmem:[%s960 + $0x3] sm:$0x1] %vm6754, %v6749
        %s6759 = sand.u32 %s593, 1
        %s6760 = scalar_lea.sflag [#allocation6], %s6759
        %s6761 = sand.u32 %s593, 1
        %s6762 = smul.addr %s6761, 4
        %s6763 = scalar_lea.vmem [#allocation25], %s6762
        // Predicated region
        $region173: #{tpu_custom_call.1} parent=119 // pred_check
          %p6764 = pneg %p603
        $region174: #{tpu_custom_call.1} parent=119 // pred_check_branch
          %6766 = sbr.rel (%p6764) target = $region176
        $region175: #{tpu_custom_call.1} parent=119 // pred_region
          %s6767 = smul.u32 4, %s50
          %s6769 = ssub.s32 64, 64
          %6770 = vsyncadd %s6760, %s6769
          %s6771 = smul.addr %s6767, 16
          %s6772 = scalar_lea.hbm %s25, %s6771
          %s6773 = sshll.u32 %s6763, 4
          %s6774 = int_to_ptr.vmem [resolvable:$true] %s6773
          %6779 = dma.vmem_to_hbm [thread:$0]  %s6774, 64, %s6772, %s6760, 16, 16, 1
        $region176: #{tpu_custom_call.1} parent=119 // pred_fallthru
          _
      $region120: #{tpu_custom_call.1} parent=5 // pred_fallthru
        _
      %p6780 = scmp.le.s32.totalorder 2, %s45
      // Predicated region
      $region177: #{tpu_custom_call.1} parent=5 // pred_check
        %p6781 = pneg %p6780
      $region178: #{tpu_custom_call.1} parent=5 // pred_check_branch
        %6783 = sbr.rel (%p6781) target = $region180
      $region179: #{tpu_custom_call.1} parent=5 // pred_region
        %s6784 = ssub.s32 %s45, 2
        // Predicated region
        $region181: #{tpu_custom_call.1} parent=179 // pred_check
          %p6785 = pneg %p609
        $region182: #{tpu_custom_call.1} parent=179 // pred_check_branch
          %6787 = sbr.rel (%p6785) target = $region184
        $region183: #{tpu_custom_call.1} parent=179 // pred_region
          %s6788 = sand.u32 %s594, 1
          %s6789 = scalar_lea.sflag [#allocation6], %s6788
          %s6790 = sand.u32 %s594, 1
          %s6791 = smul.addr %s6790, 4
          %s6792 = scalar_lea.vmem [#allocation25], %s6791
          %6793 = dma.done %s6789, 64
        $region184: #{tpu_custom_call.1} parent=179 // pred_fallthru
          _
      $region180: #{tpu_custom_call.1} parent=5 // pred_fallthru
        _
    $region6: #{tpu_custom_call.1} parent=1 // loop_footer
      %s49 = sadd.s32 1, %s45
    $region7: #{tpu_custom_call.1} parent=1 // loop_footer_branch
      %44 = sbr.rel target = $region3
    $region8: #{tpu_custom_call.1} parent=1 // loop_exit
      _
    %6794 = vsyncpa [#allocation5], 1
    %s6795 = scalar_lea.sflag [#allocation5], 1
    %6796 = vsyncpa %s6795, 1
    %6797 = vsyncpa [#allocation8], 1
    %6798 = vsyncpa [#allocation11], 1
    %6799 = vsyncpa [#allocation14], 1
    %6800 = vsyncpa [#allocation17], 1
    %6801 = vsyncpa [#allocation20], 1
    %6802 = vsyncpa [#allocation23], 1
    %6803 = vsyncpa [#allocation6], 1
    %s6804 = scalar_lea.sflag [#allocation6], 1
    %6805 = vsyncpa %s6804, 1

</llo_original>
